<compile_context>
chip_gen: v6e
topology: v6e:2x2x1
jax: 0.10.0
libtpu: 0.0.40
codegen_flags: <defaults>
</compile_context>

<pallas_src>
import math
from functools import partial

import jax
import jax.numpy as jnp
from jax import lax
from jax.experimental import pallas as pl
from jax.experimental.pallas import tpu as pltpu

# ---------------- model hyper-parameters (small, deterministic) --------------
D_MODEL = 32
N_HEADS = 4
D_HEAD = D_MODEL // N_HEADS
D_FF = 64
N_LAYERS = 2
SRC_VOCAB = 16
TGT_VOCAB = 16
MAX_LEN = 64
EPS = 1e-6
NEG_INF = -1e9
_SCALE = 1.0 / math.sqrt(D_HEAD)
_MM_DTYPE = jnp.bfloat16          # MXU operand dtype; accumulation is always f32

_ENC_W = ["ln1_g", "ln1_b", "qkv_w", "qkv_b", "wo", "bo",
          "ln2_g", "ln2_b", "w1", "b1", "w2", "b2"]
_DEC_W = ["ln1_g", "ln1_b", "sa_qkv_w", "sa_qkv_b", "sa_wo", "sa_bo",
          "ln2_g", "ln2_b", "ca_q_w", "ca_q_b", "ca_kv_w", "ca_kv_b",
          "ca_wo", "ca_bo", "ln3_g", "ln3_b", "w1", "b1", "w2", "b2"]


# --------------------------- in-kernel helpers (traced) ------------------------
def _mm(a, w):
    """Matmul with bf16 operands, f32 accumulation."""
    return jnp.dot(a.astype(_MM_DTYPE), w.astype(_MM_DTYPE),
                   preferred_element_type=jnp.float32)


def _ln_op(x, g, b):
    mean = jnp.mean(x, axis=-1, keepdims=True)
    var = jnp.mean((x - mean) ** 2, axis=-1, keepdims=True)
    return (x - mean) * lax.rsqrt(var + EPS) * g + b


def _split_heads(x):
    # (S, D) -> (H, S, D_HEAD) via lane slices + stack (no minor-dim reshape).
    return jnp.stack(
        [x[:, h * D_HEAD:(h + 1) * D_HEAD] for h in range(N_HEADS)], axis=0)


def _mha(q, k, v, mask_add, wo, bo):
    """All heads in one batched dot_general pair.
    q:(Sq,D) pre-scaled by 1/sqrt(d_head); k,v:(Sk,D);
    mask_add:(Sq,Sk) additive 0/-1e9 mask or None; wo:(D,D); bo:(1,D)."""
    qh = _split_heads(q).astype(_MM_DTYPE)       # (H, Sq, Dh)
    kh = _split_heads(k).astype(_MM_DTYPE)       # (H, Sk, Dh)
    vh = _split_heads(v).astype(_MM_DTYPE)       # (H, Sk, Dh)
    # scores: contract Dh, batch over heads -> (H, Sq, Sk)
    s = lax.dot_general(qh, kh, (((2,), (2,)), ((0,), (0,))),
                        preferred_element_type=jnp.float32)
    if mask_add is not None:
        s = s + mask_add[None]
    s = s - jnp.max(s, axis=-1, keepdims=True)
    p = jnp.exp(s)
    p = p / jnp.sum(p, axis=-1, keepdims=True)
    # PV: (H, Sq, Sk) x (H, Sk, Dh) -> (H, Sq, Dh)
    o = lax.dot_general(p.astype(_MM_DTYPE), vh, (((2,), (1,)), ((0,), (0,))),
                        preferred_element_type=jnp.float32)
    # merge heads back along lanes and do ONE output projection
    cat = jnp.concatenate([o[h] for h in range(N_HEADS)], axis=-1)   # (Sq, D)
    return _mm(cat, wo) + bo


def _ffn(x, w1, b1, w2, b2):
    h = jnp.maximum(_mm(x, w1) + b1, 0.0)
    return _mm(h, w2) + b2


# --------------------- fully fused encoder+decoder+generator kernel ------------
def _model_kernel(*refs, use_enc_mask, use_cross_mask):
    it = iter(refs)
    xs_ref = next(it)                                 # (1, Ss, D) src embeddings
    xt_ref = next(it)                                 # (1, St, D) tgt embeddings
    tm_ref = next(it)                                 # (1, St, St) tgt additive mask
    em_ref = next(it) if use_enc_mask else None       # (1, Ss, Ss) enc additive mask
    cm_ref = next(it) if use_cross_mask else None     # (1, St, Ss) cross additive mask
    enc_w = [next(it) for _ in _ENC_W]                # stacked (L, ...) encoder weights
    enc_g_ref = next(it); enc_b_ref = next(it)        # final encoder LayerNorm
    dec_w = [next(it) for _ in _DEC_W]                # stacked (L, ...) decoder weights
    dec_g_ref = next(it); dec_b_ref = next(it)        # final decoder LayerNorm
    gen_w_ref = next(it); gen_b_ref = next(it)        # Generator linear
    dec_out_ref = next(it); logp_out_ref = next(it)   # outputs

    e = dict(zip(_ENC_W, enc_w))
    d = dict(zip(_DEC_W, dec_w))

    tgt_m = tm_ref[0]
    enc_m = em_ref[0] if use_enc_mask else None
    cross_m = cm_ref[0] if use_cross_mask else None

    # -------------------- encoder stack (pre-LN layers, unrolled) --------------
    x = xs_ref[0]                                     # (Ss, D) f32
    for l in range(N_LAYERS):
        xn = _ln_op(x, e["ln1_g"][l], e["ln1_b"][l])
        qkv = _mm(xn, e["qkv_w"][l]) + e["qkv_b"][l]
        x = x + _mha(qkv[:, :D_MODEL] * _SCALE,
                     qkv[:, D_MODEL:2 * D_MODEL],
                     qkv[:, 2 * D_MODEL:],
                     enc_m, e["wo"][l], e["bo"][l])
        xn = _ln_op(x, e["ln2_g"][l], e["ln2_b"][l])
        x = x + _ffn(xn, e["w1"][l], e["b1"][l], e["w2"][l], e["b2"][l])
    memory = _ln_op(x, enc_g_ref[...], enc_b_ref[...])      # (Ss, D), stays in VMEM

    # -------------------- decoder stack (pre-LN layers, unrolled) --------------
    x = xt_ref[0]                                     # (St, D) f32
    for l in range(N_LAYERS):
        # masked self-attention
        xn = _ln_op(x, d["ln1_g"][l], d["ln1_b"][l])
        qkv = _mm(xn, d["sa_qkv_w"][l]) + d["sa_qkv_b"][l]
        x = x + _mha(qkv[:, :D_MODEL] * _SCALE,
                     qkv[:, D_MODEL:2 * D_MODEL],
                     qkv[:, 2 * D_MODEL:],
                     tgt_m, d["sa_wo"][l], d["sa_bo"][l])
        # cross-attention (queries from x, keys/values from encoder memory)
        xn = _ln_op(x, d["ln2_g"][l], d["ln2_b"][l])
        q = (_mm(xn, d["ca_q_w"][l]) + d["ca_q_b"][l]) * _SCALE
        kv = _mm(memory, d["ca_kv_w"][l]) + d["ca_kv_b"][l]
        x = x + _mha(q, kv[:, :D_MODEL], kv[:, D_MODEL:],
                     cross_m, d["ca_wo"][l], d["ca_bo"][l])
        # position-wise FFN
        xn = _ln_op(x, d["ln3_g"][l], d["ln3_b"][l])
        x = x + _ffn(xn, d["w1"][l], d["b1"][l], d["w2"][l], d["b2"][l])
    decoded = _ln_op(x, dec_g_ref[...], dec_b_ref[...])
    dec_out_ref[0] = decoded

    # -------------------- Generator head (Linear + log_softmax), fused ----------
    logits = _mm(decoded, gen_w_ref[...]) + gen_b_ref[...]
    z = logits - jnp.max(logits, axis=-1, keepdims=True)
    lse = jnp.log(jnp.sum(jnp.exp(z), axis=-1, keepdims=True))
    logp_out_ref[0] = z - lse


# ------------------------------ kernel wrapper ---------------------------------
def _fused_forward(params, xs, xt, tgt_mask_add, enc_mask_add, cross_mask_add):
    B, Ss, D = xs.shape
    St = xt.shape[1]
    use_enc = enc_mask_add is not None
    use_cross = cross_mask_add is not None

    data = [xs, xt, tgt_mask_add]
    data_specs = [pl.BlockSpec((1, Ss, D), lambda b: (b, 0, 0)),
                  pl.BlockSpec((1, St, D), lambda b: (b, 0, 0)),
                  pl.BlockSpec((1, St, St), lambda b: (b, 0, 0))]
    if use_enc:
        data.append(enc_mask_add)
        data_specs.append(pl.BlockSpec((1, Ss, Ss), lambda b: (b, 0, 0)))
    if use_cross:
        data.append(cross_mask_add)
        data_specs.append(pl.BlockSpec((1, St, Ss), lambda b: (b, 0, 0)))

    weights = ([params["enc"][n] for n in _ENC_W]
               + [params["enc_ln_g"], params["enc_ln_b"]]
               + [params["dec"][n] for n in _DEC_W]
               + [params["dec_ln_g"], params["dec_ln_b"]]
               + [params["gen_w"], params["gen_b"]])
    # whole-array blocks, constant index map -> DMA'd once, reused across grid steps
    w_specs = [pl.BlockSpec(w.shape, lambda b, n=w.ndim: (0,) * n) for w in weights]

    decoded, log_probs = pl.pallas_call(
        partial(_model_kernel, use_enc_mask=use_enc, use_cross_mask=use_cross),
        grid=(B,),
        in_specs=data_specs + w_specs,
        out_specs=(pl.BlockSpec((1, St, D), lambda b: (b, 0, 0)),
                   pl.BlockSpec((1, St, TGT_VOCAB), lambda b: (b, 0, 0))),
        out_shape=(jax.ShapeDtypeStruct((B, St, D), jnp.float32),
                   jax.ShapeDtypeStruct((B, St, TGT_VOCAB), jnp.float32)),
        compiler_params=pltpu.CompilerParams(dimension_semantics=("parallel",)),
    )(*data, *weights)
    return decoded, log_probs


# ------------------------------ model (plain-JAX glue) -------------------------
def sinusoidal_pe(max_len, d_model):
    pos = jnp.arange(max_len, dtype=jnp.float32)[:, None]
    div = jnp.exp(
        jnp.arange(0, d_model, 2, dtype=jnp.float32) * (-math.log(10000.0) / d_model))
    pe = jnp.zeros((max_len, d_model), jnp.float32)
    pe = pe.at[:, 0::2].set(jnp.sin(pos * div))
    pe = pe.at[:, 1::2].set(jnp.cos(pos * div))
    return pe


def _embed(tokens, lut, pe):
    # TODO(synk): token-id gather + positional-encoding add stay in plain JAX
    # (data-dependent gather); dropout is identity (eval semantics).
    x = jnp.take(lut, tokens, axis=0) * math.sqrt(D_MODEL)
    return x + pe[: tokens.shape[1]][None, :, :]


def _additive_mask(mask, Sq, Sk):
    """0/1 mask (B,1,Sk) or (B,Sq,Sk) -> additive f32 mask (B,Sq,Sk): 0 or -1e9."""
    B = mask.shape[0]
    m = mask.reshape(B, mask.shape[-2], mask.shape[-1])
    m = jnp.broadcast_to(m, (B, Sq, Sk))
    return jnp.where(m == 0, NEG_INF, 0.0).astype(jnp.float32)


def _is_concrete_all_ones(mask):
    """True iff mask is a concrete array that is provably all non-zero (trace-time gate)."""
    try:
        return bool(jnp.all(mask != 0))
    except Exception:            # tracer under jit -> cannot prove, keep the mask
        return False


def forward_and_generate(params, src, tgt, src_mask, tgt_mask):
    """Returns (decoder output, Generator log-probs) from ONE fused pallas_call."""
    Ss, St = src.shape[1], tgt.shape[1]
    skip_src = _is_concrete_all_ones(src_mask)
    enc_mask_add = None if skip_src else _additive_mask(src_mask, Ss, Ss)
    cross_mask_add = None if skip_src else _additive_mask(src_mask, St, Ss)
    tgt_mask_add = _additive_mask(tgt_mask, St, St)
    xs = _embed(src, params["src_emb"], params["pe"])
    xt = _embed(tgt, params["tgt_emb"], params["pe"])
    return _fused_forward(params, xs, xt, tgt_mask_add, enc_mask_add, cross_mask_add)


def forward(params, src, tgt, src_mask, tgt_mask):
    """EncoderDecoder.forward: returns the decoder output (B, T, d_model)."""
    decoded, _ = forward_and_generate(params, src, tgt, src_mask, tgt_mask)
    return decoded


# ------------------------------ deterministic init -----------------------------
def _w(key, shape, scale=0.05):
    return jax.random.normal(key, shape, jnp.float32) * scale


def _ln_params():
    return jnp.ones((1, D_MODEL), jnp.float32), jnp.zeros((1, D_MODEL), jnp.float32)


def _init_self_attn(key):
    k = jax.random.split(key, 4)
    qkv_w = jnp.concatenate([_w(k[0], (D_MODEL, D_MODEL)),
                             _w(k[1], (D_MODEL, D_MODEL)),
                             _w(k[2], (D_MODEL, D_MODEL))], axis=1)          # (D, 3D)
    return {"qkv_w": qkv_w.astype(_MM_DTYPE),
            "qkv_b": jnp.zeros((1, 3 * D_MODEL), jnp.float32),
            "wo": _w(k[3], (D_MODEL, D_MODEL)).astype(_MM_DTYPE),
            "bo": jnp.zeros((1, D_MODEL), jnp.float32)}


def _init_cross_attn(key):
    k = jax.random.split(key, 4)
    kv_w = jnp.concatenate([_w(k[1], (D_MODEL, D_MODEL)),
                            _w(k[2], (D_MODEL, D_MODEL))], axis=1)           # (D, 2D)
    return {"q_w": _w(k[0], (D_MODEL, D_MODEL)).astype(_MM_DTYPE),
            "q_b": jnp.zeros((1, D_MODEL), jnp.float32),
            "kv_w": kv_w.astype(_MM_DTYPE),
            "kv_b": jnp.zeros((1, 2 * D_MODEL), jnp.float32),
            "wo": _w(k[3], (D_MODEL, D_MODEL)).astype(_MM_DTYPE),
            "bo": jnp.zeros((1, D_MODEL), jnp.float32)}


def _init_ffn(key):
    k1, k2 = jax.random.split(key)
    return {"w1": _w(k1, (D_MODEL, D_FF)).astype(_MM_DTYPE),
            "b1": jnp.zeros((1, D_FF), jnp.float32),
            "w2": _w(k2, (D_FF, D_MODEL)).astype(_MM_DTYPE),
            "b2": jnp.zeros((1, D_MODEL), jnp.float32)}


def init_encoder_layer(key):
    k1, k2 = jax.random.split(key)
    sa = _init_self_attn(k1)
    ff = _init_ffn(k2)
    g1, b1 = _ln_params(); g2, b2 = _ln_params()
    return {"ln1_g": g1, "ln1_b": b1,
            "qkv_w": sa["qkv_w"], "qkv_b": sa["qkv_b"], "wo": sa["wo"], "bo": sa["bo"],
            "ln2_g": g2, "ln2_b": b2,
            "w1": ff["w1"], "b1": ff["b1"], "w2": ff["w2"], "b2": ff["b2"]}


def init_decoder_layer(key):
    k1, k2, k3 = jax.random.split(key, 3)
    sa = _init_self_attn(k1)
    ca = _init_cross_attn(k2)
    ff = _init_ffn(k3)
    g1, b1 = _ln_params(); g2, b2 = _ln_params(); g3, b3 = _ln_params()
    return {"ln1_g": g1, "ln1_b": b1,
            "sa_qkv_w": sa["qkv_w"], "sa_qkv_b": sa["qkv_b"],
            "sa_wo": sa["wo"], "sa_bo": sa["bo"],
            "ln2_g": g2, "ln2_b": b2,
            "ca_q_w": ca["q_w"], "ca_q_b": ca["q_b"],
            "ca_kv_w": ca["kv_w"], "ca_kv_b": ca["kv_b"],
            "ca_wo": ca["wo"], "ca_bo": ca["bo"],
            "ln3_g": g3, "ln3_b": b3,
            "w1": ff["w1"], "b1": ff["b1"], "w2": ff["w2"], "b2": ff["b2"]}


def _stack_layers(layers):
    """Stack per-layer weight dicts along a new leading layer axis."""
    return {k: jnp.stack([lyr[k] for lyr in layers], axis=0) for k in layers[0]}


def init_params(key):
    ks = jax.random.split(key, 3 + 2 * N_LAYERS)
    enc_layers = [init_encoder_layer(ks[3 + i]) for i in range(N_LAYERS)]
    dec_layers = [init_decoder_layer(ks[3 + N_LAYERS + i]) for i in range(N_LAYERS)]
    enc_g, enc_b = _ln_params()
    dec_g, dec_b = _ln_params()
    return {
        "src_emb": _w(ks[0], (SRC_VOCAB, D_MODEL), 1.0),
        "tgt_emb": _w(ks[1], (TGT_VOCAB, D_MODEL), 1.0),
        "pe": sinusoidal_pe(MAX_LEN, D_MODEL),
        "enc": _stack_layers(enc_layers),
        "dec": _stack_layers(dec_layers),
        "enc_ln_g": enc_g, "enc_ln_b": enc_b,
        "dec_ln_g": dec_g, "dec_ln_b": dec_b,
        "gen_w": _w(ks[2], (D_MODEL, TGT_VOCAB)).astype(_MM_DTYPE),
        "gen_b": jnp.zeros((1, TGT_VOCAB), jnp.float32),
    }


# ------------------------------ main --------------------------------------------
if __name__ == "__main__":
    key = jax.random.PRNGKey(0)
    kp, ksrc, ktgt = jax.random.split(key, 3)
    params = init_params(kp)

    B, S_SRC, S_TGT = 2, 8, 8
    src = jax.random.randint(ksrc, (B, S_SRC), 0, SRC_VOCAB)
    tgt = jax.random.randint(ktgt, (B, S_TGT), 0, TGT_VOCAB)
    src_mask = jnp.ones((B, 1, S_SRC), jnp.int32)                        # pad mask (all valid)
    tgt_mask = jnp.broadcast_to(                                         # causal mask
        jnp.tril(jnp.ones((S_TGT, S_TGT), jnp.int32))[None], (B, S_TGT, S_TGT))

    # Masks are concrete here, so the all-ones src_mask is skipped at trace time
    # and the whole forward pass + Generator runs as ONE fused pallas_call.
    decoded, log_probs = forward_and_generate(params, src, tgt, src_mask, tgt_mask)
    decoded = jax.block_until_ready(decoded)
    log_probs = jax.block_until_ready(log_probs)

    assert decoded.shape == (B, S_TGT, D_MODEL)
    assert bool(jnp.all(jnp.isfinite(decoded)))
    assert log_probs.shape == (B, S_TGT, TGT_VOCAB)
    # log_softmax rows sum to 1 in prob space
    assert bool(jnp.allclose(jnp.sum(jnp.exp(log_probs), axis=-1), 1.0, atol=1e-4))

    print("KERNEL_OK")
</pallas_src>

<mosaic_0001>
module attributes {stable_mosaic.version = 11 : i64} {
  func.func @_model_kernel(%arg0: i32, %arg1: memref<1x8x32xf32, #tpu.memory_space<vmem>>, %arg2: memref<1x8x32xf32, #tpu.memory_space<vmem>>, %arg3: memref<1x8x8xf32, #tpu.memory_space<vmem>>, %arg4: memref<2x1x32xf32, #tpu.memory_space<vmem>>, %arg5: memref<2x1x32xf32, #tpu.memory_space<vmem>>, %arg6: memref<2x32x96xbf16, #tpu.memory_space<vmem>>, %arg7: memref<2x1x96xf32, #tpu.memory_space<vmem>>, %arg8: memref<2x32x32xbf16, #tpu.memory_space<vmem>>, %arg9: memref<2x1x32xf32, #tpu.memory_space<vmem>>, %arg10: memref<2x1x32xf32, #tpu.memory_space<vmem>>, %arg11: memref<2x1x32xf32, #tpu.memory_space<vmem>>, %arg12: memref<2x32x64xbf16, #tpu.memory_space<vmem>>, %arg13: memref<2x1x64xf32, #tpu.memory_space<vmem>>, %arg14: memref<2x64x32xbf16, #tpu.memory_space<vmem>>, %arg15: memref<2x1x32xf32, #tpu.memory_space<vmem>>, %arg16: memref<1x32xf32, #tpu.memory_space<vmem>>, %arg17: memref<1x32xf32, #tpu.memory_space<vmem>>, %arg18: memref<2x1x32xf32, #tpu.memory_space<vmem>>, %arg19: memref<2x1x32xf32, #tpu.memory_space<vmem>>, %arg20: memref<2x32x96xbf16, #tpu.memory_space<vmem>>, %arg21: memref<2x1x96xf32, #tpu.memory_space<vmem>>, %arg22: memref<2x32x32xbf16, #tpu.memory_space<vmem>>, %arg23: memref<2x1x32xf32, #tpu.memory_space<vmem>>, %arg24: memref<2x1x32xf32, #tpu.memory_space<vmem>>, %arg25: memref<2x1x32xf32, #tpu.memory_space<vmem>>, %arg26: memref<2x32x32xbf16, #tpu.memory_space<vmem>>, %arg27: memref<2x1x32xf32, #tpu.memory_space<vmem>>, %arg28: memref<2x32x64xbf16, #tpu.memory_space<vmem>>, %arg29: memref<2x1x64xf32, #tpu.memory_space<vmem>>, %arg30: memref<2x32x32xbf16, #tpu.memory_space<vmem>>, %arg31: memref<2x1x32xf32, #tpu.memory_space<vmem>>, %arg32: memref<2x1x32xf32, #tpu.memory_space<vmem>>, %arg33: memref<2x1x32xf32, #tpu.memory_space<vmem>>, %arg34: memref<2x32x64xbf16, #tpu.memory_space<vmem>>, %arg35: memref<2x1x64xf32, #tpu.memory_space<vmem>>, %arg36: memref<2x64x32xbf16, #tpu.memory_space<vmem>>, %arg37: memref<2x1x32xf32, #tpu.memory_space<vmem>>, %arg38: memref<1x32xf32, #tpu.memory_space<vmem>>, %arg39: memref<1x32xf32, #tpu.memory_space<vmem>>, %arg40: memref<32x16xbf16, #tpu.memory_space<vmem>>, %arg41: memref<1x16xf32, #tpu.memory_space<vmem>>, %arg42: memref<1x8x32xf32, #tpu.memory_space<vmem>>, %arg43: memref<1x8x16xf32, #tpu.memory_space<vmem>>) attributes {dimension_semantics = [#tpu.dimension_semantics<parallel>], iteration_bounds = array<i64: 2>, scalar_prefetch = 0 : i64, scratch_operands = 0 : i64, tpu.core_type = #tpu.core_type<tc>, window_params = [{transform_indices = @transform_0, window_bounds = array<i64: 1, 8, 32>}, {transform_indices = @transform_1, window_bounds = array<i64: 1, 8, 32>}, {transform_indices = @transform_2, window_bounds = array<i64: 1, 8, 8>}, {pipeline_mode = #tpu.pipeline_mode<synchronous>, transform_indices = @transform_3, window_bounds = array<i64: 2, 1, 32>}, {pipeline_mode = #tpu.pipeline_mode<synchronous>, transform_indices = @transform_4, window_bounds = array<i64: 2, 1, 32>}, {pipeline_mode = #tpu.pipeline_mode<synchronous>, transform_indices = @transform_5, window_bounds = array<i64: 2, 32, 96>}, {pipeline_mode = #tpu.pipeline_mode<synchronous>, transform_indices = @transform_6, window_bounds = array<i64: 2, 1, 96>}, {pipeline_mode = #tpu.pipeline_mode<synchronous>, transform_indices = @transform_7, window_bounds = array<i64: 2, 32, 32>}, {pipeline_mode = #tpu.pipeline_mode<synchronous>, transform_indices = @transform_8, window_bounds = array<i64: 2, 1, 32>}, {pipeline_mode = #tpu.pipeline_mode<synchronous>, transform_indices = @transform_9, window_bounds = array<i64: 2, 1, 32>}, {pipeline_mode = #tpu.pipeline_mode<synchronous>, transform_indices = @transform_10, window_bounds = array<i64: 2, 1, 32>}, {pipeline_mode = #tpu.pipeline_mode<synchronous>, transform_indices = @transform_11, window_bounds = array<i64: 2, 32, 64>}, {pipeline_mode = #tpu.pipeline_mode<synchronous>, transform_indices = @transform_12, window_bounds = array<i64: 2, 1, 64>}, {pipeline_mode = #tpu.pipeline_mode<synchronous>, transform_indices = @transform_13, window_bounds = array<i64: 2, 64, 32>}, {pipeline_mode = #tpu.pipeline_mode<synchronous>, transform_indices = @transform_14, window_bounds = array<i64: 2, 1, 32>}, {pipeline_mode = #tpu.pipeline_mode<synchronous>, transform_indices = @transform_15, window_bounds = array<i64: 1, 32>}, {pipeline_mode = #tpu.pipeline_mode<synchronous>, transform_indices = @transform_16, window_bounds = array<i64: 1, 32>}, {pipeline_mode = #tpu.pipeline_mode<synchronous>, transform_indices = @transform_17, window_bounds = array<i64: 2, 1, 32>}, {pipeline_mode = #tpu.pipeline_mode<synchronous>, transform_indices = @transform_18, window_bounds = array<i64: 2, 1, 32>}, {pipeline_mode = #tpu.pipeline_mode<synchronous>, transform_indices = @transform_19, window_bounds = array<i64: 2, 32, 96>}, {pipeline_mode = #tpu.pipeline_mode<synchronous>, transform_indices = @transform_20, window_bounds = array<i64: 2, 1, 96>}, {pipeline_mode = #tpu.pipeline_mode<synchronous>, transform_indices = @transform_21, window_bounds = array<i64: 2, 32, 32>}, {pipeline_mode = #tpu.pipeline_mode<synchronous>, transform_indices = @transform_22, window_bounds = array<i64: 2, 1, 32>}, {pipeline_mode = #tpu.pipeline_mode<synchronous>, transform_indices = @transform_23, window_bounds = array<i64: 2, 1, 32>}, {pipeline_mode = #tpu.pipeline_mode<synchronous>, transform_indices = @transform_24, window_bounds = array<i64: 2, 1, 32>}, {pipeline_mode = #tpu.pipeline_mode<synchronous>, transform_indices = @transform_25, window_bounds = array<i64: 2, 32, 32>}, {pipeline_mode = #tpu.pipeline_mode<synchronous>, transform_indices = @transform_26, window_bounds = array<i64: 2, 1, 32>}, {pipeline_mode = #tpu.pipeline_mode<synchronous>, transform_indices = @transform_27, window_bounds = array<i64: 2, 32, 64>}, {pipeline_mode = #tpu.pipeline_mode<synchronous>, transform_indices = @transform_28, window_bounds = array<i64: 2, 1, 64>}, {pipeline_mode = #tpu.pipeline_mode<synchronous>, transform_indices = @transform_29, window_bounds = array<i64: 2, 32, 32>}, {pipeline_mode = #tpu.pipeline_mode<synchronous>, transform_indices = @transform_30, window_bounds = array<i64: 2, 1, 32>}, {pipeline_mode = #tpu.pipeline_mode<synchronous>, transform_indices = @transform_31, window_bounds = array<i64: 2, 1, 32>}, {pipeline_mode = #tpu.pipeline_mode<synchronous>, transform_indices = @transform_32, window_bounds = array<i64: 2, 1, 32>}, {pipeline_mode = #tpu.pipeline_mode<synchronous>, transform_indices = @transform_33, window_bounds = array<i64: 2, 32, 64>}, {pipeline_mode = #tpu.pipeline_mode<synchronous>, transform_indices = @transform_34, window_bounds = array<i64: 2, 1, 64>}, {pipeline_mode = #tpu.pipeline_mode<synchronous>, transform_indices = @transform_35, window_bounds = array<i64: 2, 64, 32>}, {pipeline_mode = #tpu.pipeline_mode<synchronous>, transform_indices = @transform_36, window_bounds = array<i64: 2, 1, 32>}, {pipeline_mode = #tpu.pipeline_mode<synchronous>, transform_indices = @transform_37, window_bounds = array<i64: 1, 32>}, {pipeline_mode = #tpu.pipeline_mode<synchronous>, transform_indices = @transform_38, window_bounds = array<i64: 1, 32>}, {pipeline_mode = #tpu.pipeline_mode<synchronous>, transform_indices = @transform_39, window_bounds = array<i64: 32, 16>}, {pipeline_mode = #tpu.pipeline_mode<synchronous>, transform_indices = @transform_40, window_bounds = array<i64: 1, 16>}, {transform_indices = @transform_41, window_bounds = array<i64: 1, 8, 32>}, {transform_indices = @transform_42, window_bounds = array<i64: 1, 8, 16>}]} {
    %c0 = arith.constant 0 : index
    %c0_0 = arith.constant 0 : index
    %c0_1 = arith.constant 0 : index
    %0 = vector.load %arg3[%c0, %c0_0, %c0_1] : memref<1x8x8xf32, #tpu.memory_space<vmem>>, vector<1x8x8xf32>
    %1 = vector.shape_cast %0 : vector<1x8x8xf32> to vector<8x8xf32>
    %c0_2 = arith.constant 0 : index
    %c0_3 = arith.constant 0 : index
    %c0_4 = arith.constant 0 : index
    %2 = vector.load %arg1[%c0_2, %c0_3, %c0_4] : memref<1x8x32xf32, #tpu.memory_space<vmem>>, vector<1x8x32xf32>
    %3 = vector.shape_cast %2 : vector<1x8x32xf32> to vector<8x32xf32>
    %c0_5 = arith.constant 0 : index
    %c0_6 = arith.constant 0 : index
    %c0_7 = arith.constant 0 : index
    %4 = vector.load %arg4[%c0_5, %c0_6, %c0_7] : memref<2x1x32xf32, #tpu.memory_space<vmem>>, vector<1x1x32xf32>
    %5 = vector.shape_cast %4 : vector<1x1x32xf32> to vector<1x32xf32>
    %c0_8 = arith.constant 0 : index
    %c0_9 = arith.constant 0 : index
    %c0_10 = arith.constant 0 : index
    %6 = vector.load %arg5[%c0_8, %c0_9, %c0_10] : memref<2x1x32xf32, #tpu.memory_space<vmem>>, vector<1x1x32xf32>
    %7 = vector.shape_cast %6 : vector<1x1x32xf32> to vector<1x32xf32>
    %cst = arith.constant dense<0.000000e+00> : vector<8xf32>
    %8 = vector.multi_reduction <add>, %3, %cst [1] : vector<8x32xf32> to vector<8xf32>
    %9 = vector.shape_cast %8 : vector<8xf32> to vector<8x1xf32>
    %cst_11 = arith.constant 3.200000e+01 : f32
    %10 = vector.broadcast %cst_11 : f32 to vector<8x1xf32>
    %11 = arith.divf %9, %10 : vector<8x1xf32>
    %12 = vector.broadcast %11 : vector<8x1xf32> to vector<8x32xf32>
    %13 = arith.subf %3, %12 : vector<8x32xf32>
    %14 = arith.mulf %13, %13 : vector<8x32xf32>
    %cst_12 = arith.constant dense<0.000000e+00> : vector<8xf32>
    %15 = vector.multi_reduction <add>, %14, %cst_12 [1] : vector<8x32xf32> to vector<8xf32>
    %16 = vector.shape_cast %15 : vector<8xf32> to vector<8x1xf32>
    %cst_13 = arith.constant 3.200000e+01 : f32
    %17 = vector.broadcast %cst_13 : f32 to vector<8x1xf32>
    %18 = arith.divf %16, %17 : vector<8x1xf32>
    %19 = vector.broadcast %11 : vector<8x1xf32> to vector<8x32xf32>
    %20 = arith.subf %3, %19 : vector<8x32xf32>
    %cst_14 = arith.constant 9.99999997E-7 : f32
    %21 = vector.broadcast %cst_14 : f32 to vector<8x1xf32>
    %22 = arith.addf %18, %21 : vector<8x1xf32>
    %23 = math.rsqrt %22 : vector<8x1xf32>
    %24 = vector.broadcast %23 : vector<8x1xf32> to vector<8x32xf32>
    %25 = arith.mulf %20, %24 : vector<8x32xf32>
    %26 = vector.broadcast %5 : vector<1x32xf32> to vector<8x32xf32>
    %27 = arith.mulf %25, %26 : vector<8x32xf32>
    %28 = vector.broadcast %7 : vector<1x32xf32> to vector<8x32xf32>
    %29 = arith.addf %27, %28 : vector<8x32xf32>
    %c0_15 = arith.constant 0 : index
    %c0_16 = arith.constant 0 : index
    %c0_17 = arith.constant 0 : index
    %30 = vector.load %arg6[%c0_15, %c0_16, %c0_17] : memref<2x32x96xbf16, #tpu.memory_space<vmem>>, vector<1x32x96xbf16>
    %31 = vector.shape_cast %30 : vector<1x32x96xbf16> to vector<32x96xbf16>
    %32 = arith.truncf %29 : vector<8x32xf32> to vector<8x32xbf16>
    %cst_18 = arith.constant dense<0.000000e+00> : vector<8x96xf32>
    %33 = tpu.matmul %32, %31, %cst_18 {dimension_numbers = #tpu.dot_dimension_numbers<[1], [0], [0], [1], [0, 0, 1, 1], [], []>} : vector<8x32xbf16>, vector<32x96xbf16>, vector<8x96xf32> -> vector<8x96xf32>
    %c0_19 = arith.constant 0 : index
    %c0_20 = arith.constant 0 : index
    %c0_21 = arith.constant 0 : index
    %34 = vector.load %arg7[%c0_19, %c0_20, %c0_21] : memref<2x1x96xf32, #tpu.memory_space<vmem>>, vector<1x1x96xf32>
    %35 = vector.shape_cast %34 : vector<1x1x96xf32> to vector<1x96xf32>
    %36 = vector.broadcast %35 : vector<1x96xf32> to vector<8x96xf32>
    %37 = arith.addf %33, %36 : vector<8x96xf32>
    %38 = vector.extract_strided_slice %37 {offsets = [0, 0], sizes = [8, 32], strides = [1, 1]} : vector<8x96xf32> to vector<8x32xf32>
    %cst_22 = arith.constant 0.353553385 : f32
    %39 = vector.broadcast %cst_22 : f32 to vector<8x32xf32>
    %40 = arith.mulf %38, %39 : vector<8x32xf32>
    %41 = vector.extract_strided_slice %37 {offsets = [0, 32], sizes = [8, 32], strides = [1, 1]} : vector<8x96xf32> to vector<8x32xf32>
    %42 = vector.extract_strided_slice %37 {offsets = [0, 64], sizes = [8, 32], strides = [1, 1]} : vector<8x96xf32> to vector<8x32xf32>
    %c0_23 = arith.constant 0 : index
    %c0_24 = arith.constant 0 : index
    %c0_25 = arith.constant 0 : index
    %43 = vector.load %arg8[%c0_23, %c0_24, %c0_25] : memref<2x32x32xbf16, #tpu.memory_space<vmem>>, vector<1x32x32xbf16>
    %44 = vector.shape_cast %43 : vector<1x32x32xbf16> to vector<32x32xbf16>
    %c0_26 = arith.constant 0 : index
    %c0_27 = arith.constant 0 : index
    %c0_28 = arith.constant 0 : index
    %45 = vector.load %arg9[%c0_26, %c0_27, %c0_28] : memref<2x1x32xf32, #tpu.memory_space<vmem>>, vector<1x1x32xf32>
    %46 = vector.shape_cast %45 : vector<1x1x32xf32> to vector<1x32xf32>
    %47 = vector.extract_strided_slice %40 {offsets = [0, 0], sizes = [8, 8], strides = [1, 1]} : vector<8x32xf32> to vector<8x8xf32>
    %48 = vector.extract_strided_slice %40 {offsets = [0, 8], sizes = [8, 8], strides = [1, 1]} : vector<8x32xf32> to vector<8x8xf32>
    %49 = vector.extract_strided_slice %40 {offsets = [0, 16], sizes = [8, 8], strides = [1, 1]} : vector<8x32xf32> to vector<8x8xf32>
    %50 = vector.extract_strided_slice %40 {offsets = [0, 24], sizes = [8, 8], strides = [1, 1]} : vector<8x32xf32> to vector<8x8xf32>
    %51 = vector.shape_cast %47 : vector<8x8xf32> to vector<1x8x8xf32>
    %52 = vector.shape_cast %48 : vector<8x8xf32> to vector<1x8x8xf32>
    %53 = vector.shape_cast %49 : vector<8x8xf32> to vector<1x8x8xf32>
    %54 = vector.shape_cast %50 : vector<8x8xf32> to vector<1x8x8xf32>
    %55 = tpu.concatenate %51, %52, %53, %54 in 0 : vector<1x8x8xf32>, vector<1x8x8xf32>, vector<1x8x8xf32>, vector<1x8x8xf32> -> vector<4x8x8xf32>
    %56 = arith.truncf %55 : vector<4x8x8xf32> to vector<4x8x8xbf16>
    %57 = vector.extract_strided_slice %41 {offsets = [0, 0], sizes = [8, 8], strides = [1, 1]} : vector<8x32xf32> to vector<8x8xf32>
    %58 = vector.extract_strided_slice %41 {offsets = [0, 8], sizes = [8, 8], strides = [1, 1]} : vector<8x32xf32> to vector<8x8xf32>
    %59 = vector.extract_strided_slice %41 {offsets = [0, 16], sizes = [8, 8], strides = [1, 1]} : vector<8x32xf32> to vector<8x8xf32>
    %60 = vector.extract_strided_slice %41 {offsets = [0, 24], sizes = [8, 8], strides = [1, 1]} : vector<8x32xf32> to vector<8x8xf32>
    %61 = vector.shape_cast %57 : vector<8x8xf32> to vector<1x8x8xf32>
    %62 = vector.shape_cast %58 : vector<8x8xf32> to vector<1x8x8xf32>
    %63 = vector.shape_cast %59 : vector<8x8xf32> to vector<1x8x8xf32>
    %64 = vector.shape_cast %60 : vector<8x8xf32> to vector<1x8x8xf32>
    %65 = tpu.concatenate %61, %62, %63, %64 in 0 : vector<1x8x8xf32>, vector<1x8x8xf32>, vector<1x8x8xf32>, vector<1x8x8xf32> -> vector<4x8x8xf32>
    %66 = arith.truncf %65 : vector<4x8x8xf32> to vector<4x8x8xbf16>
    %67 = vector.extract_strided_slice %42 {offsets = [0, 0], sizes = [8, 8], strides = [1, 1]} : vector<8x32xf32> to vector<8x8xf32>
    %68 = vector.extract_strided_slice %42 {offsets = [0, 8], sizes = [8, 8], strides = [1, 1]} : vector<8x32xf32> to vector<8x8xf32>
    %69 = vector.extract_strided_slice %42 {offsets = [0, 16], sizes = [8, 8], strides = [1, 1]} : vector<8x32xf32> to vector<8x8xf32>
    %70 = vector.extract_strided_slice %42 {offsets = [0, 24], sizes = [8, 8], strides = [1, 1]} : vector<8x32xf32> to vector<8x8xf32>
    %71 = vector.shape_cast %67 : vector<8x8xf32> to vector<1x8x8xf32>
    %72 = vector.shape_cast %68 : vector<8x8xf32> to vector<1x8x8xf32>
    %73 = vector.shape_cast %69 : vector<8x8xf32> to vector<1x8x8xf32>
    %74 = vector.shape_cast %70 : vector<8x8xf32> to vector<1x8x8xf32>
    %75 = tpu.concatenate %71, %72, %73, %74 in 0 : vector<1x8x8xf32>, vector<1x8x8xf32>, vector<1x8x8xf32>, vector<1x8x8xf32> -> vector<4x8x8xf32>
    %76 = arith.truncf %75 : vector<4x8x8xf32> to vector<4x8x8xbf16>
    %cst_29 = arith.constant dense<0.000000e+00> : vector<4x8x8xf32>
    %77 = tpu.matmul %56, %66, %cst_29 {dimension_numbers = #tpu.dot_dimension_numbers<[2], [2], [1], [1], [0, 0, 0, 1, 1, 1], [0], [0]>} : vector<4x8x8xbf16>, vector<4x8x8xbf16>, vector<4x8x8xf32> -> vector<4x8x8xf32>
    %cst_30 = arith.constant dense<0xFF800000> : vector<4x8xf32>
    %78 = vector.multi_reduction <maximumf>, %77, %cst_30 [2] : vector<4x8x8xf32> to vector<4x8xf32>
    %79 = vector.shape_cast %78 : vector<4x8xf32> to vector<4x8x1xf32>
    %80 = vector.broadcast %79 : vector<4x8x1xf32> to vector<4x8x8xf32>
    %81 = arith.subf %77, %80 : vector<4x8x8xf32>
    %82 = math.exp %81 : vector<4x8x8xf32>
    %cst_31 = arith.constant dense<0.000000e+00> : vector<4x8xf32>
    %83 = vector.multi_reduction <add>, %82, %cst_31 [2] : vector<4x8x8xf32> to vector<4x8xf32>
    %84 = vector.shape_cast %83 : vector<4x8xf32> to vector<4x8x1xf32>
    %85 = vector.broadcast %84 : vector<4x8x1xf32> to vector<4x8x8xf32>
    %86 = arith.divf %82, %85 : vector<4x8x8xf32>
    %87 = arith.truncf %86 : vector<4x8x8xf32> to vector<4x8x8xbf16>
    %cst_32 = arith.constant dense<0.000000e+00> : vector<4x8x8xf32>
    %88 = tpu.matmul %87, %76, %cst_32 {dimension_numbers = #tpu.dot_dimension_numbers<[2], [1], [1], [2], [0, 0, 0, 1, 1, 2], [0], [0]>} : vector<4x8x8xbf16>, vector<4x8x8xbf16>, vector<4x8x8xf32> -> vector<4x8x8xf32>
    %89 = vector.extract_strided_slice %88 {offsets = [0, 0, 0], sizes = [1, 8, 8], strides = [1, 1, 1]} : vector<4x8x8xf32> to vector<1x8x8xf32>
    %90 = vector.shape_cast %89 : vector<1x8x8xf32> to vector<8x8xf32>
    %91 = vector.extract_strided_slice %88 {offsets = [1, 0, 0], sizes = [1, 8, 8], strides = [1, 1, 1]} : vector<4x8x8xf32> to vector<1x8x8xf32>
    %92 = vector.shape_cast %91 : vector<1x8x8xf32> to vector<8x8xf32>
    %93 = vector.extract_strided_slice %88 {offsets = [2, 0, 0], sizes = [1, 8, 8], strides = [1, 1, 1]} : vector<4x8x8xf32> to vector<1x8x8xf32>
    %94 = vector.shape_cast %93 : vector<1x8x8xf32> to vector<8x8xf32>
    %95 = vector.extract_strided_slice %88 {offsets = [3, 0, 0], sizes = [1, 8, 8], strides = [1, 1, 1]} : vector<4x8x8xf32> to vector<1x8x8xf32>
    %96 = vector.shape_cast %95 : vector<1x8x8xf32> to vector<8x8xf32>
    %97 = tpu.concatenate %90, %92, %94, %96 in 1 : vector<8x8xf32>, vector<8x8xf32>, vector<8x8xf32>, vector<8x8xf32> -> vector<8x32xf32>
    %98 = arith.truncf %97 : vector<8x32xf32> to vector<8x32xbf16>
    %cst_33 = arith.constant dense<0.000000e+00> : vector<8x32xf32>
    %99 = tpu.matmul %98, %44, %cst_33 {dimension_numbers = #tpu.dot_dimension_numbers<[1], [0], [0], [1], [0, 0, 1, 1], [], []>} : vector<8x32xbf16>, vector<32x32xbf16>, vector<8x32xf32> -> vector<8x32xf32>
    %100 = vector.broadcast %46 : vector<1x32xf32> to vector<8x32xf32>
    %101 = arith.addf %99, %100 : vector<8x32xf32>
    %102 = arith.addf %3, %101 : vector<8x32xf32>
    %c0_34 = arith.constant 0 : index
    %c0_35 = arith.constant 0 : index
    %c0_36 = arith.constant 0 : index
    %103 = vector.load %arg10[%c0_34, %c0_35, %c0_36] : memref<2x1x32xf32, #tpu.memory_space<vmem>>, vector<1x1x32xf32>
    %104 = vector.shape_cast %103 : vector<1x1x32xf32> to vector<1x32xf32>
    %c0_37 = arith.constant 0 : index
    %c0_38 = arith.constant 0 : index
    %c0_39 = arith.constant 0 : index
    %105 = vector.load %arg11[%c0_37, %c0_38, %c0_39] : memref<2x1x32xf32, #tpu.memory_space<vmem>>, vector<1x1x32xf32>
    %106 = vector.shape_cast %105 : vector<1x1x32xf32> to vector<1x32xf32>
    %cst_40 = arith.constant dense<0.000000e+00> : vector<8xf32>
    %107 = vector.multi_reduction <add>, %102, %cst_40 [1] : vector<8x32xf32> to vector<8xf32>
    %108 = vector.shape_cast %107 : vector<8xf32> to vector<8x1xf32>
    %cst_41 = arith.constant 3.200000e+01 : f32
    %109 = vector.broadcast %cst_41 : f32 to vector<8x1xf32>
    %110 = arith.divf %108, %109 : vector<8x1xf32>
    %111 = vector.broadcast %110 : vector<8x1xf32> to vector<8x32xf32>
    %112 = arith.subf %102, %111 : vector<8x32xf32>
    %113 = arith.mulf %112, %112 : vector<8x32xf32>
    %cst_42 = arith.constant dense<0.000000e+00> : vector<8xf32>
    %114 = vector.multi_reduction <add>, %113, %cst_42 [1] : vector<8x32xf32> to vector<8xf32>
    %115 = vector.shape_cast %114 : vector<8xf32> to vector<8x1xf32>
    %cst_43 = arith.constant 3.200000e+01 : f32
    %116 = vector.broadcast %cst_43 : f32 to vector<8x1xf32>
    %117 = arith.divf %115, %116 : vector<8x1xf32>
    %118 = vector.broadcast %110 : vector<8x1xf32> to vector<8x32xf32>
    %119 = arith.subf %102, %118 : vector<8x32xf32>
    %cst_44 = arith.constant 9.99999997E-7 : f32
    %120 = vector.broadcast %cst_44 : f32 to vector<8x1xf32>
    %121 = arith.addf %117, %120 : vector<8x1xf32>
    %122 = math.rsqrt %121 : vector<8x1xf32>
    %123 = vector.broadcast %122 : vector<8x1xf32> to vector<8x32xf32>
    %124 = arith.mulf %119, %123 : vector<8x32xf32>
    %125 = vector.broadcast %104 : vector<1x32xf32> to vector<8x32xf32>
    %126 = arith.mulf %124, %125 : vector<8x32xf32>
    %127 = vector.broadcast %106 : vector<1x32xf32> to vector<8x32xf32>
    %128 = arith.addf %126, %127 : vector<8x32xf32>
    %c0_45 = arith.constant 0 : index
    %c0_46 = arith.constant 0 : index
    %c0_47 = arith.constant 0 : index
    %129 = vector.load %arg12[%c0_45, %c0_46, %c0_47] : memref<2x32x64xbf16, #tpu.memory_space<vmem>>, vector<1x32x64xbf16>
    %130 = vector.shape_cast %129 : vector<1x32x64xbf16> to vector<32x64xbf16>
    %c0_48 = arith.constant 0 : index
    %c0_49 = arith.constant 0 : index
    %c0_50 = arith.constant 0 : index
    %131 = vector.load %arg13[%c0_48, %c0_49, %c0_50] : memref<2x1x64xf32, #tpu.memory_space<vmem>>, vector<1x1x64xf32>
    %132 = vector.shape_cast %131 : vector<1x1x64xf32> to vector<1x64xf32>
    %c0_51 = arith.constant 0 : index
    %c0_52 = arith.constant 0 : index
    %c0_53 = arith.constant 0 : index
    %133 = vector.load %arg14[%c0_51, %c0_52, %c0_53] : memref<2x64x32xbf16, #tpu.memory_space<vmem>>, vector<1x64x32xbf16>
    %134 = vector.shape_cast %133 : vector<1x64x32xbf16> to vector<64x32xbf16>
    %c0_54 = arith.constant 0 : index
    %c0_55 = arith.constant 0 : index
    %c0_56 = arith.constant 0 : index
    %135 = vector.load %arg15[%c0_54, %c0_55, %c0_56] : memref<2x1x32xf32, #tpu.memory_space<vmem>>, vector<1x1x32xf32>
    %136 = vector.shape_cast %135 : vector<1x1x32xf32> to vector<1x32xf32>
    %137 = arith.truncf %128 : vector<8x32xf32> to vector<8x32xbf16>
    %cst_57 = arith.constant dense<0.000000e+00> : vector<8x64xf32>
    %138 = tpu.matmul %137, %130, %cst_57 {dimension_numbers = #tpu.dot_dimension_numbers<[1], [0], [0], [1], [0, 0, 1, 1], [], []>} : vector<8x32xbf16>, vector<32x64xbf16>, vector<8x64xf32> -> vector<8x64xf32>
    %139 = vector.broadcast %132 : vector<1x64xf32> to vector<8x64xf32>
    %140 = arith.addf %138, %139 : vector<8x64xf32>
    %cst_58 = arith.constant 0.000000e+00 : f32
    %141 = vector.broadcast %cst_58 : f32 to vector<8x64xf32>
    %142 = arith.maximumf %140, %141 : vector<8x64xf32>
    %143 = arith.truncf %142 : vector<8x64xf32> to vector<8x64xbf16>
    %cst_59 = arith.constant dense<0.000000e+00> : vector<8x32xf32>
    %144 = tpu.matmul %143, %134, %cst_59 {dimension_numbers = #tpu.dot_dimension_numbers<[1], [0], [0], [1], [0, 0, 1, 1], [], []>} : vector<8x64xbf16>, vector<64x32xbf16>, vector<8x32xf32> -> vector<8x32xf32>
    %145 = vector.broadcast %136 : vector<1x32xf32> to vector<8x32xf32>
    %146 = arith.addf %144, %145 : vector<8x32xf32>
    %147 = arith.addf %102, %146 : vector<8x32xf32>
    %c1 = arith.constant 1 : index
    %c0_60 = arith.constant 0 : index
    %c0_61 = arith.constant 0 : index
    %148 = vector.load %arg4[%c1, %c0_60, %c0_61] : memref<2x1x32xf32, #tpu.memory_space<vmem>>, vector<1x1x32xf32>
    %149 = vector.shape_cast %148 : vector<1x1x32xf32> to vector<1x32xf32>
    %c1_62 = arith.constant 1 : index
    %c0_63 = arith.constant 0 : index
    %c0_64 = arith.constant 0 : index
    %150 = vector.load %arg5[%c1_62, %c0_63, %c0_64] : memref<2x1x32xf32, #tpu.memory_space<vmem>>, vector<1x1x32xf32>
    %151 = vector.shape_cast %150 : vector<1x1x32xf32> to vector<1x32xf32>
    %cst_65 = arith.constant dense<0.000000e+00> : vector<8xf32>
    %152 = vector.multi_reduction <add>, %147, %cst_65 [1] : vector<8x32xf32> to vector<8xf32>
    %153 = vector.shape_cast %152 : vector<8xf32> to vector<8x1xf32>
    %cst_66 = arith.constant 3.200000e+01 : f32
    %154 = vector.broadcast %cst_66 : f32 to vector<8x1xf32>
    %155 = arith.divf %153, %154 : vector<8x1xf32>
    %156 = vector.broadcast %155 : vector<8x1xf32> to vector<8x32xf32>
    %157 = arith.subf %147, %156 : vector<8x32xf32>
    %158 = arith.mulf %157, %157 : vector<8x32xf32>
    %cst_67 = arith.constant dense<0.000000e+00> : vector<8xf32>
    %159 = vector.multi_reduction <add>, %158, %cst_67 [1] : vector<8x32xf32> to vector<8xf32>
    %160 = vector.shape_cast %159 : vector<8xf32> to vector<8x1xf32>
    %cst_68 = arith.constant 3.200000e+01 : f32
    %161 = vector.broadcast %cst_68 : f32 to vector<8x1xf32>
    %162 = arith.divf %160, %161 : vector<8x1xf32>
    %163 = vector.broadcast %155 : vector<8x1xf32> to vector<8x32xf32>
    %164 = arith.subf %147, %163 : vector<8x32xf32>
    %cst_69 = arith.constant 9.99999997E-7 : f32
    %165 = vector.broadcast %cst_69 : f32 to vector<8x1xf32>
    %166 = arith.addf %162, %165 : vector<8x1xf32>
    %167 = math.rsqrt %166 : vector<8x1xf32>
    %168 = vector.broadcast %167 : vector<8x1xf32> to vector<8x32xf32>
    %169 = arith.mulf %164, %168 : vector<8x32xf32>
    %170 = vector.broadcast %149 : vector<1x32xf32> to vector<8x32xf32>
    %171 = arith.mulf %169, %170 : vector<8x32xf32>
    %172 = vector.broadcast %151 : vector<1x32xf32> to vector<8x32xf32>
    %173 = arith.addf %171, %172 : vector<8x32xf32>
    %c1_70 = arith.constant 1 : index
    %c0_71 = arith.constant 0 : index
    %c0_72 = arith.constant 0 : index
    %174 = vector.load %arg6[%c1_70, %c0_71, %c0_72] : memref<2x32x96xbf16, #tpu.memory_space<vmem>>, vector<1x32x96xbf16>
    %175 = vector.shape_cast %174 : vector<1x32x96xbf16> to vector<32x96xbf16>
    %176 = arith.truncf %173 : vector<8x32xf32> to vector<8x32xbf16>
    %cst_73 = arith.constant dense<0.000000e+00> : vector<8x96xf32>
    %177 = tpu.matmul %176, %175, %cst_73 {dimension_numbers = #tpu.dot_dimension_numbers<[1], [0], [0], [1], [0, 0, 1, 1], [], []>} : vector<8x32xbf16>, vector<32x96xbf16>, vector<8x96xf32> -> vector<8x96xf32>
    %c1_74 = arith.constant 1 : index
    %c0_75 = arith.constant 0 : index
    %c0_76 = arith.constant 0 : index
    %178 = vector.load %arg7[%c1_74, %c0_75, %c0_76] : memref<2x1x96xf32, #tpu.memory_space<vmem>>, vector<1x1x96xf32>
    %179 = vector.shape_cast %178 : vector<1x1x96xf32> to vector<1x96xf32>
    %180 = vector.broadcast %179 : vector<1x96xf32> to vector<8x96xf32>
    %181 = arith.addf %177, %180 : vector<8x96xf32>
    %182 = vector.extract_strided_slice %181 {offsets = [0, 0], sizes = [8, 32], strides = [1, 1]} : vector<8x96xf32> to vector<8x32xf32>
    %cst_77 = arith.constant 0.353553385 : f32
    %183 = vector.broadcast %cst_77 : f32 to vector<8x32xf32>
    %184 = arith.mulf %182, %183 : vector<8x32xf32>
    %185 = vector.extract_strided_slice %181 {offsets = [0, 32], sizes = [8, 32], strides = [1, 1]} : vector<8x96xf32> to vector<8x32xf32>
    %186 = vector.extract_strided_slice %181 {offsets = [0, 64], sizes = [8, 32], strides = [1, 1]} : vector<8x96xf32> to vector<8x32xf32>
    %c1_78 = arith.constant 1 : index
    %c0_79 = arith.constant 0 : index
    %c0_80 = arith.constant 0 : index
    %187 = vector.load %arg8[%c1_78, %c0_79, %c0_80] : memref<2x32x32xbf16, #tpu.memory_space<vmem>>, vector<1x32x32xbf16>
    %188 = vector.shape_cast %187 : vector<1x32x32xbf16> to vector<32x32xbf16>
    %c1_81 = arith.constant 1 : index
    %c0_82 = arith.constant 0 : index
    %c0_83 = arith.constant 0 : index
    %189 = vector.load %arg9[%c1_81, %c0_82, %c0_83] : memref<2x1x32xf32, #tpu.memory_space<vmem>>, vector<1x1x32xf32>
    %190 = vector.shape_cast %189 : vector<1x1x32xf32> to vector<1x32xf32>
    %191 = vector.extract_strided_slice %184 {offsets = [0, 0], sizes = [8, 8], strides = [1, 1]} : vector<8x32xf32> to vector<8x8xf32>
    %192 = vector.extract_strided_slice %184 {offsets = [0, 8], sizes = [8, 8], strides = [1, 1]} : vector<8x32xf32> to vector<8x8xf32>
    %193 = vector.extract_strided_slice %184 {offsets = [0, 16], sizes = [8, 8], strides = [1, 1]} : vector<8x32xf32> to vector<8x8xf32>
    %194 = vector.extract_strided_slice %184 {offsets = [0, 24], sizes = [8, 8], strides = [1, 1]} : vector<8x32xf32> to vector<8x8xf32>
    %195 = vector.shape_cast %191 : vector<8x8xf32> to vector<1x8x8xf32>
    %196 = vector.shape_cast %192 : vector<8x8xf32> to vector<1x8x8xf32>
    %197 = vector.shape_cast %193 : vector<8x8xf32> to vector<1x8x8xf32>
    %198 = vector.shape_cast %194 : vector<8x8xf32> to vector<1x8x8xf32>
    %199 = tpu.concatenate %195, %196, %197, %198 in 0 : vector<1x8x8xf32>, vector<1x8x8xf32>, vector<1x8x8xf32>, vector<1x8x8xf32> -> vector<4x8x8xf32>
    %200 = arith.truncf %199 : vector<4x8x8xf32> to vector<4x8x8xbf16>
    %201 = vector.extract_strided_slice %185 {offsets = [0, 0], sizes = [8, 8], strides = [1, 1]} : vector<8x32xf32> to vector<8x8xf32>
    %202 = vector.extract_strided_slice %185 {offsets = [0, 8], sizes = [8, 8], strides = [1, 1]} : vector<8x32xf32> to vector<8x8xf32>
    %203 = vector.extract_strided_slice %185 {offsets = [0, 16], sizes = [8, 8], strides = [1, 1]} : vector<8x32xf32> to vector<8x8xf32>
    %204 = vector.extract_strided_slice %185 {offsets = [0, 24], sizes = [8, 8], strides = [1, 1]} : vector<8x32xf32> to vector<8x8xf32>
    %205 = vector.shape_cast %201 : vector<8x8xf32> to vector<1x8x8xf32>
    %206 = vector.shape_cast %202 : vector<8x8xf32> to vector<1x8x8xf32>
    %207 = vector.shape_cast %203 : vector<8x8xf32> to vector<1x8x8xf32>
    %208 = vector.shape_cast %204 : vector<8x8xf32> to vector<1x8x8xf32>
    %209 = tpu.concatenate %205, %206, %207, %208 in 0 : vector<1x8x8xf32>, vector<1x8x8xf32>, vector<1x8x8xf32>, vector<1x8x8xf32> -> vector<4x8x8xf32>
    %210 = arith.truncf %209 : vector<4x8x8xf32> to vector<4x8x8xbf16>
    %211 = vector.extract_strided_slice %186 {offsets = [0, 0], sizes = [8, 8], strides = [1, 1]} : vector<8x32xf32> to vector<8x8xf32>
    %212 = vector.extract_strided_slice %186 {offsets = [0, 8], sizes = [8, 8], strides = [1, 1]} : vector<8x32xf32> to vector<8x8xf32>
    %213 = vector.extract_strided_slice %186 {offsets = [0, 16], sizes = [8, 8], strides = [1, 1]} : vector<8x32xf32> to vector<8x8xf32>
    %214 = vector.extract_strided_slice %186 {offsets = [0, 24], sizes = [8, 8], strides = [1, 1]} : vector<8x32xf32> to vector<8x8xf32>
    %215 = vector.shape_cast %211 : vector<8x8xf32> to vector<1x8x8xf32>
    %216 = vector.shape_cast %212 : vector<8x8xf32> to vector<1x8x8xf32>
    %217 = vector.shape_cast %213 : vector<8x8xf32> to vector<1x8x8xf32>
    %218 = vector.shape_cast %214 : vector<8x8xf32> to vector<1x8x8xf32>
    %219 = tpu.concatenate %215, %216, %217, %218 in 0 : vector<1x8x8xf32>, vector<1x8x8xf32>, vector<1x8x8xf32>, vector<1x8x8xf32> -> vector<4x8x8xf32>
    %220 = arith.truncf %219 : vector<4x8x8xf32> to vector<4x8x8xbf16>
    %cst_84 = arith.constant dense<0.000000e+00> : vector<4x8x8xf32>
    %221 = tpu.matmul %200, %210, %cst_84 {dimension_numbers = #tpu.dot_dimension_numbers<[2], [2], [1], [1], [0, 0, 0, 1, 1, 1], [0], [0]>} : vector<4x8x8xbf16>, vector<4x8x8xbf16>, vector<4x8x8xf32> -> vector<4x8x8xf32>
    %cst_85 = arith.constant dense<0xFF800000> : vector<4x8xf32>
    %222 = vector.multi_reduction <maximumf>, %221, %cst_85 [2] : vector<4x8x8xf32> to vector<4x8xf32>
    %223 = vector.shape_cast %222 : vector<4x8xf32> to vector<4x8x1xf32>
    %224 = vector.broadcast %223 : vector<4x8x1xf32> to vector<4x8x8xf32>
    %225 = arith.subf %221, %224 : vector<4x8x8xf32>
    %226 = math.exp %225 : vector<4x8x8xf32>
    %cst_86 = arith.constant dense<0.000000e+00> : vector<4x8xf32>
    %227 = vector.multi_reduction <add>, %226, %cst_86 [2] : vector<4x8x8xf32> to vector<4x8xf32>
    %228 = vector.shape_cast %227 : vector<4x8xf32> to vector<4x8x1xf32>
    %229 = vector.broadcast %228 : vector<4x8x1xf32> to vector<4x8x8xf32>
    %230 = arith.divf %226, %229 : vector<4x8x8xf32>
    %231 = arith.truncf %230 : vector<4x8x8xf32> to vector<4x8x8xbf16>
    %cst_87 = arith.constant dense<0.000000e+00> : vector<4x8x8xf32>
    %232 = tpu.matmul %231, %220, %cst_87 {dimension_numbers = #tpu.dot_dimension_numbers<[2], [1], [1], [2], [0, 0, 0, 1, 1, 2], [0], [0]>} : vector<4x8x8xbf16>, vector<4x8x8xbf16>, vector<4x8x8xf32> -> vector<4x8x8xf32>
    %233 = vector.extract_strided_slice %232 {offsets = [0, 0, 0], sizes = [1, 8, 8], strides = [1, 1, 1]} : vector<4x8x8xf32> to vector<1x8x8xf32>
    %234 = vector.shape_cast %233 : vector<1x8x8xf32> to vector<8x8xf32>
    %235 = vector.extract_strided_slice %232 {offsets = [1, 0, 0], sizes = [1, 8, 8], strides = [1, 1, 1]} : vector<4x8x8xf32> to vector<1x8x8xf32>
    %236 = vector.shape_cast %235 : vector<1x8x8xf32> to vector<8x8xf32>
    %237 = vector.extract_strided_slice %232 {offsets = [2, 0, 0], sizes = [1, 8, 8], strides = [1, 1, 1]} : vector<4x8x8xf32> to vector<1x8x8xf32>
    %238 = vector.shape_cast %237 : vector<1x8x8xf32> to vector<8x8xf32>
    %239 = vector.extract_strided_slice %232 {offsets = [3, 0, 0], sizes = [1, 8, 8], strides = [1, 1, 1]} : vector<4x8x8xf32> to vector<1x8x8xf32>
    %240 = vector.shape_cast %239 : vector<1x8x8xf32> to vector<8x8xf32>
    %241 = tpu.concatenate %234, %236, %238, %240 in 1 : vector<8x8xf32>, vector<8x8xf32>, vector<8x8xf32>, vector<8x8xf32> -> vector<8x32xf32>
    %242 = arith.truncf %241 : vector<8x32xf32> to vector<8x32xbf16>
    %cst_88 = arith.constant dense<0.000000e+00> : vector<8x32xf32>
    %243 = tpu.matmul %242, %188, %cst_88 {dimension_numbers = #tpu.dot_dimension_numbers<[1], [0], [0], [1], [0, 0, 1, 1], [], []>} : vector<8x32xbf16>, vector<32x32xbf16>, vector<8x32xf32> -> vector<8x32xf32>
    %244 = vector.broadcast %190 : vector<1x32xf32> to vector<8x32xf32>
    %245 = arith.addf %243, %244 : vector<8x32xf32>
    %246 = arith.addf %147, %245 : vector<8x32xf32>
    %c1_89 = arith.constant 1 : index
    %c0_90 = arith.constant 0 : index
    %c0_91 = arith.constant 0 : index
    %247 = vector.load %arg10[%c1_89, %c0_90, %c0_91] : memref<2x1x32xf32, #tpu.memory_space<vmem>>, vector<1x1x32xf32>
    %248 = vector.shape_cast %247 : vector<1x1x32xf32> to vector<1x32xf32>
    %c1_92 = arith.constant 1 : index
    %c0_93 = arith.constant 0 : index
    %c0_94 = arith.constant 0 : index
    %249 = vector.load %arg11[%c1_92, %c0_93, %c0_94] : memref<2x1x32xf32, #tpu.memory_space<vmem>>, vector<1x1x32xf32>
    %250 = vector.shape_cast %249 : vector<1x1x32xf32> to vector<1x32xf32>
    %cst_95 = arith.constant dense<0.000000e+00> : vector<8xf32>
    %251 = vector.multi_reduction <add>, %246, %cst_95 [1] : vector<8x32xf32> to vector<8xf32>
    %252 = vector.shape_cast %251 : vector<8xf32> to vector<8x1xf32>
    %cst_96 = arith.constant 3.200000e+01 : f32
    %253 = vector.broadcast %cst_96 : f32 to vector<8x1xf32>
    %254 = arith.divf %252, %253 : vector<8x1xf32>
    %255 = vector.broadcast %254 : vector<8x1xf32> to vector<8x32xf32>
    %256 = arith.subf %246, %255 : vector<8x32xf32>
    %257 = arith.mulf %256, %256 : vector<8x32xf32>
    %cst_97 = arith.constant dense<0.000000e+00> : vector<8xf32>
    %258 = vector.multi_reduction <add>, %257, %cst_97 [1] : vector<8x32xf32> to vector<8xf32>
    %259 = vector.shape_cast %258 : vector<8xf32> to vector<8x1xf32>
    %cst_98 = arith.constant 3.200000e+01 : f32
    %260 = vector.broadcast %cst_98 : f32 to vector<8x1xf32>
    %261 = arith.divf %259, %260 : vector<8x1xf32>
    %262 = vector.broadcast %254 : vector<8x1xf32> to vector<8x32xf32>
    %263 = arith.subf %246, %262 : vector<8x32xf32>
    %cst_99 = arith.constant 9.99999997E-7 : f32
    %264 = vector.broadcast %cst_99 : f32 to vector<8x1xf32>
    %265 = arith.addf %261, %264 : vector<8x1xf32>
    %266 = math.rsqrt %265 : vector<8x1xf32>
    %267 = vector.broadcast %266 : vector<8x1xf32> to vector<8x32xf32>
    %268 = arith.mulf %263, %267 : vector<8x32xf32>
    %269 = vector.broadcast %248 : vector<1x32xf32> to vector<8x32xf32>
    %270 = arith.mulf %268, %269 : vector<8x32xf32>
    %271 = vector.broadcast %250 : vector<1x32xf32> to vector<8x32xf32>
    %272 = arith.addf %270, %271 : vector<8x32xf32>
    %c1_100 = arith.constant 1 : index
    %c0_101 = arith.constant 0 : index
    %c0_102 = arith.constant 0 : index
    %273 = vector.load %arg12[%c1_100, %c0_101, %c0_102] : memref<2x32x64xbf16, #tpu.memory_space<vmem>>, vector<1x32x64xbf16>
    %274 = vector.shape_cast %273 : vector<1x32x64xbf16> to vector<32x64xbf16>
    %c1_103 = arith.constant 1 : index
    %c0_104 = arith.constant 0 : index
    %c0_105 = arith.constant 0 : index
    %275 = vector.load %arg13[%c1_103, %c0_104, %c0_105] : memref<2x1x64xf32, #tpu.memory_space<vmem>>, vector<1x1x64xf32>
    %276 = vector.shape_cast %275 : vector<1x1x64xf32> to vector<1x64xf32>
    %c1_106 = arith.constant 1 : index
    %c0_107 = arith.constant 0 : index
    %c0_108 = arith.constant 0 : index
    %277 = vector.load %arg14[%c1_106, %c0_107, %c0_108] : memref<2x64x32xbf16, #tpu.memory_space<vmem>>, vector<1x64x32xbf16>
    %278 = vector.shape_cast %277 : vector<1x64x32xbf16> to vector<64x32xbf16>
    %c1_109 = arith.constant 1 : index
    %c0_110 = arith.constant 0 : index
    %c0_111 = arith.constant 0 : index
    %279 = vector.load %arg15[%c1_109, %c0_110, %c0_111] : memref<2x1x32xf32, #tpu.memory_space<vmem>>, vector<1x1x32xf32>
    %280 = vector.shape_cast %279 : vector<1x1x32xf32> to vector<1x32xf32>
    %281 = arith.truncf %272 : vector<8x32xf32> to vector<8x32xbf16>
    %cst_112 = arith.constant dense<0.000000e+00> : vector<8x64xf32>
    %282 = tpu.matmul %281, %274, %cst_112 {dimension_numbers = #tpu.dot_dimension_numbers<[1], [0], [0], [1], [0, 0, 1, 1], [], []>} : vector<8x32xbf16>, vector<32x64xbf16>, vector<8x64xf32> -> vector<8x64xf32>
    %283 = vector.broadcast %276 : vector<1x64xf32> to vector<8x64xf32>
    %284 = arith.addf %282, %283 : vector<8x64xf32>
    %cst_113 = arith.constant 0.000000e+00 : f32
    %285 = vector.broadcast %cst_113 : f32 to vector<8x64xf32>
    %286 = arith.maximumf %284, %285 : vector<8x64xf32>
    %287 = arith.truncf %286 : vector<8x64xf32> to vector<8x64xbf16>
    %cst_114 = arith.constant dense<0.000000e+00> : vector<8x32xf32>
    %288 = tpu.matmul %287, %278, %cst_114 {dimension_numbers = #tpu.dot_dimension_numbers<[1], [0], [0], [1], [0, 0, 1, 1], [], []>} : vector<8x64xbf16>, vector<64x32xbf16>, vector<8x32xf32> -> vector<8x32xf32>
    %289 = vector.broadcast %280 : vector<1x32xf32> to vector<8x32xf32>
    %290 = arith.addf %288, %289 : vector<8x32xf32>
    %291 = arith.addf %246, %290 : vector<8x32xf32>
    %c0_115 = arith.constant 0 : index
    %c0_116 = arith.constant 0 : index
    %292 = vector.load %arg16[%c0_115, %c0_116] : memref<1x32xf32, #tpu.memory_space<vmem>>, vector<1x32xf32>
    %c0_117 = arith.constant 0 : index
    %c0_118 = arith.constant 0 : index
    %293 = vector.load %arg17[%c0_117, %c0_118] : memref<1x32xf32, #tpu.memory_space<vmem>>, vector<1x32xf32>
    %cst_119 = arith.constant dense<0.000000e+00> : vector<8xf32>
    %294 = vector.multi_reduction <add>, %291, %cst_119 [1] : vector<8x32xf32> to vector<8xf32>
    %295 = vector.shape_cast %294 : vector<8xf32> to vector<8x1xf32>
    %cst_120 = arith.constant 3.200000e+01 : f32
    %296 = vector.broadcast %cst_120 : f32 to vector<8x1xf32>
    %297 = arith.divf %295, %296 : vector<8x1xf32>
    %298 = vector.broadcast %297 : vector<8x1xf32> to vector<8x32xf32>
    %299 = arith.subf %291, %298 : vector<8x32xf32>
    %300 = arith.mulf %299, %299 : vector<8x32xf32>
    %cst_121 = arith.constant dense<0.000000e+00> : vector<8xf32>
    %301 = vector.multi_reduction <add>, %300, %cst_121 [1] : vector<8x32xf32> to vector<8xf32>
    %302 = vector.shape_cast %301 : vector<8xf32> to vector<8x1xf32>
    %cst_122 = arith.constant 3.200000e+01 : f32
    %303 = vector.broadcast %cst_122 : f32 to vector<8x1xf32>
    %304 = arith.divf %302, %303 : vector<8x1xf32>
    %305 = vector.broadcast %297 : vector<8x1xf32> to vector<8x32xf32>
    %306 = arith.subf %291, %305 : vector<8x32xf32>
    %cst_123 = arith.constant 9.99999997E-7 : f32
    %307 = vector.broadcast %cst_123 : f32 to vector<8x1xf32>
    %308 = arith.addf %304, %307 : vector<8x1xf32>
    %309 = math.rsqrt %308 : vector<8x1xf32>
    %310 = vector.broadcast %309 : vector<8x1xf32> to vector<8x32xf32>
    %311 = arith.mulf %306, %310 : vector<8x32xf32>
    %312 = vector.broadcast %292 : vector<1x32xf32> to vector<8x32xf32>
    %313 = arith.mulf %311, %312 : vector<8x32xf32>
    %314 = vector.broadcast %293 : vector<1x32xf32> to vector<8x32xf32>
    %315 = arith.addf %313, %314 : vector<8x32xf32>
    %c0_124 = arith.constant 0 : index
    %c0_125 = arith.constant 0 : index
    %c0_126 = arith.constant 0 : index
    %316 = vector.load %arg2[%c0_124, %c0_125, %c0_126] : memref<1x8x32xf32, #tpu.memory_space<vmem>>, vector<1x8x32xf32>
    %317 = vector.shape_cast %316 : vector<1x8x32xf32> to vector<8x32xf32>
    %c0_127 = arith.constant 0 : index
    %c0_128 = arith.constant 0 : index
    %c0_129 = arith.constant 0 : index
    %318 = vector.load %arg18[%c0_127, %c0_128, %c0_129] : memref<2x1x32xf32, #tpu.memory_space<vmem>>, vector<1x1x32xf32>
    %319 = vector.shape_cast %318 : vector<1x1x32xf32> to vector<1x32xf32>
    %c0_130 = arith.constant 0 : index
    %c0_131 = arith.constant 0 : index
    %c0_132 = arith.constant 0 : index
    %320 = vector.load %arg19[%c0_130, %c0_131, %c0_132] : memref<2x1x32xf32, #tpu.memory_space<vmem>>, vector<1x1x32xf32>
    %321 = vector.shape_cast %320 : vector<1x1x32xf32> to vector<1x32xf32>
    %cst_133 = arith.constant dense<0.000000e+00> : vector<8xf32>
    %322 = vector.multi_reduction <add>, %317, %cst_133 [1] : vector<8x32xf32> to vector<8xf32>
    %323 = vector.shape_cast %322 : vector<8xf32> to vector<8x1xf32>
    %cst_134 = arith.constant 3.200000e+01 : f32
    %324 = vector.broadcast %cst_134 : f32 to vector<8x1xf32>
    %325 = arith.divf %323, %324 : vector<8x1xf32>
    %326 = vector.broadcast %325 : vector<8x1xf32> to vector<8x32xf32>
    %327 = arith.subf %317, %326 : vector<8x32xf32>
    %328 = arith.mulf %327, %327 : vector<8x32xf32>
    %cst_135 = arith.constant dense<0.000000e+00> : vector<8xf32>
    %329 = vector.multi_reduction <add>, %328, %cst_135 [1] : vector<8x32xf32> to vector<8xf32>
    %330 = vector.shape_cast %329 : vector<8xf32> to vector<8x1xf32>
    %cst_136 = arith.constant 3.200000e+01 : f32
    %331 = vector.broadcast %cst_136 : f32 to vector<8x1xf32>
    %332 = arith.divf %330, %331 : vector<8x1xf32>
    %333 = vector.broadcast %325 : vector<8x1xf32> to vector<8x32xf32>
    %334 = arith.subf %317, %333 : vector<8x32xf32>
    %cst_137 = arith.constant 9.99999997E-7 : f32
    %335 = vector.broadcast %cst_137 : f32 to vector<8x1xf32>
    %336 = arith.addf %332, %335 : vector<8x1xf32>
    %337 = math.rsqrt %336 : vector<8x1xf32>
    %338 = vector.broadcast %337 : vector<8x1xf32> to vector<8x32xf32>
    %339 = arith.mulf %334, %338 : vector<8x32xf32>
    %340 = vector.broadcast %319 : vector<1x32xf32> to vector<8x32xf32>
    %341 = arith.mulf %339, %340 : vector<8x32xf32>
    %342 = vector.broadcast %321 : vector<1x32xf32> to vector<8x32xf32>
    %343 = arith.addf %341, %342 : vector<8x32xf32>
    %c0_138 = arith.constant 0 : index
    %c0_139 = arith.constant 0 : index
    %c0_140 = arith.constant 0 : index
    %344 = vector.load %arg20[%c0_138, %c0_139, %c0_140] : memref<2x32x96xbf16, #tpu.memory_space<vmem>>, vector<1x32x96xbf16>
    %345 = vector.shape_cast %344 : vector<1x32x96xbf16> to vector<32x96xbf16>
    %346 = arith.truncf %343 : vector<8x32xf32> to vector<8x32xbf16>
    %cst_141 = arith.constant dense<0.000000e+00> : vector<8x96xf32>
    %347 = tpu.matmul %346, %345, %cst_141 {dimension_numbers = #tpu.dot_dimension_numbers<[1], [0], [0], [1], [0, 0, 1, 1], [], []>} : vector<8x32xbf16>, vector<32x96xbf16>, vector<8x96xf32> -> vector<8x96xf32>
    %c0_142 = arith.constant 0 : index
    %c0_143 = arith.constant 0 : index
    %c0_144 = arith.constant 0 : index
    %348 = vector.load %arg21[%c0_142, %c0_143, %c0_144] : memref<2x1x96xf32, #tpu.memory_space<vmem>>, vector<1x1x96xf32>
    %349 = vector.shape_cast %348 : vector<1x1x96xf32> to vector<1x96xf32>
    %350 = vector.broadcast %349 : vector<1x96xf32> to vector<8x96xf32>
    %351 = arith.addf %347, %350 : vector<8x96xf32>
    %352 = vector.extract_strided_slice %351 {offsets = [0, 0], sizes = [8, 32], strides = [1, 1]} : vector<8x96xf32> to vector<8x32xf32>
    %cst_145 = arith.constant 0.353553385 : f32
    %353 = vector.broadcast %cst_145 : f32 to vector<8x32xf32>
    %354 = arith.mulf %352, %353 : vector<8x32xf32>
    %355 = vector.extract_strided_slice %351 {offsets = [0, 32], sizes = [8, 32], strides = [1, 1]} : vector<8x96xf32> to vector<8x32xf32>
    %356 = vector.extract_strided_slice %351 {offsets = [0, 64], sizes = [8, 32], strides = [1, 1]} : vector<8x96xf32> to vector<8x32xf32>
    %c0_146 = arith.constant 0 : index
    %c0_147 = arith.constant 0 : index
    %c0_148 = arith.constant 0 : index
    %357 = vector.load %arg22[%c0_146, %c0_147, %c0_148] : memref<2x32x32xbf16, #tpu.memory_space<vmem>>, vector<1x32x32xbf16>
    %358 = vector.shape_cast %357 : vector<1x32x32xbf16> to vector<32x32xbf16>
    %c0_149 = arith.constant 0 : index
    %c0_150 = arith.constant 0 : index
    %c0_151 = arith.constant 0 : index
    %359 = vector.load %arg23[%c0_149, %c0_150, %c0_151] : memref<2x1x32xf32, #tpu.memory_space<vmem>>, vector<1x1x32xf32>
    %360 = vector.shape_cast %359 : vector<1x1x32xf32> to vector<1x32xf32>
    %361 = vector.extract_strided_slice %354 {offsets = [0, 0], sizes = [8, 8], strides = [1, 1]} : vector<8x32xf32> to vector<8x8xf32>
    %362 = vector.extract_strided_slice %354 {offsets = [0, 8], sizes = [8, 8], strides = [1, 1]} : vector<8x32xf32> to vector<8x8xf32>
    %363 = vector.extract_strided_slice %354 {offsets = [0, 16], sizes = [8, 8], strides = [1, 1]} : vector<8x32xf32> to vector<8x8xf32>
    %364 = vector.extract_strided_slice %354 {offsets = [0, 24], sizes = [8, 8], strides = [1, 1]} : vector<8x32xf32> to vector<8x8xf32>
    %365 = vector.shape_cast %361 : vector<8x8xf32> to vector<1x8x8xf32>
    %366 = vector.shape_cast %362 : vector<8x8xf32> to vector<1x8x8xf32>
    %367 = vector.shape_cast %363 : vector<8x8xf32> to vector<1x8x8xf32>
    %368 = vector.shape_cast %364 : vector<8x8xf32> to vector<1x8x8xf32>
    %369 = tpu.concatenate %365, %366, %367, %368 in 0 : vector<1x8x8xf32>, vector<1x8x8xf32>, vector<1x8x8xf32>, vector<1x8x8xf32> -> vector<4x8x8xf32>
    %370 = arith.truncf %369 : vector<4x8x8xf32> to vector<4x8x8xbf16>
    %371 = vector.extract_strided_slice %355 {offsets = [0, 0], sizes = [8, 8], strides = [1, 1]} : vector<8x32xf32> to vector<8x8xf32>
    %372 = vector.extract_strided_slice %355 {offsets = [0, 8], sizes = [8, 8], strides = [1, 1]} : vector<8x32xf32> to vector<8x8xf32>
    %373 = vector.extract_strided_slice %355 {offsets = [0, 16], sizes = [8, 8], strides = [1, 1]} : vector<8x32xf32> to vector<8x8xf32>
    %374 = vector.extract_strided_slice %355 {offsets = [0, 24], sizes = [8, 8], strides = [1, 1]} : vector<8x32xf32> to vector<8x8xf32>
    %375 = vector.shape_cast %371 : vector<8x8xf32> to vector<1x8x8xf32>
    %376 = vector.shape_cast %372 : vector<8x8xf32> to vector<1x8x8xf32>
    %377 = vector.shape_cast %373 : vector<8x8xf32> to vector<1x8x8xf32>
    %378 = vector.shape_cast %374 : vector<8x8xf32> to vector<1x8x8xf32>
    %379 = tpu.concatenate %375, %376, %377, %378 in 0 : vector<1x8x8xf32>, vector<1x8x8xf32>, vector<1x8x8xf32>, vector<1x8x8xf32> -> vector<4x8x8xf32>
    %380 = arith.truncf %379 : vector<4x8x8xf32> to vector<4x8x8xbf16>
    %381 = vector.extract_strided_slice %356 {offsets = [0, 0], sizes = [8, 8], strides = [1, 1]} : vector<8x32xf32> to vector<8x8xf32>
    %382 = vector.extract_strided_slice %356 {offsets = [0, 8], sizes = [8, 8], strides = [1, 1]} : vector<8x32xf32> to vector<8x8xf32>
    %383 = vector.extract_strided_slice %356 {offsets = [0, 16], sizes = [8, 8], strides = [1, 1]} : vector<8x32xf32> to vector<8x8xf32>
    %384 = vector.extract_strided_slice %356 {offsets = [0, 24], sizes = [8, 8], strides = [1, 1]} : vector<8x32xf32> to vector<8x8xf32>
    %385 = vector.shape_cast %381 : vector<8x8xf32> to vector<1x8x8xf32>
    %386 = vector.shape_cast %382 : vector<8x8xf32> to vector<1x8x8xf32>
    %387 = vector.shape_cast %383 : vector<8x8xf32> to vector<1x8x8xf32>
    %388 = vector.shape_cast %384 : vector<8x8xf32> to vector<1x8x8xf32>
    %389 = tpu.concatenate %385, %386, %387, %388 in 0 : vector<1x8x8xf32>, vector<1x8x8xf32>, vector<1x8x8xf32>, vector<1x8x8xf32> -> vector<4x8x8xf32>
    %390 = arith.truncf %389 : vector<4x8x8xf32> to vector<4x8x8xbf16>
    %cst_152 = arith.constant dense<0.000000e+00> : vector<4x8x8xf32>
    %391 = tpu.matmul %370, %380, %cst_152 {dimension_numbers = #tpu.dot_dimension_numbers<[2], [2], [1], [1], [0, 0, 0, 1, 1, 1], [0], [0]>} : vector<4x8x8xbf16>, vector<4x8x8xbf16>, vector<4x8x8xf32> -> vector<4x8x8xf32>
    %392 = vector.shape_cast %1 : vector<8x8xf32> to vector<1x8x8xf32>
    %393 = vector.broadcast %392 : vector<1x8x8xf32> to vector<4x8x8xf32>
    %394 = arith.addf %391, %393 : vector<4x8x8xf32>
    %cst_153 = arith.constant dense<0xFF800000> : vector<4x8xf32>
    %395 = vector.multi_reduction <maximumf>, %394, %cst_153 [2] : vector<4x8x8xf32> to vector<4x8xf32>
    %396 = vector.shape_cast %395 : vector<4x8xf32> to vector<4x8x1xf32>
    %397 = vector.broadcast %396 : vector<4x8x1xf32> to vector<4x8x8xf32>
    %398 = arith.subf %394, %397 : vector<4x8x8xf32>
    %399 = math.exp %398 : vector<4x8x8xf32>
    %cst_154 = arith.constant dense<0.000000e+00> : vector<4x8xf32>
    %400 = vector.multi_reduction <add>, %399, %cst_154 [2] : vector<4x8x8xf32> to vector<4x8xf32>
    %401 = vector.shape_cast %400 : vector<4x8xf32> to vector<4x8x1xf32>
    %402 = vector.broadcast %401 : vector<4x8x1xf32> to vector<4x8x8xf32>
    %403 = arith.divf %399, %402 : vector<4x8x8xf32>
    %404 = arith.truncf %403 : vector<4x8x8xf32> to vector<4x8x8xbf16>
    %cst_155 = arith.constant dense<0.000000e+00> : vector<4x8x8xf32>
    %405 = tpu.matmul %404, %390, %cst_155 {dimension_numbers = #tpu.dot_dimension_numbers<[2], [1], [1], [2], [0, 0, 0, 1, 1, 2], [0], [0]>} : vector<4x8x8xbf16>, vector<4x8x8xbf16>, vector<4x8x8xf32> -> vector<4x8x8xf32>
    %406 = vector.extract_strided_slice %405 {offsets = [0, 0, 0], sizes = [1, 8, 8], strides = [1, 1, 1]} : vector<4x8x8xf32> to vector<1x8x8xf32>
    %407 = vector.shape_cast %406 : vector<1x8x8xf32> to vector<8x8xf32>
    %408 = vector.extract_strided_slice %405 {offsets = [1, 0, 0], sizes = [1, 8, 8], strides = [1, 1, 1]} : vector<4x8x8xf32> to vector<1x8x8xf32>
    %409 = vector.shape_cast %408 : vector<1x8x8xf32> to vector<8x8xf32>
    %410 = vector.extract_strided_slice %405 {offsets = [2, 0, 0], sizes = [1, 8, 8], strides = [1, 1, 1]} : vector<4x8x8xf32> to vector<1x8x8xf32>
    %411 = vector.shape_cast %410 : vector<1x8x8xf32> to vector<8x8xf32>
    %412 = vector.extract_strided_slice %405 {offsets = [3, 0, 0], sizes = [1, 8, 8], strides = [1, 1, 1]} : vector<4x8x8xf32> to vector<1x8x8xf32>
    %413 = vector.shape_cast %412 : vector<1x8x8xf32> to vector<8x8xf32>
    %414 = tpu.concatenate %407, %409, %411, %413 in 1 : vector<8x8xf32>, vector<8x8xf32>, vector<8x8xf32>, vector<8x8xf32> -> vector<8x32xf32>
    %415 = arith.truncf %414 : vector<8x32xf32> to vector<8x32xbf16>
    %cst_156 = arith.constant dense<0.000000e+00> : vector<8x32xf32>
    %416 = tpu.matmul %415, %358, %cst_156 {dimension_numbers = #tpu.dot_dimension_numbers<[1], [0], [0], [1], [0, 0, 1, 1], [], []>} : vector<8x32xbf16>, vector<32x32xbf16>, vector<8x32xf32> -> vector<8x32xf32>
    %417 = vector.broadcast %360 : vector<1x32xf32> to vector<8x32xf32>
    %418 = arith.addf %416, %417 : vector<8x32xf32>
    %419 = arith.addf %317, %418 : vector<8x32xf32>
    %c0_157 = arith.constant 0 : index
    %c0_158 = arith.constant 0 : index
    %c0_159 = arith.constant 0 : index
    %420 = vector.load %arg24[%c0_157, %c0_158, %c0_159] : memref<2x1x32xf32, #tpu.memory_space<vmem>>, vector<1x1x32xf32>
    %421 = vector.shape_cast %420 : vector<1x1x32xf32> to vector<1x32xf32>
    %c0_160 = arith.constant 0 : index
    %c0_161 = arith.constant 0 : index
    %c0_162 = arith.constant 0 : index
    %422 = vector.load %arg25[%c0_160, %c0_161, %c0_162] : memref<2x1x32xf32, #tpu.memory_space<vmem>>, vector<1x1x32xf32>
    %423 = vector.shape_cast %422 : vector<1x1x32xf32> to vector<1x32xf32>
    %cst_163 = arith.constant dense<0.000000e+00> : vector<8xf32>
    %424 = vector.multi_reduction <add>, %419, %cst_163 [1] : vector<8x32xf32> to vector<8xf32>
    %425 = vector.shape_cast %424 : vector<8xf32> to vector<8x1xf32>
    %cst_164 = arith.constant 3.200000e+01 : f32
    %426 = vector.broadcast %cst_164 : f32 to vector<8x1xf32>
    %427 = arith.divf %425, %426 : vector<8x1xf32>
    %428 = vector.broadcast %427 : vector<8x1xf32> to vector<8x32xf32>
    %429 = arith.subf %419, %428 : vector<8x32xf32>
    %430 = arith.mulf %429, %429 : vector<8x32xf32>
    %cst_165 = arith.constant dense<0.000000e+00> : vector<8xf32>
    %431 = vector.multi_reduction <add>, %430, %cst_165 [1] : vector<8x32xf32> to vector<8xf32>
    %432 = vector.shape_cast %431 : vector<8xf32> to vector<8x1xf32>
    %cst_166 = arith.constant 3.200000e+01 : f32
    %433 = vector.broadcast %cst_166 : f32 to vector<8x1xf32>
    %434 = arith.divf %432, %433 : vector<8x1xf32>
    %435 = vector.broadcast %427 : vector<8x1xf32> to vector<8x32xf32>
    %436 = arith.subf %419, %435 : vector<8x32xf32>
    %cst_167 = arith.constant 9.99999997E-7 : f32
    %437 = vector.broadcast %cst_167 : f32 to vector<8x1xf32>
    %438 = arith.addf %434, %437 : vector<8x1xf32>
    %439 = math.rsqrt %438 : vector<8x1xf32>
    %440 = vector.broadcast %439 : vector<8x1xf32> to vector<8x32xf32>
    %441 = arith.mulf %436, %440 : vector<8x32xf32>
    %442 = vector.broadcast %421 : vector<1x32xf32> to vector<8x32xf32>
    %443 = arith.mulf %441, %442 : vector<8x32xf32>
    %444 = vector.broadcast %423 : vector<1x32xf32> to vector<8x32xf32>
    %445 = arith.addf %443, %444 : vector<8x32xf32>
    %c0_168 = arith.constant 0 : index
    %c0_169 = arith.constant 0 : index
    %c0_170 = arith.constant 0 : index
    %446 = vector.load %arg26[%c0_168, %c0_169, %c0_170] : memref<2x32x32xbf16, #tpu.memory_space<vmem>>, vector<1x32x32xbf16>
    %447 = vector.shape_cast %446 : vector<1x32x32xbf16> to vector<32x32xbf16>
    %448 = arith.truncf %445 : vector<8x32xf32> to vector<8x32xbf16>
    %cst_171 = arith.constant dense<0.000000e+00> : vector<8x32xf32>
    %449 = tpu.matmul %448, %447, %cst_171 {dimension_numbers = #tpu.dot_dimension_numbers<[1], [0], [0], [1], [0, 0, 1, 1], [], []>} : vector<8x32xbf16>, vector<32x32xbf16>, vector<8x32xf32> -> vector<8x32xf32>
    %c0_172 = arith.constant 0 : index
    %c0_173 = arith.constant 0 : index
    %c0_174 = arith.constant 0 : index
    %450 = vector.load %arg27[%c0_172, %c0_173, %c0_174] : memref<2x1x32xf32, #tpu.memory_space<vmem>>, vector<1x1x32xf32>
    %451 = vector.shape_cast %450 : vector<1x1x32xf32> to vector<1x32xf32>
    %452 = vector.broadcast %451 : vector<1x32xf32> to vector<8x32xf32>
    %453 = arith.addf %449, %452 : vector<8x32xf32>
    %cst_175 = arith.constant 0.353553385 : f32
    %454 = vector.broadcast %cst_175 : f32 to vector<8x32xf32>
    %455 = arith.mulf %453, %454 : vector<8x32xf32>
    %c0_176 = arith.constant 0 : index
    %c0_177 = arith.constant 0 : index
    %c0_178 = arith.constant 0 : index
    %456 = vector.load %arg28[%c0_176, %c0_177, %c0_178] : memref<2x32x64xbf16, #tpu.memory_space<vmem>>, vector<1x32x64xbf16>
    %457 = vector.shape_cast %456 : vector<1x32x64xbf16> to vector<32x64xbf16>
    %458 = arith.truncf %315 : vector<8x32xf32> to vector<8x32xbf16>
    %cst_179 = arith.constant dense<0.000000e+00> : vector<8x64xf32>
    %459 = tpu.matmul %458, %457, %cst_179 {dimension_numbers = #tpu.dot_dimension_numbers<[1], [0], [0], [1], [0, 0, 1, 1], [], []>} : vector<8x32xbf16>, vector<32x64xbf16>, vector<8x64xf32> -> vector<8x64xf32>
    %c0_180 = arith.constant 0 : index
    %c0_181 = arith.constant 0 : index
    %c0_182 = arith.constant 0 : index
    %460 = vector.load %arg29[%c0_180, %c0_181, %c0_182] : memref<2x1x64xf32, #tpu.memory_space<vmem>>, vector<1x1x64xf32>
    %461 = vector.shape_cast %460 : vector<1x1x64xf32> to vector<1x64xf32>
    %462 = vector.broadcast %461 : vector<1x64xf32> to vector<8x64xf32>
    %463 = arith.addf %459, %462 : vector<8x64xf32>
    %464 = vector.extract_strided_slice %463 {offsets = [0, 0], sizes = [8, 32], strides = [1, 1]} : vector<8x64xf32> to vector<8x32xf32>
    %465 = vector.extract_strided_slice %463 {offsets = [0, 32], sizes = [8, 32], strides = [1, 1]} : vector<8x64xf32> to vector<8x32xf32>
    %c0_183 = arith.constant 0 : index
    %c0_184 = arith.constant 0 : index
    %c0_185 = arith.constant 0 : index
    %466 = vector.load %arg30[%c0_183, %c0_184, %c0_185] : memref<2x32x32xbf16, #tpu.memory_space<vmem>>, vector<1x32x32xbf16>
    %467 = vector.shape_cast %466 : vector<1x32x32xbf16> to vector<32x32xbf16>
    %c0_186 = arith.constant 0 : index
    %c0_187 = arith.constant 0 : index
    %c0_188 = arith.constant 0 : index
    %468 = vector.load %arg31[%c0_186, %c0_187, %c0_188] : memref<2x1x32xf32, #tpu.memory_space<vmem>>, vector<1x1x32xf32>
    %469 = vector.shape_cast %468 : vector<1x1x32xf32> to vector<1x32xf32>
    %470 = vector.extract_strided_slice %455 {offsets = [0, 0], sizes = [8, 8], strides = [1, 1]} : vector<8x32xf32> to vector<8x8xf32>
    %471 = vector.extract_strided_slice %455 {offsets = [0, 8], sizes = [8, 8], strides = [1, 1]} : vector<8x32xf32> to vector<8x8xf32>
    %472 = vector.extract_strided_slice %455 {offsets = [0, 16], sizes = [8, 8], strides = [1, 1]} : vector<8x32xf32> to vector<8x8xf32>
    %473 = vector.extract_strided_slice %455 {offsets = [0, 24], sizes = [8, 8], strides = [1, 1]} : vector<8x32xf32> to vector<8x8xf32>
    %474 = vector.shape_cast %470 : vector<8x8xf32> to vector<1x8x8xf32>
    %475 = vector.shape_cast %471 : vector<8x8xf32> to vector<1x8x8xf32>
    %476 = vector.shape_cast %472 : vector<8x8xf32> to vector<1x8x8xf32>
    %477 = vector.shape_cast %473 : vector<8x8xf32> to vector<1x8x8xf32>
    %478 = tpu.concatenate %474, %475, %476, %477 in 0 : vector<1x8x8xf32>, vector<1x8x8xf32>, vector<1x8x8xf32>, vector<1x8x8xf32> -> vector<4x8x8xf32>
    %479 = arith.truncf %478 : vector<4x8x8xf32> to vector<4x8x8xbf16>
    %480 = vector.extract_strided_slice %464 {offsets = [0, 0], sizes = [8, 8], strides = [1, 1]} : vector<8x32xf32> to vector<8x8xf32>
    %481 = vector.extract_strided_slice %464 {offsets = [0, 8], sizes = [8, 8], strides = [1, 1]} : vector<8x32xf32> to vector<8x8xf32>
    %482 = vector.extract_strided_slice %464 {offsets = [0, 16], sizes = [8, 8], strides = [1, 1]} : vector<8x32xf32> to vector<8x8xf32>
    %483 = vector.extract_strided_slice %464 {offsets = [0, 24], sizes = [8, 8], strides = [1, 1]} : vector<8x32xf32> to vector<8x8xf32>
    %484 = vector.shape_cast %480 : vector<8x8xf32> to vector<1x8x8xf32>
    %485 = vector.shape_cast %481 : vector<8x8xf32> to vector<1x8x8xf32>
    %486 = vector.shape_cast %482 : vector<8x8xf32> to vector<1x8x8xf32>
    %487 = vector.shape_cast %483 : vector<8x8xf32> to vector<1x8x8xf32>
    %488 = tpu.concatenate %484, %485, %486, %487 in 0 : vector<1x8x8xf32>, vector<1x8x8xf32>, vector<1x8x8xf32>, vector<1x8x8xf32> -> vector<4x8x8xf32>
    %489 = arith.truncf %488 : vector<4x8x8xf32> to vector<4x8x8xbf16>
    %490 = vector.extract_strided_slice %465 {offsets = [0, 0], sizes = [8, 8], strides = [1, 1]} : vector<8x32xf32> to vector<8x8xf32>
    %491 = vector.extract_strided_slice %465 {offsets = [0, 8], sizes = [8, 8], strides = [1, 1]} : vector<8x32xf32> to vector<8x8xf32>
    %492 = vector.extract_strided_slice %465 {offsets = [0, 16], sizes = [8, 8], strides = [1, 1]} : vector<8x32xf32> to vector<8x8xf32>
    %493 = vector.extract_strided_slice %465 {offsets = [0, 24], sizes = [8, 8], strides = [1, 1]} : vector<8x32xf32> to vector<8x8xf32>
    %494 = vector.shape_cast %490 : vector<8x8xf32> to vector<1x8x8xf32>
    %495 = vector.shape_cast %491 : vector<8x8xf32> to vector<1x8x8xf32>
    %496 = vector.shape_cast %492 : vector<8x8xf32> to vector<1x8x8xf32>
    %497 = vector.shape_cast %493 : vector<8x8xf32> to vector<1x8x8xf32>
    %498 = tpu.concatenate %494, %495, %496, %497 in 0 : vector<1x8x8xf32>, vector<1x8x8xf32>, vector<1x8x8xf32>, vector<1x8x8xf32> -> vector<4x8x8xf32>
    %499 = arith.truncf %498 : vector<4x8x8xf32> to vector<4x8x8xbf16>
    %cst_189 = arith.constant dense<0.000000e+00> : vector<4x8x8xf32>
    %500 = tpu.matmul %479, %489, %cst_189 {dimension_numbers = #tpu.dot_dimension_numbers<[2], [2], [1], [1], [0, 0, 0, 1, 1, 1], [0], [0]>} : vector<4x8x8xbf16>, vector<4x8x8xbf16>, vector<4x8x8xf32> -> vector<4x8x8xf32>
    %cst_190 = arith.constant dense<0xFF800000> : vector<4x8xf32>
    %501 = vector.multi_reduction <maximumf>, %500, %cst_190 [2] : vector<4x8x8xf32> to vector<4x8xf32>
    %502 = vector.shape_cast %501 : vector<4x8xf32> to vector<4x8x1xf32>
    %503 = vector.broadcast %502 : vector<4x8x1xf32> to vector<4x8x8xf32>
    %504 = arith.subf %500, %503 : vector<4x8x8xf32>
    %505 = math.exp %504 : vector<4x8x8xf32>
    %cst_191 = arith.constant dense<0.000000e+00> : vector<4x8xf32>
    %506 = vector.multi_reduction <add>, %505, %cst_191 [2] : vector<4x8x8xf32> to vector<4x8xf32>
    %507 = vector.shape_cast %506 : vector<4x8xf32> to vector<4x8x1xf32>
    %508 = vector.broadcast %507 : vector<4x8x1xf32> to vector<4x8x8xf32>
    %509 = arith.divf %505, %508 : vector<4x8x8xf32>
    %510 = arith.truncf %509 : vector<4x8x8xf32> to vector<4x8x8xbf16>
    %cst_192 = arith.constant dense<0.000000e+00> : vector<4x8x8xf32>
    %511 = tpu.matmul %510, %499, %cst_192 {dimension_numbers = #tpu.dot_dimension_numbers<[2], [1], [1], [2], [0, 0, 0, 1, 1, 2], [0], [0]>} : vector<4x8x8xbf16>, vector<4x8x8xbf16>, vector<4x8x8xf32> -> vector<4x8x8xf32>
    %512 = vector.extract_strided_slice %511 {offsets = [0, 0, 0], sizes = [1, 8, 8], strides = [1, 1, 1]} : vector<4x8x8xf32> to vector<1x8x8xf32>
    %513 = vector.shape_cast %512 : vector<1x8x8xf32> to vector<8x8xf32>
    %514 = vector.extract_strided_slice %511 {offsets = [1, 0, 0], sizes = [1, 8, 8], strides = [1, 1, 1]} : vector<4x8x8xf32> to vector<1x8x8xf32>
    %515 = vector.shape_cast %514 : vector<1x8x8xf32> to vector<8x8xf32>
    %516 = vector.extract_strided_slice %511 {offsets = [2, 0, 0], sizes = [1, 8, 8], strides = [1, 1, 1]} : vector<4x8x8xf32> to vector<1x8x8xf32>
    %517 = vector.shape_cast %516 : vector<1x8x8xf32> to vector<8x8xf32>
    %518 = vector.extract_strided_slice %511 {offsets = [3, 0, 0], sizes = [1, 8, 8], strides = [1, 1, 1]} : vector<4x8x8xf32> to vector<1x8x8xf32>
    %519 = vector.shape_cast %518 : vector<1x8x8xf32> to vector<8x8xf32>
    %520 = tpu.concatenate %513, %515, %517, %519 in 1 : vector<8x8xf32>, vector<8x8xf32>, vector<8x8xf32>, vector<8x8xf32> -> vector<8x32xf32>
    %521 = arith.truncf %520 : vector<8x32xf32> to vector<8x32xbf16>
    %cst_193 = arith.constant dense<0.000000e+00> : vector<8x32xf32>
    %522 = tpu.matmul %521, %467, %cst_193 {dimension_numbers = #tpu.dot_dimension_numbers<[1], [0], [0], [1], [0, 0, 1, 1], [], []>} : vector<8x32xbf16>, vector<32x32xbf16>, vector<8x32xf32> -> vector<8x32xf32>
    %523 = vector.broadcast %469 : vector<1x32xf32> to vector<8x32xf32>
    %524 = arith.addf %522, %523 : vector<8x32xf32>
    %525 = arith.addf %419, %524 : vector<8x32xf32>
    %c0_194 = arith.constant 0 : index
    %c0_195 = arith.constant 0 : index
    %c0_196 = arith.constant 0 : index
    %526 = vector.load %arg32[%c0_194, %c0_195, %c0_196] : memref<2x1x32xf32, #tpu.memory_space<vmem>>, vector<1x1x32xf32>
    %527 = vector.shape_cast %526 : vector<1x1x32xf32> to vector<1x32xf32>
    %c0_197 = arith.constant 0 : index
    %c0_198 = arith.constant 0 : index
    %c0_199 = arith.constant 0 : index
    %528 = vector.load %arg33[%c0_197, %c0_198, %c0_199] : memref<2x1x32xf32, #tpu.memory_space<vmem>>, vector<1x1x32xf32>
    %529 = vector.shape_cast %528 : vector<1x1x32xf32> to vector<1x32xf32>
    %cst_200 = arith.constant dense<0.000000e+00> : vector<8xf32>
    %530 = vector.multi_reduction <add>, %525, %cst_200 [1] : vector<8x32xf32> to vector<8xf32>
    %531 = vector.shape_cast %530 : vector<8xf32> to vector<8x1xf32>
    %cst_201 = arith.constant 3.200000e+01 : f32
    %532 = vector.broadcast %cst_201 : f32 to vector<8x1xf32>
    %533 = arith.divf %531, %532 : vector<8x1xf32>
    %534 = vector.broadcast %533 : vector<8x1xf32> to vector<8x32xf32>
    %535 = arith.subf %525, %534 : vector<8x32xf32>
    %536 = arith.mulf %535, %535 : vector<8x32xf32>
    %cst_202 = arith.constant dense<0.000000e+00> : vector<8xf32>
    %537 = vector.multi_reduction <add>, %536, %cst_202 [1] : vector<8x32xf32> to vector<8xf32>
    %538 = vector.shape_cast %537 : vector<8xf32> to vector<8x1xf32>
    %cst_203 = arith.constant 3.200000e+01 : f32
    %539 = vector.broadcast %cst_203 : f32 to vector<8x1xf32>
    %540 = arith.divf %538, %539 : vector<8x1xf32>
    %541 = vector.broadcast %533 : vector<8x1xf32> to vector<8x32xf32>
    %542 = arith.subf %525, %541 : vector<8x32xf32>
    %cst_204 = arith.constant 9.99999997E-7 : f32
    %543 = vector.broadcast %cst_204 : f32 to vector<8x1xf32>
    %544 = arith.addf %540, %543 : vector<8x1xf32>
    %545 = math.rsqrt %544 : vector<8x1xf32>
    %546 = vector.broadcast %545 : vector<8x1xf32> to vector<8x32xf32>
    %547 = arith.mulf %542, %546 : vector<8x32xf32>
    %548 = vector.broadcast %527 : vector<1x32xf32> to vector<8x32xf32>
    %549 = arith.mulf %547, %548 : vector<8x32xf32>
    %550 = vector.broadcast %529 : vector<1x32xf32> to vector<8x32xf32>
    %551 = arith.addf %549, %550 : vector<8x32xf32>
    %c0_205 = arith.constant 0 : index
    %c0_206 = arith.constant 0 : index
    %c0_207 = arith.constant 0 : index
    %552 = vector.load %arg34[%c0_205, %c0_206, %c0_207] : memref<2x32x64xbf16, #tpu.memory_space<vmem>>, vector<1x32x64xbf16>
    %553 = vector.shape_cast %552 : vector<1x32x64xbf16> to vector<32x64xbf16>
    %c0_208 = arith.constant 0 : index
    %c0_209 = arith.constant 0 : index
    %c0_210 = arith.constant 0 : index
    %554 = vector.load %arg35[%c0_208, %c0_209, %c0_210] : memref<2x1x64xf32, #tpu.memory_space<vmem>>, vector<1x1x64xf32>
    %555 = vector.shape_cast %554 : vector<1x1x64xf32> to vector<1x64xf32>
    %c0_211 = arith.constant 0 : index
    %c0_212 = arith.constant 0 : index
    %c0_213 = arith.constant 0 : index
    %556 = vector.load %arg36[%c0_211, %c0_212, %c0_213] : memref<2x64x32xbf16, #tpu.memory_space<vmem>>, vector<1x64x32xbf16>
    %557 = vector.shape_cast %556 : vector<1x64x32xbf16> to vector<64x32xbf16>
    %c0_214 = arith.constant 0 : index
    %c0_215 = arith.constant 0 : index
    %c0_216 = arith.constant 0 : index
    %558 = vector.load %arg37[%c0_214, %c0_215, %c0_216] : memref<2x1x32xf32, #tpu.memory_space<vmem>>, vector<1x1x32xf32>
    %559 = vector.shape_cast %558 : vector<1x1x32xf32> to vector<1x32xf32>
    %560 = arith.truncf %551 : vector<8x32xf32> to vector<8x32xbf16>
    %cst_217 = arith.constant dense<0.000000e+00> : vector<8x64xf32>
    %561 = tpu.matmul %560, %553, %cst_217 {dimension_numbers = #tpu.dot_dimension_numbers<[1], [0], [0], [1], [0, 0, 1, 1], [], []>} : vector<8x32xbf16>, vector<32x64xbf16>, vector<8x64xf32> -> vector<8x64xf32>
    %562 = vector.broadcast %555 : vector<1x64xf32> to vector<8x64xf32>
    %563 = arith.addf %561, %562 : vector<8x64xf32>
    %cst_218 = arith.constant 0.000000e+00 : f32
    %564 = vector.broadcast %cst_218 : f32 to vector<8x64xf32>
    %565 = arith.maximumf %563, %564 : vector<8x64xf32>
    %566 = arith.truncf %565 : vector<8x64xf32> to vector<8x64xbf16>
    %cst_219 = arith.constant dense<0.000000e+00> : vector<8x32xf32>
    %567 = tpu.matmul %566, %557, %cst_219 {dimension_numbers = #tpu.dot_dimension_numbers<[1], [0], [0], [1], [0, 0, 1, 1], [], []>} : vector<8x64xbf16>, vector<64x32xbf16>, vector<8x32xf32> -> vector<8x32xf32>
    %568 = vector.broadcast %559 : vector<1x32xf32> to vector<8x32xf32>
    %569 = arith.addf %567, %568 : vector<8x32xf32>
    %570 = arith.addf %525, %569 : vector<8x32xf32>
    %c1_220 = arith.constant 1 : index
    %c0_221 = arith.constant 0 : index
    %c0_222 = arith.constant 0 : index
    %571 = vector.load %arg18[%c1_220, %c0_221, %c0_222] : memref<2x1x32xf32, #tpu.memory_space<vmem>>, vector<1x1x32xf32>
    %572 = vector.shape_cast %571 : vector<1x1x32xf32> to vector<1x32xf32>
    %c1_223 = arith.constant 1 : index
    %c0_224 = arith.constant 0 : index
    %c0_225 = arith.constant 0 : index
    %573 = vector.load %arg19[%c1_223, %c0_224, %c0_225] : memref<2x1x32xf32, #tpu.memory_space<vmem>>, vector<1x1x32xf32>
    %574 = vector.shape_cast %573 : vector<1x1x32xf32> to vector<1x32xf32>
    %cst_226 = arith.constant dense<0.000000e+00> : vector<8xf32>
    %575 = vector.multi_reduction <add>, %570, %cst_226 [1] : vector<8x32xf32> to vector<8xf32>
    %576 = vector.shape_cast %575 : vector<8xf32> to vector<8x1xf32>
    %cst_227 = arith.constant 3.200000e+01 : f32
    %577 = vector.broadcast %cst_227 : f32 to vector<8x1xf32>
    %578 = arith.divf %576, %577 : vector<8x1xf32>
    %579 = vector.broadcast %578 : vector<8x1xf32> to vector<8x32xf32>
    %580 = arith.subf %570, %579 : vector<8x32xf32>
    %581 = arith.mulf %580, %580 : vector<8x32xf32>
    %cst_228 = arith.constant dense<0.000000e+00> : vector<8xf32>
    %582 = vector.multi_reduction <add>, %581, %cst_228 [1] : vector<8x32xf32> to vector<8xf32>
    %583 = vector.shape_cast %582 : vector<8xf32> to vector<8x1xf32>
    %cst_229 = arith.constant 3.200000e+01 : f32
    %584 = vector.broadcast %cst_229 : f32 to vector<8x1xf32>
    %585 = arith.divf %583, %584 : vector<8x1xf32>
    %586 = vector.broadcast %578 : vector<8x1xf32> to vector<8x32xf32>
    %587 = arith.subf %570, %586 : vector<8x32xf32>
    %cst_230 = arith.constant 9.99999997E-7 : f32
    %588 = vector.broadcast %cst_230 : f32 to vector<8x1xf32>
    %589 = arith.addf %585, %588 : vector<8x1xf32>
    %590 = math.rsqrt %589 : vector<8x1xf32>
    %591 = vector.broadcast %590 : vector<8x1xf32> to vector<8x32xf32>
    %592 = arith.mulf %587, %591 : vector<8x32xf32>
    %593 = vector.broadcast %572 : vector<1x32xf32> to vector<8x32xf32>
    %594 = arith.mulf %592, %593 : vector<8x32xf32>
    %595 = vector.broadcast %574 : vector<1x32xf32> to vector<8x32xf32>
    %596 = arith.addf %594, %595 : vector<8x32xf32>
    %c1_231 = arith.constant 1 : index
    %c0_232 = arith.constant 0 : index
    %c0_233 = arith.constant 0 : index
    %597 = vector.load %arg20[%c1_231, %c0_232, %c0_233] : memref<2x32x96xbf16, #tpu.memory_space<vmem>>, vector<1x32x96xbf16>
    %598 = vector.shape_cast %597 : vector<1x32x96xbf16> to vector<32x96xbf16>
    %599 = arith.truncf %596 : vector<8x32xf32> to vector<8x32xbf16>
    %cst_234 = arith.constant dense<0.000000e+00> : vector<8x96xf32>
    %600 = tpu.matmul %599, %598, %cst_234 {dimension_numbers = #tpu.dot_dimension_numbers<[1], [0], [0], [1], [0, 0, 1, 1], [], []>} : vector<8x32xbf16>, vector<32x96xbf16>, vector<8x96xf32> -> vector<8x96xf32>
    %c1_235 = arith.constant 1 : index
    %c0_236 = arith.constant 0 : index
    %c0_237 = arith.constant 0 : index
    %601 = vector.load %arg21[%c1_235, %c0_236, %c0_237] : memref<2x1x96xf32, #tpu.memory_space<vmem>>, vector<1x1x96xf32>
    %602 = vector.shape_cast %601 : vector<1x1x96xf32> to vector<1x96xf32>
    %603 = vector.broadcast %602 : vector<1x96xf32> to vector<8x96xf32>
    %604 = arith.addf %600, %603 : vector<8x96xf32>
    %605 = vector.extract_strided_slice %604 {offsets = [0, 0], sizes = [8, 32], strides = [1, 1]} : vector<8x96xf32> to vector<8x32xf32>
    %cst_238 = arith.constant 0.353553385 : f32
    %606 = vector.broadcast %cst_238 : f32 to vector<8x32xf32>
    %607 = arith.mulf %605, %606 : vector<8x32xf32>
    %608 = vector.extract_strided_slice %604 {offsets = [0, 32], sizes = [8, 32], strides = [1, 1]} : vector<8x96xf32> to vector<8x32xf32>
    %609 = vector.extract_strided_slice %604 {offsets = [0, 64], sizes = [8, 32], strides = [1, 1]} : vector<8x96xf32> to vector<8x32xf32>
    %c1_239 = arith.constant 1 : index
    %c0_240 = arith.constant 0 : index
    %c0_241 = arith.constant 0 : index
    %610 = vector.load %arg22[%c1_239, %c0_240, %c0_241] : memref<2x32x32xbf16, #tpu.memory_space<vmem>>, vector<1x32x32xbf16>
    %611 = vector.shape_cast %610 : vector<1x32x32xbf16> to vector<32x32xbf16>
    %c1_242 = arith.constant 1 : index
    %c0_243 = arith.constant 0 : index
    %c0_244 = arith.constant 0 : index
    %612 = vector.load %arg23[%c1_242, %c0_243, %c0_244] : memref<2x1x32xf32, #tpu.memory_space<vmem>>, vector<1x1x32xf32>
    %613 = vector.shape_cast %612 : vector<1x1x32xf32> to vector<1x32xf32>
    %614 = vector.extract_strided_slice %607 {offsets = [0, 0], sizes = [8, 8], strides = [1, 1]} : vector<8x32xf32> to vector<8x8xf32>
    %615 = vector.extract_strided_slice %607 {offsets = [0, 8], sizes = [8, 8], strides = [1, 1]} : vector<8x32xf32> to vector<8x8xf32>
    %616 = vector.extract_strided_slice %607 {offsets = [0, 16], sizes = [8, 8], strides = [1, 1]} : vector<8x32xf32> to vector<8x8xf32>
    %617 = vector.extract_strided_slice %607 {offsets = [0, 24], sizes = [8, 8], strides = [1, 1]} : vector<8x32xf32> to vector<8x8xf32>
    %618 = vector.shape_cast %614 : vector<8x8xf32> to vector<1x8x8xf32>
    %619 = vector.shape_cast %615 : vector<8x8xf32> to vector<1x8x8xf32>
    %620 = vector.shape_cast %616 : vector<8x8xf32> to vector<1x8x8xf32>
    %621 = vector.shape_cast %617 : vector<8x8xf32> to vector<1x8x8xf32>
    %622 = tpu.concatenate %618, %619, %620, %621 in 0 : vector<1x8x8xf32>, vector<1x8x8xf32>, vector<1x8x8xf32>, vector<1x8x8xf32> -> vector<4x8x8xf32>
    %623 = arith.truncf %622 : vector<4x8x8xf32> to vector<4x8x8xbf16>
    %624 = vector.extract_strided_slice %608 {offsets = [0, 0], sizes = [8, 8], strides = [1, 1]} : vector<8x32xf32> to vector<8x8xf32>
    %625 = vector.extract_strided_slice %608 {offsets = [0, 8], sizes = [8, 8], strides = [1, 1]} : vector<8x32xf32> to vector<8x8xf32>
    %626 = vector.extract_strided_slice %608 {offsets = [0, 16], sizes = [8, 8], strides = [1, 1]} : vector<8x32xf32> to vector<8x8xf32>
    %627 = vector.extract_strided_slice %608 {offsets = [0, 24], sizes = [8, 8], strides = [1, 1]} : vector<8x32xf32> to vector<8x8xf32>
    %628 = vector.shape_cast %624 : vector<8x8xf32> to vector<1x8x8xf32>
    %629 = vector.shape_cast %625 : vector<8x8xf32> to vector<1x8x8xf32>
    %630 = vector.shape_cast %626 : vector<8x8xf32> to vector<1x8x8xf32>
    %631 = vector.shape_cast %627 : vector<8x8xf32> to vector<1x8x8xf32>
    %632 = tpu.concatenate %628, %629, %630, %631 in 0 : vector<1x8x8xf32>, vector<1x8x8xf32>, vector<1x8x8xf32>, vector<1x8x8xf32> -> vector<4x8x8xf32>
    %633 = arith.truncf %632 : vector<4x8x8xf32> to vector<4x8x8xbf16>
    %634 = vector.extract_strided_slice %609 {offsets = [0, 0], sizes = [8, 8], strides = [1, 1]} : vector<8x32xf32> to vector<8x8xf32>
    %635 = vector.extract_strided_slice %609 {offsets = [0, 8], sizes = [8, 8], strides = [1, 1]} : vector<8x32xf32> to vector<8x8xf32>
    %636 = vector.extract_strided_slice %609 {offsets = [0, 16], sizes = [8, 8], strides = [1, 1]} : vector<8x32xf32> to vector<8x8xf32>
    %637 = vector.extract_strided_slice %609 {offsets = [0, 24], sizes = [8, 8], strides = [1, 1]} : vector<8x32xf32> to vector<8x8xf32>
    %638 = vector.shape_cast %634 : vector<8x8xf32> to vector<1x8x8xf32>
    %639 = vector.shape_cast %635 : vector<8x8xf32> to vector<1x8x8xf32>
    %640 = vector.shape_cast %636 : vector<8x8xf32> to vector<1x8x8xf32>
    %641 = vector.shape_cast %637 : vector<8x8xf32> to vector<1x8x8xf32>
    %642 = tpu.concatenate %638, %639, %640, %641 in 0 : vector<1x8x8xf32>, vector<1x8x8xf32>, vector<1x8x8xf32>, vector<1x8x8xf32> -> vector<4x8x8xf32>
    %643 = arith.truncf %642 : vector<4x8x8xf32> to vector<4x8x8xbf16>
    %cst_245 = arith.constant dense<0.000000e+00> : vector<4x8x8xf32>
    %644 = tpu.matmul %623, %633, %cst_245 {dimension_numbers = #tpu.dot_dimension_numbers<[2], [2], [1], [1], [0, 0, 0, 1, 1, 1], [0], [0]>} : vector<4x8x8xbf16>, vector<4x8x8xbf16>, vector<4x8x8xf32> -> vector<4x8x8xf32>
    %645 = vector.shape_cast %1 : vector<8x8xf32> to vector<1x8x8xf32>
    %646 = vector.broadcast %645 : vector<1x8x8xf32> to vector<4x8x8xf32>
    %647 = arith.addf %644, %646 : vector<4x8x8xf32>
    %cst_246 = arith.constant dense<0xFF800000> : vector<4x8xf32>
    %648 = vector.multi_reduction <maximumf>, %647, %cst_246 [2] : vector<4x8x8xf32> to vector<4x8xf32>
    %649 = vector.shape_cast %648 : vector<4x8xf32> to vector<4x8x1xf32>
    %650 = vector.broadcast %649 : vector<4x8x1xf32> to vector<4x8x8xf32>
    %651 = arith.subf %647, %650 : vector<4x8x8xf32>
    %652 = math.exp %651 : vector<4x8x8xf32>
    %cst_247 = arith.constant dense<0.000000e+00> : vector<4x8xf32>
    %653 = vector.multi_reduction <add>, %652, %cst_247 [2] : vector<4x8x8xf32> to vector<4x8xf32>
    %654 = vector.shape_cast %653 : vector<4x8xf32> to vector<4x8x1xf32>
    %655 = vector.broadcast %654 : vector<4x8x1xf32> to vector<4x8x8xf32>
    %656 = arith.divf %652, %655 : vector<4x8x8xf32>
    %657 = arith.truncf %656 : vector<4x8x8xf32> to vector<4x8x8xbf16>
    %cst_248 = arith.constant dense<0.000000e+00> : vector<4x8x8xf32>
    %658 = tpu.matmul %657, %643, %cst_248 {dimension_numbers = #tpu.dot_dimension_numbers<[2], [1], [1], [2], [0, 0, 0, 1, 1, 2], [0], [0]>} : vector<4x8x8xbf16>, vector<4x8x8xbf16>, vector<4x8x8xf32> -> vector<4x8x8xf32>
    %659 = vector.extract_strided_slice %658 {offsets = [0, 0, 0], sizes = [1, 8, 8], strides = [1, 1, 1]} : vector<4x8x8xf32> to vector<1x8x8xf32>
    %660 = vector.shape_cast %659 : vector<1x8x8xf32> to vector<8x8xf32>
    %661 = vector.extract_strided_slice %658 {offsets = [1, 0, 0], sizes = [1, 8, 8], strides = [1, 1, 1]} : vector<4x8x8xf32> to vector<1x8x8xf32>
    %662 = vector.shape_cast %661 : vector<1x8x8xf32> to vector<8x8xf32>
    %663 = vector.extract_strided_slice %658 {offsets = [2, 0, 0], sizes = [1, 8, 8], strides = [1, 1, 1]} : vector<4x8x8xf32> to vector<1x8x8xf32>
    %664 = vector.shape_cast %663 : vector<1x8x8xf32> to vector<8x8xf32>
    %665 = vector.extract_strided_slice %658 {offsets = [3, 0, 0], sizes = [1, 8, 8], strides = [1, 1, 1]} : vector<4x8x8xf32> to vector<1x8x8xf32>
    %666 = vector.shape_cast %665 : vector<1x8x8xf32> to vector<8x8xf32>
    %667 = tpu.concatenate %660, %662, %664, %666 in 1 : vector<8x8xf32>, vector<8x8xf32>, vector<8x8xf32>, vector<8x8xf32> -> vector<8x32xf32>
    %668 = arith.truncf %667 : vector<8x32xf32> to vector<8x32xbf16>
    %cst_249 = arith.constant dense<0.000000e+00> : vector<8x32xf32>
    %669 = tpu.matmul %668, %611, %cst_249 {dimension_numbers = #tpu.dot_dimension_numbers<[1], [0], [0], [1], [0, 0, 1, 1], [], []>} : vector<8x32xbf16>, vector<32x32xbf16>, vector<8x32xf32> -> vector<8x32xf32>
    %670 = vector.broadcast %613 : vector<1x32xf32> to vector<8x32xf32>
    %671 = arith.addf %669, %670 : vector<8x32xf32>
    %672 = arith.addf %570, %671 : vector<8x32xf32>
    %c1_250 = arith.constant 1 : index
    %c0_251 = arith.constant 0 : index
    %c0_252 = arith.constant 0 : index
    %673 = vector.load %arg24[%c1_250, %c0_251, %c0_252] : memref<2x1x32xf32, #tpu.memory_space<vmem>>, vector<1x1x32xf32>
    %674 = vector.shape_cast %673 : vector<1x1x32xf32> to vector<1x32xf32>
    %c1_253 = arith.constant 1 : index
    %c0_254 = arith.constant 0 : index
    %c0_255 = arith.constant 0 : index
    %675 = vector.load %arg25[%c1_253, %c0_254, %c0_255] : memref<2x1x32xf32, #tpu.memory_space<vmem>>, vector<1x1x32xf32>
    %676 = vector.shape_cast %675 : vector<1x1x32xf32> to vector<1x32xf32>
    %cst_256 = arith.constant dense<0.000000e+00> : vector<8xf32>
    %677 = vector.multi_reduction <add>, %672, %cst_256 [1] : vector<8x32xf32> to vector<8xf32>
    %678 = vector.shape_cast %677 : vector<8xf32> to vector<8x1xf32>
    %cst_257 = arith.constant 3.200000e+01 : f32
    %679 = vector.broadcast %cst_257 : f32 to vector<8x1xf32>
    %680 = arith.divf %678, %679 : vector<8x1xf32>
    %681 = vector.broadcast %680 : vector<8x1xf32> to vector<8x32xf32>
    %682 = arith.subf %672, %681 : vector<8x32xf32>
    %683 = arith.mulf %682, %682 : vector<8x32xf32>
    %cst_258 = arith.constant dense<0.000000e+00> : vector<8xf32>
    %684 = vector.multi_reduction <add>, %683, %cst_258 [1] : vector<8x32xf32> to vector<8xf32>
    %685 = vector.shape_cast %684 : vector<8xf32> to vector<8x1xf32>
    %cst_259 = arith.constant 3.200000e+01 : f32
    %686 = vector.broadcast %cst_259 : f32 to vector<8x1xf32>
    %687 = arith.divf %685, %686 : vector<8x1xf32>
    %688 = vector.broadcast %680 : vector<8x1xf32> to vector<8x32xf32>
    %689 = arith.subf %672, %688 : vector<8x32xf32>
    %cst_260 = arith.constant 9.99999997E-7 : f32
    %690 = vector.broadcast %cst_260 : f32 to vector<8x1xf32>
    %691 = arith.addf %687, %690 : vector<8x1xf32>
    %692 = math.rsqrt %691 : vector<8x1xf32>
    %693 = vector.broadcast %692 : vector<8x1xf32> to vector<8x32xf32>
    %694 = arith.mulf %689, %693 : vector<8x32xf32>
    %695 = vector.broadcast %674 : vector<1x32xf32> to vector<8x32xf32>
    %696 = arith.mulf %694, %695 : vector<8x32xf32>
    %697 = vector.broadcast %676 : vector<1x32xf32> to vector<8x32xf32>
    %698 = arith.addf %696, %697 : vector<8x32xf32>
    %c1_261 = arith.constant 1 : index
    %c0_262 = arith.constant 0 : index
    %c0_263 = arith.constant 0 : index
    %699 = vector.load %arg26[%c1_261, %c0_262, %c0_263] : memref<2x32x32xbf16, #tpu.memory_space<vmem>>, vector<1x32x32xbf16>
    %700 = vector.shape_cast %699 : vector<1x32x32xbf16> to vector<32x32xbf16>
    %701 = arith.truncf %698 : vector<8x32xf32> to vector<8x32xbf16>
    %cst_264 = arith.constant dense<0.000000e+00> : vector<8x32xf32>
    %702 = tpu.matmul %701, %700, %cst_264 {dimension_numbers = #tpu.dot_dimension_numbers<[1], [0], [0], [1], [0, 0, 1, 1], [], []>} : vector<8x32xbf16>, vector<32x32xbf16>, vector<8x32xf32> -> vector<8x32xf32>
    %c1_265 = arith.constant 1 : index
    %c0_266 = arith.constant 0 : index
    %c0_267 = arith.constant 0 : index
    %703 = vector.load %arg27[%c1_265, %c0_266, %c0_267] : memref<2x1x32xf32, #tpu.memory_space<vmem>>, vector<1x1x32xf32>
    %704 = vector.shape_cast %703 : vector<1x1x32xf32> to vector<1x32xf32>
    %705 = vector.broadcast %704 : vector<1x32xf32> to vector<8x32xf32>
    %706 = arith.addf %702, %705 : vector<8x32xf32>
    %cst_268 = arith.constant 0.353553385 : f32
    %707 = vector.broadcast %cst_268 : f32 to vector<8x32xf32>
    %708 = arith.mulf %706, %707 : vector<8x32xf32>
    %c1_269 = arith.constant 1 : index
    %c0_270 = arith.constant 0 : index
    %c0_271 = arith.constant 0 : index
    %709 = vector.load %arg28[%c1_269, %c0_270, %c0_271] : memref<2x32x64xbf16, #tpu.memory_space<vmem>>, vector<1x32x64xbf16>
    %710 = vector.shape_cast %709 : vector<1x32x64xbf16> to vector<32x64xbf16>
    %711 = arith.truncf %315 : vector<8x32xf32> to vector<8x32xbf16>
    %cst_272 = arith.constant dense<0.000000e+00> : vector<8x64xf32>
    %712 = tpu.matmul %711, %710, %cst_272 {dimension_numbers = #tpu.dot_dimension_numbers<[1], [0], [0], [1], [0, 0, 1, 1], [], []>} : vector<8x32xbf16>, vector<32x64xbf16>, vector<8x64xf32> -> vector<8x64xf32>
    %c1_273 = arith.constant 1 : index
    %c0_274 = arith.constant 0 : index
    %c0_275 = arith.constant 0 : index
    %713 = vector.load %arg29[%c1_273, %c0_274, %c0_275] : memref<2x1x64xf32, #tpu.memory_space<vmem>>, vector<1x1x64xf32>
    %714 = vector.shape_cast %713 : vector<1x1x64xf32> to vector<1x64xf32>
    %715 = vector.broadcast %714 : vector<1x64xf32> to vector<8x64xf32>
    %716 = arith.addf %712, %715 : vector<8x64xf32>
    %717 = vector.extract_strided_slice %716 {offsets = [0, 0], sizes = [8, 32], strides = [1, 1]} : vector<8x64xf32> to vector<8x32xf32>
    %718 = vector.extract_strided_slice %716 {offsets = [0, 32], sizes = [8, 32], strides = [1, 1]} : vector<8x64xf32> to vector<8x32xf32>
    %c1_276 = arith.constant 1 : index
    %c0_277 = arith.constant 0 : index
    %c0_278 = arith.constant 0 : index
    %719 = vector.load %arg30[%c1_276, %c0_277, %c0_278] : memref<2x32x32xbf16, #tpu.memory_space<vmem>>, vector<1x32x32xbf16>
    %720 = vector.shape_cast %719 : vector<1x32x32xbf16> to vector<32x32xbf16>
    %c1_279 = arith.constant 1 : index
    %c0_280 = arith.constant 0 : index
    %c0_281 = arith.constant 0 : index
    %721 = vector.load %arg31[%c1_279, %c0_280, %c0_281] : memref<2x1x32xf32, #tpu.memory_space<vmem>>, vector<1x1x32xf32>
    %722 = vector.shape_cast %721 : vector<1x1x32xf32> to vector<1x32xf32>
    %723 = vector.extract_strided_slice %708 {offsets = [0, 0], sizes = [8, 8], strides = [1, 1]} : vector<8x32xf32> to vector<8x8xf32>
    %724 = vector.extract_strided_slice %708 {offsets = [0, 8], sizes = [8, 8], strides = [1, 1]} : vector<8x32xf32> to vector<8x8xf32>
    %725 = vector.extract_strided_slice %708 {offsets = [0, 16], sizes = [8, 8], strides = [1, 1]} : vector<8x32xf32> to vector<8x8xf32>
    %726 = vector.extract_strided_slice %708 {offsets = [0, 24], sizes = [8, 8], strides = [1, 1]} : vector<8x32xf32> to vector<8x8xf32>
    %727 = vector.shape_cast %723 : vector<8x8xf32> to vector<1x8x8xf32>
    %728 = vector.shape_cast %724 : vector<8x8xf32> to vector<1x8x8xf32>
    %729 = vector.shape_cast %725 : vector<8x8xf32> to vector<1x8x8xf32>
    %730 = vector.shape_cast %726 : vector<8x8xf32> to vector<1x8x8xf32>
    %731 = tpu.concatenate %727, %728, %729, %730 in 0 : vector<1x8x8xf32>, vector<1x8x8xf32>, vector<1x8x8xf32>, vector<1x8x8xf32> -> vector<4x8x8xf32>
    %732 = arith.truncf %731 : vector<4x8x8xf32> to vector<4x8x8xbf16>
    %733 = vector.extract_strided_slice %717 {offsets = [0, 0], sizes = [8, 8], strides = [1, 1]} : vector<8x32xf32> to vector<8x8xf32>
    %734 = vector.extract_strided_slice %717 {offsets = [0, 8], sizes = [8, 8], strides = [1, 1]} : vector<8x32xf32> to vector<8x8xf32>
    %735 = vector.extract_strided_slice %717 {offsets = [0, 16], sizes = [8, 8], strides = [1, 1]} : vector<8x32xf32> to vector<8x8xf32>
    %736 = vector.extract_strided_slice %717 {offsets = [0, 24], sizes = [8, 8], strides = [1, 1]} : vector<8x32xf32> to vector<8x8xf32>
    %737 = vector.shape_cast %733 : vector<8x8xf32> to vector<1x8x8xf32>
    %738 = vector.shape_cast %734 : vector<8x8xf32> to vector<1x8x8xf32>
    %739 = vector.shape_cast %735 : vector<8x8xf32> to vector<1x8x8xf32>
    %740 = vector.shape_cast %736 : vector<8x8xf32> to vector<1x8x8xf32>
    %741 = tpu.concatenate %737, %738, %739, %740 in 0 : vector<1x8x8xf32>, vector<1x8x8xf32>, vector<1x8x8xf32>, vector<1x8x8xf32> -> vector<4x8x8xf32>
    %742 = arith.truncf %741 : vector<4x8x8xf32> to vector<4x8x8xbf16>
    %743 = vector.extract_strided_slice %718 {offsets = [0, 0], sizes = [8, 8], strides = [1, 1]} : vector<8x32xf32> to vector<8x8xf32>
    %744 = vector.extract_strided_slice %718 {offsets = [0, 8], sizes = [8, 8], strides = [1, 1]} : vector<8x32xf32> to vector<8x8xf32>
    %745 = vector.extract_strided_slice %718 {offsets = [0, 16], sizes = [8, 8], strides = [1, 1]} : vector<8x32xf32> to vector<8x8xf32>
    %746 = vector.extract_strided_slice %718 {offsets = [0, 24], sizes = [8, 8], strides = [1, 1]} : vector<8x32xf32> to vector<8x8xf32>
    %747 = vector.shape_cast %743 : vector<8x8xf32> to vector<1x8x8xf32>
    %748 = vector.shape_cast %744 : vector<8x8xf32> to vector<1x8x8xf32>
    %749 = vector.shape_cast %745 : vector<8x8xf32> to vector<1x8x8xf32>
    %750 = vector.shape_cast %746 : vector<8x8xf32> to vector<1x8x8xf32>
    %751 = tpu.concatenate %747, %748, %749, %750 in 0 : vector<1x8x8xf32>, vector<1x8x8xf32>, vector<1x8x8xf32>, vector<1x8x8xf32> -> vector<4x8x8xf32>
    %752 = arith.truncf %751 : vector<4x8x8xf32> to vector<4x8x8xbf16>
    %cst_282 = arith.constant dense<0.000000e+00> : vector<4x8x8xf32>
    %753 = tpu.matmul %732, %742, %cst_282 {dimension_numbers = #tpu.dot_dimension_numbers<[2], [2], [1], [1], [0, 0, 0, 1, 1, 1], [0], [0]>} : vector<4x8x8xbf16>, vector<4x8x8xbf16>, vector<4x8x8xf32> -> vector<4x8x8xf32>
    %cst_283 = arith.constant dense<0xFF800000> : vector<4x8xf32>
    %754 = vector.multi_reduction <maximumf>, %753, %cst_283 [2] : vector<4x8x8xf32> to vector<4x8xf32>
    %755 = vector.shape_cast %754 : vector<4x8xf32> to vector<4x8x1xf32>
    %756 = vector.broadcast %755 : vector<4x8x1xf32> to vector<4x8x8xf32>
    %757 = arith.subf %753, %756 : vector<4x8x8xf32>
    %758 = math.exp %757 : vector<4x8x8xf32>
    %cst_284 = arith.constant dense<0.000000e+00> : vector<4x8xf32>
    %759 = vector.multi_reduction <add>, %758, %cst_284 [2] : vector<4x8x8xf32> to vector<4x8xf32>
    %760 = vector.shape_cast %759 : vector<4x8xf32> to vector<4x8x1xf32>
    %761 = vector.broadcast %760 : vector<4x8x1xf32> to vector<4x8x8xf32>
    %762 = arith.divf %758, %761 : vector<4x8x8xf32>
    %763 = arith.truncf %762 : vector<4x8x8xf32> to vector<4x8x8xbf16>
    %cst_285 = arith.constant dense<0.000000e+00> : vector<4x8x8xf32>
    %764 = tpu.matmul %763, %752, %cst_285 {dimension_numbers = #tpu.dot_dimension_numbers<[2], [1], [1], [2], [0, 0, 0, 1, 1, 2], [0], [0]>} : vector<4x8x8xbf16>, vector<4x8x8xbf16>, vector<4x8x8xf32> -> vector<4x8x8xf32>
    %765 = vector.extract_strided_slice %764 {offsets = [0, 0, 0], sizes = [1, 8, 8], strides = [1, 1, 1]} : vector<4x8x8xf32> to vector<1x8x8xf32>
    %766 = vector.shape_cast %765 : vector<1x8x8xf32> to vector<8x8xf32>
    %767 = vector.extract_strided_slice %764 {offsets = [1, 0, 0], sizes = [1, 8, 8], strides = [1, 1, 1]} : vector<4x8x8xf32> to vector<1x8x8xf32>
    %768 = vector.shape_cast %767 : vector<1x8x8xf32> to vector<8x8xf32>
    %769 = vector.extract_strided_slice %764 {offsets = [2, 0, 0], sizes = [1, 8, 8], strides = [1, 1, 1]} : vector<4x8x8xf32> to vector<1x8x8xf32>
    %770 = vector.shape_cast %769 : vector<1x8x8xf32> to vector<8x8xf32>
    %771 = vector.extract_strided_slice %764 {offsets = [3, 0, 0], sizes = [1, 8, 8], strides = [1, 1, 1]} : vector<4x8x8xf32> to vector<1x8x8xf32>
    %772 = vector.shape_cast %771 : vector<1x8x8xf32> to vector<8x8xf32>
    %773 = tpu.concatenate %766, %768, %770, %772 in 1 : vector<8x8xf32>, vector<8x8xf32>, vector<8x8xf32>, vector<8x8xf32> -> vector<8x32xf32>
    %774 = arith.truncf %773 : vector<8x32xf32> to vector<8x32xbf16>
    %cst_286 = arith.constant dense<0.000000e+00> : vector<8x32xf32>
    %775 = tpu.matmul %774, %720, %cst_286 {dimension_numbers = #tpu.dot_dimension_numbers<[1], [0], [0], [1], [0, 0, 1, 1], [], []>} : vector<8x32xbf16>, vector<32x32xbf16>, vector<8x32xf32> -> vector<8x32xf32>
    %776 = vector.broadcast %722 : vector<1x32xf32> to vector<8x32xf32>
    %777 = arith.addf %775, %776 : vector<8x32xf32>
    %778 = arith.addf %672, %777 : vector<8x32xf32>
    %c1_287 = arith.constant 1 : index
    %c0_288 = arith.constant 0 : index
    %c0_289 = arith.constant 0 : index
    %779 = vector.load %arg32[%c1_287, %c0_288, %c0_289] : memref<2x1x32xf32, #tpu.memory_space<vmem>>, vector<1x1x32xf32>
    %780 = vector.shape_cast %779 : vector<1x1x32xf32> to vector<1x32xf32>
    %c1_290 = arith.constant 1 : index
    %c0_291 = arith.constant 0 : index
    %c0_292 = arith.constant 0 : index
    %781 = vector.load %arg33[%c1_290, %c0_291, %c0_292] : memref<2x1x32xf32, #tpu.memory_space<vmem>>, vector<1x1x32xf32>
    %782 = vector.shape_cast %781 : vector<1x1x32xf32> to vector<1x32xf32>
    %cst_293 = arith.constant dense<0.000000e+00> : vector<8xf32>
    %783 = vector.multi_reduction <add>, %778, %cst_293 [1] : vector<8x32xf32> to vector<8xf32>
    %784 = vector.shape_cast %783 : vector<8xf32> to vector<8x1xf32>
    %cst_294 = arith.constant 3.200000e+01 : f32
    %785 = vector.broadcast %cst_294 : f32 to vector<8x1xf32>
    %786 = arith.divf %784, %785 : vector<8x1xf32>
    %787 = vector.broadcast %786 : vector<8x1xf32> to vector<8x32xf32>
    %788 = arith.subf %778, %787 : vector<8x32xf32>
    %789 = arith.mulf %788, %788 : vector<8x32xf32>
    %cst_295 = arith.constant dense<0.000000e+00> : vector<8xf32>
    %790 = vector.multi_reduction <add>, %789, %cst_295 [1] : vector<8x32xf32> to vector<8xf32>
    %791 = vector.shape_cast %790 : vector<8xf32> to vector<8x1xf32>
    %cst_296 = arith.constant 3.200000e+01 : f32
    %792 = vector.broadcast %cst_296 : f32 to vector<8x1xf32>
    %793 = arith.divf %791, %792 : vector<8x1xf32>
    %794 = vector.broadcast %786 : vector<8x1xf32> to vector<8x32xf32>
    %795 = arith.subf %778, %794 : vector<8x32xf32>
    %cst_297 = arith.constant 9.99999997E-7 : f32
    %796 = vector.broadcast %cst_297 : f32 to vector<8x1xf32>
    %797 = arith.addf %793, %796 : vector<8x1xf32>
    %798 = math.rsqrt %797 : vector<8x1xf32>
    %799 = vector.broadcast %798 : vector<8x1xf32> to vector<8x32xf32>
    %800 = arith.mulf %795, %799 : vector<8x32xf32>
    %801 = vector.broadcast %780 : vector<1x32xf32> to vector<8x32xf32>
    %802 = arith.mulf %800, %801 : vector<8x32xf32>
    %803 = vector.broadcast %782 : vector<1x32xf32> to vector<8x32xf32>
    %804 = arith.addf %802, %803 : vector<8x32xf32>
    %c1_298 = arith.constant 1 : index
    %c0_299 = arith.constant 0 : index
    %c0_300 = arith.constant 0 : index
    %805 = vector.load %arg34[%c1_298, %c0_299, %c0_300] : memref<2x32x64xbf16, #tpu.memory_space<vmem>>, vector<1x32x64xbf16>
    %806 = vector.shape_cast %805 : vector<1x32x64xbf16> to vector<32x64xbf16>
    %c1_301 = arith.constant 1 : index
    %c0_302 = arith.constant 0 : index
    %c0_303 = arith.constant 0 : index
    %807 = vector.load %arg35[%c1_301, %c0_302, %c0_303] : memref<2x1x64xf32, #tpu.memory_space<vmem>>, vector<1x1x64xf32>
    %808 = vector.shape_cast %807 : vector<1x1x64xf32> to vector<1x64xf32>
    %c1_304 = arith.constant 1 : index
    %c0_305 = arith.constant 0 : index
    %c0_306 = arith.constant 0 : index
    %809 = vector.load %arg36[%c1_304, %c0_305, %c0_306] : memref<2x64x32xbf16, #tpu.memory_space<vmem>>, vector<1x64x32xbf16>
    %810 = vector.shape_cast %809 : vector<1x64x32xbf16> to vector<64x32xbf16>
    %c1_307 = arith.constant 1 : index
    %c0_308 = arith.constant 0 : index
    %c0_309 = arith.constant 0 : index
    %811 = vector.load %arg37[%c1_307, %c0_308, %c0_309] : memref<2x1x32xf32, #tpu.memory_space<vmem>>, vector<1x1x32xf32>
    %812 = vector.shape_cast %811 : vector<1x1x32xf32> to vector<1x32xf32>
    %813 = arith.truncf %804 : vector<8x32xf32> to vector<8x32xbf16>
    %cst_310 = arith.constant dense<0.000000e+00> : vector<8x64xf32>
    %814 = tpu.matmul %813, %806, %cst_310 {dimension_numbers = #tpu.dot_dimension_numbers<[1], [0], [0], [1], [0, 0, 1, 1], [], []>} : vector<8x32xbf16>, vector<32x64xbf16>, vector<8x64xf32> -> vector<8x64xf32>
    %815 = vector.broadcast %808 : vector<1x64xf32> to vector<8x64xf32>
    %816 = arith.addf %814, %815 : vector<8x64xf32>
    %cst_311 = arith.constant 0.000000e+00 : f32
    %817 = vector.broadcast %cst_311 : f32 to vector<8x64xf32>
    %818 = arith.maximumf %816, %817 : vector<8x64xf32>
    %819 = arith.truncf %818 : vector<8x64xf32> to vector<8x64xbf16>
    %cst_312 = arith.constant dense<0.000000e+00> : vector<8x32xf32>
    %820 = tpu.matmul %819, %810, %cst_312 {dimension_numbers = #tpu.dot_dimension_numbers<[1], [0], [0], [1], [0, 0, 1, 1], [], []>} : vector<8x64xbf16>, vector<64x32xbf16>, vector<8x32xf32> -> vector<8x32xf32>
    %821 = vector.broadcast %812 : vector<1x32xf32> to vector<8x32xf32>
    %822 = arith.addf %820, %821 : vector<8x32xf32>
    %823 = arith.addf %778, %822 : vector<8x32xf32>
    %c0_313 = arith.constant 0 : index
    %c0_314 = arith.constant 0 : index
    %824 = vector.load %arg38[%c0_313, %c0_314] : memref<1x32xf32, #tpu.memory_space<vmem>>, vector<1x32xf32>
    %c0_315 = arith.constant 0 : index
    %c0_316 = arith.constant 0 : index
    %825 = vector.load %arg39[%c0_315, %c0_316] : memref<1x32xf32, #tpu.memory_space<vmem>>, vector<1x32xf32>
    %cst_317 = arith.constant dense<0.000000e+00> : vector<8xf32>
    %826 = vector.multi_reduction <add>, %823, %cst_317 [1] : vector<8x32xf32> to vector<8xf32>
    %827 = vector.shape_cast %826 : vector<8xf32> to vector<8x1xf32>
    %cst_318 = arith.constant 3.200000e+01 : f32
    %828 = vector.broadcast %cst_318 : f32 to vector<8x1xf32>
    %829 = arith.divf %827, %828 : vector<8x1xf32>
    %830 = vector.broadcast %829 : vector<8x1xf32> to vector<8x32xf32>
    %831 = arith.subf %823, %830 : vector<8x32xf32>
    %832 = arith.mulf %831, %831 : vector<8x32xf32>
    %cst_319 = arith.constant dense<0.000000e+00> : vector<8xf32>
    %833 = vector.multi_reduction <add>, %832, %cst_319 [1] : vector<8x32xf32> to vector<8xf32>
    %834 = vector.shape_cast %833 : vector<8xf32> to vector<8x1xf32>
    %cst_320 = arith.constant 3.200000e+01 : f32
    %835 = vector.broadcast %cst_320 : f32 to vector<8x1xf32>
    %836 = arith.divf %834, %835 : vector<8x1xf32>
    %837 = vector.broadcast %829 : vector<8x1xf32> to vector<8x32xf32>
    %838 = arith.subf %823, %837 : vector<8x32xf32>
    %cst_321 = arith.constant 9.99999997E-7 : f32
    %839 = vector.broadcast %cst_321 : f32 to vector<8x1xf32>
    %840 = arith.addf %836, %839 : vector<8x1xf32>
    %841 = math.rsqrt %840 : vector<8x1xf32>
    %842 = vector.broadcast %841 : vector<8x1xf32> to vector<8x32xf32>
    %843 = arith.mulf %838, %842 : vector<8x32xf32>
    %844 = vector.broadcast %824 : vector<1x32xf32> to vector<8x32xf32>
    %845 = arith.mulf %843, %844 : vector<8x32xf32>
    %846 = vector.broadcast %825 : vector<1x32xf32> to vector<8x32xf32>
    %847 = arith.addf %845, %846 : vector<8x32xf32>
    %c0_322 = arith.constant 0 : index
    %c0_323 = arith.constant 0 : index
    %c0_324 = arith.constant 0 : index
    %848 = vector.load %arg42[%c0_322, %c0_323, %c0_324] : memref<1x8x32xf32, #tpu.memory_space<vmem>>, vector<1x8x32xf32>
    %849 = vector.shape_cast %848 : vector<1x8x32xf32> to vector<8x32xf32>
    %850 = vector.shape_cast %847 : vector<8x32xf32> to vector<1x8x32xf32>
    tpu.vector_store %arg42[%c0_322, %c0_323, %c0_324], %850 {strides = array<i32>} : memref<1x8x32xf32, #tpu.memory_space<vmem>>, vector<1x8x32xf32>,
    %c0_325 = arith.constant 0 : index
    %c0_326 = arith.constant 0 : index
    %851 = vector.load %arg40[%c0_325, %c0_326] : memref<32x16xbf16, #tpu.memory_space<vmem>>, vector<32x16xbf16>
    %852 = arith.truncf %847 : vector<8x32xf32> to vector<8x32xbf16>
    %cst_327 = arith.constant dense<0.000000e+00> : vector<8x16xf32>
    %853 = tpu.matmul %852, %851, %cst_327 {dimension_numbers = #tpu.dot_dimension_numbers<[1], [0], [0], [1], [0, 0, 1, 1], [], []>} : vector<8x32xbf16>, vector<32x16xbf16>, vector<8x16xf32> -> vector<8x16xf32>
    %c0_328 = arith.constant 0 : index
    %c0_329 = arith.constant 0 : index
    %854 = vector.load %arg41[%c0_328, %c0_329] : memref<1x16xf32, #tpu.memory_space<vmem>>, vector<1x16xf32>
    %855 = vector.broadcast %854 : vector<1x16xf32> to vector<8x16xf32>
    %856 = arith.addf %853, %855 : vector<8x16xf32>
    %cst_330 = arith.constant dense<0xFF800000> : vector<8xf32>
    %857 = vector.multi_reduction <maximumf>, %856, %cst_330 [1] : vector<8x16xf32> to vector<8xf32>
    %858 = vector.shape_cast %857 : vector<8xf32> to vector<8x1xf32>
    %859 = vector.broadcast %858 : vector<8x1xf32> to vector<8x16xf32>
    %860 = arith.subf %856, %859 : vector<8x16xf32>
    %861 = math.exp %860 : vector<8x16xf32>
    %cst_331 = arith.constant dense<0.000000e+00> : vector<8xf32>
    %862 = vector.multi_reduction <add>, %861, %cst_331 [1] : vector<8x16xf32> to vector<8xf32>
    %863 = vector.shape_cast %862 : vector<8xf32> to vector<8x1xf32>
    %864 = math.log %863 : vector<8x1xf32>
    %865 = vector.broadcast %864 : vector<8x1xf32> to vector<8x16xf32>
    %866 = arith.subf %860, %865 : vector<8x16xf32>
    %c0_332 = arith.constant 0 : index
    %c0_333 = arith.constant 0 : index
    %c0_334 = arith.constant 0 : index
    %867 = vector.load %arg43[%c0_332, %c0_333, %c0_334] : memref<1x8x16xf32, #tpu.memory_space<vmem>>, vector<1x8x16xf32>
    %868 = vector.shape_cast %867 : vector<1x8x16xf32> to vector<8x16xf32>
    %869 = vector.shape_cast %866 : vector<8x16xf32> to vector<1x8x16xf32>
    tpu.vector_store %arg43[%c0_332, %c0_333, %c0_334], %869 {strides = array<i32>} : memref<1x8x16xf32, #tpu.memory_space<vmem>>, vector<1x8x16xf32>,
    return
  }
  func.func @transform_0(%arg0: i32) -> (i32, i32, i32) {
    %c0_i32 = arith.constant 0 : i32
    %c0_i32_0 = arith.constant 0 : i32
    %c0_i32_1 = arith.constant 0 : i32
    return %arg0, %c0_i32, %c0_i32_0 : i32, i32, i32
  }
  func.func @transform_1(%arg0: i32) -> (i32, i32, i32) {
    %c0_i32 = arith.constant 0 : i32
    %c0_i32_0 = arith.constant 0 : i32
    %c0_i32_1 = arith.constant 0 : i32
    return %arg0, %c0_i32, %c0_i32_0 : i32, i32, i32
  }
  func.func @transform_2(%arg0: i32) -> (i32, i32, i32) {
    %c0_i32 = arith.constant 0 : i32
    %c0_i32_0 = arith.constant 0 : i32
    %c0_i32_1 = arith.constant 0 : i32
    return %arg0, %c0_i32, %c0_i32_0 : i32, i32, i32
  }
  func.func @transform_3(%arg0: i32) -> (i32, i32, i32) {
    %c0_i32 = arith.constant 0 : i32
    %c0_i32_0 = arith.constant 0 : i32
    %c0_i32_1 = arith.constant 0 : i32
    %c0_i32_2 = arith.constant 0 : i32
    return %c0_i32, %c0_i32_0, %c0_i32_1 : i32, i32, i32
  }
  func.func @transform_4(%arg0: i32) -> (i32, i32, i32) {
    %c0_i32 = arith.constant 0 : i32
    %c0_i32_0 = arith.constant 0 : i32
    %c0_i32_1 = arith.constant 0 : i32
    %c0_i32_2 = arith.constant 0 : i32
    return %c0_i32, %c0_i32_0, %c0_i32_1 : i32, i32, i32
  }
  func.func @transform_5(%arg0: i32) -> (i32, i32, i32) {
    %c0_i32 = arith.constant 0 : i32
    %c0_i32_0 = arith.constant 0 : i32
    %c0_i32_1 = arith.constant 0 : i32
    %c0_i32_2 = arith.constant 0 : i32
    return %c0_i32, %c0_i32_0, %c0_i32_1 : i32, i32, i32
  }
  func.func @transform_6(%arg0: i32) -> (i32, i32, i32) {
    %c0_i32 = arith.constant 0 : i32
    %c0_i32_0 = arith.constant 0 : i32
    %c0_i32_1 = arith.constant 0 : i32
    %c0_i32_2 = arith.constant 0 : i32
    return %c0_i32, %c0_i32_0, %c0_i32_1 : i32, i32, i32
  }
  func.func @transform_7(%arg0: i32) -> (i32, i32, i32) {
    %c0_i32 = arith.constant 0 : i32
    %c0_i32_0 = arith.constant 0 : i32
    %c0_i32_1 = arith.constant 0 : i32
    %c0_i32_2 = arith.constant 0 : i32
    return %c0_i32, %c0_i32_0, %c0_i32_1 : i32, i32, i32
  }
  func.func @transform_8(%arg0: i32) -> (i32, i32, i32) {
    %c0_i32 = arith.constant 0 : i32
    %c0_i32_0 = arith.constant 0 : i32
    %c0_i32_1 = arith.constant 0 : i32
    %c0_i32_2 = arith.constant 0 : i32
    return %c0_i32, %c0_i32_0, %c0_i32_1 : i32, i32, i32
  }
  func.func @transform_9(%arg0: i32) -> (i32, i32, i32) {
    %c0_i32 = arith.constant 0 : i32
    %c0_i32_0 = arith.constant 0 : i32
    %c0_i32_1 = arith.constant 0 : i32
    %c0_i32_2 = arith.constant 0 : i32
    return %c0_i32, %c0_i32_0, %c0_i32_1 : i32, i32, i32
  }
  func.func @transform_10(%arg0: i32) -> (i32, i32, i32) {
    %c0_i32 = arith.constant 0 : i32
    %c0_i32_0 = arith.constant 0 : i32
    %c0_i32_1 = arith.constant 0 : i32
    %c0_i32_2 = arith.constant 0 : i32
    return %c0_i32, %c0_i32_0, %c0_i32_1 : i32, i32, i32
  }
  func.func @transform_11(%arg0: i32) -> (i32, i32, i32) {
    %c0_i32 = arith.constant 0 : i32
    %c0_i32_0 = arith.constant 0 : i32
    %c0_i32_1 = arith.constant 0 : i32
    %c0_i32_2 = arith.constant 0 : i32
    return %c0_i32, %c0_i32_0, %c0_i32_1 : i32, i32, i32
  }
  func.func @transform_12(%arg0: i32) -> (i32, i32, i32) {
    %c0_i32 = arith.constant 0 : i32
    %c0_i32_0 = arith.constant 0 : i32
    %c0_i32_1 = arith.constant 0 : i32
    %c0_i32_2 = arith.constant 0 : i32
    return %c0_i32, %c0_i32_0, %c0_i32_1 : i32, i32, i32
  }
  func.func @transform_13(%arg0: i32) -> (i32, i32, i32) {
    %c0_i32 = arith.constant 0 : i32
    %c0_i32_0 = arith.constant 0 : i32
    %c0_i32_1 = arith.constant 0 : i32
    %c0_i32_2 = arith.constant 0 : i32
    return %c0_i32, %c0_i32_0, %c0_i32_1 : i32, i32, i32
  }
  func.func @transform_14(%arg0: i32) -> (i32, i32, i32) {
    %c0_i32 = arith.constant 0 : i32
    %c0_i32_0 = arith.constant 0 : i32
    %c0_i32_1 = arith.constant 0 : i32
    %c0_i32_2 = arith.constant 0 : i32
    return %c0_i32, %c0_i32_0, %c0_i32_1 : i32, i32, i32
  }
  func.func @transform_15(%arg0: i32) -> (i32, i32) {
    %c0_i32 = arith.constant 0 : i32
    %c0_i32_0 = arith.constant 0 : i32
    %c0_i32_1 = arith.constant 0 : i32
    return %c0_i32, %c0_i32_0 : i32, i32
  }
  func.func @transform_16(%arg0: i32) -> (i32, i32) {
    %c0_i32 = arith.constant 0 : i32
    %c0_i32_0 = arith.constant 0 : i32
    %c0_i32_1 = arith.constant 0 : i32
    return %c0_i32, %c0_i32_0 : i32, i32
  }
  func.func @transform_17(%arg0: i32) -> (i32, i32, i32) {
    %c0_i32 = arith.constant 0 : i32
    %c0_i32_0 = arith.constant 0 : i32
    %c0_i32_1 = arith.constant 0 : i32
    %c0_i32_2 = arith.constant 0 : i32
    return %c0_i32, %c0_i32_0, %c0_i32_1 : i32, i32, i32
  }
  func.func @transform_18(%arg0: i32) -> (i32, i32, i32) {
    %c0_i32 = arith.constant 0 : i32
    %c0_i32_0 = arith.constant 0 : i32
    %c0_i32_1 = arith.constant 0 : i32
    %c0_i32_2 = arith.constant 0 : i32
    return %c0_i32, %c0_i32_0, %c0_i32_1 : i32, i32, i32
  }
  func.func @transform_19(%arg0: i32) -> (i32, i32, i32) {
    %c0_i32 = arith.constant 0 : i32
    %c0_i32_0 = arith.constant 0 : i32
    %c0_i32_1 = arith.constant 0 : i32
    %c0_i32_2 = arith.constant 0 : i32
    return %c0_i32, %c0_i32_0, %c0_i32_1 : i32, i32, i32
  }
  func.func @transform_20(%arg0: i32) -> (i32, i32, i32) {
    %c0_i32 = arith.constant 0 : i32
    %c0_i32_0 = arith.constant 0 : i32
    %c0_i32_1 = arith.constant 0 : i32
    %c0_i32_2 = arith.constant 0 : i32
    return %c0_i32, %c0_i32_0, %c0_i32_1 : i32, i32, i32
  }
  func.func @transform_21(%arg0: i32) -> (i32, i32, i32) {
    %c0_i32 = arith.constant 0 : i32
    %c0_i32_0 = arith.constant 0 : i32
    %c0_i32_1 = arith.constant 0 : i32
    %c0_i32_2 = arith.constant 0 : i32
    return %c0_i32, %c0_i32_0, %c0_i32_1 : i32, i32, i32
  }
  func.func @transform_22(%arg0: i32) -> (i32, i32, i32) {
    %c0_i32 = arith.constant 0 : i32
    %c0_i32_0 = arith.constant 0 : i32
    %c0_i32_1 = arith.constant 0 : i32
    %c0_i32_2 = arith.constant 0 : i32
    return %c0_i32, %c0_i32_0, %c0_i32_1 : i32, i32, i32
  }
  func.func @transform_23(%arg0: i32) -> (i32, i32, i32) {
    %c0_i32 = arith.constant 0 : i32
    %c0_i32_0 = arith.constant 0 : i32
    %c0_i32_1 = arith.constant 0 : i32
    %c0_i32_2 = arith.constant 0 : i32
    return %c0_i32, %c0_i32_0, %c0_i32_1 : i32, i32, i32
  }
  func.func @transform_24(%arg0: i32) -> (i32, i32, i32) {
    %c0_i32 = arith.constant 0 : i32
    %c0_i32_0 = arith.constant 0 : i32
    %c0_i32_1 = arith.constant 0 : i32
    %c0_i32_2 = arith.constant 0 : i32
    return %c0_i32, %c0_i32_0, %c0_i32_1 : i32, i32, i32
  }
  func.func @transform_25(%arg0: i32) -> (i32, i32, i32) {
    %c0_i32 = arith.constant 0 : i32
    %c0_i32_0 = arith.constant 0 : i32
    %c0_i32_1 = arith.constant 0 : i32
    %c0_i32_2 = arith.constant 0 : i32
    return %c0_i32, %c0_i32_0, %c0_i32_1 : i32, i32, i32
  }
  func.func @transform_26(%arg0: i32) -> (i32, i32, i32) {
    %c0_i32 = arith.constant 0 : i32
    %c0_i32_0 = arith.constant 0 : i32
    %c0_i32_1 = arith.constant 0 : i32
    %c0_i32_2 = arith.constant 0 : i32
    return %c0_i32, %c0_i32_0, %c0_i32_1 : i32, i32, i32
  }
  func.func @transform_27(%arg0: i32) -> (i32, i32, i32) {
    %c0_i32 = arith.constant 0 : i32
    %c0_i32_0 = arith.constant 0 : i32
    %c0_i32_1 = arith.constant 0 : i32
    %c0_i32_2 = arith.constant 0 : i32
    return %c0_i32, %c0_i32_0, %c0_i32_1 : i32, i32, i32
  }
  func.func @transform_28(%arg0: i32) -> (i32, i32, i32) {
    %c0_i32 = arith.constant 0 : i32
    %c0_i32_0 = arith.constant 0 : i32
    %c0_i32_1 = arith.constant 0 : i32
    %c0_i32_2 = arith.constant 0 : i32
    return %c0_i32, %c0_i32_0, %c0_i32_1 : i32, i32, i32
  }
  func.func @transform_29(%arg0: i32) -> (i32, i32, i32) {
    %c0_i32 = arith.constant 0 : i32
    %c0_i32_0 = arith.constant 0 : i32
    %c0_i32_1 = arith.constant 0 : i32
    %c0_i32_2 = arith.constant 0 : i32
    return %c0_i32, %c0_i32_0, %c0_i32_1 : i32, i32, i32
  }
  func.func @transform_30(%arg0: i32) -> (i32, i32, i32) {
    %c0_i32 = arith.constant 0 : i32
    %c0_i32_0 = arith.constant 0 : i32
    %c0_i32_1 = arith.constant 0 : i32
    %c0_i32_2 = arith.constant 0 : i32
    return %c0_i32, %c0_i32_0, %c0_i32_1 : i32, i32, i32
  }
  func.func @transform_31(%arg0: i32) -> (i32, i32, i32) {
    %c0_i32 = arith.constant 0 : i32
    %c0_i32_0 = arith.constant 0 : i32
    %c0_i32_1 = arith.constant 0 : i32
    %c0_i32_2 = arith.constant 0 : i32
    return %c0_i32, %c0_i32_0, %c0_i32_1 : i32, i32, i32
  }
  func.func @transform_32(%arg0: i32) -> (i32, i32, i32) {
    %c0_i32 = arith.constant 0 : i32
    %c0_i32_0 = arith.constant 0 : i32
    %c0_i32_1 = arith.constant 0 : i32
    %c0_i32_2 = arith.constant 0 : i32
    return %c0_i32, %c0_i32_0, %c0_i32_1 : i32, i32, i32
  }
  func.func @transform_33(%arg0: i32) -> (i32, i32, i32) {
    %c0_i32 = arith.constant 0 : i32
    %c0_i32_0 = arith.constant 0 : i32
    %c0_i32_1 = arith.constant 0 : i32
    %c0_i32_2 = arith.constant 0 : i32
    return %c0_i32, %c0_i32_0, %c0_i32_1 : i32, i32, i32
  }
  func.func @transform_34(%arg0: i32) -> (i32, i32, i32) {
    %c0_i32 = arith.constant 0 : i32
    %c0_i32_0 = arith.constant 0 : i32
    %c0_i32_1 = arith.constant 0 : i32
    %c0_i32_2 = arith.constant 0 : i32
    return %c0_i32, %c0_i32_0, %c0_i32_1 : i32, i32, i32
  }
  func.func @transform_35(%arg0: i32) -> (i32, i32, i32) {
    %c0_i32 = arith.constant 0 : i32
    %c0_i32_0 = arith.constant 0 : i32
    %c0_i32_1 = arith.constant 0 : i32
    %c0_i32_2 = arith.constant 0 : i32
    return %c0_i32, %c0_i32_0, %c0_i32_1 : i32, i32, i32
  }
  func.func @transform_36(%arg0: i32) -> (i32, i32, i32) {
    %c0_i32 = arith.constant 0 : i32
    %c0_i32_0 = arith.constant 0 : i32
    %c0_i32_1 = arith.constant 0 : i32
    %c0_i32_2 = arith.constant 0 : i32
    return %c0_i32, %c0_i32_0, %c0_i32_1 : i32, i32, i32
  }
  func.func @transform_37(%arg0: i32) -> (i32, i32) {
    %c0_i32 = arith.constant 0 : i32
    %c0_i32_0 = arith.constant 0 : i32
    %c0_i32_1 = arith.constant 0 : i32
    return %c0_i32, %c0_i32_0 : i32, i32
  }
  func.func @transform_38(%arg0: i32) -> (i32, i32) {
    %c0_i32 = arith.constant 0 : i32
    %c0_i32_0 = arith.constant 0 : i32
    %c0_i32_1 = arith.constant 0 : i32
    return %c0_i32, %c0_i32_0 : i32, i32
  }
  func.func @transform_39(%arg0: i32) -> (i32, i32) {
    %c0_i32 = arith.constant 0 : i32
    %c0_i32_0 = arith.constant 0 : i32
    %c0_i32_1 = arith.constant 0 : i32
    return %c0_i32, %c0_i32_0 : i32, i32
  }
  func.func @transform_40(%arg0: i32) -> (i32, i32) {
    %c0_i32 = arith.constant 0 : i32
    %c0_i32_0 = arith.constant 0 : i32
    %c0_i32_1 = arith.constant 0 : i32
    return %c0_i32, %c0_i32_0 : i32, i32
  }
  func.func @transform_41(%arg0: i32) -> (i32, i32, i32) {
    %c0_i32 = arith.constant 0 : i32
    %c0_i32_0 = arith.constant 0 : i32
    %c0_i32_1 = arith.constant 0 : i32
    return %arg0, %c0_i32, %c0_i32_0 : i32, i32, i32
  }
  func.func @transform_42(%arg0: i32) -> (i32, i32, i32) {
    %c0_i32 = arith.constant 0 : i32
    %c0_i32_0 = arith.constant 0 : i32
    %c0_i32_1 = arith.constant 0 : i32
    return %arg0, %c0_i32, %c0_i32_0 : i32, i32, i32
  }
}

</mosaic_0001>

<llo_original>
// kernel: tpu_custom_call.1
$region0: #{tpu_custom_call.1}
  #allocation0 [shape = 'u32[]', space=smem, size = 0x4, offset = 0x4, fixed_abs, tag = 'smem constant byte address 0x4 - core index']
  #allocation1 [shape = 'u32[144,128]{1,0:T(1,128)}', space=vmem, size = 0x12000, scoped, tag = 'internal scratch']
  %s0 = inlined_call_operand.smem [shape: u32[43], index: -1, kind: input, shape index: {}]
  %s1 = sld [smem:[%s0]]
  %s2 = scalar_lea.smem %s0, 1
  %s3 = sld [smem:[%s2]]
  %s4 = scalar_lea.smem %s0, 2
  %s5 = sld [smem:[%s4]]
  %s6 = scalar_lea.smem %s0, 3
  %s7 = sld [smem:[%s6]]
  %s8 = scalar_lea.smem %s0, 4
  %s9 = sld [smem:[%s8]]
  %s10 = scalar_lea.smem %s0, 5
  %s11 = sld [smem:[%s10]]
  %s12 = scalar_lea.smem %s0, 6
  %s13 = sld [smem:[%s12]]
  %s14 = scalar_lea.smem %s0, 7
  %s15 = sld [smem:[%s14]]
  %s16 = scalar_lea.smem %s0, 8
  %s17 = sld [smem:[%s16]]
  %s18 = scalar_lea.smem %s0, 9
  %s19 = sld [smem:[%s18]]
  %s20 = scalar_lea.smem %s0, 10
  %s21 = sld [smem:[%s20]]
  %s22 = scalar_lea.smem %s0, 11
  %s23 = sld [smem:[%s22]]
  %s24 = scalar_lea.smem %s0, 12
  %s25 = sld [smem:[%s24]]
  %s26 = scalar_lea.smem %s0, 13
  %s27 = sld [smem:[%s26]]
  %s28 = scalar_lea.smem %s0, 14
  %s29 = sld [smem:[%s28]]
  %s30 = scalar_lea.smem %s0, 15
  %s31 = sld [smem:[%s30]]
  %s32 = scalar_lea.smem %s0, 16
  %s33 = sld [smem:[%s32]]
  %s34 = scalar_lea.smem %s0, 17
  %s35 = sld [smem:[%s34]]
  %s36 = scalar_lea.smem %s0, 18
  %s37 = sld [smem:[%s36]]
  %s38 = scalar_lea.smem %s0, 19
  %s39 = sld [smem:[%s38]]
  %s40 = scalar_lea.smem %s0, 20
  %s41 = sld [smem:[%s40]]
  %s42 = scalar_lea.smem %s0, 21
  %s43 = sld [smem:[%s42]]
  %s44 = scalar_lea.smem %s0, 22
  %s45 = sld [smem:[%s44]]
  %s46 = scalar_lea.smem %s0, 23
  %s47 = sld [smem:[%s46]]
  %s48 = scalar_lea.smem %s0, 24
  %s49 = sld [smem:[%s48]]
  %s50 = scalar_lea.smem %s0, 25
  %s51 = sld [smem:[%s50]]
  %s52 = scalar_lea.smem %s0, 26
  %s53 = sld [smem:[%s52]]
  %s54 = scalar_lea.smem %s0, 27
  %s55 = sld [smem:[%s54]]
  %s56 = scalar_lea.smem %s0, 28
  %s57 = sld [smem:[%s56]]
  %s58 = scalar_lea.smem %s0, 29
  %s59 = sld [smem:[%s58]]
  %s60 = scalar_lea.smem %s0, 30
  %s61 = sld [smem:[%s60]]
  %s62 = scalar_lea.smem %s0, 31
  %s63 = sld [smem:[%s62]]
  %s64 = scalar_lea.smem %s0, 32
  %s65 = sld [smem:[%s64]]
  %s66 = scalar_lea.smem %s0, 33
  %s67 = sld [smem:[%s66]]
  %s68 = scalar_lea.smem %s0, 34
  %s69 = sld [smem:[%s68]]
  %s70 = scalar_lea.smem %s0, 35
  %s71 = sld [smem:[%s70]]
  %s72 = scalar_lea.smem %s0, 36
  %s73 = sld [smem:[%s72]]
  %s74 = scalar_lea.smem %s0, 37
  %s75 = sld [smem:[%s74]]
  %s76 = scalar_lea.smem %s0, 38
  %s77 = sld [smem:[%s76]]
  %s78 = scalar_lea.smem %s0, 39
  %s79 = sld [smem:[%s78]]
  %s80 = scalar_lea.smem %s0, 40
  %s81 = sld [smem:[%s80]]
  %s82 = scalar_lea.smem %s0, 41
  %s83 = sld [smem:[%s82]]
  %s84 = scalar_lea.smem %s0, 42
  %s85 = sld [smem:[%s84]]
  %86 = xla_tuple %s83, %s85
  %s87 = sld [smem:[#allocation0]]
  $region289: #{tpu_custom_call.1} parent=0
    _
  %s89 = ssub.s32 1, %s87
  %s90 = scalar_select 0, %s89, %s87
  $region1: #{tpu_custom_call.1} parent=0
    #allocation2 [shape = 'u8[8192]{0}', space=vmem, size = 0x2000, scoped, tag = 'input window, operand 0']
    #allocation3 [shape = 's32[2]{0}', space=sflag, size = 0x8, scoped, tag = 'scoped memory for tpu_custom_call.1']
    #allocation4 [shape = 's32[2]{0}', space=sflag, size = 0x8, scoped, tag = 'scoped memory for tpu_custom_call.1']
    #allocation5 [shape = 'u8[8192]{0}', space=vmem, size = 0x2000, scoped, tag = 'input window, operand 1']
    #allocation6 [shape = 's32[2]{0}', space=sflag, size = 0x8, scoped, tag = 'scoped memory for tpu_custom_call.1']
    #allocation7 [shape = 'u8[8192]{0}', space=vmem, size = 0x2000, scoped, tag = 'input window, operand 2']
    #allocation8 [shape = 'u8[1024]{0}', space=vmem, size = 0x400, scoped, tag = 'input window, operand 3, single buffered']
    #allocation9 [shape = 's32[1]{0}', space=sflag, size = 0x4, scoped, tag = 'scoped memory for tpu_custom_call.1']
    #allocation10 [shape = 'u8[1024]{0}', space=vmem, size = 0x400, scoped, tag = 'input window, operand 4, single buffered']
    #allocation11 [shape = 'u8[1024]{0}', space=vmem, size = 0x400, scoped, tag = 'input window, operand 6, single buffered']
    #allocation12 [shape = 's32[1]{0}', space=sflag, size = 0x4, scoped, tag = 'scoped memory for tpu_custom_call.1']
    #allocation13 [shape = 'u8[1024]{0}', space=vmem, size = 0x400, scoped, tag = 'input window, operand 8, single buffered']
    #allocation14 [shape = 'u8[1024]{0}', space=vmem, size = 0x400, scoped, tag = 'input window, operand 9, single buffered']
    #allocation15 [shape = 's32[1]{0}', space=sflag, size = 0x4, scoped, tag = 'scoped memory for tpu_custom_call.1']
    #allocation16 [shape = 'u8[1024]{0}', space=vmem, size = 0x400, scoped, tag = 'input window, operand 10, single buffered']
    #allocation17 [shape = 'u8[1024]{0}', space=vmem, size = 0x400, scoped, tag = 'input window, operand 12, single buffered']
    #allocation18 [shape = 's32[1]{0}', space=sflag, size = 0x4, scoped, tag = 'scoped memory for tpu_custom_call.1']
    #allocation19 [shape = 'u8[1024]{0}', space=vmem, size = 0x400, scoped, tag = 'input window, operand 14, single buffered']
    #allocation20 [shape = 'u8[512]{0}', space=vmem, size = 0x400, scoped, tag = 'input window, operand 15, single buffered']
    #allocation21 [shape = 's32[1]{0}', space=sflag, size = 0x4, scoped, tag = 'scoped memory for tpu_custom_call.1']
    #allocation22 [shape = 'u8[512]{0}', space=vmem, size = 0x400, scoped, tag = 'input window, operand 16, single buffered']
    #allocation23 [shape = 'u8[1024]{0}', space=vmem, size = 0x400, scoped, tag = 'input window, operand 17, single buffered']
    #allocation24 [shape = 's32[1]{0}', space=sflag, size = 0x4, scoped, tag = 'scoped memory for tpu_custom_call.1']
    #allocation25 [shape = 'u8[1024]{0}', space=vmem, size = 0x400, scoped, tag = 'input window, operand 18, single buffered']
    #allocation26 [shape = 'u8[1024]{0}', space=vmem, size = 0x400, scoped, tag = 'input window, operand 20, single buffered']
    #allocation27 [shape = 's32[1]{0}', space=sflag, size = 0x4, scoped, tag = 'scoped memory for tpu_custom_call.1']
    #allocation28 [shape = 'u8[1024]{0}', space=vmem, size = 0x400, scoped, tag = 'input window, operand 22, single buffered']
    #allocation29 [shape = 'u8[1024]{0}', space=vmem, size = 0x400, scoped, tag = 'input window, operand 23, single buffered']
    #allocation30 [shape = 's32[1]{0}', space=sflag, size = 0x4, scoped, tag = 'scoped memory for tpu_custom_call.1']
    #allocation31 [shape = 'u8[1024]{0}', space=vmem, size = 0x400, scoped, tag = 'input window, operand 24, single buffered']
    #allocation32 [shape = 'u8[1024]{0}', space=vmem, size = 0x400, scoped, tag = 'input window, operand 26, single buffered']
    #allocation33 [shape = 's32[1]{0}', space=sflag, size = 0x4, scoped, tag = 'scoped memory for tpu_custom_call.1']
    #allocation34 [shape = 'u8[16384]{0}', space=vmem, size = 0x4000, scoped, tag = 'input window, operand 33, single buffered']
    #allocation35 [shape = 'u8[8192]{0}', space=vmem, size = 0x2000, scoped, tag = 'output window, operand 0']
    #allocation36 [shape = 'u8[8192]{0}', space=vmem, size = 0x2000, scoped, tag = 'output window, operand 1']
    #allocation37 [shape = 's32[2]{0}', space=sflag, size = 0x8, scoped, tag = 'scoped memory for tpu_custom_call.1']
    %91 = vsyncpa [#allocation3], 0
    %s92 = scalar_lea.sflag [#allocation3], 1
    %93 = vsyncpa %s92, 0
    %94 = vsyncpa [#allocation6], 0
    %s95 = scalar_lea.sflag [#allocation6], 1
    %96 = vsyncpa %s95, 0
    %97 = vsyncpa [#allocation9], 0
    %98 = vsyncpa [#allocation12], 0
    %99 = vsyncpa [#allocation15], 0
    %100 = vsyncpa [#allocation18], 0
    %101 = vsyncpa [#allocation21], 0
    %102 = vsyncpa [#allocation24], 0
    %103 = vsyncpa [#allocation27], 0
    %104 = vsyncpa [#allocation30], 0
    %105 = vsyncpa [#allocation33], 0
    %106 = vsyncpa [#allocation4], 0
    %s107 = scalar_lea.sflag [#allocation4], 1
    %108 = vsyncpa %s107, 0
    %109 = vsyncpa [#allocation37], 0
    %s110 = scalar_lea.sflag [#allocation37], 1
    %111 = vsyncpa %s110, 0
    loop: start=0, step=1, limit=4
    $region2: #{tpu_custom_call.1} parent=1 // loop_pre_header
      _
    $region3: #{tpu_custom_call.1} parent=1 // loop_header
      %s113 = sphi 0, %s117
      %p114 = scmp.ge.s32.totalorder %s113, 4
      %s123 = sphi 0, %s125
      %s126 = sphi 0, %s123
      %s127 = sphi 0, %s126
      %s143 = sphi 0, %s127
      %s149 = sphi 0, %s151
      %s152 = sphi 0, %s149
      %s153 = sphi 0, %s152
      %s169 = sphi 0, %s153
      %s175 = sphi 0, %s177
      %s178 = sphi 0, %s175
      %s179 = sphi 0, %s178
      %s195 = sphi 0, %s179
      %s199 = sphi 0, %s199
      %s201 = sphi 0, %s199
      %s202 = sphi 0, %s201
      %s216 = sphi 0, %s202
      %s220 = sphi 0, %s220
      %s222 = sphi 0, %s220
      %s223 = sphi 0, %s222
      %s237 = sphi 0, %s223
      %s241 = sphi 0, %s241
      %s243 = sphi 0, %s241
      %s244 = sphi 0, %s243
      %s258 = sphi 0, %s244
      %s262 = sphi 0, %s262
      %s264 = sphi 0, %s262
      %s265 = sphi 0, %s264
      %s279 = sphi 0, %s265
      %s283 = sphi 0, %s283
      %s285 = sphi 0, %s283
      %s286 = sphi 0, %s285
      %s300 = sphi 0, %s286
      %s304 = sphi 0, %s304
      %s306 = sphi 0, %s304
      %s307 = sphi 0, %s306
      %s321 = sphi 0, %s307
      %s325 = sphi 0, %s325
      %s327 = sphi 0, %s325
      %s328 = sphi 0, %s327
      %s342 = sphi 0, %s328
      %s346 = sphi 0, %s346
      %s348 = sphi 0, %s346
      %s349 = sphi 0, %s348
      %s363 = sphi 0, %s349
      %s367 = sphi 0, %s367
      %s369 = sphi 0, %s367
      %s370 = sphi 0, %s369
      %s384 = sphi 0, %s370
      %s388 = sphi 0, %s388
      %s390 = sphi 0, %s388
      %s391 = sphi 0, %s390
      %s405 = sphi 0, %s391
      %s409 = sphi 0, %s409
      %s411 = sphi 0, %s409
      %s412 = sphi 0, %s411
      %s426 = sphi 0, %s412
      %s430 = sphi 0, %s430
      %s432 = sphi 0, %s430
      %s433 = sphi 0, %s432
      %s447 = sphi 0, %s433
      %s451 = sphi 0, %s451
      %s453 = sphi 0, %s451
      %s454 = sphi 0, %s453
      %s468 = sphi 0, %s454
      %s472 = sphi 0, %s472
      %s474 = sphi 0, %s472
      %s475 = sphi 0, %s474
      %s489 = sphi 0, %s475
      %s493 = sphi 0, %s493
      %s495 = sphi 0, %s493
      %s496 = sphi 0, %s495
      %s510 = sphi 0, %s496
      %s514 = sphi 0, %s514
      %s516 = sphi 0, %s514
      %s517 = sphi 0, %s516
      %s531 = sphi 0, %s517
      %s535 = sphi 0, %s535
      %s537 = sphi 0, %s535
      %s538 = sphi 0, %s537
      %s552 = sphi 0, %s538
      %s556 = sphi 0, %s556
      %s558 = sphi 0, %s556
      %s559 = sphi 0, %s558
      %s573 = sphi 0, %s559
      %s577 = sphi 0, %s577
      %s579 = sphi 0, %s577
      %s580 = sphi 0, %s579
      %s594 = sphi 0, %s580
      %s598 = sphi 0, %s598
      %s600 = sphi 0, %s598
      %s601 = sphi 0, %s600
      %s615 = sphi 0, %s601
      %s619 = sphi 0, %s619
      %s621 = sphi 0, %s619
      %s622 = sphi 0, %s621
      %s636 = sphi 0, %s622
      %s640 = sphi 0, %s640
      %s642 = sphi 0, %s640
      %s643 = sphi 0, %s642
      %s657 = sphi 0, %s643
      %s661 = sphi 0, %s661
      %s663 = sphi 0, %s661
      %s664 = sphi 0, %s663
      %s678 = sphi 0, %s664
      %s682 = sphi 0, %s682
      %s684 = sphi 0, %s682
      %s685 = sphi 0, %s684
      %s699 = sphi 0, %s685
      %s703 = sphi 0, %s703
      %s705 = sphi 0, %s703
      %s706 = sphi 0, %s705
      %s720 = sphi 0, %s706
      %s724 = sphi 0, %s724
      %s726 = sphi 0, %s724
      %s727 = sphi 0, %s726
      %s741 = sphi 0, %s727
      %s745 = sphi 0, %s745
      %s747 = sphi 0, %s745
      %s748 = sphi 0, %s747
      %s762 = sphi 0, %s748
      %s766 = sphi 0, %s766
      %s768 = sphi 0, %s766
      %s769 = sphi 0, %s768
      %s783 = sphi 0, %s769
      %s787 = sphi 0, %s787
      %s789 = sphi 0, %s787
      %s790 = sphi 0, %s789
      %s804 = sphi 0, %s790
      %s808 = sphi 0, %s808
      %s810 = sphi 0, %s808
      %s811 = sphi 0, %s810
      %s825 = sphi 0, %s811
      %s829 = sphi 0, %s829
      %s831 = sphi 0, %s829
      %s832 = sphi 0, %s831
      %s846 = sphi 0, %s832
      %s850 = sphi 0, %s850
      %s852 = sphi 0, %s850
      %s853 = sphi 0, %s852
      %s867 = sphi 0, %s853
      %s871 = sphi 0, %s871
      %s873 = sphi 0, %s871
      %s874 = sphi 0, %s873
      %s888 = sphi 0, %s874
      %s892 = sphi 0, %s892
      %s894 = sphi 0, %s892
      %s895 = sphi 0, %s894
      %s909 = sphi 0, %s895
      %s913 = sphi 0, %s913
      %s915 = sphi 0, %s913
      %s916 = sphi 0, %s915
      %s930 = sphi 0, %s916
      %s934 = sphi 0, %s934
      %s936 = sphi 0, %s934
      %s937 = sphi 0, %s936
      %s951 = sphi 0, %s937
      %s955 = sphi 0, %s955
      %s957 = sphi 0, %s955
      %s958 = sphi 0, %s957
      %s972 = sphi 0, %s958
      %s976 = sphi 0, %s976
      %s978 = sphi 0, %s976
      %s979 = sphi 0, %s978
      %s993 = sphi 0, %s979
      %s999 = sphi 0, %s1001
      %s1002 = sphi 0, %s999
      %s1003 = sphi 0, %s1002
      %s1019 = sphi 0, %s1003
      %s1025 = sphi 0, %s1027
      %s1028 = sphi 0, %s1025
      %s1029 = sphi 0, %s1028
      %s1045 = sphi 0, %s1029
    $region4: #{tpu_custom_call.1} parent=1 // loop_header_branch
      %116 = sbr.rel (%p114) target = $region8
    $region5: #{tpu_custom_call.1} parent=1 // loop_body
      %s118 = ssub.s32 %s113, 1
      %s119 = ssub.s32 %s113, 2
      %s120 = sadd.s32 %s113, 1
      %s121 = ssub.s32 %s113, %s120
      %p122 = scmp.eq.s32.totalorder %s121, 0
      %s124 = sadd.s32 %s123, 1
      %s125 = scalar_select %p122, %s123, %s124
      %p128 = pneg %p122
      %p129 = scmp.eq.s32.totalorder %s113, 1
      %p130 = por %p128, %p129
      %p131 = scmp.ne.s32.totalorder %s123, %s126
      %p132 = scmp.eq.s32.totalorder %s113, 0
      %p133 = por %p131, %p132
      %p134 = scmp.ne.s32.totalorder %s123, %s126
      %p135 = scmp.eq.s32.totalorder %s118, 1
      %p136 = por %p134, %p135
      %p137 = scmp.ne.s32.totalorder %s126, %s127
      %p138 = scmp.eq.s32.totalorder %s118, 0
      %p139 = por %p137, %p138
      %p140 = scmp.ne.s32.totalorder %s126, %s127
      %p141 = scmp.eq.s32.totalorder %s119, 1
      %p142 = por %p140, %p141
      %p144 = scmp.ne.s32.totalorder %s127, %s143
      %p145 = scmp.eq.s32.totalorder %s119, 0
      %p146 = por %p144, %p145
      %s147 = ssub.s32 %s113, %s120
      %p148 = scmp.eq.s32.totalorder %s147, 0
      %s150 = sadd.s32 %s149, 1
      %s151 = scalar_select %p148, %s149, %s150
      %p154 = pneg %p148
      %p155 = scmp.eq.s32.totalorder %s113, 1
      %p156 = por %p154, %p155
      %p157 = scmp.ne.s32.totalorder %s149, %s152
      %p158 = scmp.eq.s32.totalorder %s113, 0
      %p159 = por %p157, %p158
      %p160 = scmp.ne.s32.totalorder %s149, %s152
      %p161 = scmp.eq.s32.totalorder %s118, 1
      %p162 = por %p160, %p161
      %p163 = scmp.ne.s32.totalorder %s152, %s153
      %p164 = scmp.eq.s32.totalorder %s118, 0
      %p165 = por %p163, %p164
      %p166 = scmp.ne.s32.totalorder %s152, %s153
      %p167 = scmp.eq.s32.totalorder %s119, 1
      %p168 = por %p166, %p167
      %p170 = scmp.ne.s32.totalorder %s153, %s169
      %p171 = scmp.eq.s32.totalorder %s119, 0
      %p172 = por %p170, %p171
      %s173 = ssub.s32 %s113, %s120
      %p174 = scmp.eq.s32.totalorder %s173, 0
      %s176 = sadd.s32 %s175, 1
      %s177 = scalar_select %p174, %s175, %s176
      %p180 = pneg %p174
      %p181 = scmp.eq.s32.totalorder %s113, 1
      %p182 = por %p180, %p181
      %p183 = scmp.ne.s32.totalorder %s175, %s178
      %p184 = scmp.eq.s32.totalorder %s113, 0
      %p185 = por %p183, %p184
      %p186 = scmp.ne.s32.totalorder %s175, %s178
      %p187 = scmp.eq.s32.totalorder %s118, 1
      %p188 = por %p186, %p187
      %p189 = scmp.ne.s32.totalorder %s178, %s179
      %p190 = scmp.eq.s32.totalorder %s118, 0
      %p191 = por %p189, %p190
      %p192 = scmp.ne.s32.totalorder %s178, %s179
      %p193 = scmp.eq.s32.totalorder %s119, 1
      %p194 = por %p192, %p193
      %p196 = scmp.ne.s32.totalorder %s179, %s195
      %p197 = scmp.eq.s32.totalorder %s119, 0
      %p198 = por %p196, %p197
      %s200 = sadd.s32 %s199, 1
      %p203 = scmp.eq.s32.totalorder %s113, 1
      %p204 = scmp.ne.s32.totalorder %s199, %s201
      %p205 = scmp.eq.s32.totalorder %s113, 0
      %p206 = por %p204, %p205
      %p207 = scmp.ne.s32.totalorder %s199, %s201
      %p208 = scmp.eq.s32.totalorder %s118, 1
      %p209 = por %p207, %p208
      %p210 = scmp.ne.s32.totalorder %s201, %s202
      %p211 = scmp.eq.s32.totalorder %s118, 0
      %p212 = por %p210, %p211
      %p213 = scmp.ne.s32.totalorder %s201, %s202
      %p214 = scmp.eq.s32.totalorder %s119, 1
      %p215 = por %p213, %p214
      %p217 = scmp.ne.s32.totalorder %s202, %s216
      %p218 = scmp.eq.s32.totalorder %s119, 0
      %p219 = por %p217, %p218
      %s221 = sadd.s32 %s220, 1
      %p224 = scmp.eq.s32.totalorder %s113, 1
      %p225 = scmp.ne.s32.totalorder %s220, %s222
      %p226 = scmp.eq.s32.totalorder %s113, 0
      %p227 = por %p225, %p226
      %p228 = scmp.ne.s32.totalorder %s220, %s222
      %p229 = scmp.eq.s32.totalorder %s118, 1
      %p230 = por %p228, %p229
      %p231 = scmp.ne.s32.totalorder %s222, %s223
      %p232 = scmp.eq.s32.totalorder %s118, 0
      %p233 = por %p231, %p232
      %p234 = scmp.ne.s32.totalorder %s222, %s223
      %p235 = scmp.eq.s32.totalorder %s119, 1
      %p236 = por %p234, %p235
      %p238 = scmp.ne.s32.totalorder %s223, %s237
      %p239 = scmp.eq.s32.totalorder %s119, 0
      %p240 = por %p238, %p239
      %s242 = sadd.s32 %s241, 1
      %p245 = scmp.eq.s32.totalorder %s113, 1
      %p246 = scmp.ne.s32.totalorder %s241, %s243
      %p247 = scmp.eq.s32.totalorder %s113, 0
      %p248 = por %p246, %p247
      %p249 = scmp.ne.s32.totalorder %s241, %s243
      %p250 = scmp.eq.s32.totalorder %s118, 1
      %p251 = por %p249, %p250
      %p252 = scmp.ne.s32.totalorder %s243, %s244
      %p253 = scmp.eq.s32.totalorder %s118, 0
      %p254 = por %p252, %p253
      %p255 = scmp.ne.s32.totalorder %s243, %s244
      %p256 = scmp.eq.s32.totalorder %s119, 1
      %p257 = por %p255, %p256
      %p259 = scmp.ne.s32.totalorder %s244, %s258
      %p260 = scmp.eq.s32.totalorder %s119, 0
      %p261 = por %p259, %p260
      %s263 = sadd.s32 %s262, 1
      %p266 = scmp.eq.s32.totalorder %s113, 1
      %p267 = scmp.ne.s32.totalorder %s262, %s264
      %p268 = scmp.eq.s32.totalorder %s113, 0
      %p269 = por %p267, %p268
      %p270 = scmp.ne.s32.totalorder %s262, %s264
      %p271 = scmp.eq.s32.totalorder %s118, 1
      %p272 = por %p270, %p271
      %p273 = scmp.ne.s32.totalorder %s264, %s265
      %p274 = scmp.eq.s32.totalorder %s118, 0
      %p275 = por %p273, %p274
      %p276 = scmp.ne.s32.totalorder %s264, %s265
      %p277 = scmp.eq.s32.totalorder %s119, 1
      %p278 = por %p276, %p277
      %p280 = scmp.ne.s32.totalorder %s265, %s279
      %p281 = scmp.eq.s32.totalorder %s119, 0
      %p282 = por %p280, %p281
      %s284 = sadd.s32 %s283, 1
      %p287 = scmp.eq.s32.totalorder %s113, 1
      %p288 = scmp.ne.s32.totalorder %s283, %s285
      %p289 = scmp.eq.s32.totalorder %s113, 0
      %p290 = por %p288, %p289
      %p291 = scmp.ne.s32.totalorder %s283, %s285
      %p292 = scmp.eq.s32.totalorder %s118, 1
      %p293 = por %p291, %p292
      %p294 = scmp.ne.s32.totalorder %s285, %s286
      %p295 = scmp.eq.s32.totalorder %s118, 0
      %p296 = por %p294, %p295
      %p297 = scmp.ne.s32.totalorder %s285, %s286
      %p298 = scmp.eq.s32.totalorder %s119, 1
      %p299 = por %p297, %p298
      %p301 = scmp.ne.s32.totalorder %s286, %s300
      %p302 = scmp.eq.s32.totalorder %s119, 0
      %p303 = por %p301, %p302
      %s305 = sadd.s32 %s304, 1
      %p308 = scmp.eq.s32.totalorder %s113, 1
      %p309 = scmp.ne.s32.totalorder %s304, %s306
      %p310 = scmp.eq.s32.totalorder %s113, 0
      %p311 = por %p309, %p310
      %p312 = scmp.ne.s32.totalorder %s304, %s306
      %p313 = scmp.eq.s32.totalorder %s118, 1
      %p314 = por %p312, %p313
      %p315 = scmp.ne.s32.totalorder %s306, %s307
      %p316 = scmp.eq.s32.totalorder %s118, 0
      %p317 = por %p315, %p316
      %p318 = scmp.ne.s32.totalorder %s306, %s307
      %p319 = scmp.eq.s32.totalorder %s119, 1
      %p320 = por %p318, %p319
      %p322 = scmp.ne.s32.totalorder %s307, %s321
      %p323 = scmp.eq.s32.totalorder %s119, 0
      %p324 = por %p322, %p323
      %s326 = sadd.s32 %s325, 1
      %p329 = scmp.eq.s32.totalorder %s113, 1
      %p330 = scmp.ne.s32.totalorder %s325, %s327
      %p331 = scmp.eq.s32.totalorder %s113, 0
      %p332 = por %p330, %p331
      %p333 = scmp.ne.s32.totalorder %s325, %s327
      %p334 = scmp.eq.s32.totalorder %s118, 1
      %p335 = por %p333, %p334
      %p336 = scmp.ne.s32.totalorder %s327, %s328
      %p337 = scmp.eq.s32.totalorder %s118, 0
      %p338 = por %p336, %p337
      %p339 = scmp.ne.s32.totalorder %s327, %s328
      %p340 = scmp.eq.s32.totalorder %s119, 1
      %p341 = por %p339, %p340
      %p343 = scmp.ne.s32.totalorder %s328, %s342
      %p344 = scmp.eq.s32.totalorder %s119, 0
      %p345 = por %p343, %p344
      %s347 = sadd.s32 %s346, 1
      %p350 = scmp.eq.s32.totalorder %s113, 1
      %p351 = scmp.ne.s32.totalorder %s346, %s348
      %p352 = scmp.eq.s32.totalorder %s113, 0
      %p353 = por %p351, %p352
      %p354 = scmp.ne.s32.totalorder %s346, %s348
      %p355 = scmp.eq.s32.totalorder %s118, 1
      %p356 = por %p354, %p355
      %p357 = scmp.ne.s32.totalorder %s348, %s349
      %p358 = scmp.eq.s32.totalorder %s118, 0
      %p359 = por %p357, %p358
      %p360 = scmp.ne.s32.totalorder %s348, %s349
      %p361 = scmp.eq.s32.totalorder %s119, 1
      %p362 = por %p360, %p361
      %p364 = scmp.ne.s32.totalorder %s349, %s363
      %p365 = scmp.eq.s32.totalorder %s119, 0
      %p366 = por %p364, %p365
      %s368 = sadd.s32 %s367, 1
      %p371 = scmp.eq.s32.totalorder %s113, 1
      %p372 = scmp.ne.s32.totalorder %s367, %s369
      %p373 = scmp.eq.s32.totalorder %s113, 0
      %p374 = por %p372, %p373
      %p375 = scmp.ne.s32.totalorder %s367, %s369
      %p376 = scmp.eq.s32.totalorder %s118, 1
      %p377 = por %p375, %p376
      %p378 = scmp.ne.s32.totalorder %s369, %s370
      %p379 = scmp.eq.s32.totalorder %s118, 0
      %p380 = por %p378, %p379
      %p381 = scmp.ne.s32.totalorder %s369, %s370
      %p382 = scmp.eq.s32.totalorder %s119, 1
      %p383 = por %p381, %p382
      %p385 = scmp.ne.s32.totalorder %s370, %s384
      %p386 = scmp.eq.s32.totalorder %s119, 0
      %p387 = por %p385, %p386
      %s389 = sadd.s32 %s388, 1
      %p392 = scmp.eq.s32.totalorder %s113, 1
      %p393 = scmp.ne.s32.totalorder %s388, %s390
      %p394 = scmp.eq.s32.totalorder %s113, 0
      %p395 = por %p393, %p394
      %p396 = scmp.ne.s32.totalorder %s388, %s390
      %p397 = scmp.eq.s32.totalorder %s118, 1
      %p398 = por %p396, %p397
      %p399 = scmp.ne.s32.totalorder %s390, %s391
      %p400 = scmp.eq.s32.totalorder %s118, 0
      %p401 = por %p399, %p400
      %p402 = scmp.ne.s32.totalorder %s390, %s391
      %p403 = scmp.eq.s32.totalorder %s119, 1
      %p404 = por %p402, %p403
      %p406 = scmp.ne.s32.totalorder %s391, %s405
      %p407 = scmp.eq.s32.totalorder %s119, 0
      %p408 = por %p406, %p407
      %s410 = sadd.s32 %s409, 1
      %p413 = scmp.eq.s32.totalorder %s113, 1
      %p414 = scmp.ne.s32.totalorder %s409, %s411
      %p415 = scmp.eq.s32.totalorder %s113, 0
      %p416 = por %p414, %p415
      %p417 = scmp.ne.s32.totalorder %s409, %s411
      %p418 = scmp.eq.s32.totalorder %s118, 1
      %p419 = por %p417, %p418
      %p420 = scmp.ne.s32.totalorder %s411, %s412
      %p421 = scmp.eq.s32.totalorder %s118, 0
      %p422 = por %p420, %p421
      %p423 = scmp.ne.s32.totalorder %s411, %s412
      %p424 = scmp.eq.s32.totalorder %s119, 1
      %p425 = por %p423, %p424
      %p427 = scmp.ne.s32.totalorder %s412, %s426
      %p428 = scmp.eq.s32.totalorder %s119, 0
      %p429 = por %p427, %p428
      %s431 = sadd.s32 %s430, 1
      %p434 = scmp.eq.s32.totalorder %s113, 1
      %p435 = scmp.ne.s32.totalorder %s430, %s432
      %p436 = scmp.eq.s32.totalorder %s113, 0
      %p437 = por %p435, %p436
      %p438 = scmp.ne.s32.totalorder %s430, %s432
      %p439 = scmp.eq.s32.totalorder %s118, 1
      %p440 = por %p438, %p439
      %p441 = scmp.ne.s32.totalorder %s432, %s433
      %p442 = scmp.eq.s32.totalorder %s118, 0
      %p443 = por %p441, %p442
      %p444 = scmp.ne.s32.totalorder %s432, %s433
      %p445 = scmp.eq.s32.totalorder %s119, 1
      %p446 = por %p444, %p445
      %p448 = scmp.ne.s32.totalorder %s433, %s447
      %p449 = scmp.eq.s32.totalorder %s119, 0
      %p450 = por %p448, %p449
      %s452 = sadd.s32 %s451, 1
      %p455 = scmp.eq.s32.totalorder %s113, 1
      %p456 = scmp.ne.s32.totalorder %s451, %s453
      %p457 = scmp.eq.s32.totalorder %s113, 0
      %p458 = por %p456, %p457
      %p459 = scmp.ne.s32.totalorder %s451, %s453
      %p460 = scmp.eq.s32.totalorder %s118, 1
      %p461 = por %p459, %p460
      %p462 = scmp.ne.s32.totalorder %s453, %s454
      %p463 = scmp.eq.s32.totalorder %s118, 0
      %p464 = por %p462, %p463
      %p465 = scmp.ne.s32.totalorder %s453, %s454
      %p466 = scmp.eq.s32.totalorder %s119, 1
      %p467 = por %p465, %p466
      %p469 = scmp.ne.s32.totalorder %s454, %s468
      %p470 = scmp.eq.s32.totalorder %s119, 0
      %p471 = por %p469, %p470
      %s473 = sadd.s32 %s472, 1
      %p476 = scmp.eq.s32.totalorder %s113, 1
      %p477 = scmp.ne.s32.totalorder %s472, %s474
      %p478 = scmp.eq.s32.totalorder %s113, 0
      %p479 = por %p477, %p478
      %p480 = scmp.ne.s32.totalorder %s472, %s474
      %p481 = scmp.eq.s32.totalorder %s118, 1
      %p482 = por %p480, %p481
      %p483 = scmp.ne.s32.totalorder %s474, %s475
      %p484 = scmp.eq.s32.totalorder %s118, 0
      %p485 = por %p483, %p484
      %p486 = scmp.ne.s32.totalorder %s474, %s475
      %p487 = scmp.eq.s32.totalorder %s119, 1
      %p488 = por %p486, %p487
      %p490 = scmp.ne.s32.totalorder %s475, %s489
      %p491 = scmp.eq.s32.totalorder %s119, 0
      %p492 = por %p490, %p491
      %s494 = sadd.s32 %s493, 1
      %p497 = scmp.eq.s32.totalorder %s113, 1
      %p498 = scmp.ne.s32.totalorder %s493, %s495
      %p499 = scmp.eq.s32.totalorder %s113, 0
      %p500 = por %p498, %p499
      %p501 = scmp.ne.s32.totalorder %s493, %s495
      %p502 = scmp.eq.s32.totalorder %s118, 1
      %p503 = por %p501, %p502
      %p504 = scmp.ne.s32.totalorder %s495, %s496
      %p505 = scmp.eq.s32.totalorder %s118, 0
      %p506 = por %p504, %p505
      %p507 = scmp.ne.s32.totalorder %s495, %s496
      %p508 = scmp.eq.s32.totalorder %s119, 1
      %p509 = por %p507, %p508
      %p511 = scmp.ne.s32.totalorder %s496, %s510
      %p512 = scmp.eq.s32.totalorder %s119, 0
      %p513 = por %p511, %p512
      %s515 = sadd.s32 %s514, 1
      %p518 = scmp.eq.s32.totalorder %s113, 1
      %p519 = scmp.ne.s32.totalorder %s514, %s516
      %p520 = scmp.eq.s32.totalorder %s113, 0
      %p521 = por %p519, %p520
      %p522 = scmp.ne.s32.totalorder %s514, %s516
      %p523 = scmp.eq.s32.totalorder %s118, 1
      %p524 = por %p522, %p523
      %p525 = scmp.ne.s32.totalorder %s516, %s517
      %p526 = scmp.eq.s32.totalorder %s118, 0
      %p527 = por %p525, %p526
      %p528 = scmp.ne.s32.totalorder %s516, %s517
      %p529 = scmp.eq.s32.totalorder %s119, 1
      %p530 = por %p528, %p529
      %p532 = scmp.ne.s32.totalorder %s517, %s531
      %p533 = scmp.eq.s32.totalorder %s119, 0
      %p534 = por %p532, %p533
      %s536 = sadd.s32 %s535, 1
      %p539 = scmp.eq.s32.totalorder %s113, 1
      %p540 = scmp.ne.s32.totalorder %s535, %s537
      %p541 = scmp.eq.s32.totalorder %s113, 0
      %p542 = por %p540, %p541
      %p543 = scmp.ne.s32.totalorder %s535, %s537
      %p544 = scmp.eq.s32.totalorder %s118, 1
      %p545 = por %p543, %p544
      %p546 = scmp.ne.s32.totalorder %s537, %s538
      %p547 = scmp.eq.s32.totalorder %s118, 0
      %p548 = por %p546, %p547
      %p549 = scmp.ne.s32.totalorder %s537, %s538
      %p550 = scmp.eq.s32.totalorder %s119, 1
      %p551 = por %p549, %p550
      %p553 = scmp.ne.s32.totalorder %s538, %s552
      %p554 = scmp.eq.s32.totalorder %s119, 0
      %p555 = por %p553, %p554
      %s557 = sadd.s32 %s556, 1
      %p560 = scmp.eq.s32.totalorder %s113, 1
      %p561 = scmp.ne.s32.totalorder %s556, %s558
      %p562 = scmp.eq.s32.totalorder %s113, 0
      %p563 = por %p561, %p562
      %p564 = scmp.ne.s32.totalorder %s556, %s558
      %p565 = scmp.eq.s32.totalorder %s118, 1
      %p566 = por %p564, %p565
      %p567 = scmp.ne.s32.totalorder %s558, %s559
      %p568 = scmp.eq.s32.totalorder %s118, 0
      %p569 = por %p567, %p568
      %p570 = scmp.ne.s32.totalorder %s558, %s559
      %p571 = scmp.eq.s32.totalorder %s119, 1
      %p572 = por %p570, %p571
      %p574 = scmp.ne.s32.totalorder %s559, %s573
      %p575 = scmp.eq.s32.totalorder %s119, 0
      %p576 = por %p574, %p575
      %s578 = sadd.s32 %s577, 1
      %p581 = scmp.eq.s32.totalorder %s113, 1
      %p582 = scmp.ne.s32.totalorder %s577, %s579
      %p583 = scmp.eq.s32.totalorder %s113, 0
      %p584 = por %p582, %p583
      %p585 = scmp.ne.s32.totalorder %s577, %s579
      %p586 = scmp.eq.s32.totalorder %s118, 1
      %p587 = por %p585, %p586
      %p588 = scmp.ne.s32.totalorder %s579, %s580
      %p589 = scmp.eq.s32.totalorder %s118, 0
      %p590 = por %p588, %p589
      %p591 = scmp.ne.s32.totalorder %s579, %s580
      %p592 = scmp.eq.s32.totalorder %s119, 1
      %p593 = por %p591, %p592
      %p595 = scmp.ne.s32.totalorder %s580, %s594
      %p596 = scmp.eq.s32.totalorder %s119, 0
      %p597 = por %p595, %p596
      %s599 = sadd.s32 %s598, 1
      %p602 = scmp.eq.s32.totalorder %s113, 1
      %p603 = scmp.ne.s32.totalorder %s598, %s600
      %p604 = scmp.eq.s32.totalorder %s113, 0
      %p605 = por %p603, %p604
      %p606 = scmp.ne.s32.totalorder %s598, %s600
      %p607 = scmp.eq.s32.totalorder %s118, 1
      %p608 = por %p606, %p607
      %p609 = scmp.ne.s32.totalorder %s600, %s601
      %p610 = scmp.eq.s32.totalorder %s118, 0
      %p611 = por %p609, %p610
      %p612 = scmp.ne.s32.totalorder %s600, %s601
      %p613 = scmp.eq.s32.totalorder %s119, 1
      %p614 = por %p612, %p613
      %p616 = scmp.ne.s32.totalorder %s601, %s615
      %p617 = scmp.eq.s32.totalorder %s119, 0
      %p618 = por %p616, %p617
      %s620 = sadd.s32 %s619, 1
      %p623 = scmp.eq.s32.totalorder %s113, 1
      %p624 = scmp.ne.s32.totalorder %s619, %s621
      %p625 = scmp.eq.s32.totalorder %s113, 0
      %p626 = por %p624, %p625
      %p627 = scmp.ne.s32.totalorder %s619, %s621
      %p628 = scmp.eq.s32.totalorder %s118, 1
      %p629 = por %p627, %p628
      %p630 = scmp.ne.s32.totalorder %s621, %s622
      %p631 = scmp.eq.s32.totalorder %s118, 0
      %p632 = por %p630, %p631
      %p633 = scmp.ne.s32.totalorder %s621, %s622
      %p634 = scmp.eq.s32.totalorder %s119, 1
      %p635 = por %p633, %p634
      %p637 = scmp.ne.s32.totalorder %s622, %s636
      %p638 = scmp.eq.s32.totalorder %s119, 0
      %p639 = por %p637, %p638
      %s641 = sadd.s32 %s640, 1
      %p644 = scmp.eq.s32.totalorder %s113, 1
      %p645 = scmp.ne.s32.totalorder %s640, %s642
      %p646 = scmp.eq.s32.totalorder %s113, 0
      %p647 = por %p645, %p646
      %p648 = scmp.ne.s32.totalorder %s640, %s642
      %p649 = scmp.eq.s32.totalorder %s118, 1
      %p650 = por %p648, %p649
      %p651 = scmp.ne.s32.totalorder %s642, %s643
      %p652 = scmp.eq.s32.totalorder %s118, 0
      %p653 = por %p651, %p652
      %p654 = scmp.ne.s32.totalorder %s642, %s643
      %p655 = scmp.eq.s32.totalorder %s119, 1
      %p656 = por %p654, %p655
      %p658 = scmp.ne.s32.totalorder %s643, %s657
      %p659 = scmp.eq.s32.totalorder %s119, 0
      %p660 = por %p658, %p659
      %s662 = sadd.s32 %s661, 1
      %p665 = scmp.eq.s32.totalorder %s113, 1
      %p666 = scmp.ne.s32.totalorder %s661, %s663
      %p667 = scmp.eq.s32.totalorder %s113, 0
      %p668 = por %p666, %p667
      %p669 = scmp.ne.s32.totalorder %s661, %s663
      %p670 = scmp.eq.s32.totalorder %s118, 1
      %p671 = por %p669, %p670
      %p672 = scmp.ne.s32.totalorder %s663, %s664
      %p673 = scmp.eq.s32.totalorder %s118, 0
      %p674 = por %p672, %p673
      %p675 = scmp.ne.s32.totalorder %s663, %s664
      %p676 = scmp.eq.s32.totalorder %s119, 1
      %p677 = por %p675, %p676
      %p679 = scmp.ne.s32.totalorder %s664, %s678
      %p680 = scmp.eq.s32.totalorder %s119, 0
      %p681 = por %p679, %p680
      %s683 = sadd.s32 %s682, 1
      %p686 = scmp.eq.s32.totalorder %s113, 1
      %p687 = scmp.ne.s32.totalorder %s682, %s684
      %p688 = scmp.eq.s32.totalorder %s113, 0
      %p689 = por %p687, %p688
      %p690 = scmp.ne.s32.totalorder %s682, %s684
      %p691 = scmp.eq.s32.totalorder %s118, 1
      %p692 = por %p690, %p691
      %p693 = scmp.ne.s32.totalorder %s684, %s685
      %p694 = scmp.eq.s32.totalorder %s118, 0
      %p695 = por %p693, %p694
      %p696 = scmp.ne.s32.totalorder %s684, %s685
      %p697 = scmp.eq.s32.totalorder %s119, 1
      %p698 = por %p696, %p697
      %p700 = scmp.ne.s32.totalorder %s685, %s699
      %p701 = scmp.eq.s32.totalorder %s119, 0
      %p702 = por %p700, %p701
      %s704 = sadd.s32 %s703, 1
      %p707 = scmp.eq.s32.totalorder %s113, 1
      %p708 = scmp.ne.s32.totalorder %s703, %s705
      %p709 = scmp.eq.s32.totalorder %s113, 0
      %p710 = por %p708, %p709
      %p711 = scmp.ne.s32.totalorder %s703, %s705
      %p712 = scmp.eq.s32.totalorder %s118, 1
      %p713 = por %p711, %p712
      %p714 = scmp.ne.s32.totalorder %s705, %s706
      %p715 = scmp.eq.s32.totalorder %s118, 0
      %p716 = por %p714, %p715
      %p717 = scmp.ne.s32.totalorder %s705, %s706
      %p718 = scmp.eq.s32.totalorder %s119, 1
      %p719 = por %p717, %p718
      %p721 = scmp.ne.s32.totalorder %s706, %s720
      %p722 = scmp.eq.s32.totalorder %s119, 0
      %p723 = por %p721, %p722
      %s725 = sadd.s32 %s724, 1
      %p728 = scmp.eq.s32.totalorder %s113, 1
      %p729 = scmp.ne.s32.totalorder %s724, %s726
      %p730 = scmp.eq.s32.totalorder %s113, 0
      %p731 = por %p729, %p730
      %p732 = scmp.ne.s32.totalorder %s724, %s726
      %p733 = scmp.eq.s32.totalorder %s118, 1
      %p734 = por %p732, %p733
      %p735 = scmp.ne.s32.totalorder %s726, %s727
      %p736 = scmp.eq.s32.totalorder %s118, 0
      %p737 = por %p735, %p736
      %p738 = scmp.ne.s32.totalorder %s726, %s727
      %p739 = scmp.eq.s32.totalorder %s119, 1
      %p740 = por %p738, %p739
      %p742 = scmp.ne.s32.totalorder %s727, %s741
      %p743 = scmp.eq.s32.totalorder %s119, 0
      %p744 = por %p742, %p743
      %s746 = sadd.s32 %s745, 1
      %p749 = scmp.eq.s32.totalorder %s113, 1
      %p750 = scmp.ne.s32.totalorder %s745, %s747
      %p751 = scmp.eq.s32.totalorder %s113, 0
      %p752 = por %p750, %p751
      %p753 = scmp.ne.s32.totalorder %s745, %s747
      %p754 = scmp.eq.s32.totalorder %s118, 1
      %p755 = por %p753, %p754
      %p756 = scmp.ne.s32.totalorder %s747, %s748
      %p757 = scmp.eq.s32.totalorder %s118, 0
      %p758 = por %p756, %p757
      %p759 = scmp.ne.s32.totalorder %s747, %s748
      %p760 = scmp.eq.s32.totalorder %s119, 1
      %p761 = por %p759, %p760
      %p763 = scmp.ne.s32.totalorder %s748, %s762
      %p764 = scmp.eq.s32.totalorder %s119, 0
      %p765 = por %p763, %p764
      %s767 = sadd.s32 %s766, 1
      %p770 = scmp.eq.s32.totalorder %s113, 1
      %p771 = scmp.ne.s32.totalorder %s766, %s768
      %p772 = scmp.eq.s32.totalorder %s113, 0
      %p773 = por %p771, %p772
      %p774 = scmp.ne.s32.totalorder %s766, %s768
      %p775 = scmp.eq.s32.totalorder %s118, 1
      %p776 = por %p774, %p775
      %p777 = scmp.ne.s32.totalorder %s768, %s769
      %p778 = scmp.eq.s32.totalorder %s118, 0
      %p779 = por %p777, %p778
      %p780 = scmp.ne.s32.totalorder %s768, %s769
      %p781 = scmp.eq.s32.totalorder %s119, 1
      %p782 = por %p780, %p781
      %p784 = scmp.ne.s32.totalorder %s769, %s783
      %p785 = scmp.eq.s32.totalorder %s119, 0
      %p786 = por %p784, %p785
      %s788 = sadd.s32 %s787, 1
      %p791 = scmp.eq.s32.totalorder %s113, 1
      %p792 = scmp.ne.s32.totalorder %s787, %s789
      %p793 = scmp.eq.s32.totalorder %s113, 0
      %p794 = por %p792, %p793
      %p795 = scmp.ne.s32.totalorder %s787, %s789
      %p796 = scmp.eq.s32.totalorder %s118, 1
      %p797 = por %p795, %p796
      %p798 = scmp.ne.s32.totalorder %s789, %s790
      %p799 = scmp.eq.s32.totalorder %s118, 0
      %p800 = por %p798, %p799
      %p801 = scmp.ne.s32.totalorder %s789, %s790
      %p802 = scmp.eq.s32.totalorder %s119, 1
      %p803 = por %p801, %p802
      %p805 = scmp.ne.s32.totalorder %s790, %s804
      %p806 = scmp.eq.s32.totalorder %s119, 0
      %p807 = por %p805, %p806
      %s809 = sadd.s32 %s808, 1
      %p812 = scmp.eq.s32.totalorder %s113, 1
      %p813 = scmp.ne.s32.totalorder %s808, %s810
      %p814 = scmp.eq.s32.totalorder %s113, 0
      %p815 = por %p813, %p814
      %p816 = scmp.ne.s32.totalorder %s808, %s810
      %p817 = scmp.eq.s32.totalorder %s118, 1
      %p818 = por %p816, %p817
      %p819 = scmp.ne.s32.totalorder %s810, %s811
      %p820 = scmp.eq.s32.totalorder %s118, 0
      %p821 = por %p819, %p820
      %p822 = scmp.ne.s32.totalorder %s810, %s811
      %p823 = scmp.eq.s32.totalorder %s119, 1
      %p824 = por %p822, %p823
      %p826 = scmp.ne.s32.totalorder %s811, %s825
      %p827 = scmp.eq.s32.totalorder %s119, 0
      %p828 = por %p826, %p827
      %s830 = sadd.s32 %s829, 1
      %p833 = scmp.eq.s32.totalorder %s113, 1
      %p834 = scmp.ne.s32.totalorder %s829, %s831
      %p835 = scmp.eq.s32.totalorder %s113, 0
      %p836 = por %p834, %p835
      %p837 = scmp.ne.s32.totalorder %s829, %s831
      %p838 = scmp.eq.s32.totalorder %s118, 1
      %p839 = por %p837, %p838
      %p840 = scmp.ne.s32.totalorder %s831, %s832
      %p841 = scmp.eq.s32.totalorder %s118, 0
      %p842 = por %p840, %p841
      %p843 = scmp.ne.s32.totalorder %s831, %s832
      %p844 = scmp.eq.s32.totalorder %s119, 1
      %p845 = por %p843, %p844
      %p847 = scmp.ne.s32.totalorder %s832, %s846
      %p848 = scmp.eq.s32.totalorder %s119, 0
      %p849 = por %p847, %p848
      %s851 = sadd.s32 %s850, 1
      %p854 = scmp.eq.s32.totalorder %s113, 1
      %p855 = scmp.ne.s32.totalorder %s850, %s852
      %p856 = scmp.eq.s32.totalorder %s113, 0
      %p857 = por %p855, %p856
      %p858 = scmp.ne.s32.totalorder %s850, %s852
      %p859 = scmp.eq.s32.totalorder %s118, 1
      %p860 = por %p858, %p859
      %p861 = scmp.ne.s32.totalorder %s852, %s853
      %p862 = scmp.eq.s32.totalorder %s118, 0
      %p863 = por %p861, %p862
      %p864 = scmp.ne.s32.totalorder %s852, %s853
      %p865 = scmp.eq.s32.totalorder %s119, 1
      %p866 = por %p864, %p865
      %p868 = scmp.ne.s32.totalorder %s853, %s867
      %p869 = scmp.eq.s32.totalorder %s119, 0
      %p870 = por %p868, %p869
      %s872 = sadd.s32 %s871, 1
      %p875 = scmp.eq.s32.totalorder %s113, 1
      %p876 = scmp.ne.s32.totalorder %s871, %s873
      %p877 = scmp.eq.s32.totalorder %s113, 0
      %p878 = por %p876, %p877
      %p879 = scmp.ne.s32.totalorder %s871, %s873
      %p880 = scmp.eq.s32.totalorder %s118, 1
      %p881 = por %p879, %p880
      %p882 = scmp.ne.s32.totalorder %s873, %s874
      %p883 = scmp.eq.s32.totalorder %s118, 0
      %p884 = por %p882, %p883
      %p885 = scmp.ne.s32.totalorder %s873, %s874
      %p886 = scmp.eq.s32.totalorder %s119, 1
      %p887 = por %p885, %p886
      %p889 = scmp.ne.s32.totalorder %s874, %s888
      %p890 = scmp.eq.s32.totalorder %s119, 0
      %p891 = por %p889, %p890
      %s893 = sadd.s32 %s892, 1
      %p896 = scmp.eq.s32.totalorder %s113, 1
      %p897 = scmp.ne.s32.totalorder %s892, %s894
      %p898 = scmp.eq.s32.totalorder %s113, 0
      %p899 = por %p897, %p898
      %p900 = scmp.ne.s32.totalorder %s892, %s894
      %p901 = scmp.eq.s32.totalorder %s118, 1
      %p902 = por %p900, %p901
      %p903 = scmp.ne.s32.totalorder %s894, %s895
      %p904 = scmp.eq.s32.totalorder %s118, 0
      %p905 = por %p903, %p904
      %p906 = scmp.ne.s32.totalorder %s894, %s895
      %p907 = scmp.eq.s32.totalorder %s119, 1
      %p908 = por %p906, %p907
      %p910 = scmp.ne.s32.totalorder %s895, %s909
      %p911 = scmp.eq.s32.totalorder %s119, 0
      %p912 = por %p910, %p911
      %s914 = sadd.s32 %s913, 1
      %p917 = scmp.eq.s32.totalorder %s113, 1
      %p918 = scmp.ne.s32.totalorder %s913, %s915
      %p919 = scmp.eq.s32.totalorder %s113, 0
      %p920 = por %p918, %p919
      %p921 = scmp.ne.s32.totalorder %s913, %s915
      %p922 = scmp.eq.s32.totalorder %s118, 1
      %p923 = por %p921, %p922
      %p924 = scmp.ne.s32.totalorder %s915, %s916
      %p925 = scmp.eq.s32.totalorder %s118, 0
      %p926 = por %p924, %p925
      %p927 = scmp.ne.s32.totalorder %s915, %s916
      %p928 = scmp.eq.s32.totalorder %s119, 1
      %p929 = por %p927, %p928
      %p931 = scmp.ne.s32.totalorder %s916, %s930
      %p932 = scmp.eq.s32.totalorder %s119, 0
      %p933 = por %p931, %p932
      %s935 = sadd.s32 %s934, 1
      %p938 = scmp.eq.s32.totalorder %s113, 1
      %p939 = scmp.ne.s32.totalorder %s934, %s936
      %p940 = scmp.eq.s32.totalorder %s113, 0
      %p941 = por %p939, %p940
      %p942 = scmp.ne.s32.totalorder %s934, %s936
      %p943 = scmp.eq.s32.totalorder %s118, 1
      %p944 = por %p942, %p943
      %p945 = scmp.ne.s32.totalorder %s936, %s937
      %p946 = scmp.eq.s32.totalorder %s118, 0
      %p947 = por %p945, %p946
      %p948 = scmp.ne.s32.totalorder %s936, %s937
      %p949 = scmp.eq.s32.totalorder %s119, 1
      %p950 = por %p948, %p949
      %p952 = scmp.ne.s32.totalorder %s937, %s951
      %p953 = scmp.eq.s32.totalorder %s119, 0
      %p954 = por %p952, %p953
      %s956 = sadd.s32 %s955, 1
      %p959 = scmp.eq.s32.totalorder %s113, 1
      %p960 = scmp.ne.s32.totalorder %s955, %s957
      %p961 = scmp.eq.s32.totalorder %s113, 0
      %p962 = por %p960, %p961
      %p963 = scmp.ne.s32.totalorder %s955, %s957
      %p964 = scmp.eq.s32.totalorder %s118, 1
      %p965 = por %p963, %p964
      %p966 = scmp.ne.s32.totalorder %s957, %s958
      %p967 = scmp.eq.s32.totalorder %s118, 0
      %p968 = por %p966, %p967
      %p969 = scmp.ne.s32.totalorder %s957, %s958
      %p970 = scmp.eq.s32.totalorder %s119, 1
      %p971 = por %p969, %p970
      %p973 = scmp.ne.s32.totalorder %s958, %s972
      %p974 = scmp.eq.s32.totalorder %s119, 0
      %p975 = por %p973, %p974
      %s977 = sadd.s32 %s976, 1
      %p980 = scmp.eq.s32.totalorder %s113, 1
      %p981 = scmp.ne.s32.totalorder %s976, %s978
      %p982 = scmp.eq.s32.totalorder %s113, 0
      %p983 = por %p981, %p982
      %p984 = scmp.ne.s32.totalorder %s976, %s978
      %p985 = scmp.eq.s32.totalorder %s118, 1
      %p986 = por %p984, %p985
      %p987 = scmp.ne.s32.totalorder %s978, %s979
      %p988 = scmp.eq.s32.totalorder %s118, 0
      %p989 = por %p987, %p988
      %p990 = scmp.ne.s32.totalorder %s978, %s979
      %p991 = scmp.eq.s32.totalorder %s119, 1
      %p992 = por %p990, %p991
      %p994 = scmp.ne.s32.totalorder %s979, %s993
      %p995 = scmp.eq.s32.totalorder %s119, 0
      %p996 = por %p994, %p995
      %s997 = ssub.s32 %s113, %s120
      %p998 = scmp.eq.s32.totalorder %s997, 0
      %s1000 = sadd.s32 %s999, 1
      %s1001 = scalar_select %p998, %s999, %s1000
      %p1004 = pneg %p998
      %p1005 = scmp.eq.s32.totalorder %s113, 1
      %p1006 = por %p1004, %p1005
      %p1007 = scmp.ne.s32.totalorder %s999, %s1002
      %p1008 = scmp.eq.s32.totalorder %s113, 0
      %p1009 = por %p1007, %p1008
      %p1010 = scmp.ne.s32.totalorder %s999, %s1002
      %p1011 = scmp.eq.s32.totalorder %s118, 1
      %p1012 = por %p1010, %p1011
      %p1013 = scmp.ne.s32.totalorder %s1002, %s1003
      %p1014 = scmp.eq.s32.totalorder %s118, 0
      %p1015 = por %p1013, %p1014
      %p1016 = scmp.ne.s32.totalorder %s1002, %s1003
      %p1017 = scmp.eq.s32.totalorder %s119, 1
      %p1018 = por %p1016, %p1017
      %p1020 = scmp.ne.s32.totalorder %s1003, %s1019
      %p1021 = scmp.eq.s32.totalorder %s119, 0
      %p1022 = por %p1020, %p1021
      %s1023 = ssub.s32 %s113, %s120
      %p1024 = scmp.eq.s32.totalorder %s1023, 0
      %s1026 = sadd.s32 %s1025, 1
      %s1027 = scalar_select %p1024, %s1025, %s1026
      %p1030 = pneg %p1024
      %p1031 = scmp.eq.s32.totalorder %s113, 1
      %p1032 = por %p1030, %p1031
      %p1033 = scmp.ne.s32.totalorder %s1025, %s1028
      %p1034 = scmp.eq.s32.totalorder %s113, 0
      %p1035 = por %p1033, %p1034
      %p1036 = scmp.ne.s32.totalorder %s1025, %s1028
      %p1037 = scmp.eq.s32.totalorder %s118, 1
      %p1038 = por %p1036, %p1037
      %p1039 = scmp.ne.s32.totalorder %s1028, %s1029
      %p1040 = scmp.eq.s32.totalorder %s118, 0
      %p1041 = por %p1039, %p1040
      %p1042 = scmp.ne.s32.totalorder %s1028, %s1029
      %p1043 = scmp.eq.s32.totalorder %s119, 1
      %p1044 = por %p1042, %p1043
      %p1046 = scmp.ne.s32.totalorder %s1029, %s1045
      %p1047 = scmp.eq.s32.totalorder %s119, 0
      %p1048 = por %p1046, %p1047
      %p1049 = scmp.le.s32.totalorder 1, %s113
      %p1050 = scmp.lt.s32.totalorder %s113, 3
      %p1051 = pnand %p1049, %p1050
      %p1052 = pneg %p1051
      // Predicated region
      $region9: #{tpu_custom_call.1} parent=5 // pred_check
        _
      $region10: #{tpu_custom_call.1} parent=5 // pred_check_branch
        %1054 = sbr.rel (%p1051) target = $region12
      $region11: #{tpu_custom_call.1} parent=5 // pred_region
        %s1055 = ssub.s32 %s113, 1
        // Predicated region
        $region13: #{tpu_custom_call.1} parent=11 // pred_check
          %p1056 = pneg %p212
        $region14: #{tpu_custom_call.1} parent=11 // pred_check_branch
          %1058 = sbr.rel (%p1056) target = $region16
        $region15: #{tpu_custom_call.1} parent=11 // pred_region
          %s1060 = ssub.s32 32, 32
          %1061 = vsyncadd [#allocation9], %s1060
          %s1062 = sshll.u32 [#allocation8], 4
          %s1063 = int_to_ptr.vmem [resolvable:$true] %s1062
          %1068 = dma.hbm_to_vmem [thread:$0]  %s7, 32, %s1063, [#allocation9], 16, 16, 1
        $region16: #{tpu_custom_call.1} parent=11 // pred_fallthru
          _
        // Predicated region
        $region17: #{tpu_custom_call.1} parent=11 // pred_check
          %p1069 = pneg %p233
        $region18: #{tpu_custom_call.1} parent=11 // pred_check_branch
          %1071 = sbr.rel (%p1069) target = $region20
        $region19: #{tpu_custom_call.1} parent=11 // pred_region
          %s1073 = ssub.s32 32, 32
          %1074 = vsyncadd [#allocation9], %s1073
          %s1075 = sshll.u32 [#allocation10], 4
          %s1076 = int_to_ptr.vmem [resolvable:$true] %s1075
          %1081 = dma.hbm_to_vmem [thread:$0]  %s9, 32, %s1076, [#allocation9], 16, 16, 1
        $region20: #{tpu_custom_call.1} parent=11 // pred_fallthru
          _
        // Predicated region
        $region21: #{tpu_custom_call.1} parent=11 // pred_check
          %p1082 = pneg %p254
        $region22: #{tpu_custom_call.1} parent=11 // pred_check_branch
          %1084 = sbr.rel (%p1082) target = $region24
        $region23: #{tpu_custom_call.1} parent=11 // pred_region
          _
        $region24: #{tpu_custom_call.1} parent=11 // pred_fallthru
          _
        // Predicated region
        $region25: #{tpu_custom_call.1} parent=11 // pred_check
          %p1085 = pneg %p275
        $region26: #{tpu_custom_call.1} parent=11 // pred_check_branch
          %1087 = sbr.rel (%p1085) target = $region28
        $region27: #{tpu_custom_call.1} parent=11 // pred_region
          %s1089 = ssub.s32 32, 32
          %1090 = vsyncadd [#allocation12], %s1089
          %s1091 = sshll.u32 [#allocation11], 4
          %s1092 = int_to_ptr.vmem [resolvable:$true] %s1091
          %1097 = dma.hbm_to_vmem [thread:$0]  %s13, 32, %s1092, [#allocation12], 16, 16, 1
        $region28: #{tpu_custom_call.1} parent=11 // pred_fallthru
          _
        // Predicated region
        $region29: #{tpu_custom_call.1} parent=11 // pred_check
          %p1098 = pneg %p296
        $region30: #{tpu_custom_call.1} parent=11 // pred_check_branch
          %1100 = sbr.rel (%p1098) target = $region32
        $region31: #{tpu_custom_call.1} parent=11 // pred_region
          _
        $region32: #{tpu_custom_call.1} parent=11 // pred_fallthru
          _
        // Predicated region
        $region33: #{tpu_custom_call.1} parent=11 // pred_check
          %p1101 = pneg %p317
        $region34: #{tpu_custom_call.1} parent=11 // pred_check_branch
          %1103 = sbr.rel (%p1101) target = $region36
        $region35: #{tpu_custom_call.1} parent=11 // pred_region
          %s1105 = ssub.s32 32, 32
          %1106 = vsyncadd [#allocation12], %s1105
          %s1107 = sshll.u32 [#allocation13], 4
          %s1108 = int_to_ptr.vmem [resolvable:$true] %s1107
          %1113 = dma.hbm_to_vmem [thread:$0]  %s17, 32, %s1108, [#allocation12], 16, 16, 1
        $region36: #{tpu_custom_call.1} parent=11 // pred_fallthru
          _
        // Predicated region
        $region37: #{tpu_custom_call.1} parent=11 // pred_check
          %p1114 = pneg %p338
        $region38: #{tpu_custom_call.1} parent=11 // pred_check_branch
          %1116 = sbr.rel (%p1114) target = $region40
        $region39: #{tpu_custom_call.1} parent=11 // pred_region
          %s1118 = ssub.s32 32, 32
          %1119 = vsyncadd [#allocation15], %s1118
          %s1120 = sshll.u32 [#allocation14], 4
          %s1121 = int_to_ptr.vmem [resolvable:$true] %s1120
          %1126 = dma.hbm_to_vmem [thread:$0]  %s19, 32, %s1121, [#allocation15], 16, 16, 1
        $region40: #{tpu_custom_call.1} parent=11 // pred_fallthru
          _
        // Predicated region
        $region41: #{tpu_custom_call.1} parent=11 // pred_check
          %p1127 = pneg %p359
        $region42: #{tpu_custom_call.1} parent=11 // pred_check_branch
          %1129 = sbr.rel (%p1127) target = $region44
        $region43: #{tpu_custom_call.1} parent=11 // pred_region
          %s1131 = ssub.s32 32, 32
          %1132 = vsyncadd [#allocation15], %s1131
          %s1133 = sshll.u32 [#allocation16], 4
          %s1134 = int_to_ptr.vmem [resolvable:$true] %s1133
          %1139 = dma.hbm_to_vmem [thread:$0]  %s21, 32, %s1134, [#allocation15], 16, 16, 1
        $region44: #{tpu_custom_call.1} parent=11 // pred_fallthru
          _
        // Predicated region
        $region45: #{tpu_custom_call.1} parent=11 // pred_check
          %p1140 = pneg %p380
        $region46: #{tpu_custom_call.1} parent=11 // pred_check_branch
          %1142 = sbr.rel (%p1140) target = $region48
        $region47: #{tpu_custom_call.1} parent=11 // pred_region
          _
        $region48: #{tpu_custom_call.1} parent=11 // pred_fallthru
          _
        // Predicated region
        $region49: #{tpu_custom_call.1} parent=11 // pred_check
          %p1143 = pneg %p401
        $region50: #{tpu_custom_call.1} parent=11 // pred_check_branch
          %1145 = sbr.rel (%p1143) target = $region52
        $region51: #{tpu_custom_call.1} parent=11 // pred_region
          %s1147 = ssub.s32 32, 32
          %1148 = vsyncadd [#allocation18], %s1147
          %s1149 = sshll.u32 [#allocation17], 4
          %s1150 = int_to_ptr.vmem [resolvable:$true] %s1149
          %1155 = dma.hbm_to_vmem [thread:$0]  %s25, 32, %s1150, [#allocation18], 16, 16, 1
        $region52: #{tpu_custom_call.1} parent=11 // pred_fallthru
          _
        // Predicated region
        $region53: #{tpu_custom_call.1} parent=11 // pred_check
          %p1156 = pneg %p422
        $region54: #{tpu_custom_call.1} parent=11 // pred_check_branch
          %1158 = sbr.rel (%p1156) target = $region56
        $region55: #{tpu_custom_call.1} parent=11 // pred_region
          _
        $region56: #{tpu_custom_call.1} parent=11 // pred_fallthru
          _
        // Predicated region
        $region57: #{tpu_custom_call.1} parent=11 // pred_check
          %p1159 = pneg %p443
        $region58: #{tpu_custom_call.1} parent=11 // pred_check_branch
          %1161 = sbr.rel (%p1159) target = $region60
        $region59: #{tpu_custom_call.1} parent=11 // pred_region
          %s1163 = ssub.s32 32, 32
          %1164 = vsyncadd [#allocation18], %s1163
          %s1165 = sshll.u32 [#allocation19], 4
          %s1166 = int_to_ptr.vmem [resolvable:$true] %s1165
          %1171 = dma.hbm_to_vmem [thread:$0]  %s29, 32, %s1166, [#allocation18], 16, 16, 1
        $region60: #{tpu_custom_call.1} parent=11 // pred_fallthru
          _
        // Predicated region
        $region61: #{tpu_custom_call.1} parent=11 // pred_check
          %p1172 = pneg %p464
        $region62: #{tpu_custom_call.1} parent=11 // pred_check_branch
          %1174 = sbr.rel (%p1172) target = $region64
        $region63: #{tpu_custom_call.1} parent=11 // pred_region
          %s1176 = ssub.s32 16, 16
          %1177 = vsyncadd [#allocation21], %s1176
          %s1179 = sshll.u32 [#allocation20], 4
          %s1180 = int_to_ptr.vmem [resolvable:$true] %s1179
          %1182 = dma.hbm_to_vmem [thread:$0]  %s31, 16, %s1180, [#allocation21]
        $region64: #{tpu_custom_call.1} parent=11 // pred_fallthru
          _
        // Predicated region
        $region65: #{tpu_custom_call.1} parent=11 // pred_check
          %p1183 = pneg %p485
        $region66: #{tpu_custom_call.1} parent=11 // pred_check_branch
          %1185 = sbr.rel (%p1183) target = $region68
        $region67: #{tpu_custom_call.1} parent=11 // pred_region
          %s1187 = ssub.s32 16, 16
          %1188 = vsyncadd [#allocation21], %s1187
          %s1190 = sshll.u32 [#allocation22], 4
          %s1191 = int_to_ptr.vmem [resolvable:$true] %s1190
          %1193 = dma.hbm_to_vmem [thread:$0]  %s33, 16, %s1191, [#allocation21]
        $region68: #{tpu_custom_call.1} parent=11 // pred_fallthru
          _
        // Predicated region
        $region69: #{tpu_custom_call.1} parent=11 // pred_check
          %p1194 = pneg %p506
        $region70: #{tpu_custom_call.1} parent=11 // pred_check_branch
          %1196 = sbr.rel (%p1194) target = $region72
        $region71: #{tpu_custom_call.1} parent=11 // pred_region
          %s1198 = ssub.s32 32, 32
          %1199 = vsyncadd [#allocation24], %s1198
          %s1200 = sshll.u32 [#allocation23], 4
          %s1201 = int_to_ptr.vmem [resolvable:$true] %s1200
          %1206 = dma.hbm_to_vmem [thread:$0]  %s35, 32, %s1201, [#allocation24], 16, 16, 1
        $region72: #{tpu_custom_call.1} parent=11 // pred_fallthru
          _
        // Predicated region
        $region73: #{tpu_custom_call.1} parent=11 // pred_check
          %p1207 = pneg %p527
        $region74: #{tpu_custom_call.1} parent=11 // pred_check_branch
          %1209 = sbr.rel (%p1207) target = $region76
        $region75: #{tpu_custom_call.1} parent=11 // pred_region
          %s1211 = ssub.s32 32, 32
          %1212 = vsyncadd [#allocation24], %s1211
          %s1213 = sshll.u32 [#allocation25], 4
          %s1214 = int_to_ptr.vmem [resolvable:$true] %s1213
          %1219 = dma.hbm_to_vmem [thread:$0]  %s37, 32, %s1214, [#allocation24], 16, 16, 1
        $region76: #{tpu_custom_call.1} parent=11 // pred_fallthru
          _
        // Predicated region
        $region77: #{tpu_custom_call.1} parent=11 // pred_check
          %p1220 = pneg %p548
        $region78: #{tpu_custom_call.1} parent=11 // pred_check_branch
          %1222 = sbr.rel (%p1220) target = $region80
        $region79: #{tpu_custom_call.1} parent=11 // pred_region
          _
        $region80: #{tpu_custom_call.1} parent=11 // pred_fallthru
          _
        // Predicated region
        $region81: #{tpu_custom_call.1} parent=11 // pred_check
          %p1223 = pneg %p569
        $region82: #{tpu_custom_call.1} parent=11 // pred_check_branch
          %1225 = sbr.rel (%p1223) target = $region84
        $region83: #{tpu_custom_call.1} parent=11 // pred_region
          %s1227 = ssub.s32 32, 32
          %1228 = vsyncadd [#allocation27], %s1227
          %s1229 = sshll.u32 [#allocation26], 4
          %s1230 = int_to_ptr.vmem [resolvable:$true] %s1229
          %1235 = dma.hbm_to_vmem [thread:$0]  %s41, 32, %s1230, [#allocation27], 16, 16, 1
        $region84: #{tpu_custom_call.1} parent=11 // pred_fallthru
          _
        // Predicated region
        $region85: #{tpu_custom_call.1} parent=11 // pred_check
          %p1236 = pneg %p590
        $region86: #{tpu_custom_call.1} parent=11 // pred_check_branch
          %1238 = sbr.rel (%p1236) target = $region88
        $region87: #{tpu_custom_call.1} parent=11 // pred_region
          _
        $region88: #{tpu_custom_call.1} parent=11 // pred_fallthru
          _
        // Predicated region
        $region89: #{tpu_custom_call.1} parent=11 // pred_check
          %p1239 = pneg %p611
        $region90: #{tpu_custom_call.1} parent=11 // pred_check_branch
          %1241 = sbr.rel (%p1239) target = $region92
        $region91: #{tpu_custom_call.1} parent=11 // pred_region
          %s1243 = ssub.s32 32, 32
          %1244 = vsyncadd [#allocation27], %s1243
          %s1245 = sshll.u32 [#allocation28], 4
          %s1246 = int_to_ptr.vmem [resolvable:$true] %s1245
          %1251 = dma.hbm_to_vmem [thread:$0]  %s45, 32, %s1246, [#allocation27], 16, 16, 1
        $region92: #{tpu_custom_call.1} parent=11 // pred_fallthru
          _
        // Predicated region
        $region93: #{tpu_custom_call.1} parent=11 // pred_check
          %p1252 = pneg %p632
        $region94: #{tpu_custom_call.1} parent=11 // pred_check_branch
          %1254 = sbr.rel (%p1252) target = $region96
        $region95: #{tpu_custom_call.1} parent=11 // pred_region
          %s1256 = ssub.s32 32, 32
          %1257 = vsyncadd [#allocation30], %s1256
          %s1258 = sshll.u32 [#allocation29], 4
          %s1259 = int_to_ptr.vmem [resolvable:$true] %s1258
          %1264 = dma.hbm_to_vmem [thread:$0]  %s47, 32, %s1259, [#allocation30], 16, 16, 1
        $region96: #{tpu_custom_call.1} parent=11 // pred_fallthru
          _
        // Predicated region
        $region97: #{tpu_custom_call.1} parent=11 // pred_check
          %p1265 = pneg %p653
        $region98: #{tpu_custom_call.1} parent=11 // pred_check_branch
          %1267 = sbr.rel (%p1265) target = $region100
        $region99: #{tpu_custom_call.1} parent=11 // pred_region
          %s1269 = ssub.s32 32, 32
          %1270 = vsyncadd [#allocation30], %s1269
          %s1271 = sshll.u32 [#allocation31], 4
          %s1272 = int_to_ptr.vmem [resolvable:$true] %s1271
          %1277 = dma.hbm_to_vmem [thread:$0]  %s49, 32, %s1272, [#allocation30], 16, 16, 1
        $region100: #{tpu_custom_call.1} parent=11 // pred_fallthru
          _
        // Predicated region
        $region101: #{tpu_custom_call.1} parent=11 // pred_check
          %p1278 = pneg %p674
        $region102: #{tpu_custom_call.1} parent=11 // pred_check_branch
          %1280 = sbr.rel (%p1278) target = $region104
        $region103: #{tpu_custom_call.1} parent=11 // pred_region
          _
        $region104: #{tpu_custom_call.1} parent=11 // pred_fallthru
          _
        // Predicated region
        $region105: #{tpu_custom_call.1} parent=11 // pred_check
          %p1281 = pneg %p695
        $region106: #{tpu_custom_call.1} parent=11 // pred_check_branch
          %1283 = sbr.rel (%p1281) target = $region108
        $region107: #{tpu_custom_call.1} parent=11 // pred_region
          %s1285 = ssub.s32 32, 32
          %1286 = vsyncadd [#allocation33], %s1285
          %s1287 = sshll.u32 [#allocation32], 4
          %s1288 = int_to_ptr.vmem [resolvable:$true] %s1287
          %1293 = dma.hbm_to_vmem [thread:$0]  %s53, 32, %s1288, [#allocation33], 16, 16, 1
        $region108: #{tpu_custom_call.1} parent=11 // pred_fallthru
          _
        // Predicated region
        $region109: #{tpu_custom_call.1} parent=11 // pred_check
          %p1294 = pneg %p716
        $region110: #{tpu_custom_call.1} parent=11 // pred_check_branch
          %1296 = sbr.rel (%p1294) target = $region112
        $region111: #{tpu_custom_call.1} parent=11 // pred_region
          _
        $region112: #{tpu_custom_call.1} parent=11 // pred_fallthru
          _
        // Predicated region
        $region113: #{tpu_custom_call.1} parent=11 // pred_check
          %p1297 = pneg %p737
        $region114: #{tpu_custom_call.1} parent=11 // pred_check_branch
          %1299 = sbr.rel (%p1297) target = $region116
        $region115: #{tpu_custom_call.1} parent=11 // pred_region
          _
        $region116: #{tpu_custom_call.1} parent=11 // pred_fallthru
          _
        // Predicated region
        $region117: #{tpu_custom_call.1} parent=11 // pred_check
          %p1300 = pneg %p758
        $region118: #{tpu_custom_call.1} parent=11 // pred_check_branch
          %1302 = sbr.rel (%p1300) target = $region120
        $region119: #{tpu_custom_call.1} parent=11 // pred_region
          _
        $region120: #{tpu_custom_call.1} parent=11 // pred_fallthru
          _
        // Predicated region
        $region121: #{tpu_custom_call.1} parent=11 // pred_check
          %p1303 = pneg %p779
        $region122: #{tpu_custom_call.1} parent=11 // pred_check_branch
          %1305 = sbr.rel (%p1303) target = $region124
        $region123: #{tpu_custom_call.1} parent=11 // pred_region
          _
        $region124: #{tpu_custom_call.1} parent=11 // pred_fallthru
          _
        // Predicated region
        $region125: #{tpu_custom_call.1} parent=11 // pred_check
          %p1306 = pneg %p800
        $region126: #{tpu_custom_call.1} parent=11 // pred_check_branch
          %1308 = sbr.rel (%p1306) target = $region128
        $region127: #{tpu_custom_call.1} parent=11 // pred_region
          _
        $region128: #{tpu_custom_call.1} parent=11 // pred_fallthru
          _
        // Predicated region
        $region129: #{tpu_custom_call.1} parent=11 // pred_check
          %p1309 = pneg %p821
        $region130: #{tpu_custom_call.1} parent=11 // pred_check_branch
          %1311 = sbr.rel (%p1309) target = $region132
        $region131: #{tpu_custom_call.1} parent=11 // pred_region
          _
        $region132: #{tpu_custom_call.1} parent=11 // pred_fallthru
          _
        // Predicated region
        $region133: #{tpu_custom_call.1} parent=11 // pred_check
          %p1312 = pneg %p842
        $region134: #{tpu_custom_call.1} parent=11 // pred_check_branch
          %1314 = sbr.rel (%p1312) target = $region136
        $region135: #{tpu_custom_call.1} parent=11 // pred_region
          %s1316 = ssub.s32 512, 512
          %1317 = vsyncadd [#allocation33], %s1316
          %s1318 = sshll.u32 [#allocation34], 4
          %s1319 = int_to_ptr.vmem [resolvable:$true] %s1318
          %1324 = dma.hbm_to_vmem [thread:$0]  %s67, 512, %s1319, [#allocation33], 64, 64, 4
        $region136: #{tpu_custom_call.1} parent=11 // pred_fallthru
          _
        // Predicated region
        $region137: #{tpu_custom_call.1} parent=11 // pred_check
          %p1325 = pneg %p863
        $region138: #{tpu_custom_call.1} parent=11 // pred_check_branch
          %1327 = sbr.rel (%p1325) target = $region140
        $region139: #{tpu_custom_call.1} parent=11 // pred_region
          _
        $region140: #{tpu_custom_call.1} parent=11 // pred_fallthru
          _
        // Predicated region
        $region141: #{tpu_custom_call.1} parent=11 // pred_check
          %p1328 = pneg %p884
        $region142: #{tpu_custom_call.1} parent=11 // pred_check_branch
          %1330 = sbr.rel (%p1328) target = $region144
        $region143: #{tpu_custom_call.1} parent=11 // pred_region
          _
        $region144: #{tpu_custom_call.1} parent=11 // pred_fallthru
          _
        // Predicated region
        $region145: #{tpu_custom_call.1} parent=11 // pred_check
          %p1331 = pneg %p905
        $region146: #{tpu_custom_call.1} parent=11 // pred_check_branch
          %1333 = sbr.rel (%p1331) target = $region148
        $region147: #{tpu_custom_call.1} parent=11 // pred_region
          _
        $region148: #{tpu_custom_call.1} parent=11 // pred_fallthru
          _
        // Predicated region
        $region149: #{tpu_custom_call.1} parent=11 // pred_check
          %p1334 = pneg %p926
        $region150: #{tpu_custom_call.1} parent=11 // pred_check_branch
          %1336 = sbr.rel (%p1334) target = $region152
        $region151: #{tpu_custom_call.1} parent=11 // pred_region
          _
        $region152: #{tpu_custom_call.1} parent=11 // pred_fallthru
          _
        // Predicated region
        $region153: #{tpu_custom_call.1} parent=11 // pred_check
          %p1337 = pneg %p947
        $region154: #{tpu_custom_call.1} parent=11 // pred_check_branch
          %1339 = sbr.rel (%p1337) target = $region156
        $region155: #{tpu_custom_call.1} parent=11 // pred_region
          _
        $region156: #{tpu_custom_call.1} parent=11 // pred_fallthru
          _
        // Predicated region
        $region157: #{tpu_custom_call.1} parent=11 // pred_check
          %p1340 = pneg %p968
        $region158: #{tpu_custom_call.1} parent=11 // pred_check_branch
          %1342 = sbr.rel (%p1340) target = $region160
        $region159: #{tpu_custom_call.1} parent=11 // pred_region
          _
        $region160: #{tpu_custom_call.1} parent=11 // pred_fallthru
          _
        // Predicated region
        $region161: #{tpu_custom_call.1} parent=11 // pred_check
          %p1343 = pneg %p989
        $region162: #{tpu_custom_call.1} parent=11 // pred_check_branch
          %1345 = sbr.rel (%p1343) target = $region164
        $region163: #{tpu_custom_call.1} parent=11 // pred_region
          _
        $region164: #{tpu_custom_call.1} parent=11 // pred_fallthru
          _
      $region12: #{tpu_custom_call.1} parent=5 // pred_fallthru
        _
      %p1346 = scmp.lt.s32.totalorder %s113, 2
      // Predicated region
      $region165: #{tpu_custom_call.1} parent=5 // pred_check
        %p1347 = pneg %p1346
      $region166: #{tpu_custom_call.1} parent=5 // pred_check_branch
        %1349 = sbr.rel (%p1347) target = $region168
      $region167: #{tpu_custom_call.1} parent=5 // pred_region
        // Predicated region
        $region169: #{tpu_custom_call.1} parent=167 // pred_check
          %p1350 = pneg %p133
        $region170: #{tpu_custom_call.1} parent=167 // pred_check_branch
          %1352 = sbr.rel (%p1350) target = $region172
        $region171: #{tpu_custom_call.1} parent=167 // pred_region
          %s1353 = sand.u32 %s123, 1
          %s1354 = scalar_lea.sflag [#allocation3], %s1353
          %s1355 = sand.u32 %s123, 1
          %s1356 = smul.addr %s1355, 8
          %s1357 = scalar_lea.vmem [#allocation2], %s1356
          %s1359 = ssub.s32 128, 128
          %1360 = vsyncadd %s1354, %s1359
          %s1361 = smul.addr %s113, 128
          %s1362 = scalar_lea.hbm %s1, %s1361
          %s1364 = sshll.u32 %s1357, 4
          %s1365 = int_to_ptr.vmem [resolvable:$true] %s1364
          %1367 = dma.hbm_to_vmem [thread:$0]  %s1362, 128, %s1365, %s1354
        $region172: #{tpu_custom_call.1} parent=167 // pred_fallthru
          _
        // Predicated region
        $region173: #{tpu_custom_call.1} parent=167 // pred_check
          %p1368 = pneg %p159
        $region174: #{tpu_custom_call.1} parent=167 // pred_check_branch
          %1370 = sbr.rel (%p1368) target = $region176
        $region175: #{tpu_custom_call.1} parent=167 // pred_region
          %s1371 = sand.u32 %s113, 1
          %s1372 = scalar_lea.sflag [#allocation6], %s1371
          %s1373 = sand.u32 %s149, 1
          %s1374 = smul.addr %s1373, 8
          %s1375 = scalar_lea.vmem [#allocation5], %s1374
          %s1377 = ssub.s32 128, 128
          %1378 = vsyncadd %s1372, %s1377
          %s1379 = smul.addr %s113, 128
          %s1380 = scalar_lea.hbm %s3, %s1379
          %s1382 = sshll.u32 %s1375, 4
          %s1383 = int_to_ptr.vmem [resolvable:$true] %s1382
          %1385 = dma.hbm_to_vmem [thread:$0]  %s1380, 128, %s1383, %s1372
        $region176: #{tpu_custom_call.1} parent=167 // pred_fallthru
          _
        // Predicated region
        $region177: #{tpu_custom_call.1} parent=167 // pred_check
          %p1386 = pneg %p185
        $region178: #{tpu_custom_call.1} parent=167 // pred_check_branch
          %1388 = sbr.rel (%p1386) target = $region180
        $region179: #{tpu_custom_call.1} parent=167 // pred_region
          %s1389 = sand.u32 %s113, 1
          %s1390 = scalar_lea.sflag [#allocation6], %s1389
          %s1391 = sand.u32 %s175, 1
          %s1392 = smul.addr %s1391, 8
          %s1393 = scalar_lea.vmem [#allocation7], %s1392
          %s1395 = ssub.s32 128, 128
          %1396 = vsyncadd %s1390, %s1395
          %s1397 = smul.addr %s113, 128
          %s1398 = scalar_lea.hbm %s5, %s1397
          %s1400 = sshll.u32 %s1393, 4
          %s1401 = int_to_ptr.vmem [resolvable:$true] %s1400
          %1403 = dma.hbm_to_vmem [thread:$0]  %s1398, 128, %s1401, %s1390
        $region180: #{tpu_custom_call.1} parent=167 // pred_fallthru
          _
      $region168: #{tpu_custom_call.1} parent=5 // pred_fallthru
        _
      %p1404 = scmp.le.s32.totalorder 1, %s113
      %p1405 = scmp.lt.s32.totalorder %s113, 3
      %p1406 = pnand %p1404, %p1405
      %p1407 = pneg %p1406
      // Predicated region
      $region181: #{tpu_custom_call.1} parent=5 // pred_check
        _
      $region182: #{tpu_custom_call.1} parent=5 // pred_check_branch
        %1409 = sbr.rel (%p1406) target = $region184
      $region183: #{tpu_custom_call.1} parent=5 // pred_region
        %s1410 = ssub.s32 %s113, 1
        %s1411 = sand.u32 %s126, 1
        %s1412 = scalar_lea.sflag [#allocation3], %s1411
        %s1413 = sand.u32 %s126, 1
        %s1414 = smul.addr %s1413, 8
        %s1415 = scalar_lea.vmem [#allocation2], %s1414
        // Predicated region
        $region185: #{tpu_custom_call.1} parent=183 // pred_check
          %p1416 = pneg %p139
        $region186: #{tpu_custom_call.1} parent=183 // pred_check_branch
          %1418 = sbr.rel (%p1416) target = $region188
        $region187: #{tpu_custom_call.1} parent=183 // pred_region
          %1419 = dma.done %s1412, 128
        $region188: #{tpu_custom_call.1} parent=183 // pred_fallthru
          _
        %s1420 = sand.u32 %s118, 1
        %s1421 = scalar_lea.sflag [#allocation6], %s1420
        %s1422 = sand.u32 %s152, 1
        %s1423 = smul.addr %s1422, 8
        %s1424 = scalar_lea.vmem [#allocation5], %s1423
        // Predicated region
        $region189: #{tpu_custom_call.1} parent=183 // pred_check
          %p1425 = pneg %p165
        $region190: #{tpu_custom_call.1} parent=183 // pred_check_branch
          %1427 = sbr.rel (%p1425) target = $region192
        $region191: #{tpu_custom_call.1} parent=183 // pred_region
          %1428 = dma.done %s1421, 128
        $region192: #{tpu_custom_call.1} parent=183 // pred_fallthru
          _
        %s1429 = sand.u32 %s118, 1
        %s1430 = scalar_lea.sflag [#allocation6], %s1429
        %s1431 = sand.u32 %s178, 1
        %s1432 = smul.addr %s1431, 8
        %s1433 = scalar_lea.vmem [#allocation7], %s1432
        // Predicated region
        $region193: #{tpu_custom_call.1} parent=183 // pred_check
          %p1434 = pneg %p191
        $region194: #{tpu_custom_call.1} parent=183 // pred_check_branch
          %1436 = sbr.rel (%p1434) target = $region196
        $region195: #{tpu_custom_call.1} parent=183 // pred_region
          %1437 = dma.done %s1430, 128
        $region196: #{tpu_custom_call.1} parent=183 // pred_fallthru
          _
        // Predicated region
        $region197: #{tpu_custom_call.1} parent=183 // pred_check
          %p1438 = pneg %p212
        $region198: #{tpu_custom_call.1} parent=183 // pred_check_branch
          %1440 = sbr.rel (%p1438) target = $region200
        $region199: #{tpu_custom_call.1} parent=183 // pred_region
          %1441 = dma.done [#allocation9], 32
        $region200: #{tpu_custom_call.1} parent=183 // pred_fallthru
          _
        // Predicated region
        $region201: #{tpu_custom_call.1} parent=183 // pred_check
          %p1442 = pneg %p233
        $region202: #{tpu_custom_call.1} parent=183 // pred_check_branch
          %1444 = sbr.rel (%p1442) target = $region204
        $region203: #{tpu_custom_call.1} parent=183 // pred_region
          %1445 = dma.done [#allocation9], 32
        $region204: #{tpu_custom_call.1} parent=183 // pred_fallthru
          _
        // Predicated region
        $region205: #{tpu_custom_call.1} parent=183 // pred_check
          %p1446 = pneg %p275
        $region206: #{tpu_custom_call.1} parent=183 // pred_check_branch
          %1448 = sbr.rel (%p1446) target = $region208
        $region207: #{tpu_custom_call.1} parent=183 // pred_region
          %1449 = dma.done [#allocation12], 32
        $region208: #{tpu_custom_call.1} parent=183 // pred_fallthru
          _
        // Predicated region
        $region209: #{tpu_custom_call.1} parent=183 // pred_check
          %p1450 = pneg %p317
        $region210: #{tpu_custom_call.1} parent=183 // pred_check_branch
          %1452 = sbr.rel (%p1450) target = $region212
        $region211: #{tpu_custom_call.1} parent=183 // pred_region
          %1453 = dma.done [#allocation12], 32
        $region212: #{tpu_custom_call.1} parent=183 // pred_fallthru
          _
        // Predicated region
        $region213: #{tpu_custom_call.1} parent=183 // pred_check
          %p1454 = pneg %p338
        $region214: #{tpu_custom_call.1} parent=183 // pred_check_branch
          %1456 = sbr.rel (%p1454) target = $region216
        $region215: #{tpu_custom_call.1} parent=183 // pred_region
          %1457 = dma.done [#allocation15], 32
        $region216: #{tpu_custom_call.1} parent=183 // pred_fallthru
          _
        // Predicated region
        $region217: #{tpu_custom_call.1} parent=183 // pred_check
          %p1458 = pneg %p359
        $region218: #{tpu_custom_call.1} parent=183 // pred_check_branch
          %1460 = sbr.rel (%p1458) target = $region220
        $region219: #{tpu_custom_call.1} parent=183 // pred_region
          %1461 = dma.done [#allocation15], 32
        $region220: #{tpu_custom_call.1} parent=183 // pred_fallthru
          _
        // Predicated region
        $region221: #{tpu_custom_call.1} parent=183 // pred_check
          %p1462 = pneg %p401
        $region222: #{tpu_custom_call.1} parent=183 // pred_check_branch
          %1464 = sbr.rel (%p1462) target = $region224
        $region223: #{tpu_custom_call.1} parent=183 // pred_region
          %1465 = dma.done [#allocation18], 32
        $region224: #{tpu_custom_call.1} parent=183 // pred_fallthru
          _
        // Predicated region
        $region225: #{tpu_custom_call.1} parent=183 // pred_check
          %p1466 = pneg %p443
        $region226: #{tpu_custom_call.1} parent=183 // pred_check_branch
          %1468 = sbr.rel (%p1466) target = $region228
        $region227: #{tpu_custom_call.1} parent=183 // pred_region
          %1469 = dma.done [#allocation18], 32
        $region228: #{tpu_custom_call.1} parent=183 // pred_fallthru
          _
        // Predicated region
        $region229: #{tpu_custom_call.1} parent=183 // pred_check
          %p1470 = pneg %p464
        $region230: #{tpu_custom_call.1} parent=183 // pred_check_branch
          %1472 = sbr.rel (%p1470) target = $region232
        $region231: #{tpu_custom_call.1} parent=183 // pred_region
          %1473 = dma.done [#allocation21], 16
        $region232: #{tpu_custom_call.1} parent=183 // pred_fallthru
          _
        // Predicated region
        $region233: #{tpu_custom_call.1} parent=183 // pred_check
          %p1474 = pneg %p485
        $region234: #{tpu_custom_call.1} parent=183 // pred_check_branch
          %1476 = sbr.rel (%p1474) target = $region236
        $region235: #{tpu_custom_call.1} parent=183 // pred_region
          %1477 = dma.done [#allocation21], 16
        $region236: #{tpu_custom_call.1} parent=183 // pred_fallthru
          _
        // Predicated region
        $region237: #{tpu_custom_call.1} parent=183 // pred_check
          %p1478 = pneg %p506
        $region238: #{tpu_custom_call.1} parent=183 // pred_check_branch
          %1480 = sbr.rel (%p1478) target = $region240
        $region239: #{tpu_custom_call.1} parent=183 // pred_region
          %1481 = dma.done [#allocation24], 32
        $region240: #{tpu_custom_call.1} parent=183 // pred_fallthru
          _
        // Predicated region
        $region241: #{tpu_custom_call.1} parent=183 // pred_check
          %p1482 = pneg %p527
        $region242: #{tpu_custom_call.1} parent=183 // pred_check_branch
          %1484 = sbr.rel (%p1482) target = $region244
        $region243: #{tpu_custom_call.1} parent=183 // pred_region
          %1485 = dma.done [#allocation24], 32
        $region244: #{tpu_custom_call.1} parent=183 // pred_fallthru
          _
        // Predicated region
        $region245: #{tpu_custom_call.1} parent=183 // pred_check
          %p1486 = pneg %p569
        $region246: #{tpu_custom_call.1} parent=183 // pred_check_branch
          %1488 = sbr.rel (%p1486) target = $region248
        $region247: #{tpu_custom_call.1} parent=183 // pred_region
          %1489 = dma.done [#allocation27], 32
        $region248: #{tpu_custom_call.1} parent=183 // pred_fallthru
          _
        // Predicated region
        $region249: #{tpu_custom_call.1} parent=183 // pred_check
          %p1490 = pneg %p611
        $region250: #{tpu_custom_call.1} parent=183 // pred_check_branch
          %1492 = sbr.rel (%p1490) target = $region252
        $region251: #{tpu_custom_call.1} parent=183 // pred_region
          %1493 = dma.done [#allocation27], 32
        $region252: #{tpu_custom_call.1} parent=183 // pred_fallthru
          _
        // Predicated region
        $region253: #{tpu_custom_call.1} parent=183 // pred_check
          %p1494 = pneg %p632
        $region254: #{tpu_custom_call.1} parent=183 // pred_check_branch
          %1496 = sbr.rel (%p1494) target = $region256
        $region255: #{tpu_custom_call.1} parent=183 // pred_region
          %1497 = dma.done [#allocation30], 32
        $region256: #{tpu_custom_call.1} parent=183 // pred_fallthru
          _
        // Predicated region
        $region257: #{tpu_custom_call.1} parent=183 // pred_check
          %p1498 = pneg %p653
        $region258: #{tpu_custom_call.1} parent=183 // pred_check_branch
          %1500 = sbr.rel (%p1498) target = $region260
        $region259: #{tpu_custom_call.1} parent=183 // pred_region
          %1501 = dma.done [#allocation30], 32
        $region260: #{tpu_custom_call.1} parent=183 // pred_fallthru
          _
        // Predicated region
        $region261: #{tpu_custom_call.1} parent=183 // pred_check
          %p1502 = pneg %p695
        $region262: #{tpu_custom_call.1} parent=183 // pred_check_branch
          %1504 = sbr.rel (%p1502) target = $region264
        $region263: #{tpu_custom_call.1} parent=183 // pred_region
          %1505 = dma.done [#allocation33], 32
        $region264: #{tpu_custom_call.1} parent=183 // pred_fallthru
          _
        // Predicated region
        $region265: #{tpu_custom_call.1} parent=183 // pred_check
          %p1506 = pneg %p842
        $region266: #{tpu_custom_call.1} parent=183 // pred_check_branch
          %1508 = sbr.rel (%p1506) target = $region268
        $region267: #{tpu_custom_call.1} parent=183 // pred_region
          %1509 = dma.done [#allocation33], 512
        $region268: #{tpu_custom_call.1} parent=183 // pred_fallthru
          _
        %s1510 = sand.u32 %s126, 1
        %s1511 = scalar_lea.sflag [#allocation3], %s1510
        %s1512 = sand.u32 %s126, 1
        %s1513 = smul.addr %s1512, 8
        %s1514 = scalar_lea.vmem [#allocation2], %s1513
        %p1515 = pneg %p139
        %p1516 = pneg %p136
        %s1517 = sand.u32 %s118, 1
        %s1518 = scalar_lea.sflag [#allocation6], %s1517
        %s1519 = sand.u32 %s152, 1
        %s1520 = smul.addr %s1519, 8
        %s1521 = scalar_lea.vmem [#allocation5], %s1520
        %p1522 = pneg %p165
        %p1523 = pneg %p162
        %s1524 = sand.u32 %s118, 1
        %s1525 = scalar_lea.sflag [#allocation6], %s1524
        %s1526 = sand.u32 %s178, 1
        %s1527 = smul.addr %s1526, 8
        %s1528 = scalar_lea.vmem [#allocation7], %s1527
        %p1529 = pneg %p191
        %p1530 = pneg %p188
        %p1531 = pneg %p212
        %p1532 = pneg %p209
        %p1533 = pneg %p233
        %p1534 = pneg %p230
        %p1535 = pneg %p254
        %p1536 = pneg %p251
        %p1537 = pneg %p275
        %p1538 = pneg %p272
        %p1539 = pneg %p296
        %p1540 = pneg %p293
        %p1541 = pneg %p317
        %p1542 = pneg %p314
        %p1543 = pneg %p338
        %p1544 = pneg %p335
        %p1545 = pneg %p359
        %p1546 = pneg %p356
        %p1547 = pneg %p380
        %p1548 = pneg %p377
        %p1549 = pneg %p401
        %p1550 = pneg %p398
        %p1551 = pneg %p422
        %p1552 = pneg %p419
        %p1553 = pneg %p443
        %p1554 = pneg %p440
        %p1555 = pneg %p464
        %p1556 = pneg %p461
        %p1557 = pneg %p485
        %p1558 = pneg %p482
        %p1559 = pneg %p506
        %p1560 = pneg %p503
        %p1561 = pneg %p527
        %p1562 = pneg %p524
        %p1563 = pneg %p548
        %p1564 = pneg %p545
        %p1565 = pneg %p569
        %p1566 = pneg %p566
        %p1567 = pneg %p590
        %p1568 = pneg %p587
        %p1569 = pneg %p611
        %p1570 = pneg %p608
        %p1571 = pneg %p632
        %p1572 = pneg %p629
        %p1573 = pneg %p653
        %p1574 = pneg %p650
        %p1575 = pneg %p674
        %p1576 = pneg %p671
        %p1577 = pneg %p695
        %p1578 = pneg %p692
        %p1579 = pneg %p716
        %p1580 = pneg %p713
        %p1581 = pneg %p737
        %p1582 = pneg %p734
        %p1583 = pneg %p758
        %p1584 = pneg %p755
        %p1585 = pneg %p779
        %p1586 = pneg %p776
        %p1587 = pneg %p800
        %p1588 = pneg %p797
        %p1589 = pneg %p821
        %p1590 = pneg %p818
        %p1591 = pneg %p842
        %p1592 = pneg %p839
        %p1593 = pneg %p863
        %p1594 = pneg %p860
        %p1595 = pneg %p884
        %p1596 = pneg %p881
        %p1597 = pneg %p905
        %p1598 = pneg %p902
        %p1599 = pneg %p926
        %p1600 = pneg %p923
        %p1601 = pneg %p947
        %p1602 = pneg %p944
        %p1603 = pneg %p968
        %p1604 = pneg %p965
        %p1605 = pneg %p989
        %p1606 = pneg %p986
        %p1607 = pneg %p1015
        %p1608 = pneg %p1012
        %s1609 = sand.u32 %s1002, 1
        %s1610 = scalar_lea.sflag [#allocation4], %s1609
        %s1611 = sand.u32 %s1002, 1
        %s1612 = smul.addr %s1611, 8
        %s1613 = scalar_lea.vmem [#allocation35], %s1612
        %p1614 = pneg %p1041
        %p1615 = pneg %p1038
        %s1616 = sand.u32 %s1028, 1
        %s1617 = scalar_lea.sflag [#allocation37], %s1616
        %s1618 = sand.u32 %s1028, 1
        %s1619 = smul.addr %s1618, 8
        %s1620 = scalar_lea.vmem [#allocation36], %s1619
        %v1622 = vld [vmem:[%s1433] sm:$0xff]
        %v1623 = vld [vmem:[%s1415] sm:$0xff]
        %v1624 = vld [vmem:[#allocation8] sm:$0x1]
        %v1625 = vld [vmem:[#allocation10] sm:$0x1]
        %vm1626 = vcmask 261120
        %v1627 = vsel %vm1626, %v1623, 0.0
        %1628 = vadd.xlane.f32.xlu0 %v1627
        %v1629 = vpop.xlane.xlu0 %1628
        %v1630 = vrcp.pop 32.0
        %v1631 = vmul.f32 %v1629, %v1630
        %v1632 = vsub.f32 %v1623, %v1631
        %v1633 = vmul.f32 %v1632, %v1632
        %v1634 = vsel %vm1626, %v1633, 0.0
        %1635 = vadd.xlane.f32.xlu0 %v1634
        %v1636 = vpop.xlane.xlu0 %1635
        %v1637 = vmul.f32 %v1636, %v1630
        %v1638 = vadd.f32 %v1637, 1e-06
        %v1639 = vrsqrt.pop %v1638
        %v1640 = vmul.f32 %v1632, %v1639
        %v1642 = vlaneseq
        %v1643 = vshrl.u32 %v1642, 7
        %v1644 = vsub.s32 0, %v1643
        %v1645 = vrot.slane %v1624, %v1644
        %v1647 = vmul.f32 %v1640, %v1645
        %v1649 = vlaneseq
        %v1650 = vshrl.u32 %v1649, 7
        %v1651 = vsub.s32 0, %v1650
        %v1652 = vrot.slane %v1625, %v1651
        %v1654 = vadd.f32 %v1647, %v1652
        %v1655 = vld [vmem:[%s11] sm:$0xf]
        %v1656 = vld [vmem:[%s11 + $0x4] sm:$0xf]
        %v1657 = vld [vmem:[%s11 + $0x8] sm:$0xf]
        %v1658 = vld [vmem:[%s11 + $0xc] sm:$0xf]
        %v1659 = vpack.c.bf16 %v1654, %v1654
        %v1660 = vld [vmem:[#allocation11] sm:$0x1]
        %v1662 = vlaneseq
        %v1663 = vshrl.u32 %v1662, 7
        %v1664 = vsub.s32 0, %v1663
        %v1665 = vrot.slane %v1660, %v1664
        %v1671 = vunpack.c.l.b16 %v1655
        %v1672 = vunpack.c.l.b16 %v1656
        %v1673 = vunpack.c.l.b16 %v1657
        %v1674 = vunpack.c.l.b16 %v1658
        %v1675 = vpack.c.b16 %v1672, %v1671
        %v1676 = vpack.c.b16 %v1674, %v1673
        %v1680 = vsel %vm1626, %v1659, 0
        %1682 = vmatprep.subr.bf16.mxu0 0
        %1683 = vmatpush1.bf16.msra.mxu0 0
        %1684 = vmatprep.subr.bf16.mxu0 0
        %1685 = vmatpush1.bf16.msra.mxu0 0
        %1686 = vmatprep.subr.bf16.mxu0 0
        %1687 = vmatpush1.bf16.msra.mxu0 0
        %1688 = vmatprep.subr.bf16.mxu0 0
        %1689 = vmatpush1.bf16.msra.mxu0 0
        %1690 = vmatprep.subr.bf16.mxu0 0
        %1691 = vmatpush1.bf16.msra.mxu0 0
        %1692 = vmatprep.subr.bf16.mxu0 0
        %1693 = vmatpush1.bf16.msra.mxu0 0
        %1694 = vmatprep.subr.bf16.mxu0 0
        %1695 = vmatpush1.bf16.msra.mxu0 %v1676
        %1696 = vmatprep.subr.bf16.mxu0 0
        %1697 = vmatpush1.bf16.msra.mxu0 %v1675
        %1698 = vmatprep.subr.bf16.mxu0 0
        %1699 = vmatpush2.bf16.msra.mxu0 0
        %1700 = vmatprep.subr.bf16.mxu0 0
        %1701 = vmatpush2.bf16.msra.mxu0 0
        %1702 = vmatprep.subr.bf16.mxu0 0
        %1703 = vmatpush2.bf16.msra.mxu0 0
        %1704 = vmatprep.subr.bf16.mxu0 0
        %1705 = vmatpush2.bf16.msra.mxu0 0
        %1706 = vmatprep.subr.bf16.mxu0 0
        %1707 = vmatpush2.bf16.msra.mxu0 0
        %1708 = vmatprep.subr.bf16.mxu0 0
        %1709 = vmatpush2.bf16.msra.mxu0 0
        %1710 = vmatprep.subr.bf16.mxu0 0
        %1711 = vmatpush2.bf16.msra.mxu0 0
        %1712 = vmatprep.subr.bf16.mxu0 0
        %1713 = vmatpush2.bf16.msra.mxu0 0
        %1714 = vmatprep.mubr.bf16.mxu0 0
        %1715 = vmatmul.mubr.bf16.gmra.mxu0 %v1680
        %v1716 = vpop.f32.mrf.mxu0
        %v1717 = vadd.f32 %v1665, %v1716
        %v1718 = vpop.f32.mrf.mxu0
        %v1719 = vpop.f32.mrf.mxu0
        %v1720 = vpop.f32.mrf.mxu0
        %1721 = vdwg.mxu0
        %v1722 = vmul.f32 %v1717, 0.35355338
        %v1723 = vld [vmem:[%s15] sm:$0xf]
        %v1724 = vld [vmem:[%s15 + $0x4] sm:$0xf]
        %v1725 = vld [vmem:[%s15 + $0x8] sm:$0xf]
        %v1726 = vld [vmem:[%s15 + $0xc] sm:$0xf]
        %v1727 = vld [vmem:[#allocation13] sm:$0x1]
        %1729 = vrot.lane.b32.xlu0 %v1722, 120
        %v1730 = vpop.permute.xlu0 %1729
        %1732 = vrot.lane.b32.xlu0 %v1722, 112
        %v1733 = vpop.permute.xlu0 %1732
        %1735 = vrot.lane.b32.xlu0 %v1722, 104
        %v1736 = vpop.permute.xlu0 %1735
        %v1738 = vpack.c.bf16 %v1722, %v1722
        %v1739 = vpack.c.bf16 %v1730, %v1730
        %v1740 = vpack.c.bf16 %v1733, %v1733
        %v1741 = vpack.c.bf16 %v1736, %v1736
        %1743 = vrot.lane.b32.xlu0 %v1717, 120
        %v1744 = vpop.permute.xlu0 %1743
        %1746 = vrot.lane.b32.xlu0 %v1717, 112
        %v1747 = vpop.permute.xlu0 %1746
        %1749 = vrot.lane.b32.xlu0 %v1717, 104
        %v1750 = vpop.permute.xlu0 %1749
        %v1752 = vpack.c.bf16 %v1717, %v1717
        %v1753 = vpack.c.bf16 %v1744, %v1744
        %v1754 = vpack.c.bf16 %v1747, %v1747
        %v1755 = vpack.c.bf16 %v1750, %v1750
        %1757 = vrot.lane.b32.xlu0 %v1752, 96
        %v1758 = vpop.permute.xlu0 %1757
        %vm1759 = vcmask 64512
        %v1761 = vsel %vm1759, %v1738, 0
        %v1764 = vsel %vm1759, %v1758, 0
        %1766 = vmatprep.subr.bf16.mxu0 0
        %1767 = vmatpush1.bf16.xpose.msra.mxu0 0
        %1768 = vmatprep.subr.bf16.mxu0 0
        %1769 = vmatpush1.bf16.xpose.msra.mxu0 0
        %1770 = vmatprep.subr.bf16.mxu0 0
        %1771 = vmatpush1.bf16.xpose.msra.mxu0 0
        %1772 = vmatprep.subr.bf16.mxu0 0
        %1773 = vmatpush1.bf16.xpose.msra.mxu0 0
        %1774 = vmatprep.subr.bf16.mxu0 0
        %1775 = vmatpush1.bf16.xpose.msra.mxu0 0
        %1776 = vmatprep.subr.bf16.mxu0 0
        %1777 = vmatpush1.bf16.xpose.msra.mxu0 0
        %1778 = vmatprep.subr.bf16.mxu0 0
        %1779 = vmatpush1.bf16.xpose.msra.mxu0 0
        %1780 = vmatprep.subr.bf16.mxu0 0
        %1781 = vmatpush1.bf16.xpose.msra.mxu0 %v1764
        %1782 = vmatprep.subr.bf16.mxu0 0
        %1783 = vmatpush2.bf16.xpose.msra.mxu0 0
        %1784 = vmatprep.subr.bf16.mxu0 0
        %1785 = vmatpush2.bf16.xpose.msra.mxu0 0
        %1786 = vmatprep.subr.bf16.mxu0 0
        %1787 = vmatpush2.bf16.xpose.msra.mxu0 0
        %1788 = vmatprep.subr.bf16.mxu0 0
        %1789 = vmatpush2.bf16.xpose.msra.mxu0 0
        %1790 = vmatprep.subr.bf16.mxu0 0
        %1791 = vmatpush2.bf16.xpose.msra.mxu0 0
        %1792 = vmatprep.subr.bf16.mxu0 0
        %1793 = vmatpush2.bf16.xpose.msra.mxu0 0
        %1794 = vmatprep.subr.bf16.mxu0 0
        %1795 = vmatpush2.bf16.xpose.msra.mxu0 0
        %1796 = vmatprep.subr.bf16.mxu0 0
        %1797 = vmatpush2.bf16.xpose.msra.mxu0 0
        %1798 = vmatprep.mubr.bf16.mxu0 0
        %1799 = vmatmul.mubr.bf16.gmra.mxu0 %v1761
        %v1800 = vpop.f32.mrf.mxu0
        %v1801 = vadd.f32 0.0, %v1800
        %v1802 = vpop.f32.mrf.mxu0
        %v1803 = vpop.f32.mrf.mxu0
        %v1804 = vpop.f32.mrf.mxu0
        %1805 = vdwg.mxu0
        %1807 = vrot.lane.b32.xlu0 %v1753, 96
        %v1808 = vpop.permute.xlu0 %1807
        %v1810 = vsel %vm1759, %v1739, 0
        %v1813 = vsel %vm1759, %v1808, 0
        %1815 = vmatprep.subr.bf16.mxu0 0
        %1816 = vmatpush1.bf16.xpose.msra.mxu0 0
        %1817 = vmatprep.subr.bf16.mxu0 0
        %1818 = vmatpush1.bf16.xpose.msra.mxu0 0
        %1819 = vmatprep.subr.bf16.mxu0 0
        %1820 = vmatpush1.bf16.xpose.msra.mxu0 0
        %1821 = vmatprep.subr.bf16.mxu0 0
        %1822 = vmatpush1.bf16.xpose.msra.mxu0 0
        %1823 = vmatprep.subr.bf16.mxu0 0
        %1824 = vmatpush1.bf16.xpose.msra.mxu0 0
        %1825 = vmatprep.subr.bf16.mxu0 0
        %1826 = vmatpush1.bf16.xpose.msra.mxu0 0
        %1827 = vmatprep.subr.bf16.mxu0 0
        %1828 = vmatpush1.bf16.xpose.msra.mxu0 0
        %1829 = vmatprep.subr.bf16.mxu0 0
        %1830 = vmatpush1.bf16.xpose.msra.mxu0 %v1813
        %1831 = vmatprep.subr.bf16.mxu0 0
        %1832 = vmatpush2.bf16.xpose.msra.mxu0 0
        %1833 = vmatprep.subr.bf16.mxu0 0
        %1834 = vmatpush2.bf16.xpose.msra.mxu0 0
        %1835 = vmatprep.subr.bf16.mxu0 0
        %1836 = vmatpush2.bf16.xpose.msra.mxu0 0
        %1837 = vmatprep.subr.bf16.mxu0 0
        %1838 = vmatpush2.bf16.xpose.msra.mxu0 0
        %1839 = vmatprep.subr.bf16.mxu0 0
        %1840 = vmatpush2.bf16.xpose.msra.mxu0 0
        %1841 = vmatprep.subr.bf16.mxu0 0
        %1842 = vmatpush2.bf16.xpose.msra.mxu0 0
        %1843 = vmatprep.subr.bf16.mxu0 0
        %1844 = vmatpush2.bf16.xpose.msra.mxu0 0
        %1845 = vmatprep.subr.bf16.mxu0 0
        %1846 = vmatpush2.bf16.xpose.msra.mxu0 0
        %1847 = vmatprep.mubr.bf16.mxu0 0
        %1848 = vmatmul.mubr.bf16.gmra.mxu0 %v1810
        %v1849 = vpop.f32.mrf.mxu0
        %v1850 = vadd.f32 0.0, %v1849
        %v1851 = vpop.f32.mrf.mxu0
        %v1852 = vpop.f32.mrf.mxu0
        %v1853 = vpop.f32.mrf.mxu0
        %1854 = vdwg.mxu0
        %1856 = vrot.lane.b32.xlu0 %v1754, 96
        %v1857 = vpop.permute.xlu0 %1856
        %v1859 = vsel %vm1759, %v1740, 0
        %v1862 = vsel %vm1759, %v1857, 0
        %1864 = vmatprep.subr.bf16.mxu0 0
        %1865 = vmatpush1.bf16.xpose.msra.mxu0 0
        %1866 = vmatprep.subr.bf16.mxu0 0
        %1867 = vmatpush1.bf16.xpose.msra.mxu0 0
        %1868 = vmatprep.subr.bf16.mxu0 0
        %1869 = vmatpush1.bf16.xpose.msra.mxu0 0
        %1870 = vmatprep.subr.bf16.mxu0 0
        %1871 = vmatpush1.bf16.xpose.msra.mxu0 0
        %1872 = vmatprep.subr.bf16.mxu0 0
        %1873 = vmatpush1.bf16.xpose.msra.mxu0 0
        %1874 = vmatprep.subr.bf16.mxu0 0
        %1875 = vmatpush1.bf16.xpose.msra.mxu0 0
        %1876 = vmatprep.subr.bf16.mxu0 0
        %1877 = vmatpush1.bf16.xpose.msra.mxu0 0
        %1878 = vmatprep.subr.bf16.mxu0 0
        %1879 = vmatpush1.bf16.xpose.msra.mxu0 %v1862
        %1880 = vmatprep.subr.bf16.mxu0 0
        %1881 = vmatpush2.bf16.xpose.msra.mxu0 0
        %1882 = vmatprep.subr.bf16.mxu0 0
        %1883 = vmatpush2.bf16.xpose.msra.mxu0 0
        %1884 = vmatprep.subr.bf16.mxu0 0
        %1885 = vmatpush2.bf16.xpose.msra.mxu0 0
        %1886 = vmatprep.subr.bf16.mxu0 0
        %1887 = vmatpush2.bf16.xpose.msra.mxu0 0
        %1888 = vmatprep.subr.bf16.mxu0 0
        %1889 = vmatpush2.bf16.xpose.msra.mxu0 0
        %1890 = vmatprep.subr.bf16.mxu0 0
        %1891 = vmatpush2.bf16.xpose.msra.mxu0 0
        %1892 = vmatprep.subr.bf16.mxu0 0
        %1893 = vmatpush2.bf16.xpose.msra.mxu0 0
        %1894 = vmatprep.subr.bf16.mxu0 0
        %1895 = vmatpush2.bf16.xpose.msra.mxu0 0
        %1896 = vmatprep.mubr.bf16.mxu0 0
        %1897 = vmatmul.mubr.bf16.gmra.mxu0 %v1859
        %v1898 = vpop.f32.mrf.mxu0
        %v1899 = vadd.f32 0.0, %v1898
        %v1900 = vpop.f32.mrf.mxu0
        %v1901 = vpop.f32.mrf.mxu0
        %v1902 = vpop.f32.mrf.mxu0
        %1903 = vdwg.mxu0
        %1905 = vrot.lane.b32.xlu0 %v1755, 96
        %v1906 = vpop.permute.xlu0 %1905
        %v1908 = vsel %vm1759, %v1741, 0
        %v1911 = vsel %vm1759, %v1906, 0
        %1913 = vmatprep.subr.bf16.mxu0 0
        %1914 = vmatpush1.bf16.xpose.msra.mxu0 0
        %1915 = vmatprep.subr.bf16.mxu0 0
        %1916 = vmatpush1.bf16.xpose.msra.mxu0 0
        %1917 = vmatprep.subr.bf16.mxu0 0
        %1918 = vmatpush1.bf16.xpose.msra.mxu0 0
        %1919 = vmatprep.subr.bf16.mxu0 0
        %1920 = vmatpush1.bf16.xpose.msra.mxu0 0
        %1921 = vmatprep.subr.bf16.mxu0 0
        %1922 = vmatpush1.bf16.xpose.msra.mxu0 0
        %1923 = vmatprep.subr.bf16.mxu0 0
        %1924 = vmatpush1.bf16.xpose.msra.mxu0 0
        %1925 = vmatprep.subr.bf16.mxu0 0
        %1926 = vmatpush1.bf16.xpose.msra.mxu0 0
        %1927 = vmatprep.subr.bf16.mxu0 0
        %1928 = vmatpush1.bf16.xpose.msra.mxu0 %v1911
        %1929 = vmatprep.subr.bf16.mxu0 0
        %1930 = vmatpush2.bf16.xpose.msra.mxu0 0
        %1931 = vmatprep.subr.bf16.mxu0 0
        %1932 = vmatpush2.bf16.xpose.msra.mxu0 0
        %1933 = vmatprep.subr.bf16.mxu0 0
        %1934 = vmatpush2.bf16.xpose.msra.mxu0 0
        %1935 = vmatprep.subr.bf16.mxu0 0
        %1936 = vmatpush2.bf16.xpose.msra.mxu0 0
        %1937 = vmatprep.subr.bf16.mxu0 0
        %1938 = vmatpush2.bf16.xpose.msra.mxu0 0
        %1939 = vmatprep.subr.bf16.mxu0 0
        %1940 = vmatpush2.bf16.xpose.msra.mxu0 0
        %1941 = vmatprep.subr.bf16.mxu0 0
        %1942 = vmatpush2.bf16.xpose.msra.mxu0 0
        %1943 = vmatprep.subr.bf16.mxu0 0
        %1944 = vmatpush2.bf16.xpose.msra.mxu0 0
        %1945 = vmatprep.mubr.bf16.mxu0 0
        %1946 = vmatmul.mubr.bf16.gmra.mxu0 %v1908
        %v1947 = vpop.f32.mrf.mxu0
        %v1948 = vadd.f32 0.0, %v1947
        %v1949 = vpop.f32.mrf.mxu0
        %v1950 = vpop.f32.mrf.mxu0
        %v1951 = vpop.f32.mrf.mxu0
        %1952 = vdwg.mxu0
        %v1953 = vsel %vm1759, %v1801, -inf
        %1954 = vmax.xlane.f32.xlu0 %v1953
        %v1955 = vpop.xlane.xlu0 %1954
        %v1956 = vsel %vm1759, %v1850, -inf
        %1957 = vmax.xlane.f32.xlu0 %v1956
        %v1958 = vpop.xlane.xlu0 %1957
        %v1959 = vsel %vm1759, %v1899, -inf
        %1960 = vmax.xlane.f32.xlu0 %v1959
        %v1961 = vpop.xlane.xlu0 %1960
        %v1962 = vsel %vm1759, %v1948, -inf
        %1963 = vmax.xlane.f32.xlu0 %v1962
        %v1964 = vpop.xlane.xlu0 %1963
        %v1965 = vsub.f32 %v1801, %v1955
        %v1966 = vsub.f32 %v1850, %v1958
        %v1967 = vsub.f32 %v1899, %v1961
        %v1968 = vsub.f32 %v1948, %v1964
        %v1969 = vmul.f32 %v1965, 1.442695
        %v1970 = vpow.pop %v1969
        %v1971 = vmul.f32 %v1966, 1.442695
        %v1972 = vpow.pop %v1971
        %v1973 = vmul.f32 %v1967, 1.442695
        %v1974 = vpow.pop %v1973
        %v1975 = vmul.f32 %v1968, 1.442695
        %v1976 = vpow.pop %v1975
        %v1977 = vsel %vm1759, %v1970, 0.0
        %1978 = vadd.xlane.f32.xlu0 %v1977
        %v1979 = vpop.xlane.xlu0 %1978
        %v1980 = vsel %vm1759, %v1972, 0.0
        %1981 = vadd.xlane.f32.xlu0 %v1980
        %v1982 = vpop.xlane.xlu0 %1981
        %v1983 = vsel %vm1759, %v1974, 0.0
        %1984 = vadd.xlane.f32.xlu0 %v1983
        %v1985 = vpop.xlane.xlu0 %1984
        %v1986 = vsel %vm1759, %v1976, 0.0
        %1987 = vadd.xlane.f32.xlu0 %v1986
        %v1988 = vpop.xlane.xlu0 %1987
        %v1989 = vrcp.pop %v1979
        %v1990 = vmul.f32 %v1970, %v1989
        %v1991 = vrcp.pop %v1982
        %v1992 = vmul.f32 %v1972, %v1991
        %v1993 = vrcp.pop %v1985
        %v1994 = vmul.f32 %v1974, %v1993
        %v1995 = vrcp.pop %v1988
        %v1996 = vmul.f32 %v1976, %v1995
        %v1997 = vpack.c.bf16 %v1990, %v1990
        %v1998 = vpack.c.bf16 %v1992, %v1992
        %v1999 = vpack.c.bf16 %v1994, %v1994
        %v2000 = vpack.c.bf16 %v1996, %v1996
        %2001 = vrot.lane.b32.xlu0 %v1752, 64
        %v2002 = vpop.permute.xlu0 %2001
        %v2004 = vsel %vm1759, %v1997, 0
        %vm2006 = vcmask 1043456
        %v2008 = vsel %vm2006, %v2002, 0
        %2010 = vmatprep.subr.bf16.mxu0 0
        %2011 = vmatpush1.bf16.msra.mxu0 0
        %2012 = vmatprep.subr.bf16.mxu0 0
        %2013 = vmatpush1.bf16.msra.mxu0 0
        %2014 = vmatprep.subr.bf16.mxu0 0
        %2015 = vmatpush1.bf16.msra.mxu0 0
        %2016 = vmatprep.subr.bf16.mxu0 0
        %2017 = vmatpush1.bf16.msra.mxu0 0
        %2018 = vmatprep.subr.bf16.mxu0 0
        %2019 = vmatpush1.bf16.msra.mxu0 0
        %2020 = vmatprep.subr.bf16.mxu0 0
        %2021 = vmatpush1.bf16.msra.mxu0 0
        %2022 = vmatprep.subr.bf16.mxu0 0
        %2023 = vmatpush1.bf16.msra.mxu0 0
        %2024 = vmatprep.subr.bf16.mxu0 0
        %2025 = vmatpush1.bf16.msra.mxu0 %v2008
        %2026 = vmatprep.subr.bf16.mxu0 0
        %2027 = vmatpush2.bf16.msra.mxu0 0
        %2028 = vmatprep.subr.bf16.mxu0 0
        %2029 = vmatpush2.bf16.msra.mxu0 0
        %2030 = vmatprep.subr.bf16.mxu0 0
        %2031 = vmatpush2.bf16.msra.mxu0 0
        %2032 = vmatprep.subr.bf16.mxu0 0
        %2033 = vmatpush2.bf16.msra.mxu0 0
        %2034 = vmatprep.subr.bf16.mxu0 0
        %2035 = vmatpush2.bf16.msra.mxu0 0
        %2036 = vmatprep.subr.bf16.mxu0 0
        %2037 = vmatpush2.bf16.msra.mxu0 0
        %2038 = vmatprep.subr.bf16.mxu0 0
        %2039 = vmatpush2.bf16.msra.mxu0 0
        %2040 = vmatprep.subr.bf16.mxu0 0
        %2041 = vmatpush2.bf16.msra.mxu0 0
        %2042 = vmatprep.mubr.bf16.mxu0 0
        %2043 = vmatmul.mubr.bf16.gmra.mxu0 %v2004
        %v2044 = vpop.f32.mrf.mxu0
        %v2045 = vadd.f32 0.0, %v2044
        %v2046 = vpop.f32.mrf.mxu0
        %v2047 = vpop.f32.mrf.mxu0
        %v2048 = vpop.f32.mrf.mxu0
        %2049 = vdwg.mxu0
        %2050 = vrot.lane.b32.xlu0 %v1753, 64
        %v2051 = vpop.permute.xlu0 %2050
        %v2053 = vsel %vm1759, %v1998, 0
        %v2056 = vsel %vm2006, %v2051, 0
        %2058 = vmatprep.subr.bf16.mxu0 0
        %2059 = vmatpush1.bf16.msra.mxu0 0
        %2060 = vmatprep.subr.bf16.mxu0 0
        %2061 = vmatpush1.bf16.msra.mxu0 0
        %2062 = vmatprep.subr.bf16.mxu0 0
        %2063 = vmatpush1.bf16.msra.mxu0 0
        %2064 = vmatprep.subr.bf16.mxu0 0
        %2065 = vmatpush1.bf16.msra.mxu0 0
        %2066 = vmatprep.subr.bf16.mxu0 0
        %2067 = vmatpush1.bf16.msra.mxu0 0
        %2068 = vmatprep.subr.bf16.mxu0 0
        %2069 = vmatpush1.bf16.msra.mxu0 0
        %2070 = vmatprep.subr.bf16.mxu0 0
        %2071 = vmatpush1.bf16.msra.mxu0 0
        %2072 = vmatprep.subr.bf16.mxu0 0
        %2073 = vmatpush1.bf16.msra.mxu0 %v2056
        %2074 = vmatprep.subr.bf16.mxu0 0
        %2075 = vmatpush2.bf16.msra.mxu0 0
        %2076 = vmatprep.subr.bf16.mxu0 0
        %2077 = vmatpush2.bf16.msra.mxu0 0
        %2078 = vmatprep.subr.bf16.mxu0 0
        %2079 = vmatpush2.bf16.msra.mxu0 0
        %2080 = vmatprep.subr.bf16.mxu0 0
        %2081 = vmatpush2.bf16.msra.mxu0 0
        %2082 = vmatprep.subr.bf16.mxu0 0
        %2083 = vmatpush2.bf16.msra.mxu0 0
        %2084 = vmatprep.subr.bf16.mxu0 0
        %2085 = vmatpush2.bf16.msra.mxu0 0
        %2086 = vmatprep.subr.bf16.mxu0 0
        %2087 = vmatpush2.bf16.msra.mxu0 0
        %2088 = vmatprep.subr.bf16.mxu0 0
        %2089 = vmatpush2.bf16.msra.mxu0 0
        %2090 = vmatprep.mubr.bf16.mxu0 0
        %2091 = vmatmul.mubr.bf16.gmra.mxu0 %v2053
        %v2092 = vpop.f32.mrf.mxu0
        %v2093 = vadd.f32 0.0, %v2092
        %v2094 = vpop.f32.mrf.mxu0
        %v2095 = vpop.f32.mrf.mxu0
        %v2096 = vpop.f32.mrf.mxu0
        %2097 = vdwg.mxu0
        %2098 = vrot.lane.b32.xlu0 %v1754, 64
        %v2099 = vpop.permute.xlu0 %2098
        %v2101 = vsel %vm1759, %v1999, 0
        %v2104 = vsel %vm2006, %v2099, 0
        %2106 = vmatprep.subr.bf16.mxu0 0
        %2107 = vmatpush1.bf16.msra.mxu0 0
        %2108 = vmatprep.subr.bf16.mxu0 0
        %2109 = vmatpush1.bf16.msra.mxu0 0
        %2110 = vmatprep.subr.bf16.mxu0 0
        %2111 = vmatpush1.bf16.msra.mxu0 0
        %2112 = vmatprep.subr.bf16.mxu0 0
        %2113 = vmatpush1.bf16.msra.mxu0 0
        %2114 = vmatprep.subr.bf16.mxu0 0
        %2115 = vmatpush1.bf16.msra.mxu0 0
        %2116 = vmatprep.subr.bf16.mxu0 0
        %2117 = vmatpush1.bf16.msra.mxu0 0
        %2118 = vmatprep.subr.bf16.mxu0 0
        %2119 = vmatpush1.bf16.msra.mxu0 0
        %2120 = vmatprep.subr.bf16.mxu0 0
        %2121 = vmatpush1.bf16.msra.mxu0 %v2104
        %2122 = vmatprep.subr.bf16.mxu0 0
        %2123 = vmatpush2.bf16.msra.mxu0 0
        %2124 = vmatprep.subr.bf16.mxu0 0
        %2125 = vmatpush2.bf16.msra.mxu0 0
        %2126 = vmatprep.subr.bf16.mxu0 0
        %2127 = vmatpush2.bf16.msra.mxu0 0
        %2128 = vmatprep.subr.bf16.mxu0 0
        %2129 = vmatpush2.bf16.msra.mxu0 0
        %2130 = vmatprep.subr.bf16.mxu0 0
        %2131 = vmatpush2.bf16.msra.mxu0 0
        %2132 = vmatprep.subr.bf16.mxu0 0
        %2133 = vmatpush2.bf16.msra.mxu0 0
        %2134 = vmatprep.subr.bf16.mxu0 0
        %2135 = vmatpush2.bf16.msra.mxu0 0
        %2136 = vmatprep.subr.bf16.mxu0 0
        %2137 = vmatpush2.bf16.msra.mxu0 0
        %2138 = vmatprep.mubr.bf16.mxu0 0
        %2139 = vmatmul.mubr.bf16.gmra.mxu0 %v2101
        %v2140 = vpop.f32.mrf.mxu0
        %v2141 = vadd.f32 0.0, %v2140
        %v2142 = vpop.f32.mrf.mxu0
        %v2143 = vpop.f32.mrf.mxu0
        %v2144 = vpop.f32.mrf.mxu0
        %2145 = vdwg.mxu0
        %2146 = vrot.lane.b32.xlu0 %v1755, 64
        %v2147 = vpop.permute.xlu0 %2146
        %v2149 = vsel %vm1759, %v2000, 0
        %v2152 = vsel %vm2006, %v2147, 0
        %2154 = vmatprep.subr.bf16.mxu0 0
        %2155 = vmatpush1.bf16.msra.mxu0 0
        %2156 = vmatprep.subr.bf16.mxu0 0
        %2157 = vmatpush1.bf16.msra.mxu0 0
        %2158 = vmatprep.subr.bf16.mxu0 0
        %2159 = vmatpush1.bf16.msra.mxu0 0
        %2160 = vmatprep.subr.bf16.mxu0 0
        %2161 = vmatpush1.bf16.msra.mxu0 0
        %2162 = vmatprep.subr.bf16.mxu0 0
        %2163 = vmatpush1.bf16.msra.mxu0 0
        %2164 = vmatprep.subr.bf16.mxu0 0
        %2165 = vmatpush1.bf16.msra.mxu0 0
        %2166 = vmatprep.subr.bf16.mxu0 0
        %2167 = vmatpush1.bf16.msra.mxu0 0
        %2168 = vmatprep.subr.bf16.mxu0 0
        %2169 = vmatpush1.bf16.msra.mxu0 %v2152
        %2170 = vmatprep.subr.bf16.mxu0 0
        %2171 = vmatpush2.bf16.msra.mxu0 0
        %2172 = vmatprep.subr.bf16.mxu0 0
        %2173 = vmatpush2.bf16.msra.mxu0 0
        %2174 = vmatprep.subr.bf16.mxu0 0
        %2175 = vmatpush2.bf16.msra.mxu0 0
        %2176 = vmatprep.subr.bf16.mxu0 0
        %2177 = vmatpush2.bf16.msra.mxu0 0
        %2178 = vmatprep.subr.bf16.mxu0 0
        %2179 = vmatpush2.bf16.msra.mxu0 0
        %2180 = vmatprep.subr.bf16.mxu0 0
        %2181 = vmatpush2.bf16.msra.mxu0 0
        %2182 = vmatprep.subr.bf16.mxu0 0
        %2183 = vmatpush2.bf16.msra.mxu0 0
        %2184 = vmatprep.subr.bf16.mxu0 0
        %2185 = vmatpush2.bf16.msra.mxu0 0
        %2186 = vmatprep.mubr.bf16.mxu0 0
        %2187 = vmatmul.mubr.bf16.gmra.mxu0 %v2149
        %v2188 = vpop.f32.mrf.mxu0
        %v2189 = vadd.f32 0.0, %v2188
        %v2190 = vpop.f32.mrf.mxu0
        %v2191 = vpop.f32.mrf.mxu0
        %v2192 = vpop.f32.mrf.mxu0
        %2193 = vdwg.mxu0
        %2195 = vrot.lane.b32.xlu0 %v2093, 8
        %v2196 = vpop.permute.xlu0 %2195
        %2199 = vrot.lane.b32.xlu0 %v2141, 16
        %v2200 = vpop.permute.xlu0 %2199
        %2203 = vrot.lane.b32.xlu0 %v2189, 24
        %v2204 = vpop.permute.xlu0 %2203
        %v2206 = vsel %vm1759, %v2045, %v2196
        %vm2207 = vcmask 130048
        %v2208 = vsel %vm2207, %v2206, %v2200
        %vm2209 = vcmask 195584
        %v2210 = vsel %vm2209, %v2208, %v2204
        %v2211 = vpack.c.bf16 %v2210, %v2210
        %v2213 = vlaneseq
        %v2214 = vshrl.u32 %v2213, 7
        %v2215 = vsub.s32 0, %v2214
        %v2216 = vrot.slane %v1727, %v2215
        %v2222 = vunpack.c.l.b16 %v1723
        %v2223 = vunpack.c.l.b16 %v1724
        %v2224 = vunpack.c.l.b16 %v1725
        %v2225 = vunpack.c.l.b16 %v1726
        %v2226 = vpack.c.b16 %v2223, %v2222
        %v2227 = vpack.c.b16 %v2225, %v2224
        %v2231 = vsel %vm1626, %v2211, 0
        %2233 = vmatprep.subr.bf16.mxu0 0
        %2234 = vmatpush1.bf16.msra.mxu0 0
        %2235 = vmatprep.subr.bf16.mxu0 0
        %2236 = vmatpush1.bf16.msra.mxu0 0
        %2237 = vmatprep.subr.bf16.mxu0 0
        %2238 = vmatpush1.bf16.msra.mxu0 0
        %2239 = vmatprep.subr.bf16.mxu0 0
        %2240 = vmatpush1.bf16.msra.mxu0 0
        %2241 = vmatprep.subr.bf16.mxu0 0
        %2242 = vmatpush1.bf16.msra.mxu0 0
        %2243 = vmatprep.subr.bf16.mxu0 0
        %2244 = vmatpush1.bf16.msra.mxu0 0
        %2245 = vmatprep.subr.bf16.mxu0 0
        %2246 = vmatpush1.bf16.msra.mxu0 %v2227
        %2247 = vmatprep.subr.bf16.mxu0 0
        %2248 = vmatpush1.bf16.msra.mxu0 %v2226
        %2249 = vmatprep.subr.bf16.mxu0 0
        %2250 = vmatpush2.bf16.msra.mxu0 0
        %2251 = vmatprep.subr.bf16.mxu0 0
        %2252 = vmatpush2.bf16.msra.mxu0 0
        %2253 = vmatprep.subr.bf16.mxu0 0
        %2254 = vmatpush2.bf16.msra.mxu0 0
        %2255 = vmatprep.subr.bf16.mxu0 0
        %2256 = vmatpush2.bf16.msra.mxu0 0
        %2257 = vmatprep.subr.bf16.mxu0 0
        %2258 = vmatpush2.bf16.msra.mxu0 0
        %2259 = vmatprep.subr.bf16.mxu0 0
        %2260 = vmatpush2.bf16.msra.mxu0 0
        %2261 = vmatprep.subr.bf16.mxu0 0
        %2262 = vmatpush2.bf16.msra.mxu0 0
        %2263 = vmatprep.subr.bf16.mxu0 0
        %2264 = vmatpush2.bf16.msra.mxu0 0
        %2265 = vmatprep.mubr.bf16.mxu0 0
        %2266 = vmatmul.mubr.bf16.gmra.mxu0 %v2231
        %v2267 = vpop.f32.mrf.mxu0
        %v2268 = vadd.f32 %v2216, %v2267
        %v2269 = vpop.f32.mrf.mxu0
        %v2270 = vpop.f32.mrf.mxu0
        %v2271 = vpop.f32.mrf.mxu0
        %2272 = vdwg.mxu0
        %v2273 = vadd.f32 %v1623, %v2268
        %v2274 = vld [vmem:[#allocation14] sm:$0x1]
        %v2275 = vld [vmem:[#allocation16] sm:$0x1]
        %v2276 = vsel %vm1626, %v2273, 0.0
        %2277 = vadd.xlane.f32.xlu0 %v2276
        %v2278 = vpop.xlane.xlu0 %2277
        %v2279 = vmul.f32 %v2278, %v1630
        %v2280 = vsub.f32 %v2273, %v2279
        %v2281 = vmul.f32 %v2280, %v2280
        %v2282 = vsel %vm1626, %v2281, 0.0
        %2283 = vadd.xlane.f32.xlu0 %v2282
        %v2284 = vpop.xlane.xlu0 %2283
        %v2285 = vmul.f32 %v2284, %v1630
        %v2286 = vadd.f32 %v2285, 1e-06
        %v2287 = vrsqrt.pop %v2286
        %v2288 = vmul.f32 %v2280, %v2287
        %v2290 = vlaneseq
        %v2291 = vshrl.u32 %v2290, 7
        %v2292 = vsub.s32 0, %v2291
        %v2293 = vrot.slane %v2274, %v2292
        %v2295 = vmul.f32 %v2288, %v2293
        %v2297 = vlaneseq
        %v2298 = vshrl.u32 %v2297, 7
        %v2299 = vsub.s32 0, %v2298
        %v2300 = vrot.slane %v2275, %v2299
        %v2302 = vadd.f32 %v2295, %v2300
        %v2303 = vld [vmem:[%s23] sm:$0xf]
        %v2304 = vld [vmem:[%s23 + $0x4] sm:$0xf]
        %v2305 = vld [vmem:[%s23 + $0x8] sm:$0xf]
        %v2306 = vld [vmem:[%s23 + $0xc] sm:$0xf]
        %v2307 = vld [vmem:[#allocation17] sm:$0x1]
        %v2308 = vld [vmem:[%s27] sm:$0xf]
        %v2309 = vld [vmem:[%s27 + $0x4] sm:$0xf]
        %v2310 = vld [vmem:[%s27 + $0x8] sm:$0xf]
        %v2311 = vld [vmem:[%s27 + $0xc] sm:$0xf]
        %v2312 = vld [vmem:[%s27 + $0x10] sm:$0xf]
        %v2313 = vld [vmem:[%s27 + $0x14] sm:$0xf]
        %v2314 = vld [vmem:[%s27 + $0x18] sm:$0xf]
        %v2315 = vld [vmem:[%s27 + $0x1c] sm:$0xf]
        %v2316 = vld [vmem:[#allocation19] sm:$0x1]
        %v2317 = vpack.c.bf16 %v2302, %v2302
        %v2319 = vlaneseq
        %v2320 = vshrl.u32 %v2319, 7
        %v2321 = vsub.s32 0, %v2320
        %v2322 = vrot.slane %v2307, %v2321
        %v2328 = vunpack.c.l.b16 %v2303
        %v2329 = vunpack.c.l.b16 %v2304
        %v2330 = vunpack.c.l.b16 %v2305
        %v2331 = vunpack.c.l.b16 %v2306
        %v2332 = vpack.c.b16 %v2329, %v2328
        %v2333 = vpack.c.b16 %v2331, %v2330
        %v2337 = vsel %vm1626, %v2317, 0
        %2339 = vmatprep.subr.bf16.mxu0 0
        %2340 = vmatpush1.bf16.msra.mxu0 0
        %2341 = vmatprep.subr.bf16.mxu0 0
        %2342 = vmatpush1.bf16.msra.mxu0 0
        %2343 = vmatprep.subr.bf16.mxu0 0
        %2344 = vmatpush1.bf16.msra.mxu0 0
        %2345 = vmatprep.subr.bf16.mxu0 0
        %2346 = vmatpush1.bf16.msra.mxu0 0
        %2347 = vmatprep.subr.bf16.mxu0 0
        %2348 = vmatpush1.bf16.msra.mxu0 0
        %2349 = vmatprep.subr.bf16.mxu0 0
        %2350 = vmatpush1.bf16.msra.mxu0 0
        %2351 = vmatprep.subr.bf16.mxu0 0
        %2352 = vmatpush1.bf16.msra.mxu0 %v2333
        %2353 = vmatprep.subr.bf16.mxu0 0
        %2354 = vmatpush1.bf16.msra.mxu0 %v2332
        %2355 = vmatprep.subr.bf16.mxu0 0
        %2356 = vmatpush2.bf16.msra.mxu0 0
        %2357 = vmatprep.subr.bf16.mxu0 0
        %2358 = vmatpush2.bf16.msra.mxu0 0
        %2359 = vmatprep.subr.bf16.mxu0 0
        %2360 = vmatpush2.bf16.msra.mxu0 0
        %2361 = vmatprep.subr.bf16.mxu0 0
        %2362 = vmatpush2.bf16.msra.mxu0 0
        %2363 = vmatprep.subr.bf16.mxu0 0
        %2364 = vmatpush2.bf16.msra.mxu0 0
        %2365 = vmatprep.subr.bf16.mxu0 0
        %2366 = vmatpush2.bf16.msra.mxu0 0
        %2367 = vmatprep.subr.bf16.mxu0 0
        %2368 = vmatpush2.bf16.msra.mxu0 0
        %2369 = vmatprep.subr.bf16.mxu0 0
        %2370 = vmatpush2.bf16.msra.mxu0 0
        %2371 = vmatprep.mubr.bf16.mxu0 0
        %2372 = vmatmul.mubr.bf16.gmra.mxu0 %v2337
        %v2373 = vpop.f32.mrf.mxu0
        %v2374 = vadd.f32 %v2322, %v2373
        %v2375 = vpop.f32.mrf.mxu0
        %v2376 = vpop.f32.mrf.mxu0
        %v2377 = vpop.f32.mrf.mxu0
        %2378 = vdwg.mxu0
        %v2379 = vmax.f32 %v2374, 0.0
        %v2380 = vpack.c.bf16 %v2379, %v2379
        %v2382 = vlaneseq
        %v2383 = vshrl.u32 %v2382, 7
        %v2384 = vsub.s32 0, %v2383
        %v2385 = vrot.slane %v2316, %v2384
        %v2395 = vunpack.c.l.b16 %v2308
        %v2396 = vunpack.c.l.b16 %v2309
        %v2397 = vunpack.c.l.b16 %v2310
        %v2398 = vunpack.c.l.b16 %v2311
        %v2399 = vunpack.c.l.b16 %v2312
        %v2400 = vunpack.c.l.b16 %v2313
        %v2401 = vunpack.c.l.b16 %v2314
        %v2402 = vunpack.c.l.b16 %v2315
        %v2403 = vpack.c.b16 %v2396, %v2395
        %v2404 = vpack.c.b16 %v2398, %v2397
        %v2405 = vpack.c.b16 %v2400, %v2399
        %v2406 = vpack.c.b16 %v2402, %v2401
        %vm2411 = vcmask 523264
        %v2413 = vsel %vm2411, %v2380, 0
        %2415 = vmatprep.subr.bf16.mxu0 0
        %2416 = vmatpush1.bf16.msra.mxu0 0
        %2417 = vmatprep.subr.bf16.mxu0 0
        %2418 = vmatpush1.bf16.msra.mxu0 0
        %2419 = vmatprep.subr.bf16.mxu0 0
        %2420 = vmatpush1.bf16.msra.mxu0 0
        %2421 = vmatprep.subr.bf16.mxu0 0
        %2422 = vmatpush1.bf16.msra.mxu0 0
        %2423 = vmatprep.subr.bf16.mxu0 0
        %2424 = vmatpush1.bf16.msra.mxu0 %v2406
        %2425 = vmatprep.subr.bf16.mxu0 0
        %2426 = vmatpush1.bf16.msra.mxu0 %v2405
        %2427 = vmatprep.subr.bf16.mxu0 0
        %2428 = vmatpush1.bf16.msra.mxu0 %v2404
        %2429 = vmatprep.subr.bf16.mxu0 0
        %2430 = vmatpush1.bf16.msra.mxu0 %v2403
        %2431 = vmatprep.subr.bf16.mxu0 0
        %2432 = vmatpush2.bf16.msra.mxu0 0
        %2433 = vmatprep.subr.bf16.mxu0 0
        %2434 = vmatpush2.bf16.msra.mxu0 0
        %2435 = vmatprep.subr.bf16.mxu0 0
        %2436 = vmatpush2.bf16.msra.mxu0 0
        %2437 = vmatprep.subr.bf16.mxu0 0
        %2438 = vmatpush2.bf16.msra.mxu0 0
        %2439 = vmatprep.subr.bf16.mxu0 0
        %2440 = vmatpush2.bf16.msra.mxu0 0
        %2441 = vmatprep.subr.bf16.mxu0 0
        %2442 = vmatpush2.bf16.msra.mxu0 0
        %2443 = vmatprep.subr.bf16.mxu0 0
        %2444 = vmatpush2.bf16.msra.mxu0 0
        %2445 = vmatprep.subr.bf16.mxu0 0
        %2446 = vmatpush2.bf16.msra.mxu0 0
        %2447 = vmatprep.mubr.bf16.mxu0 0
        %2448 = vmatmul.mubr.bf16.gmra.mxu0 %v2413
        %v2449 = vpop.f32.mrf.mxu0
        %v2450 = vadd.f32 %v2385, %v2449
        %v2451 = vpop.f32.mrf.mxu0
        %v2452 = vpop.f32.mrf.mxu0
        %v2453 = vpop.f32.mrf.mxu0
        %2454 = vdwg.mxu0
        %v2455 = vadd.f32 %v2273, %v2450
        %s2456 = scalar_lea.vmem [#allocation8], 1
        %v2457 = vld [vmem:[%s2456] sm:$0x1]
        %s2458 = scalar_lea.vmem [#allocation10], 1
        %v2459 = vld [vmem:[%s2458] sm:$0x1]
        %v2460 = vsel %vm1626, %v2455, 0.0
        %2461 = vadd.xlane.f32.xlu0 %v2460
        %v2462 = vpop.xlane.xlu0 %2461
        %v2463 = vmul.f32 %v2462, %v1630
        %v2464 = vsub.f32 %v2455, %v2463
        %v2465 = vmul.f32 %v2464, %v2464
        %v2466 = vsel %vm1626, %v2465, 0.0
        %2467 = vadd.xlane.f32.xlu0 %v2466
        %v2468 = vpop.xlane.xlu0 %2467
        %v2469 = vmul.f32 %v2468, %v1630
        %v2470 = vadd.f32 %v2469, 1e-06
        %v2471 = vrsqrt.pop %v2470
        %v2472 = vmul.f32 %v2464, %v2471
        %v2474 = vlaneseq
        %v2475 = vshrl.u32 %v2474, 7
        %v2476 = vsub.s32 0, %v2475
        %v2477 = vrot.slane %v2457, %v2476
        %v2479 = vmul.f32 %v2472, %v2477
        %v2481 = vlaneseq
        %v2482 = vshrl.u32 %v2481, 7
        %v2483 = vsub.s32 0, %v2482
        %v2484 = vrot.slane %v2459, %v2483
        %v2486 = vadd.f32 %v2479, %v2484
        %s2487 = scalar_lea.vmem %s11, 16
        %v2488 = vld [vmem:[%s2487] sm:$0xf]
        %v2489 = vld [vmem:[%s2487 + $0x4] sm:$0xf]
        %v2490 = vld [vmem:[%s2487 + $0x8] sm:$0xf]
        %v2491 = vld [vmem:[%s2487 + $0xc] sm:$0xf]
        %v2492 = vpack.c.bf16 %v2486, %v2486
        %s2493 = scalar_lea.vmem [#allocation11], 1
        %v2494 = vld [vmem:[%s2493] sm:$0x1]
        %v2496 = vlaneseq
        %v2497 = vshrl.u32 %v2496, 7
        %v2498 = vsub.s32 0, %v2497
        %v2499 = vrot.slane %v2494, %v2498
        %v2505 = vunpack.c.l.b16 %v2488
        %v2506 = vunpack.c.l.b16 %v2489
        %v2507 = vunpack.c.l.b16 %v2490
        %v2508 = vunpack.c.l.b16 %v2491
        %v2509 = vpack.c.b16 %v2506, %v2505
        %v2510 = vpack.c.b16 %v2508, %v2507
        %v2514 = vsel %vm1626, %v2492, 0
        %2516 = vmatprep.subr.bf16.mxu0 0
        %2517 = vmatpush1.bf16.msra.mxu0 0
        %2518 = vmatprep.subr.bf16.mxu0 0
        %2519 = vmatpush1.bf16.msra.mxu0 0
        %2520 = vmatprep.subr.bf16.mxu0 0
        %2521 = vmatpush1.bf16.msra.mxu0 0
        %2522 = vmatprep.subr.bf16.mxu0 0
        %2523 = vmatpush1.bf16.msra.mxu0 0
        %2524 = vmatprep.subr.bf16.mxu0 0
        %2525 = vmatpush1.bf16.msra.mxu0 0
        %2526 = vmatprep.subr.bf16.mxu0 0
        %2527 = vmatpush1.bf16.msra.mxu0 0
        %2528 = vmatprep.subr.bf16.mxu0 0
        %2529 = vmatpush1.bf16.msra.mxu0 %v2510
        %2530 = vmatprep.subr.bf16.mxu0 0
        %2531 = vmatpush1.bf16.msra.mxu0 %v2509
        %2532 = vmatprep.subr.bf16.mxu0 0
        %2533 = vmatpush2.bf16.msra.mxu0 0
        %2534 = vmatprep.subr.bf16.mxu0 0
        %2535 = vmatpush2.bf16.msra.mxu0 0
        %2536 = vmatprep.subr.bf16.mxu0 0
        %2537 = vmatpush2.bf16.msra.mxu0 0
        %2538 = vmatprep.subr.bf16.mxu0 0
        %2539 = vmatpush2.bf16.msra.mxu0 0
        %2540 = vmatprep.subr.bf16.mxu0 0
        %2541 = vmatpush2.bf16.msra.mxu0 0
        %2542 = vmatprep.subr.bf16.mxu0 0
        %2543 = vmatpush2.bf16.msra.mxu0 0
        %2544 = vmatprep.subr.bf16.mxu0 0
        %2545 = vmatpush2.bf16.msra.mxu0 0
        %2546 = vmatprep.subr.bf16.mxu0 0
        %2547 = vmatpush2.bf16.msra.mxu0 0
        %2548 = vmatprep.mubr.bf16.mxu0 0
        %2549 = vmatmul.mubr.bf16.gmra.mxu0 %v2514
        %v2550 = vpop.f32.mrf.mxu0
        %v2551 = vadd.f32 %v2499, %v2550
        %v2552 = vpop.f32.mrf.mxu0
        %v2553 = vpop.f32.mrf.mxu0
        %v2554 = vpop.f32.mrf.mxu0
        %2555 = vdwg.mxu0
        %v2556 = vmul.f32 %v2551, 0.35355338
        %s2557 = scalar_lea.vmem %s15, 16
        %v2558 = vld [vmem:[%s2557] sm:$0xf]
        %v2559 = vld [vmem:[%s2557 + $0x4] sm:$0xf]
        %v2560 = vld [vmem:[%s2557 + $0x8] sm:$0xf]
        %v2561 = vld [vmem:[%s2557 + $0xc] sm:$0xf]
        %s2562 = scalar_lea.vmem [#allocation13], 1
        %v2563 = vld [vmem:[%s2562] sm:$0x1]
        %2565 = vrot.lane.b32.xlu0 %v2556, 120
        %v2566 = vpop.permute.xlu0 %2565
        %2568 = vrot.lane.b32.xlu0 %v2556, 112
        %v2569 = vpop.permute.xlu0 %2568
        %2571 = vrot.lane.b32.xlu0 %v2556, 104
        %v2572 = vpop.permute.xlu0 %2571
        %v2574 = vpack.c.bf16 %v2556, %v2556
        %v2575 = vpack.c.bf16 %v2566, %v2566
        %v2576 = vpack.c.bf16 %v2569, %v2569
        %v2577 = vpack.c.bf16 %v2572, %v2572
        %2579 = vrot.lane.b32.xlu0 %v2551, 120
        %v2580 = vpop.permute.xlu0 %2579
        %2582 = vrot.lane.b32.xlu0 %v2551, 112
        %v2583 = vpop.permute.xlu0 %2582
        %2585 = vrot.lane.b32.xlu0 %v2551, 104
        %v2586 = vpop.permute.xlu0 %2585
        %v2588 = vpack.c.bf16 %v2551, %v2551
        %v2589 = vpack.c.bf16 %v2580, %v2580
        %v2590 = vpack.c.bf16 %v2583, %v2583
        %v2591 = vpack.c.bf16 %v2586, %v2586
        %2593 = vrot.lane.b32.xlu0 %v2588, 96
        %v2594 = vpop.permute.xlu0 %2593
        %v2596 = vsel %vm1759, %v2574, 0
        %v2599 = vsel %vm1759, %v2594, 0
        %2601 = vmatprep.subr.bf16.mxu0 0
        %2602 = vmatpush1.bf16.xpose.msra.mxu0 0
        %2603 = vmatprep.subr.bf16.mxu0 0
        %2604 = vmatpush1.bf16.xpose.msra.mxu0 0
        %2605 = vmatprep.subr.bf16.mxu0 0
        %2606 = vmatpush1.bf16.xpose.msra.mxu0 0
        %2607 = vmatprep.subr.bf16.mxu0 0
        %2608 = vmatpush1.bf16.xpose.msra.mxu0 0
        %2609 = vmatprep.subr.bf16.mxu0 0
        %2610 = vmatpush1.bf16.xpose.msra.mxu0 0
        %2611 = vmatprep.subr.bf16.mxu0 0
        %2612 = vmatpush1.bf16.xpose.msra.mxu0 0
        %2613 = vmatprep.subr.bf16.mxu0 0
        %2614 = vmatpush1.bf16.xpose.msra.mxu0 0
        %2615 = vmatprep.subr.bf16.mxu0 0
        %2616 = vmatpush1.bf16.xpose.msra.mxu0 %v2599
        %2617 = vmatprep.subr.bf16.mxu0 0
        %2618 = vmatpush2.bf16.xpose.msra.mxu0 0
        %2619 = vmatprep.subr.bf16.mxu0 0
        %2620 = vmatpush2.bf16.xpose.msra.mxu0 0
        %2621 = vmatprep.subr.bf16.mxu0 0
        %2622 = vmatpush2.bf16.xpose.msra.mxu0 0
        %2623 = vmatprep.subr.bf16.mxu0 0
        %2624 = vmatpush2.bf16.xpose.msra.mxu0 0
        %2625 = vmatprep.subr.bf16.mxu0 0
        %2626 = vmatpush2.bf16.xpose.msra.mxu0 0
        %2627 = vmatprep.subr.bf16.mxu0 0
        %2628 = vmatpush2.bf16.xpose.msra.mxu0 0
        %2629 = vmatprep.subr.bf16.mxu0 0
        %2630 = vmatpush2.bf16.xpose.msra.mxu0 0
        %2631 = vmatprep.subr.bf16.mxu0 0
        %2632 = vmatpush2.bf16.xpose.msra.mxu0 0
        %2633 = vmatprep.mubr.bf16.mxu0 0
        %2634 = vmatmul.mubr.bf16.gmra.mxu0 %v2596
        %v2635 = vpop.f32.mrf.mxu0
        %v2636 = vadd.f32 0.0, %v2635
        %v2637 = vpop.f32.mrf.mxu0
        %v2638 = vpop.f32.mrf.mxu0
        %v2639 = vpop.f32.mrf.mxu0
        %2640 = vdwg.mxu0
        %2642 = vrot.lane.b32.xlu0 %v2589, 96
        %v2643 = vpop.permute.xlu0 %2642
        %v2645 = vsel %vm1759, %v2575, 0
        %v2648 = vsel %vm1759, %v2643, 0
        %2650 = vmatprep.subr.bf16.mxu0 0
        %2651 = vmatpush1.bf16.xpose.msra.mxu0 0
        %2652 = vmatprep.subr.bf16.mxu0 0
        %2653 = vmatpush1.bf16.xpose.msra.mxu0 0
        %2654 = vmatprep.subr.bf16.mxu0 0
        %2655 = vmatpush1.bf16.xpose.msra.mxu0 0
        %2656 = vmatprep.subr.bf16.mxu0 0
        %2657 = vmatpush1.bf16.xpose.msra.mxu0 0
        %2658 = vmatprep.subr.bf16.mxu0 0
        %2659 = vmatpush1.bf16.xpose.msra.mxu0 0
        %2660 = vmatprep.subr.bf16.mxu0 0
        %2661 = vmatpush1.bf16.xpose.msra.mxu0 0
        %2662 = vmatprep.subr.bf16.mxu0 0
        %2663 = vmatpush1.bf16.xpose.msra.mxu0 0
        %2664 = vmatprep.subr.bf16.mxu0 0
        %2665 = vmatpush1.bf16.xpose.msra.mxu0 %v2648
        %2666 = vmatprep.subr.bf16.mxu0 0
        %2667 = vmatpush2.bf16.xpose.msra.mxu0 0
        %2668 = vmatprep.subr.bf16.mxu0 0
        %2669 = vmatpush2.bf16.xpose.msra.mxu0 0
        %2670 = vmatprep.subr.bf16.mxu0 0
        %2671 = vmatpush2.bf16.xpose.msra.mxu0 0
        %2672 = vmatprep.subr.bf16.mxu0 0
        %2673 = vmatpush2.bf16.xpose.msra.mxu0 0
        %2674 = vmatprep.subr.bf16.mxu0 0
        %2675 = vmatpush2.bf16.xpose.msra.mxu0 0
        %2676 = vmatprep.subr.bf16.mxu0 0
        %2677 = vmatpush2.bf16.xpose.msra.mxu0 0
        %2678 = vmatprep.subr.bf16.mxu0 0
        %2679 = vmatpush2.bf16.xpose.msra.mxu0 0
        %2680 = vmatprep.subr.bf16.mxu0 0
        %2681 = vmatpush2.bf16.xpose.msra.mxu0 0
        %2682 = vmatprep.mubr.bf16.mxu0 0
        %2683 = vmatmul.mubr.bf16.gmra.mxu0 %v2645
        %v2684 = vpop.f32.mrf.mxu0
        %v2685 = vadd.f32 0.0, %v2684
        %v2686 = vpop.f32.mrf.mxu0
        %v2687 = vpop.f32.mrf.mxu0
        %v2688 = vpop.f32.mrf.mxu0
        %2689 = vdwg.mxu0
        %2691 = vrot.lane.b32.xlu0 %v2590, 96
        %v2692 = vpop.permute.xlu0 %2691
        %v2694 = vsel %vm1759, %v2576, 0
        %v2697 = vsel %vm1759, %v2692, 0
        %2699 = vmatprep.subr.bf16.mxu0 0
        %2700 = vmatpush1.bf16.xpose.msra.mxu0 0
        %2701 = vmatprep.subr.bf16.mxu0 0
        %2702 = vmatpush1.bf16.xpose.msra.mxu0 0
        %2703 = vmatprep.subr.bf16.mxu0 0
        %2704 = vmatpush1.bf16.xpose.msra.mxu0 0
        %2705 = vmatprep.subr.bf16.mxu0 0
        %2706 = vmatpush1.bf16.xpose.msra.mxu0 0
        %2707 = vmatprep.subr.bf16.mxu0 0
        %2708 = vmatpush1.bf16.xpose.msra.mxu0 0
        %2709 = vmatprep.subr.bf16.mxu0 0
        %2710 = vmatpush1.bf16.xpose.msra.mxu0 0
        %2711 = vmatprep.subr.bf16.mxu0 0
        %2712 = vmatpush1.bf16.xpose.msra.mxu0 0
        %2713 = vmatprep.subr.bf16.mxu0 0
        %2714 = vmatpush1.bf16.xpose.msra.mxu0 %v2697
        %2715 = vmatprep.subr.bf16.mxu0 0
        %2716 = vmatpush2.bf16.xpose.msra.mxu0 0
        %2717 = vmatprep.subr.bf16.mxu0 0
        %2718 = vmatpush2.bf16.xpose.msra.mxu0 0
        %2719 = vmatprep.subr.bf16.mxu0 0
        %2720 = vmatpush2.bf16.xpose.msra.mxu0 0
        %2721 = vmatprep.subr.bf16.mxu0 0
        %2722 = vmatpush2.bf16.xpose.msra.mxu0 0
        %2723 = vmatprep.subr.bf16.mxu0 0
        %2724 = vmatpush2.bf16.xpose.msra.mxu0 0
        %2725 = vmatprep.subr.bf16.mxu0 0
        %2726 = vmatpush2.bf16.xpose.msra.mxu0 0
        %2727 = vmatprep.subr.bf16.mxu0 0
        %2728 = vmatpush2.bf16.xpose.msra.mxu0 0
        %2729 = vmatprep.subr.bf16.mxu0 0
        %2730 = vmatpush2.bf16.xpose.msra.mxu0 0
        %2731 = vmatprep.mubr.bf16.mxu0 0
        %2732 = vmatmul.mubr.bf16.gmra.mxu0 %v2694
        %v2733 = vpop.f32.mrf.mxu0
        %v2734 = vadd.f32 0.0, %v2733
        %v2735 = vpop.f32.mrf.mxu0
        %v2736 = vpop.f32.mrf.mxu0
        %v2737 = vpop.f32.mrf.mxu0
        %2738 = vdwg.mxu0
        %2740 = vrot.lane.b32.xlu0 %v2591, 96
        %v2741 = vpop.permute.xlu0 %2740
        %v2743 = vsel %vm1759, %v2577, 0
        %v2746 = vsel %vm1759, %v2741, 0
        %2748 = vmatprep.subr.bf16.mxu0 0
        %2749 = vmatpush1.bf16.xpose.msra.mxu0 0
        %2750 = vmatprep.subr.bf16.mxu0 0
        %2751 = vmatpush1.bf16.xpose.msra.mxu0 0
        %2752 = vmatprep.subr.bf16.mxu0 0
        %2753 = vmatpush1.bf16.xpose.msra.mxu0 0
        %2754 = vmatprep.subr.bf16.mxu0 0
        %2755 = vmatpush1.bf16.xpose.msra.mxu0 0
        %2756 = vmatprep.subr.bf16.mxu0 0
        %2757 = vmatpush1.bf16.xpose.msra.mxu0 0
        %2758 = vmatprep.subr.bf16.mxu0 0
        %2759 = vmatpush1.bf16.xpose.msra.mxu0 0
        %2760 = vmatprep.subr.bf16.mxu0 0
        %2761 = vmatpush1.bf16.xpose.msra.mxu0 0
        %2762 = vmatprep.subr.bf16.mxu0 0
        %2763 = vmatpush1.bf16.xpose.msra.mxu0 %v2746
        %2764 = vmatprep.subr.bf16.mxu0 0
        %2765 = vmatpush2.bf16.xpose.msra.mxu0 0
        %2766 = vmatprep.subr.bf16.mxu0 0
        %2767 = vmatpush2.bf16.xpose.msra.mxu0 0
        %2768 = vmatprep.subr.bf16.mxu0 0
        %2769 = vmatpush2.bf16.xpose.msra.mxu0 0
        %2770 = vmatprep.subr.bf16.mxu0 0
        %2771 = vmatpush2.bf16.xpose.msra.mxu0 0
        %2772 = vmatprep.subr.bf16.mxu0 0
        %2773 = vmatpush2.bf16.xpose.msra.mxu0 0
        %2774 = vmatprep.subr.bf16.mxu0 0
        %2775 = vmatpush2.bf16.xpose.msra.mxu0 0
        %2776 = vmatprep.subr.bf16.mxu0 0
        %2777 = vmatpush2.bf16.xpose.msra.mxu0 0
        %2778 = vmatprep.subr.bf16.mxu0 0
        %2779 = vmatpush2.bf16.xpose.msra.mxu0 0
        %2780 = vmatprep.mubr.bf16.mxu0 0
        %2781 = vmatmul.mubr.bf16.gmra.mxu0 %v2743
        %v2782 = vpop.f32.mrf.mxu0
        %v2783 = vadd.f32 0.0, %v2782
        %v2784 = vpop.f32.mrf.mxu0
        %v2785 = vpop.f32.mrf.mxu0
        %v2786 = vpop.f32.mrf.mxu0
        %2787 = vdwg.mxu0
        %v2788 = vsel %vm1759, %v2636, -inf
        %2789 = vmax.xlane.f32.xlu0 %v2788
        %v2790 = vpop.xlane.xlu0 %2789
        %v2791 = vsel %vm1759, %v2685, -inf
        %2792 = vmax.xlane.f32.xlu0 %v2791
        %v2793 = vpop.xlane.xlu0 %2792
        %v2794 = vsel %vm1759, %v2734, -inf
        %2795 = vmax.xlane.f32.xlu0 %v2794
        %v2796 = vpop.xlane.xlu0 %2795
        %v2797 = vsel %vm1759, %v2783, -inf
        %2798 = vmax.xlane.f32.xlu0 %v2797
        %v2799 = vpop.xlane.xlu0 %2798
        %v2800 = vsub.f32 %v2636, %v2790
        %v2801 = vsub.f32 %v2685, %v2793
        %v2802 = vsub.f32 %v2734, %v2796
        %v2803 = vsub.f32 %v2783, %v2799
        %v2804 = vmul.f32 %v2800, 1.442695
        %v2805 = vpow.pop %v2804
        %v2806 = vmul.f32 %v2801, 1.442695
        %v2807 = vpow.pop %v2806
        %v2808 = vmul.f32 %v2802, 1.442695
        %v2809 = vpow.pop %v2808
        %v2810 = vmul.f32 %v2803, 1.442695
        %v2811 = vpow.pop %v2810
        %v2812 = vsel %vm1759, %v2805, 0.0
        %2813 = vadd.xlane.f32.xlu0 %v2812
        %v2814 = vpop.xlane.xlu0 %2813
        %v2815 = vsel %vm1759, %v2807, 0.0
        %2816 = vadd.xlane.f32.xlu0 %v2815
        %v2817 = vpop.xlane.xlu0 %2816
        %v2818 = vsel %vm1759, %v2809, 0.0
        %2819 = vadd.xlane.f32.xlu0 %v2818
        %v2820 = vpop.xlane.xlu0 %2819
        %v2821 = vsel %vm1759, %v2811, 0.0
        %2822 = vadd.xlane.f32.xlu0 %v2821
        %v2823 = vpop.xlane.xlu0 %2822
        %v2824 = vrcp.pop %v2814
        %v2825 = vmul.f32 %v2805, %v2824
        %v2826 = vrcp.pop %v2817
        %v2827 = vmul.f32 %v2807, %v2826
        %v2828 = vrcp.pop %v2820
        %v2829 = vmul.f32 %v2809, %v2828
        %v2830 = vrcp.pop %v2823
        %v2831 = vmul.f32 %v2811, %v2830
        %v2832 = vpack.c.bf16 %v2825, %v2825
        %v2833 = vpack.c.bf16 %v2827, %v2827
        %v2834 = vpack.c.bf16 %v2829, %v2829
        %v2835 = vpack.c.bf16 %v2831, %v2831
        %2836 = vrot.lane.b32.xlu0 %v2588, 64
        %v2837 = vpop.permute.xlu0 %2836
        %v2839 = vsel %vm1759, %v2832, 0
        %v2842 = vsel %vm2006, %v2837, 0
        %2844 = vmatprep.subr.bf16.mxu0 0
        %2845 = vmatpush1.bf16.msra.mxu0 0
        %2846 = vmatprep.subr.bf16.mxu0 0
        %2847 = vmatpush1.bf16.msra.mxu0 0
        %2848 = vmatprep.subr.bf16.mxu0 0
        %2849 = vmatpush1.bf16.msra.mxu0 0
        %2850 = vmatprep.subr.bf16.mxu0 0
        %2851 = vmatpush1.bf16.msra.mxu0 0
        %2852 = vmatprep.subr.bf16.mxu0 0
        %2853 = vmatpush1.bf16.msra.mxu0 0
        %2854 = vmatprep.subr.bf16.mxu0 0
        %2855 = vmatpush1.bf16.msra.mxu0 0
        %2856 = vmatprep.subr.bf16.mxu0 0
        %2857 = vmatpush1.bf16.msra.mxu0 0
        %2858 = vmatprep.subr.bf16.mxu0 0
        %2859 = vmatpush1.bf16.msra.mxu0 %v2842
        %2860 = vmatprep.subr.bf16.mxu0 0
        %2861 = vmatpush2.bf16.msra.mxu0 0
        %2862 = vmatprep.subr.bf16.mxu0 0
        %2863 = vmatpush2.bf16.msra.mxu0 0
        %2864 = vmatprep.subr.bf16.mxu0 0
        %2865 = vmatpush2.bf16.msra.mxu0 0
        %2866 = vmatprep.subr.bf16.mxu0 0
        %2867 = vmatpush2.bf16.msra.mxu0 0
        %2868 = vmatprep.subr.bf16.mxu0 0
        %2869 = vmatpush2.bf16.msra.mxu0 0
        %2870 = vmatprep.subr.bf16.mxu0 0
        %2871 = vmatpush2.bf16.msra.mxu0 0
        %2872 = vmatprep.subr.bf16.mxu0 0
        %2873 = vmatpush2.bf16.msra.mxu0 0
        %2874 = vmatprep.subr.bf16.mxu0 0
        %2875 = vmatpush2.bf16.msra.mxu0 0
        %2876 = vmatprep.mubr.bf16.mxu0 0
        %2877 = vmatmul.mubr.bf16.gmra.mxu0 %v2839
        %v2878 = vpop.f32.mrf.mxu0
        %v2879 = vadd.f32 0.0, %v2878
        %v2880 = vpop.f32.mrf.mxu0
        %v2881 = vpop.f32.mrf.mxu0
        %v2882 = vpop.f32.mrf.mxu0
        %2883 = vdwg.mxu0
        %2884 = vrot.lane.b32.xlu0 %v2589, 64
        %v2885 = vpop.permute.xlu0 %2884
        %v2887 = vsel %vm1759, %v2833, 0
        %v2890 = vsel %vm2006, %v2885, 0
        %2892 = vmatprep.subr.bf16.mxu0 0
        %2893 = vmatpush1.bf16.msra.mxu0 0
        %2894 = vmatprep.subr.bf16.mxu0 0
        %2895 = vmatpush1.bf16.msra.mxu0 0
        %2896 = vmatprep.subr.bf16.mxu0 0
        %2897 = vmatpush1.bf16.msra.mxu0 0
        %2898 = vmatprep.subr.bf16.mxu0 0
        %2899 = vmatpush1.bf16.msra.mxu0 0
        %2900 = vmatprep.subr.bf16.mxu0 0
        %2901 = vmatpush1.bf16.msra.mxu0 0
        %2902 = vmatprep.subr.bf16.mxu0 0
        %2903 = vmatpush1.bf16.msra.mxu0 0
        %2904 = vmatprep.subr.bf16.mxu0 0
        %2905 = vmatpush1.bf16.msra.mxu0 0
        %2906 = vmatprep.subr.bf16.mxu0 0
        %2907 = vmatpush1.bf16.msra.mxu0 %v2890
        %2908 = vmatprep.subr.bf16.mxu0 0
        %2909 = vmatpush2.bf16.msra.mxu0 0
        %2910 = vmatprep.subr.bf16.mxu0 0
        %2911 = vmatpush2.bf16.msra.mxu0 0
        %2912 = vmatprep.subr.bf16.mxu0 0
        %2913 = vmatpush2.bf16.msra.mxu0 0
        %2914 = vmatprep.subr.bf16.mxu0 0
        %2915 = vmatpush2.bf16.msra.mxu0 0
        %2916 = vmatprep.subr.bf16.mxu0 0
        %2917 = vmatpush2.bf16.msra.mxu0 0
        %2918 = vmatprep.subr.bf16.mxu0 0
        %2919 = vmatpush2.bf16.msra.mxu0 0
        %2920 = vmatprep.subr.bf16.mxu0 0
        %2921 = vmatpush2.bf16.msra.mxu0 0
        %2922 = vmatprep.subr.bf16.mxu0 0
        %2923 = vmatpush2.bf16.msra.mxu0 0
        %2924 = vmatprep.mubr.bf16.mxu0 0
        %2925 = vmatmul.mubr.bf16.gmra.mxu0 %v2887
        %v2926 = vpop.f32.mrf.mxu0
        %v2927 = vadd.f32 0.0, %v2926
        %v2928 = vpop.f32.mrf.mxu0
        %v2929 = vpop.f32.mrf.mxu0
        %v2930 = vpop.f32.mrf.mxu0
        %2931 = vdwg.mxu0
        %2932 = vrot.lane.b32.xlu0 %v2590, 64
        %v2933 = vpop.permute.xlu0 %2932
        %v2935 = vsel %vm1759, %v2834, 0
        %v2938 = vsel %vm2006, %v2933, 0
        %2940 = vmatprep.subr.bf16.mxu0 0
        %2941 = vmatpush1.bf16.msra.mxu0 0
        %2942 = vmatprep.subr.bf16.mxu0 0
        %2943 = vmatpush1.bf16.msra.mxu0 0
        %2944 = vmatprep.subr.bf16.mxu0 0
        %2945 = vmatpush1.bf16.msra.mxu0 0
        %2946 = vmatprep.subr.bf16.mxu0 0
        %2947 = vmatpush1.bf16.msra.mxu0 0
        %2948 = vmatprep.subr.bf16.mxu0 0
        %2949 = vmatpush1.bf16.msra.mxu0 0
        %2950 = vmatprep.subr.bf16.mxu0 0
        %2951 = vmatpush1.bf16.msra.mxu0 0
        %2952 = vmatprep.subr.bf16.mxu0 0
        %2953 = vmatpush1.bf16.msra.mxu0 0
        %2954 = vmatprep.subr.bf16.mxu0 0
        %2955 = vmatpush1.bf16.msra.mxu0 %v2938
        %2956 = vmatprep.subr.bf16.mxu0 0
        %2957 = vmatpush2.bf16.msra.mxu0 0
        %2958 = vmatprep.subr.bf16.mxu0 0
        %2959 = vmatpush2.bf16.msra.mxu0 0
        %2960 = vmatprep.subr.bf16.mxu0 0
        %2961 = vmatpush2.bf16.msra.mxu0 0
        %2962 = vmatprep.subr.bf16.mxu0 0
        %2963 = vmatpush2.bf16.msra.mxu0 0
        %2964 = vmatprep.subr.bf16.mxu0 0
        %2965 = vmatpush2.bf16.msra.mxu0 0
        %2966 = vmatprep.subr.bf16.mxu0 0
        %2967 = vmatpush2.bf16.msra.mxu0 0
        %2968 = vmatprep.subr.bf16.mxu0 0
        %2969 = vmatpush2.bf16.msra.mxu0 0
        %2970 = vmatprep.subr.bf16.mxu0 0
        %2971 = vmatpush2.bf16.msra.mxu0 0
        %2972 = vmatprep.mubr.bf16.mxu0 0
        %2973 = vmatmul.mubr.bf16.gmra.mxu0 %v2935
        %v2974 = vpop.f32.mrf.mxu0
        %v2975 = vadd.f32 0.0, %v2974
        %v2976 = vpop.f32.mrf.mxu0
        %v2977 = vpop.f32.mrf.mxu0
        %v2978 = vpop.f32.mrf.mxu0
        %2979 = vdwg.mxu0
        %2980 = vrot.lane.b32.xlu0 %v2591, 64
        %v2981 = vpop.permute.xlu0 %2980
        %v2983 = vsel %vm1759, %v2835, 0
        %v2986 = vsel %vm2006, %v2981, 0
        %2988 = vmatprep.subr.bf16.mxu0 0
        %2989 = vmatpush1.bf16.msra.mxu0 0
        %2990 = vmatprep.subr.bf16.mxu0 0
        %2991 = vmatpush1.bf16.msra.mxu0 0
        %2992 = vmatprep.subr.bf16.mxu0 0
        %2993 = vmatpush1.bf16.msra.mxu0 0
        %2994 = vmatprep.subr.bf16.mxu0 0
        %2995 = vmatpush1.bf16.msra.mxu0 0
        %2996 = vmatprep.subr.bf16.mxu0 0
        %2997 = vmatpush1.bf16.msra.mxu0 0
        %2998 = vmatprep.subr.bf16.mxu0 0
        %2999 = vmatpush1.bf16.msra.mxu0 0
        %3000 = vmatprep.subr.bf16.mxu0 0
        %3001 = vmatpush1.bf16.msra.mxu0 0
        %3002 = vmatprep.subr.bf16.mxu0 0
        %3003 = vmatpush1.bf16.msra.mxu0 %v2986
        %3004 = vmatprep.subr.bf16.mxu0 0
        %3005 = vmatpush2.bf16.msra.mxu0 0
        %3006 = vmatprep.subr.bf16.mxu0 0
        %3007 = vmatpush2.bf16.msra.mxu0 0
        %3008 = vmatprep.subr.bf16.mxu0 0
        %3009 = vmatpush2.bf16.msra.mxu0 0
        %3010 = vmatprep.subr.bf16.mxu0 0
        %3011 = vmatpush2.bf16.msra.mxu0 0
        %3012 = vmatprep.subr.bf16.mxu0 0
        %3013 = vmatpush2.bf16.msra.mxu0 0
        %3014 = vmatprep.subr.bf16.mxu0 0
        %3015 = vmatpush2.bf16.msra.mxu0 0
        %3016 = vmatprep.subr.bf16.mxu0 0
        %3017 = vmatpush2.bf16.msra.mxu0 0
        %3018 = vmatprep.subr.bf16.mxu0 0
        %3019 = vmatpush2.bf16.msra.mxu0 0
        %3020 = vmatprep.mubr.bf16.mxu0 0
        %3021 = vmatmul.mubr.bf16.gmra.mxu0 %v2983
        %v3022 = vpop.f32.mrf.mxu0
        %v3023 = vadd.f32 0.0, %v3022
        %v3024 = vpop.f32.mrf.mxu0
        %v3025 = vpop.f32.mrf.mxu0
        %v3026 = vpop.f32.mrf.mxu0
        %3027 = vdwg.mxu0
        %3029 = vrot.lane.b32.xlu0 %v2927, 8
        %v3030 = vpop.permute.xlu0 %3029
        %3033 = vrot.lane.b32.xlu0 %v2975, 16
        %v3034 = vpop.permute.xlu0 %3033
        %3037 = vrot.lane.b32.xlu0 %v3023, 24
        %v3038 = vpop.permute.xlu0 %3037
        %v3040 = vsel %vm1759, %v2879, %v3030
        %v3041 = vsel %vm2207, %v3040, %v3034
        %v3042 = vsel %vm2209, %v3041, %v3038
        %v3043 = vpack.c.bf16 %v3042, %v3042
        %v3045 = vlaneseq
        %v3046 = vshrl.u32 %v3045, 7
        %v3047 = vsub.s32 0, %v3046
        %v3048 = vrot.slane %v2563, %v3047
        %v3054 = vunpack.c.l.b16 %v2558
        %v3055 = vunpack.c.l.b16 %v2559
        %v3056 = vunpack.c.l.b16 %v2560
        %v3057 = vunpack.c.l.b16 %v2561
        %v3058 = vpack.c.b16 %v3055, %v3054
        %v3059 = vpack.c.b16 %v3057, %v3056
        %v3063 = vsel %vm1626, %v3043, 0
        %3065 = vmatprep.subr.bf16.mxu0 0
        %3066 = vmatpush1.bf16.msra.mxu0 0
        %3067 = vmatprep.subr.bf16.mxu0 0
        %3068 = vmatpush1.bf16.msra.mxu0 0
        %3069 = vmatprep.subr.bf16.mxu0 0
        %3070 = vmatpush1.bf16.msra.mxu0 0
        %3071 = vmatprep.subr.bf16.mxu0 0
        %3072 = vmatpush1.bf16.msra.mxu0 0
        %3073 = vmatprep.subr.bf16.mxu0 0
        %3074 = vmatpush1.bf16.msra.mxu0 0
        %3075 = vmatprep.subr.bf16.mxu0 0
        %3076 = vmatpush1.bf16.msra.mxu0 0
        %3077 = vmatprep.subr.bf16.mxu0 0
        %3078 = vmatpush1.bf16.msra.mxu0 %v3059
        %3079 = vmatprep.subr.bf16.mxu0 0
        %3080 = vmatpush1.bf16.msra.mxu0 %v3058
        %3081 = vmatprep.subr.bf16.mxu0 0
        %3082 = vmatpush2.bf16.msra.mxu0 0
        %3083 = vmatprep.subr.bf16.mxu0 0
        %3084 = vmatpush2.bf16.msra.mxu0 0
        %3085 = vmatprep.subr.bf16.mxu0 0
        %3086 = vmatpush2.bf16.msra.mxu0 0
        %3087 = vmatprep.subr.bf16.mxu0 0
        %3088 = vmatpush2.bf16.msra.mxu0 0
        %3089 = vmatprep.subr.bf16.mxu0 0
        %3090 = vmatpush2.bf16.msra.mxu0 0
        %3091 = vmatprep.subr.bf16.mxu0 0
        %3092 = vmatpush2.bf16.msra.mxu0 0
        %3093 = vmatprep.subr.bf16.mxu0 0
        %3094 = vmatpush2.bf16.msra.mxu0 0
        %3095 = vmatprep.subr.bf16.mxu0 0
        %3096 = vmatpush2.bf16.msra.mxu0 0
        %3097 = vmatprep.mubr.bf16.mxu0 0
        %3098 = vmatmul.mubr.bf16.gmra.mxu0 %v3063
        %v3099 = vpop.f32.mrf.mxu0
        %v3100 = vadd.f32 %v3048, %v3099
        %v3101 = vpop.f32.mrf.mxu0
        %v3102 = vpop.f32.mrf.mxu0
        %v3103 = vpop.f32.mrf.mxu0
        %3104 = vdwg.mxu0
        %v3105 = vadd.f32 %v2455, %v3100
        %s3106 = scalar_lea.vmem [#allocation14], 1
        %v3107 = vld [vmem:[%s3106] sm:$0x1]
        %s3108 = scalar_lea.vmem [#allocation16], 1
        %v3109 = vld [vmem:[%s3108] sm:$0x1]
        %v3110 = vsel %vm1626, %v3105, 0.0
        %3111 = vadd.xlane.f32.xlu0 %v3110
        %v3112 = vpop.xlane.xlu0 %3111
        %v3113 = vmul.f32 %v3112, %v1630
        %v3114 = vsub.f32 %v3105, %v3113
        %v3115 = vmul.f32 %v3114, %v3114
        %v3116 = vsel %vm1626, %v3115, 0.0
        %3117 = vadd.xlane.f32.xlu0 %v3116
        %v3118 = vpop.xlane.xlu0 %3117
        %v3119 = vmul.f32 %v3118, %v1630
        %v3120 = vadd.f32 %v3119, 1e-06
        %v3121 = vrsqrt.pop %v3120
        %v3122 = vmul.f32 %v3114, %v3121
        %v3124 = vlaneseq
        %v3125 = vshrl.u32 %v3124, 7
        %v3126 = vsub.s32 0, %v3125
        %v3127 = vrot.slane %v3107, %v3126
        %v3129 = vmul.f32 %v3122, %v3127
        %v3131 = vlaneseq
        %v3132 = vshrl.u32 %v3131, 7
        %v3133 = vsub.s32 0, %v3132
        %v3134 = vrot.slane %v3109, %v3133
        %v3136 = vadd.f32 %v3129, %v3134
        %s3137 = scalar_lea.vmem %s23, 16
        %v3138 = vld [vmem:[%s3137] sm:$0xf]
        %v3139 = vld [vmem:[%s3137 + $0x4] sm:$0xf]
        %v3140 = vld [vmem:[%s3137 + $0x8] sm:$0xf]
        %v3141 = vld [vmem:[%s3137 + $0xc] sm:$0xf]
        %s3142 = scalar_lea.vmem [#allocation17], 1
        %v3143 = vld [vmem:[%s3142] sm:$0x1]
        %s3144 = scalar_lea.vmem %s27, 32
        %v3145 = vld [vmem:[%s3144] sm:$0xf]
        %v3146 = vld [vmem:[%s3144 + $0x4] sm:$0xf]
        %v3147 = vld [vmem:[%s3144 + $0x8] sm:$0xf]
        %v3148 = vld [vmem:[%s3144 + $0xc] sm:$0xf]
        %v3149 = vld [vmem:[%s3144 + $0x10] sm:$0xf]
        %v3150 = vld [vmem:[%s3144 + $0x14] sm:$0xf]
        %v3151 = vld [vmem:[%s3144 + $0x18] sm:$0xf]
        %v3152 = vld [vmem:[%s3144 + $0x1c] sm:$0xf]
        %s3153 = scalar_lea.vmem [#allocation19], 1
        %v3154 = vld [vmem:[%s3153] sm:$0x1]
        %v3155 = vpack.c.bf16 %v3136, %v3136
        %v3157 = vlaneseq
        %v3158 = vshrl.u32 %v3157, 7
        %v3159 = vsub.s32 0, %v3158
        %v3160 = vrot.slane %v3143, %v3159
        %v3166 = vunpack.c.l.b16 %v3138
        %v3167 = vunpack.c.l.b16 %v3139
        %v3168 = vunpack.c.l.b16 %v3140
        %v3169 = vunpack.c.l.b16 %v3141
        %v3170 = vpack.c.b16 %v3167, %v3166
        %v3171 = vpack.c.b16 %v3169, %v3168
        %v3175 = vsel %vm1626, %v3155, 0
        %3177 = vmatprep.subr.bf16.mxu0 0
        %3178 = vmatpush1.bf16.msra.mxu0 0
        %3179 = vmatprep.subr.bf16.mxu0 0
        %3180 = vmatpush1.bf16.msra.mxu0 0
        %3181 = vmatprep.subr.bf16.mxu0 0
        %3182 = vmatpush1.bf16.msra.mxu0 0
        %3183 = vmatprep.subr.bf16.mxu0 0
        %3184 = vmatpush1.bf16.msra.mxu0 0
        %3185 = vmatprep.subr.bf16.mxu0 0
        %3186 = vmatpush1.bf16.msra.mxu0 0
        %3187 = vmatprep.subr.bf16.mxu0 0
        %3188 = vmatpush1.bf16.msra.mxu0 0
        %3189 = vmatprep.subr.bf16.mxu0 0
        %3190 = vmatpush1.bf16.msra.mxu0 %v3171
        %3191 = vmatprep.subr.bf16.mxu0 0
        %3192 = vmatpush1.bf16.msra.mxu0 %v3170
        %3193 = vmatprep.subr.bf16.mxu0 0
        %3194 = vmatpush2.bf16.msra.mxu0 0
        %3195 = vmatprep.subr.bf16.mxu0 0
        %3196 = vmatpush2.bf16.msra.mxu0 0
        %3197 = vmatprep.subr.bf16.mxu0 0
        %3198 = vmatpush2.bf16.msra.mxu0 0
        %3199 = vmatprep.subr.bf16.mxu0 0
        %3200 = vmatpush2.bf16.msra.mxu0 0
        %3201 = vmatprep.subr.bf16.mxu0 0
        %3202 = vmatpush2.bf16.msra.mxu0 0
        %3203 = vmatprep.subr.bf16.mxu0 0
        %3204 = vmatpush2.bf16.msra.mxu0 0
        %3205 = vmatprep.subr.bf16.mxu0 0
        %3206 = vmatpush2.bf16.msra.mxu0 0
        %3207 = vmatprep.subr.bf16.mxu0 0
        %3208 = vmatpush2.bf16.msra.mxu0 0
        %3209 = vmatprep.mubr.bf16.mxu0 0
        %3210 = vmatmul.mubr.bf16.gmra.mxu0 %v3175
        %v3211 = vpop.f32.mrf.mxu0
        %v3212 = vadd.f32 %v3160, %v3211
        %v3213 = vpop.f32.mrf.mxu0
        %v3214 = vpop.f32.mrf.mxu0
        %v3215 = vpop.f32.mrf.mxu0
        %3216 = vdwg.mxu0
        %v3217 = vmax.f32 %v3212, 0.0
        %v3218 = vpack.c.bf16 %v3217, %v3217
        %v3220 = vlaneseq
        %v3221 = vshrl.u32 %v3220, 7
        %v3222 = vsub.s32 0, %v3221
        %v3223 = vrot.slane %v3154, %v3222
        %v3233 = vunpack.c.l.b16 %v3145
        %v3234 = vunpack.c.l.b16 %v3146
        %v3235 = vunpack.c.l.b16 %v3147
        %v3236 = vunpack.c.l.b16 %v3148
        %v3237 = vunpack.c.l.b16 %v3149
        %v3238 = vunpack.c.l.b16 %v3150
        %v3239 = vunpack.c.l.b16 %v3151
        %v3240 = vunpack.c.l.b16 %v3152
        %v3241 = vpack.c.b16 %v3234, %v3233
        %v3242 = vpack.c.b16 %v3236, %v3235
        %v3243 = vpack.c.b16 %v3238, %v3237
        %v3244 = vpack.c.b16 %v3240, %v3239
        %v3250 = vsel %vm2411, %v3218, 0
        %3252 = vmatprep.subr.bf16.mxu0 0
        %3253 = vmatpush1.bf16.msra.mxu0 0
        %3254 = vmatprep.subr.bf16.mxu0 0
        %3255 = vmatpush1.bf16.msra.mxu0 0
        %3256 = vmatprep.subr.bf16.mxu0 0
        %3257 = vmatpush1.bf16.msra.mxu0 0
        %3258 = vmatprep.subr.bf16.mxu0 0
        %3259 = vmatpush1.bf16.msra.mxu0 0
        %3260 = vmatprep.subr.bf16.mxu0 0
        %3261 = vmatpush1.bf16.msra.mxu0 %v3244
        %3262 = vmatprep.subr.bf16.mxu0 0
        %3263 = vmatpush1.bf16.msra.mxu0 %v3243
        %3264 = vmatprep.subr.bf16.mxu0 0
        %3265 = vmatpush1.bf16.msra.mxu0 %v3242
        %3266 = vmatprep.subr.bf16.mxu0 0
        %3267 = vmatpush1.bf16.msra.mxu0 %v3241
        %3268 = vmatprep.subr.bf16.mxu0 0
        %3269 = vmatpush2.bf16.msra.mxu0 0
        %3270 = vmatprep.subr.bf16.mxu0 0
        %3271 = vmatpush2.bf16.msra.mxu0 0
        %3272 = vmatprep.subr.bf16.mxu0 0
        %3273 = vmatpush2.bf16.msra.mxu0 0
        %3274 = vmatprep.subr.bf16.mxu0 0
        %3275 = vmatpush2.bf16.msra.mxu0 0
        %3276 = vmatprep.subr.bf16.mxu0 0
        %3277 = vmatpush2.bf16.msra.mxu0 0
        %3278 = vmatprep.subr.bf16.mxu0 0
        %3279 = vmatpush2.bf16.msra.mxu0 0
        %3280 = vmatprep.subr.bf16.mxu0 0
        %3281 = vmatpush2.bf16.msra.mxu0 0
        %3282 = vmatprep.subr.bf16.mxu0 0
        %3283 = vmatpush2.bf16.msra.mxu0 0
        %3284 = vmatprep.mubr.bf16.mxu0 0
        %3285 = vmatmul.mubr.bf16.gmra.mxu0 %v3250
        %v3286 = vpop.f32.mrf.mxu0
        %v3287 = vadd.f32 %v3223, %v3286
        %v3288 = vpop.f32.mrf.mxu0
        %v3289 = vpop.f32.mrf.mxu0
        %v3290 = vpop.f32.mrf.mxu0
        %3291 = vdwg.mxu0
        %v3292 = vadd.f32 %v3105, %v3287
        %v3293 = vld [vmem:[#allocation20] sm:$0x1]
        %v3294 = vld [vmem:[#allocation22] sm:$0x1]
        %v3295 = vsel %vm1626, %v3292, 0.0
        %3296 = vadd.xlane.f32.xlu0 %v3295
        %v3297 = vpop.xlane.xlu0 %3296
        %v3298 = vmul.f32 %v3297, %v1630
        %v3299 = vsub.f32 %v3292, %v3298
        %v3300 = vmul.f32 %v3299, %v3299
        %v3301 = vsel %vm1626, %v3300, 0.0
        %3302 = vadd.xlane.f32.xlu0 %v3301
        %v3303 = vpop.xlane.xlu0 %3302
        %v3304 = vmul.f32 %v3303, %v1630
        %v3305 = vadd.f32 %v3304, 1e-06
        %v3306 = vrsqrt.pop %v3305
        %v3307 = vmul.f32 %v3299, %v3306
        %v3309 = vlaneseq
        %v3310 = vshrl.u32 %v3309, 7
        %v3311 = vsub.s32 0, %v3310
        %v3312 = vrot.slane %v3293, %v3311
        %v3314 = vmul.f32 %v3307, %v3312
        %v3316 = vlaneseq
        %v3317 = vshrl.u32 %v3316, 7
        %v3318 = vsub.s32 0, %v3317
        %v3319 = vrot.slane %v3294, %v3318
        %v3321 = vadd.f32 %v3314, %v3319
        %v3322 = vld [vmem:[%s1424] sm:$0xff]
        %v3323 = vld [vmem:[#allocation23] sm:$0x1]
        %v3324 = vld [vmem:[#allocation25] sm:$0x1]
        %v3325 = vsel %vm1626, %v3322, 0.0
        %3326 = vadd.xlane.f32.xlu0 %v3325
        %v3327 = vpop.xlane.xlu0 %3326
        %v3328 = vmul.f32 %v3327, %v1630
        %v3329 = vsub.f32 %v3322, %v3328
        %v3330 = vmul.f32 %v3329, %v3329
        %v3331 = vsel %vm1626, %v3330, 0.0
        %3332 = vadd.xlane.f32.xlu0 %v3331
        %v3333 = vpop.xlane.xlu0 %3332
        %v3334 = vmul.f32 %v3333, %v1630
        %v3335 = vadd.f32 %v3334, 1e-06
        %v3336 = vrsqrt.pop %v3335
        %v3337 = vmul.f32 %v3329, %v3336
        %v3339 = vlaneseq
        %v3340 = vshrl.u32 %v3339, 7
        %v3341 = vsub.s32 0, %v3340
        %v3342 = vrot.slane %v3323, %v3341
        %v3344 = vmul.f32 %v3337, %v3342
        %v3346 = vlaneseq
        %v3347 = vshrl.u32 %v3346, 7
        %v3348 = vsub.s32 0, %v3347
        %v3349 = vrot.slane %v3324, %v3348
        %v3351 = vadd.f32 %v3344, %v3349
        %v3352 = vld [vmem:[%s39] sm:$0xf]
        %v3353 = vld [vmem:[%s39 + $0x4] sm:$0xf]
        %v3354 = vld [vmem:[%s39 + $0x8] sm:$0xf]
        %v3355 = vld [vmem:[%s39 + $0xc] sm:$0xf]
        %v3356 = vpack.c.bf16 %v3351, %v3351
        %v3357 = vld [vmem:[#allocation26] sm:$0x1]
        %v3359 = vlaneseq
        %v3360 = vshrl.u32 %v3359, 7
        %v3361 = vsub.s32 0, %v3360
        %v3362 = vrot.slane %v3357, %v3361
        %v3368 = vunpack.c.l.b16 %v3352
        %v3369 = vunpack.c.l.b16 %v3353
        %v3370 = vunpack.c.l.b16 %v3354
        %v3371 = vunpack.c.l.b16 %v3355
        %v3372 = vpack.c.b16 %v3369, %v3368
        %v3373 = vpack.c.b16 %v3371, %v3370
        %v3377 = vsel %vm1626, %v3356, 0
        %3379 = vmatprep.subr.bf16.mxu0 0
        %3380 = vmatpush1.bf16.msra.mxu0 0
        %3381 = vmatprep.subr.bf16.mxu0 0
        %3382 = vmatpush1.bf16.msra.mxu0 0
        %3383 = vmatprep.subr.bf16.mxu0 0
        %3384 = vmatpush1.bf16.msra.mxu0 0
        %3385 = vmatprep.subr.bf16.mxu0 0
        %3386 = vmatpush1.bf16.msra.mxu0 0
        %3387 = vmatprep.subr.bf16.mxu0 0
        %3388 = vmatpush1.bf16.msra.mxu0 0
        %3389 = vmatprep.subr.bf16.mxu0 0
        %3390 = vmatpush1.bf16.msra.mxu0 0
        %3391 = vmatprep.subr.bf16.mxu0 0
        %3392 = vmatpush1.bf16.msra.mxu0 %v3373
        %3393 = vmatprep.subr.bf16.mxu0 0
        %3394 = vmatpush1.bf16.msra.mxu0 %v3372
        %3395 = vmatprep.subr.bf16.mxu0 0
        %3396 = vmatpush2.bf16.msra.mxu0 0
        %3397 = vmatprep.subr.bf16.mxu0 0
        %3398 = vmatpush2.bf16.msra.mxu0 0
        %3399 = vmatprep.subr.bf16.mxu0 0
        %3400 = vmatpush2.bf16.msra.mxu0 0
        %3401 = vmatprep.subr.bf16.mxu0 0
        %3402 = vmatpush2.bf16.msra.mxu0 0
        %3403 = vmatprep.subr.bf16.mxu0 0
        %3404 = vmatpush2.bf16.msra.mxu0 0
        %3405 = vmatprep.subr.bf16.mxu0 0
        %3406 = vmatpush2.bf16.msra.mxu0 0
        %3407 = vmatprep.subr.bf16.mxu0 0
        %3408 = vmatpush2.bf16.msra.mxu0 0
        %3409 = vmatprep.subr.bf16.mxu0 0
        %3410 = vmatpush2.bf16.msra.mxu0 0
        %3411 = vmatprep.mubr.bf16.mxu0 0
        %3412 = vmatmul.mubr.bf16.gmra.mxu0 %v3377
        %v3413 = vpop.f32.mrf.mxu0
        %v3414 = vadd.f32 %v3362, %v3413
        %v3415 = vpop.f32.mrf.mxu0
        %v3416 = vpop.f32.mrf.mxu0
        %v3417 = vpop.f32.mrf.mxu0
        %3418 = vdwg.mxu0
        %v3419 = vmul.f32 %v3414, 0.35355338
        %v3420 = vld [vmem:[%s43] sm:$0xf]
        %v3421 = vld [vmem:[%s43 + $0x4] sm:$0xf]
        %v3422 = vld [vmem:[%s43 + $0x8] sm:$0xf]
        %v3423 = vld [vmem:[%s43 + $0xc] sm:$0xf]
        %v3424 = vld [vmem:[#allocation28] sm:$0x1]
        %3426 = vrot.lane.b32.xlu0 %v3419, 120
        %v3427 = vpop.permute.xlu0 %3426
        %3429 = vrot.lane.b32.xlu0 %v3419, 112
        %v3430 = vpop.permute.xlu0 %3429
        %3432 = vrot.lane.b32.xlu0 %v3419, 104
        %v3433 = vpop.permute.xlu0 %3432
        %v3435 = vpack.c.bf16 %v3419, %v3419
        %v3436 = vpack.c.bf16 %v3427, %v3427
        %v3437 = vpack.c.bf16 %v3430, %v3430
        %v3438 = vpack.c.bf16 %v3433, %v3433
        %3440 = vrot.lane.b32.xlu0 %v3414, 120
        %v3441 = vpop.permute.xlu0 %3440
        %3443 = vrot.lane.b32.xlu0 %v3414, 112
        %v3444 = vpop.permute.xlu0 %3443
        %3446 = vrot.lane.b32.xlu0 %v3414, 104
        %v3447 = vpop.permute.xlu0 %3446
        %v3449 = vpack.c.bf16 %v3414, %v3414
        %v3450 = vpack.c.bf16 %v3441, %v3441
        %v3451 = vpack.c.bf16 %v3444, %v3444
        %v3452 = vpack.c.bf16 %v3447, %v3447
        %3454 = vrot.lane.b32.xlu0 %v3449, 96
        %v3455 = vpop.permute.xlu0 %3454
        %v3457 = vsel %vm1759, %v3435, 0
        %v3460 = vsel %vm1759, %v3455, 0
        %3462 = vmatprep.subr.bf16.mxu0 0
        %3463 = vmatpush1.bf16.xpose.msra.mxu0 0
        %3464 = vmatprep.subr.bf16.mxu0 0
        %3465 = vmatpush1.bf16.xpose.msra.mxu0 0
        %3466 = vmatprep.subr.bf16.mxu0 0
        %3467 = vmatpush1.bf16.xpose.msra.mxu0 0
        %3468 = vmatprep.subr.bf16.mxu0 0
        %3469 = vmatpush1.bf16.xpose.msra.mxu0 0
        %3470 = vmatprep.subr.bf16.mxu0 0
        %3471 = vmatpush1.bf16.xpose.msra.mxu0 0
        %3472 = vmatprep.subr.bf16.mxu0 0
        %3473 = vmatpush1.bf16.xpose.msra.mxu0 0
        %3474 = vmatprep.subr.bf16.mxu0 0
        %3475 = vmatpush1.bf16.xpose.msra.mxu0 0
        %3476 = vmatprep.subr.bf16.mxu0 0
        %3477 = vmatpush1.bf16.xpose.msra.mxu0 %v3460
        %3478 = vmatprep.subr.bf16.mxu0 0
        %3479 = vmatpush2.bf16.xpose.msra.mxu0 0
        %3480 = vmatprep.subr.bf16.mxu0 0
        %3481 = vmatpush2.bf16.xpose.msra.mxu0 0
        %3482 = vmatprep.subr.bf16.mxu0 0
        %3483 = vmatpush2.bf16.xpose.msra.mxu0 0
        %3484 = vmatprep.subr.bf16.mxu0 0
        %3485 = vmatpush2.bf16.xpose.msra.mxu0 0
        %3486 = vmatprep.subr.bf16.mxu0 0
        %3487 = vmatpush2.bf16.xpose.msra.mxu0 0
        %3488 = vmatprep.subr.bf16.mxu0 0
        %3489 = vmatpush2.bf16.xpose.msra.mxu0 0
        %3490 = vmatprep.subr.bf16.mxu0 0
        %3491 = vmatpush2.bf16.xpose.msra.mxu0 0
        %3492 = vmatprep.subr.bf16.mxu0 0
        %3493 = vmatpush2.bf16.xpose.msra.mxu0 0
        %3494 = vmatprep.mubr.bf16.mxu0 0
        %3495 = vmatmul.mubr.bf16.gmra.mxu0 %v3457
        %v3496 = vpop.f32.mrf.mxu0
        %v3497 = vadd.f32 %v1622, %v3496
        %v3498 = vpop.f32.mrf.mxu0
        %v3499 = vpop.f32.mrf.mxu0
        %v3500 = vpop.f32.mrf.mxu0
        %3501 = vdwg.mxu0
        %3503 = vrot.lane.b32.xlu0 %v3450, 96
        %v3504 = vpop.permute.xlu0 %3503
        %v3506 = vsel %vm1759, %v3436, 0
        %v3509 = vsel %vm1759, %v3504, 0
        %3511 = vmatprep.subr.bf16.mxu0 0
        %3512 = vmatpush1.bf16.xpose.msra.mxu0 0
        %3513 = vmatprep.subr.bf16.mxu0 0
        %3514 = vmatpush1.bf16.xpose.msra.mxu0 0
        %3515 = vmatprep.subr.bf16.mxu0 0
        %3516 = vmatpush1.bf16.xpose.msra.mxu0 0
        %3517 = vmatprep.subr.bf16.mxu0 0
        %3518 = vmatpush1.bf16.xpose.msra.mxu0 0
        %3519 = vmatprep.subr.bf16.mxu0 0
        %3520 = vmatpush1.bf16.xpose.msra.mxu0 0
        %3521 = vmatprep.subr.bf16.mxu0 0
        %3522 = vmatpush1.bf16.xpose.msra.mxu0 0
        %3523 = vmatprep.subr.bf16.mxu0 0
        %3524 = vmatpush1.bf16.xpose.msra.mxu0 0
        %3525 = vmatprep.subr.bf16.mxu0 0
        %3526 = vmatpush1.bf16.xpose.msra.mxu0 %v3509
        %3527 = vmatprep.subr.bf16.mxu0 0
        %3528 = vmatpush2.bf16.xpose.msra.mxu0 0
        %3529 = vmatprep.subr.bf16.mxu0 0
        %3530 = vmatpush2.bf16.xpose.msra.mxu0 0
        %3531 = vmatprep.subr.bf16.mxu0 0
        %3532 = vmatpush2.bf16.xpose.msra.mxu0 0
        %3533 = vmatprep.subr.bf16.mxu0 0
        %3534 = vmatpush2.bf16.xpose.msra.mxu0 0
        %3535 = vmatprep.subr.bf16.mxu0 0
        %3536 = vmatpush2.bf16.xpose.msra.mxu0 0
        %3537 = vmatprep.subr.bf16.mxu0 0
        %3538 = vmatpush2.bf16.xpose.msra.mxu0 0
        %3539 = vmatprep.subr.bf16.mxu0 0
        %3540 = vmatpush2.bf16.xpose.msra.mxu0 0
        %3541 = vmatprep.subr.bf16.mxu0 0
        %3542 = vmatpush2.bf16.xpose.msra.mxu0 0
        %3543 = vmatprep.mubr.bf16.mxu0 0
        %3544 = vmatmul.mubr.bf16.gmra.mxu0 %v3506
        %v3545 = vpop.f32.mrf.mxu0
        %v3546 = vadd.f32 %v1622, %v3545
        %v3547 = vpop.f32.mrf.mxu0
        %v3548 = vpop.f32.mrf.mxu0
        %v3549 = vpop.f32.mrf.mxu0
        %3550 = vdwg.mxu0
        %3552 = vrot.lane.b32.xlu0 %v3451, 96
        %v3553 = vpop.permute.xlu0 %3552
        %v3555 = vsel %vm1759, %v3437, 0
        %v3558 = vsel %vm1759, %v3553, 0
        %3560 = vmatprep.subr.bf16.mxu0 0
        %3561 = vmatpush1.bf16.xpose.msra.mxu0 0
        %3562 = vmatprep.subr.bf16.mxu0 0
        %3563 = vmatpush1.bf16.xpose.msra.mxu0 0
        %3564 = vmatprep.subr.bf16.mxu0 0
        %3565 = vmatpush1.bf16.xpose.msra.mxu0 0
        %3566 = vmatprep.subr.bf16.mxu0 0
        %3567 = vmatpush1.bf16.xpose.msra.mxu0 0
        %3568 = vmatprep.subr.bf16.mxu0 0
        %3569 = vmatpush1.bf16.xpose.msra.mxu0 0
        %3570 = vmatprep.subr.bf16.mxu0 0
        %3571 = vmatpush1.bf16.xpose.msra.mxu0 0
        %3572 = vmatprep.subr.bf16.mxu0 0
        %3573 = vmatpush1.bf16.xpose.msra.mxu0 0
        %3574 = vmatprep.subr.bf16.mxu0 0
        %3575 = vmatpush1.bf16.xpose.msra.mxu0 %v3558
        %3576 = vmatprep.subr.bf16.mxu0 0
        %3577 = vmatpush2.bf16.xpose.msra.mxu0 0
        %3578 = vmatprep.subr.bf16.mxu0 0
        %3579 = vmatpush2.bf16.xpose.msra.mxu0 0
        %3580 = vmatprep.subr.bf16.mxu0 0
        %3581 = vmatpush2.bf16.xpose.msra.mxu0 0
        %3582 = vmatprep.subr.bf16.mxu0 0
        %3583 = vmatpush2.bf16.xpose.msra.mxu0 0
        %3584 = vmatprep.subr.bf16.mxu0 0
        %3585 = vmatpush2.bf16.xpose.msra.mxu0 0
        %3586 = vmatprep.subr.bf16.mxu0 0
        %3587 = vmatpush2.bf16.xpose.msra.mxu0 0
        %3588 = vmatprep.subr.bf16.mxu0 0
        %3589 = vmatpush2.bf16.xpose.msra.mxu0 0
        %3590 = vmatprep.subr.bf16.mxu0 0
        %3591 = vmatpush2.bf16.xpose.msra.mxu0 0
        %3592 = vmatprep.mubr.bf16.mxu0 0
        %3593 = vmatmul.mubr.bf16.gmra.mxu0 %v3555
        %v3594 = vpop.f32.mrf.mxu0
        %v3595 = vadd.f32 %v1622, %v3594
        %v3596 = vpop.f32.mrf.mxu0
        %v3597 = vpop.f32.mrf.mxu0
        %v3598 = vpop.f32.mrf.mxu0
        %3599 = vdwg.mxu0
        %3601 = vrot.lane.b32.xlu0 %v3452, 96
        %v3602 = vpop.permute.xlu0 %3601
        %v3604 = vsel %vm1759, %v3438, 0
        %v3607 = vsel %vm1759, %v3602, 0
        %3609 = vmatprep.subr.bf16.mxu0 0
        %3610 = vmatpush1.bf16.xpose.msra.mxu0 0
        %3611 = vmatprep.subr.bf16.mxu0 0
        %3612 = vmatpush1.bf16.xpose.msra.mxu0 0
        %3613 = vmatprep.subr.bf16.mxu0 0
        %3614 = vmatpush1.bf16.xpose.msra.mxu0 0
        %3615 = vmatprep.subr.bf16.mxu0 0
        %3616 = vmatpush1.bf16.xpose.msra.mxu0 0
        %3617 = vmatprep.subr.bf16.mxu0 0
        %3618 = vmatpush1.bf16.xpose.msra.mxu0 0
        %3619 = vmatprep.subr.bf16.mxu0 0
        %3620 = vmatpush1.bf16.xpose.msra.mxu0 0
        %3621 = vmatprep.subr.bf16.mxu0 0
        %3622 = vmatpush1.bf16.xpose.msra.mxu0 0
        %3623 = vmatprep.subr.bf16.mxu0 0
        %3624 = vmatpush1.bf16.xpose.msra.mxu0 %v3607
        %3625 = vmatprep.subr.bf16.mxu0 0
        %3626 = vmatpush2.bf16.xpose.msra.mxu0 0
        %3627 = vmatprep.subr.bf16.mxu0 0
        %3628 = vmatpush2.bf16.xpose.msra.mxu0 0
        %3629 = vmatprep.subr.bf16.mxu0 0
        %3630 = vmatpush2.bf16.xpose.msra.mxu0 0
        %3631 = vmatprep.subr.bf16.mxu0 0
        %3632 = vmatpush2.bf16.xpose.msra.mxu0 0
        %3633 = vmatprep.subr.bf16.mxu0 0
        %3634 = vmatpush2.bf16.xpose.msra.mxu0 0
        %3635 = vmatprep.subr.bf16.mxu0 0
        %3636 = vmatpush2.bf16.xpose.msra.mxu0 0
        %3637 = vmatprep.subr.bf16.mxu0 0
        %3638 = vmatpush2.bf16.xpose.msra.mxu0 0
        %3639 = vmatprep.subr.bf16.mxu0 0
        %3640 = vmatpush2.bf16.xpose.msra.mxu0 0
        %3641 = vmatprep.mubr.bf16.mxu0 0
        %3642 = vmatmul.mubr.bf16.gmra.mxu0 %v3604
        %v3643 = vpop.f32.mrf.mxu0
        %v3644 = vadd.f32 %v1622, %v3643
        %v3645 = vpop.f32.mrf.mxu0
        %v3646 = vpop.f32.mrf.mxu0
        %v3647 = vpop.f32.mrf.mxu0
        %3648 = vdwg.mxu0
        %v3649 = vsel %vm1759, %v3497, -inf
        %3650 = vmax.xlane.f32.xlu0 %v3649
        %v3651 = vpop.xlane.xlu0 %3650
        %v3652 = vsel %vm1759, %v3546, -inf
        %3653 = vmax.xlane.f32.xlu0 %v3652
        %v3654 = vpop.xlane.xlu0 %3653
        %v3655 = vsel %vm1759, %v3595, -inf
        %3656 = vmax.xlane.f32.xlu0 %v3655
        %v3657 = vpop.xlane.xlu0 %3656
        %v3658 = vsel %vm1759, %v3644, -inf
        %3659 = vmax.xlane.f32.xlu0 %v3658
        %v3660 = vpop.xlane.xlu0 %3659
        %v3661 = vsub.f32 %v3497, %v3651
        %v3662 = vsub.f32 %v3546, %v3654
        %v3663 = vsub.f32 %v3595, %v3657
        %v3664 = vsub.f32 %v3644, %v3660
        %v3665 = vmul.f32 %v3661, 1.442695
        %v3666 = vpow.pop %v3665
        %v3667 = vmul.f32 %v3662, 1.442695
        %v3668 = vpow.pop %v3667
        %v3669 = vmul.f32 %v3663, 1.442695
        %v3670 = vpow.pop %v3669
        %v3671 = vmul.f32 %v3664, 1.442695
        %v3672 = vpow.pop %v3671
        %v3673 = vsel %vm1759, %v3666, 0.0
        %3674 = vadd.xlane.f32.xlu0 %v3673
        %v3675 = vpop.xlane.xlu0 %3674
        %v3676 = vsel %vm1759, %v3668, 0.0
        %3677 = vadd.xlane.f32.xlu0 %v3676
        %v3678 = vpop.xlane.xlu0 %3677
        %v3679 = vsel %vm1759, %v3670, 0.0
        %3680 = vadd.xlane.f32.xlu0 %v3679
        %v3681 = vpop.xlane.xlu0 %3680
        %v3682 = vsel %vm1759, %v3672, 0.0
        %3683 = vadd.xlane.f32.xlu0 %v3682
        %v3684 = vpop.xlane.xlu0 %3683
        %v3685 = vrcp.pop %v3675
        %v3686 = vmul.f32 %v3666, %v3685
        %v3687 = vrcp.pop %v3678
        %v3688 = vmul.f32 %v3668, %v3687
        %v3689 = vrcp.pop %v3681
        %v3690 = vmul.f32 %v3670, %v3689
        %v3691 = vrcp.pop %v3684
        %v3692 = vmul.f32 %v3672, %v3691
        %v3693 = vpack.c.bf16 %v3686, %v3686
        %v3694 = vpack.c.bf16 %v3688, %v3688
        %v3695 = vpack.c.bf16 %v3690, %v3690
        %v3696 = vpack.c.bf16 %v3692, %v3692
        %3697 = vrot.lane.b32.xlu0 %v3449, 64
        %v3698 = vpop.permute.xlu0 %3697
        %v3700 = vsel %vm1759, %v3693, 0
        %v3703 = vsel %vm2006, %v3698, 0
        %3705 = vmatprep.subr.bf16.mxu0 0
        %3706 = vmatpush1.bf16.msra.mxu0 0
        %3707 = vmatprep.subr.bf16.mxu0 0
        %3708 = vmatpush1.bf16.msra.mxu0 0
        %3709 = vmatprep.subr.bf16.mxu0 0
        %3710 = vmatpush1.bf16.msra.mxu0 0
        %3711 = vmatprep.subr.bf16.mxu0 0
        %3712 = vmatpush1.bf16.msra.mxu0 0
        %3713 = vmatprep.subr.bf16.mxu0 0
        %3714 = vmatpush1.bf16.msra.mxu0 0
        %3715 = vmatprep.subr.bf16.mxu0 0
        %3716 = vmatpush1.bf16.msra.mxu0 0
        %3717 = vmatprep.subr.bf16.mxu0 0
        %3718 = vmatpush1.bf16.msra.mxu0 0
        %3719 = vmatprep.subr.bf16.mxu0 0
        %3720 = vmatpush1.bf16.msra.mxu0 %v3703
        %3721 = vmatprep.subr.bf16.mxu0 0
        %3722 = vmatpush2.bf16.msra.mxu0 0
        %3723 = vmatprep.subr.bf16.mxu0 0
        %3724 = vmatpush2.bf16.msra.mxu0 0
        %3725 = vmatprep.subr.bf16.mxu0 0
        %3726 = vmatpush2.bf16.msra.mxu0 0
        %3727 = vmatprep.subr.bf16.mxu0 0
        %3728 = vmatpush2.bf16.msra.mxu0 0
        %3729 = vmatprep.subr.bf16.mxu0 0
        %3730 = vmatpush2.bf16.msra.mxu0 0
        %3731 = vmatprep.subr.bf16.mxu0 0
        %3732 = vmatpush2.bf16.msra.mxu0 0
        %3733 = vmatprep.subr.bf16.mxu0 0
        %3734 = vmatpush2.bf16.msra.mxu0 0
        %3735 = vmatprep.subr.bf16.mxu0 0
        %3736 = vmatpush2.bf16.msra.mxu0 0
        %3737 = vmatprep.mubr.bf16.mxu0 0
        %3738 = vmatmul.mubr.bf16.gmra.mxu0 %v3700
        %v3739 = vpop.f32.mrf.mxu0
        %v3740 = vadd.f32 0.0, %v3739
        %v3741 = vpop.f32.mrf.mxu0
        %v3742 = vpop.f32.mrf.mxu0
        %v3743 = vpop.f32.mrf.mxu0
        %3744 = vdwg.mxu0
        %3745 = vrot.lane.b32.xlu0 %v3450, 64
        %v3746 = vpop.permute.xlu0 %3745
        %v3748 = vsel %vm1759, %v3694, 0
        %v3751 = vsel %vm2006, %v3746, 0
        %3753 = vmatprep.subr.bf16.mxu0 0
        %3754 = vmatpush1.bf16.msra.mxu0 0
        %3755 = vmatprep.subr.bf16.mxu0 0
        %3756 = vmatpush1.bf16.msra.mxu0 0
        %3757 = vmatprep.subr.bf16.mxu0 0
        %3758 = vmatpush1.bf16.msra.mxu0 0
        %3759 = vmatprep.subr.bf16.mxu0 0
        %3760 = vmatpush1.bf16.msra.mxu0 0
        %3761 = vmatprep.subr.bf16.mxu0 0
        %3762 = vmatpush1.bf16.msra.mxu0 0
        %3763 = vmatprep.subr.bf16.mxu0 0
        %3764 = vmatpush1.bf16.msra.mxu0 0
        %3765 = vmatprep.subr.bf16.mxu0 0
        %3766 = vmatpush1.bf16.msra.mxu0 0
        %3767 = vmatprep.subr.bf16.mxu0 0
        %3768 = vmatpush1.bf16.msra.mxu0 %v3751
        %3769 = vmatprep.subr.bf16.mxu0 0
        %3770 = vmatpush2.bf16.msra.mxu0 0
        %3771 = vmatprep.subr.bf16.mxu0 0
        %3772 = vmatpush2.bf16.msra.mxu0 0
        %3773 = vmatprep.subr.bf16.mxu0 0
        %3774 = vmatpush2.bf16.msra.mxu0 0
        %3775 = vmatprep.subr.bf16.mxu0 0
        %3776 = vmatpush2.bf16.msra.mxu0 0
        %3777 = vmatprep.subr.bf16.mxu0 0
        %3778 = vmatpush2.bf16.msra.mxu0 0
        %3779 = vmatprep.subr.bf16.mxu0 0
        %3780 = vmatpush2.bf16.msra.mxu0 0
        %3781 = vmatprep.subr.bf16.mxu0 0
        %3782 = vmatpush2.bf16.msra.mxu0 0
        %3783 = vmatprep.subr.bf16.mxu0 0
        %3784 = vmatpush2.bf16.msra.mxu0 0
        %3785 = vmatprep.mubr.bf16.mxu0 0
        %3786 = vmatmul.mubr.bf16.gmra.mxu0 %v3748
        %v3787 = vpop.f32.mrf.mxu0
        %v3788 = vadd.f32 0.0, %v3787
        %v3789 = vpop.f32.mrf.mxu0
        %v3790 = vpop.f32.mrf.mxu0
        %v3791 = vpop.f32.mrf.mxu0
        %3792 = vdwg.mxu0
        %3793 = vrot.lane.b32.xlu0 %v3451, 64
        %v3794 = vpop.permute.xlu0 %3793
        %v3796 = vsel %vm1759, %v3695, 0
        %v3799 = vsel %vm2006, %v3794, 0
        %3801 = vmatprep.subr.bf16.mxu0 0
        %3802 = vmatpush1.bf16.msra.mxu0 0
        %3803 = vmatprep.subr.bf16.mxu0 0
        %3804 = vmatpush1.bf16.msra.mxu0 0
        %3805 = vmatprep.subr.bf16.mxu0 0
        %3806 = vmatpush1.bf16.msra.mxu0 0
        %3807 = vmatprep.subr.bf16.mxu0 0
        %3808 = vmatpush1.bf16.msra.mxu0 0
        %3809 = vmatprep.subr.bf16.mxu0 0
        %3810 = vmatpush1.bf16.msra.mxu0 0
        %3811 = vmatprep.subr.bf16.mxu0 0
        %3812 = vmatpush1.bf16.msra.mxu0 0
        %3813 = vmatprep.subr.bf16.mxu0 0
        %3814 = vmatpush1.bf16.msra.mxu0 0
        %3815 = vmatprep.subr.bf16.mxu0 0
        %3816 = vmatpush1.bf16.msra.mxu0 %v3799
        %3817 = vmatprep.subr.bf16.mxu0 0
        %3818 = vmatpush2.bf16.msra.mxu0 0
        %3819 = vmatprep.subr.bf16.mxu0 0
        %3820 = vmatpush2.bf16.msra.mxu0 0
        %3821 = vmatprep.subr.bf16.mxu0 0
        %3822 = vmatpush2.bf16.msra.mxu0 0
        %3823 = vmatprep.subr.bf16.mxu0 0
        %3824 = vmatpush2.bf16.msra.mxu0 0
        %3825 = vmatprep.subr.bf16.mxu0 0
        %3826 = vmatpush2.bf16.msra.mxu0 0
        %3827 = vmatprep.subr.bf16.mxu0 0
        %3828 = vmatpush2.bf16.msra.mxu0 0
        %3829 = vmatprep.subr.bf16.mxu0 0
        %3830 = vmatpush2.bf16.msra.mxu0 0
        %3831 = vmatprep.subr.bf16.mxu0 0
        %3832 = vmatpush2.bf16.msra.mxu0 0
        %3833 = vmatprep.mubr.bf16.mxu0 0
        %3834 = vmatmul.mubr.bf16.gmra.mxu0 %v3796
        %v3835 = vpop.f32.mrf.mxu0
        %v3836 = vadd.f32 0.0, %v3835
        %v3837 = vpop.f32.mrf.mxu0
        %v3838 = vpop.f32.mrf.mxu0
        %v3839 = vpop.f32.mrf.mxu0
        %3840 = vdwg.mxu0
        %3841 = vrot.lane.b32.xlu0 %v3452, 64
        %v3842 = vpop.permute.xlu0 %3841
        %v3844 = vsel %vm1759, %v3696, 0
        %v3847 = vsel %vm2006, %v3842, 0
        %3849 = vmatprep.subr.bf16.mxu0 0
        %3850 = vmatpush1.bf16.msra.mxu0 0
        %3851 = vmatprep.subr.bf16.mxu0 0
        %3852 = vmatpush1.bf16.msra.mxu0 0
        %3853 = vmatprep.subr.bf16.mxu0 0
        %3854 = vmatpush1.bf16.msra.mxu0 0
        %3855 = vmatprep.subr.bf16.mxu0 0
        %3856 = vmatpush1.bf16.msra.mxu0 0
        %3857 = vmatprep.subr.bf16.mxu0 0
        %3858 = vmatpush1.bf16.msra.mxu0 0
        %3859 = vmatprep.subr.bf16.mxu0 0
        %3860 = vmatpush1.bf16.msra.mxu0 0
        %3861 = vmatprep.subr.bf16.mxu0 0
        %3862 = vmatpush1.bf16.msra.mxu0 0
        %3863 = vmatprep.subr.bf16.mxu0 0
        %3864 = vmatpush1.bf16.msra.mxu0 %v3847
        %3865 = vmatprep.subr.bf16.mxu0 0
        %3866 = vmatpush2.bf16.msra.mxu0 0
        %3867 = vmatprep.subr.bf16.mxu0 0
        %3868 = vmatpush2.bf16.msra.mxu0 0
        %3869 = vmatprep.subr.bf16.mxu0 0
        %3870 = vmatpush2.bf16.msra.mxu0 0
        %3871 = vmatprep.subr.bf16.mxu0 0
        %3872 = vmatpush2.bf16.msra.mxu0 0
        %3873 = vmatprep.subr.bf16.mxu0 0
        %3874 = vmatpush2.bf16.msra.mxu0 0
        %3875 = vmatprep.subr.bf16.mxu0 0
        %3876 = vmatpush2.bf16.msra.mxu0 0
        %3877 = vmatprep.subr.bf16.mxu0 0
        %3878 = vmatpush2.bf16.msra.mxu0 0
        %3879 = vmatprep.subr.bf16.mxu0 0
        %3880 = vmatpush2.bf16.msra.mxu0 0
        %3881 = vmatprep.mubr.bf16.mxu0 0
        %3882 = vmatmul.mubr.bf16.gmra.mxu0 %v3844
        %v3883 = vpop.f32.mrf.mxu0
        %v3884 = vadd.f32 0.0, %v3883
        %v3885 = vpop.f32.mrf.mxu0
        %v3886 = vpop.f32.mrf.mxu0
        %v3887 = vpop.f32.mrf.mxu0
        %3888 = vdwg.mxu0
        %3890 = vrot.lane.b32.xlu0 %v3788, 8
        %v3891 = vpop.permute.xlu0 %3890
        %3894 = vrot.lane.b32.xlu0 %v3836, 16
        %v3895 = vpop.permute.xlu0 %3894
        %3898 = vrot.lane.b32.xlu0 %v3884, 24
        %v3899 = vpop.permute.xlu0 %3898
        %v3901 = vsel %vm1759, %v3740, %v3891
        %v3902 = vsel %vm2207, %v3901, %v3895
        %v3903 = vsel %vm2209, %v3902, %v3899
        %v3904 = vpack.c.bf16 %v3903, %v3903
        %v3906 = vlaneseq
        %v3907 = vshrl.u32 %v3906, 7
        %v3908 = vsub.s32 0, %v3907
        %v3909 = vrot.slane %v3424, %v3908
        %v3915 = vunpack.c.l.b16 %v3420
        %v3916 = vunpack.c.l.b16 %v3421
        %v3917 = vunpack.c.l.b16 %v3422
        %v3918 = vunpack.c.l.b16 %v3423
        %v3919 = vpack.c.b16 %v3916, %v3915
        %v3920 = vpack.c.b16 %v3918, %v3917
        %v3924 = vsel %vm1626, %v3904, 0
        %3926 = vmatprep.subr.bf16.mxu0 0
        %3927 = vmatpush1.bf16.msra.mxu0 0
        %3928 = vmatprep.subr.bf16.mxu0 0
        %3929 = vmatpush1.bf16.msra.mxu0 0
        %3930 = vmatprep.subr.bf16.mxu0 0
        %3931 = vmatpush1.bf16.msra.mxu0 0
        %3932 = vmatprep.subr.bf16.mxu0 0
        %3933 = vmatpush1.bf16.msra.mxu0 0
        %3934 = vmatprep.subr.bf16.mxu0 0
        %3935 = vmatpush1.bf16.msra.mxu0 0
        %3936 = vmatprep.subr.bf16.mxu0 0
        %3937 = vmatpush1.bf16.msra.mxu0 0
        %3938 = vmatprep.subr.bf16.mxu0 0
        %3939 = vmatpush1.bf16.msra.mxu0 %v3920
        %3940 = vmatprep.subr.bf16.mxu0 0
        %3941 = vmatpush1.bf16.msra.mxu0 %v3919
        %3942 = vmatprep.subr.bf16.mxu0 0
        %3943 = vmatpush2.bf16.msra.mxu0 0
        %3944 = vmatprep.subr.bf16.mxu0 0
        %3945 = vmatpush2.bf16.msra.mxu0 0
        %3946 = vmatprep.subr.bf16.mxu0 0
        %3947 = vmatpush2.bf16.msra.mxu0 0
        %3948 = vmatprep.subr.bf16.mxu0 0
        %3949 = vmatpush2.bf16.msra.mxu0 0
        %3950 = vmatprep.subr.bf16.mxu0 0
        %3951 = vmatpush2.bf16.msra.mxu0 0
        %3952 = vmatprep.subr.bf16.mxu0 0
        %3953 = vmatpush2.bf16.msra.mxu0 0
        %3954 = vmatprep.subr.bf16.mxu0 0
        %3955 = vmatpush2.bf16.msra.mxu0 0
        %3956 = vmatprep.subr.bf16.mxu0 0
        %3957 = vmatpush2.bf16.msra.mxu0 0
        %3958 = vmatprep.mubr.bf16.mxu0 0
        %3959 = vmatmul.mubr.bf16.gmra.mxu0 %v3924
        %v3960 = vpop.f32.mrf.mxu0
        %v3961 = vadd.f32 %v3909, %v3960
        %v3962 = vpop.f32.mrf.mxu0
        %v3963 = vpop.f32.mrf.mxu0
        %v3964 = vpop.f32.mrf.mxu0
        %3965 = vdwg.mxu0
        %v3966 = vadd.f32 %v3322, %v3961
        %v3967 = vld [vmem:[#allocation29] sm:$0x1]
        %v3968 = vld [vmem:[#allocation31] sm:$0x1]
        %v3969 = vsel %vm1626, %v3966, 0.0
        %3970 = vadd.xlane.f32.xlu0 %v3969
        %v3971 = vpop.xlane.xlu0 %3970
        %v3972 = vmul.f32 %v3971, %v1630
        %v3973 = vsub.f32 %v3966, %v3972
        %v3974 = vmul.f32 %v3973, %v3973
        %v3975 = vsel %vm1626, %v3974, 0.0
        %3976 = vadd.xlane.f32.xlu0 %v3975
        %v3977 = vpop.xlane.xlu0 %3976
        %v3978 = vmul.f32 %v3977, %v1630
        %v3979 = vadd.f32 %v3978, 1e-06
        %v3980 = vrsqrt.pop %v3979
        %v3981 = vmul.f32 %v3973, %v3980
        %v3983 = vlaneseq
        %v3984 = vshrl.u32 %v3983, 7
        %v3985 = vsub.s32 0, %v3984
        %v3986 = vrot.slane %v3967, %v3985
        %v3988 = vmul.f32 %v3981, %v3986
        %v3990 = vlaneseq
        %v3991 = vshrl.u32 %v3990, 7
        %v3992 = vsub.s32 0, %v3991
        %v3993 = vrot.slane %v3968, %v3992
        %v3995 = vadd.f32 %v3988, %v3993
        %v3996 = vld [vmem:[%s51] sm:$0xf]
        %v3997 = vld [vmem:[%s51 + $0x4] sm:$0xf]
        %v3998 = vld [vmem:[%s51 + $0x8] sm:$0xf]
        %v3999 = vld [vmem:[%s51 + $0xc] sm:$0xf]
        %v4000 = vpack.c.bf16 %v3995, %v3995
        %v4001 = vld [vmem:[#allocation32] sm:$0x1]
        %v4003 = vlaneseq
        %v4004 = vshrl.u32 %v4003, 7
        %v4005 = vsub.s32 0, %v4004
        %v4006 = vrot.slane %v4001, %v4005
        %v4012 = vunpack.c.l.b16 %v3996
        %v4013 = vunpack.c.l.b16 %v3997
        %v4014 = vunpack.c.l.b16 %v3998
        %v4015 = vunpack.c.l.b16 %v3999
        %v4016 = vpack.c.b16 %v4013, %v4012
        %v4017 = vpack.c.b16 %v4015, %v4014
        %v4021 = vsel %vm1626, %v4000, 0
        %4023 = vmatprep.subr.bf16.mxu0 0
        %4024 = vmatpush1.bf16.msra.mxu0 0
        %4025 = vmatprep.subr.bf16.mxu0 0
        %4026 = vmatpush1.bf16.msra.mxu0 0
        %4027 = vmatprep.subr.bf16.mxu0 0
        %4028 = vmatpush1.bf16.msra.mxu0 0
        %4029 = vmatprep.subr.bf16.mxu0 0
        %4030 = vmatpush1.bf16.msra.mxu0 0
        %4031 = vmatprep.subr.bf16.mxu0 0
        %4032 = vmatpush1.bf16.msra.mxu0 0
        %4033 = vmatprep.subr.bf16.mxu0 0
        %4034 = vmatpush1.bf16.msra.mxu0 0
        %4035 = vmatprep.subr.bf16.mxu0 0
        %4036 = vmatpush1.bf16.msra.mxu0 %v4017
        %4037 = vmatprep.subr.bf16.mxu0 0
        %4038 = vmatpush1.bf16.msra.mxu0 %v4016
        %4039 = vmatprep.subr.bf16.mxu0 0
        %4040 = vmatpush2.bf16.msra.mxu0 0
        %4041 = vmatprep.subr.bf16.mxu0 0
        %4042 = vmatpush2.bf16.msra.mxu0 0
        %4043 = vmatprep.subr.bf16.mxu0 0
        %4044 = vmatpush2.bf16.msra.mxu0 0
        %4045 = vmatprep.subr.bf16.mxu0 0
        %4046 = vmatpush2.bf16.msra.mxu0 0
        %4047 = vmatprep.subr.bf16.mxu0 0
        %4048 = vmatpush2.bf16.msra.mxu0 0
        %4049 = vmatprep.subr.bf16.mxu0 0
        %4050 = vmatpush2.bf16.msra.mxu0 0
        %4051 = vmatprep.subr.bf16.mxu0 0
        %4052 = vmatpush2.bf16.msra.mxu0 0
        %4053 = vmatprep.subr.bf16.mxu0 0
        %4054 = vmatpush2.bf16.msra.mxu0 0
        %4055 = vmatprep.mubr.bf16.mxu0 0
        %4056 = vmatmul.mubr.bf16.gmra.mxu0 %v4021
        %v4057 = vpop.f32.mrf.mxu0
        %v4058 = vadd.f32 %v4006, %v4057
        %v4059 = vpop.f32.mrf.mxu0
        %v4060 = vpop.f32.mrf.mxu0
        %v4061 = vpop.f32.mrf.mxu0
        %4062 = vdwg.mxu0
        %v4063 = vmul.f32 %v4058, 0.35355338
        %v4064 = vld [vmem:[%s55] sm:$0xf]
        %v4065 = vld [vmem:[%s55 + $0x4] sm:$0xf]
        %v4066 = vld [vmem:[%s55 + $0x8] sm:$0xf]
        %v4067 = vld [vmem:[%s55 + $0xc] sm:$0xf]
        %v4068 = vpack.c.bf16 %v3321, %v3321
        %v4069 = vld [vmem:[%s57] sm:$0x1]
        %v4071 = vlaneseq
        %v4072 = vshrl.u32 %v4071, 7
        %v4073 = vsub.s32 0, %v4072
        %v4074 = vrot.slane %v4069, %v4073
        %v4080 = vunpack.c.l.b16 %v4064
        %v4081 = vunpack.c.l.b16 %v4065
        %v4082 = vunpack.c.l.b16 %v4066
        %v4083 = vunpack.c.l.b16 %v4067
        %v4084 = vpack.c.b16 %v4081, %v4080
        %v4085 = vpack.c.b16 %v4083, %v4082
        %v4089 = vsel %vm1626, %v4068, 0
        %4091 = vmatprep.subr.bf16.mxu0 0
        %4092 = vmatpush1.bf16.msra.mxu0 0
        %4093 = vmatprep.subr.bf16.mxu0 0
        %4094 = vmatpush1.bf16.msra.mxu0 0
        %4095 = vmatprep.subr.bf16.mxu0 0
        %4096 = vmatpush1.bf16.msra.mxu0 0
        %4097 = vmatprep.subr.bf16.mxu0 0
        %4098 = vmatpush1.bf16.msra.mxu0 0
        %4099 = vmatprep.subr.bf16.mxu0 0
        %4100 = vmatpush1.bf16.msra.mxu0 0
        %4101 = vmatprep.subr.bf16.mxu0 0
        %4102 = vmatpush1.bf16.msra.mxu0 0
        %4103 = vmatprep.subr.bf16.mxu0 0
        %4104 = vmatpush1.bf16.msra.mxu0 %v4085
        %4105 = vmatprep.subr.bf16.mxu0 0
        %4106 = vmatpush1.bf16.msra.mxu0 %v4084
        %4107 = vmatprep.subr.bf16.mxu0 0
        %4108 = vmatpush2.bf16.msra.mxu0 0
        %4109 = vmatprep.subr.bf16.mxu0 0
        %4110 = vmatpush2.bf16.msra.mxu0 0
        %4111 = vmatprep.subr.bf16.mxu0 0
        %4112 = vmatpush2.bf16.msra.mxu0 0
        %4113 = vmatprep.subr.bf16.mxu0 0
        %4114 = vmatpush2.bf16.msra.mxu0 0
        %4115 = vmatprep.subr.bf16.mxu0 0
        %4116 = vmatpush2.bf16.msra.mxu0 0
        %4117 = vmatprep.subr.bf16.mxu0 0
        %4118 = vmatpush2.bf16.msra.mxu0 0
        %4119 = vmatprep.subr.bf16.mxu0 0
        %4120 = vmatpush2.bf16.msra.mxu0 0
        %4121 = vmatprep.subr.bf16.mxu0 0
        %4122 = vmatpush2.bf16.msra.mxu0 0
        %4123 = vmatprep.mubr.bf16.mxu0 0
        %4124 = vmatmul.mubr.bf16.gmra.mxu0 %v4089
        %v4125 = vpop.f32.mrf.mxu0
        %v4126 = vadd.f32 %v4074, %v4125
        %v4127 = vpop.f32.mrf.mxu0
        %v4128 = vpop.f32.mrf.mxu0
        %v4129 = vpop.f32.mrf.mxu0
        %4130 = vdwg.mxu0
        %v4131 = vld [vmem:[%s59] sm:$0xf]
        %v4132 = vld [vmem:[%s59 + $0x4] sm:$0xf]
        %v4133 = vld [vmem:[%s59 + $0x8] sm:$0xf]
        %v4134 = vld [vmem:[%s59 + $0xc] sm:$0xf]
        %v4135 = vld [vmem:[%s61] sm:$0x1]
        %4137 = vrot.lane.b32.xlu0 %v4063, 120
        %v4138 = vpop.permute.xlu0 %4137
        %4140 = vrot.lane.b32.xlu0 %v4063, 112
        %v4141 = vpop.permute.xlu0 %4140
        %4143 = vrot.lane.b32.xlu0 %v4063, 104
        %v4144 = vpop.permute.xlu0 %4143
        %v4146 = vpack.c.bf16 %v4063, %v4063
        %v4147 = vpack.c.bf16 %v4138, %v4138
        %v4148 = vpack.c.bf16 %v4141, %v4141
        %v4149 = vpack.c.bf16 %v4144, %v4144
        %4151 = vrot.lane.b32.xlu0 %v4126, 120
        %v4152 = vpop.permute.xlu0 %4151
        %4154 = vrot.lane.b32.xlu0 %v4126, 112
        %v4155 = vpop.permute.xlu0 %4154
        %4157 = vrot.lane.b32.xlu0 %v4126, 104
        %v4158 = vpop.permute.xlu0 %4157
        %v4160 = vpack.c.bf16 %v4126, %v4126
        %v4161 = vpack.c.bf16 %v4152, %v4152
        %v4162 = vpack.c.bf16 %v4155, %v4155
        %v4163 = vpack.c.bf16 %v4158, %v4158
        %v4165 = vsel %vm1759, %v4146, 0
        %v4168 = vsel %vm1759, %v4160, 0
        %4170 = vmatprep.subr.bf16.mxu0 0
        %4171 = vmatpush1.bf16.xpose.msra.mxu0 0
        %4172 = vmatprep.subr.bf16.mxu0 0
        %4173 = vmatpush1.bf16.xpose.msra.mxu0 0
        %4174 = vmatprep.subr.bf16.mxu0 0
        %4175 = vmatpush1.bf16.xpose.msra.mxu0 0
        %4176 = vmatprep.subr.bf16.mxu0 0
        %4177 = vmatpush1.bf16.xpose.msra.mxu0 0
        %4178 = vmatprep.subr.bf16.mxu0 0
        %4179 = vmatpush1.bf16.xpose.msra.mxu0 0
        %4180 = vmatprep.subr.bf16.mxu0 0
        %4181 = vmatpush1.bf16.xpose.msra.mxu0 0
        %4182 = vmatprep.subr.bf16.mxu0 0
        %4183 = vmatpush1.bf16.xpose.msra.mxu0 0
        %4184 = vmatprep.subr.bf16.mxu0 0
        %4185 = vmatpush1.bf16.xpose.msra.mxu0 %v4168
        %4186 = vmatprep.subr.bf16.mxu0 0
        %4187 = vmatpush2.bf16.xpose.msra.mxu0 0
        %4188 = vmatprep.subr.bf16.mxu0 0
        %4189 = vmatpush2.bf16.xpose.msra.mxu0 0
        %4190 = vmatprep.subr.bf16.mxu0 0
        %4191 = vmatpush2.bf16.xpose.msra.mxu0 0
        %4192 = vmatprep.subr.bf16.mxu0 0
        %4193 = vmatpush2.bf16.xpose.msra.mxu0 0
        %4194 = vmatprep.subr.bf16.mxu0 0
        %4195 = vmatpush2.bf16.xpose.msra.mxu0 0
        %4196 = vmatprep.subr.bf16.mxu0 0
        %4197 = vmatpush2.bf16.xpose.msra.mxu0 0
        %4198 = vmatprep.subr.bf16.mxu0 0
        %4199 = vmatpush2.bf16.xpose.msra.mxu0 0
        %4200 = vmatprep.subr.bf16.mxu0 0
        %4201 = vmatpush2.bf16.xpose.msra.mxu0 0
        %4202 = vmatprep.mubr.bf16.mxu0 0
        %4203 = vmatmul.mubr.bf16.gmra.mxu0 %v4165
        %v4204 = vpop.f32.mrf.mxu0
        %v4205 = vadd.f32 0.0, %v4204
        %v4206 = vpop.f32.mrf.mxu0
        %v4207 = vpop.f32.mrf.mxu0
        %v4208 = vpop.f32.mrf.mxu0
        %4209 = vdwg.mxu0
        %v4211 = vsel %vm1759, %v4147, 0
        %v4214 = vsel %vm1759, %v4161, 0
        %4216 = vmatprep.subr.bf16.mxu0 0
        %4217 = vmatpush1.bf16.xpose.msra.mxu0 0
        %4218 = vmatprep.subr.bf16.mxu0 0
        %4219 = vmatpush1.bf16.xpose.msra.mxu0 0
        %4220 = vmatprep.subr.bf16.mxu0 0
        %4221 = vmatpush1.bf16.xpose.msra.mxu0 0
        %4222 = vmatprep.subr.bf16.mxu0 0
        %4223 = vmatpush1.bf16.xpose.msra.mxu0 0
        %4224 = vmatprep.subr.bf16.mxu0 0
        %4225 = vmatpush1.bf16.xpose.msra.mxu0 0
        %4226 = vmatprep.subr.bf16.mxu0 0
        %4227 = vmatpush1.bf16.xpose.msra.mxu0 0
        %4228 = vmatprep.subr.bf16.mxu0 0
        %4229 = vmatpush1.bf16.xpose.msra.mxu0 0
        %4230 = vmatprep.subr.bf16.mxu0 0
        %4231 = vmatpush1.bf16.xpose.msra.mxu0 %v4214
        %4232 = vmatprep.subr.bf16.mxu0 0
        %4233 = vmatpush2.bf16.xpose.msra.mxu0 0
        %4234 = vmatprep.subr.bf16.mxu0 0
        %4235 = vmatpush2.bf16.xpose.msra.mxu0 0
        %4236 = vmatprep.subr.bf16.mxu0 0
        %4237 = vmatpush2.bf16.xpose.msra.mxu0 0
        %4238 = vmatprep.subr.bf16.mxu0 0
        %4239 = vmatpush2.bf16.xpose.msra.mxu0 0
        %4240 = vmatprep.subr.bf16.mxu0 0
        %4241 = vmatpush2.bf16.xpose.msra.mxu0 0
        %4242 = vmatprep.subr.bf16.mxu0 0
        %4243 = vmatpush2.bf16.xpose.msra.mxu0 0
        %4244 = vmatprep.subr.bf16.mxu0 0
        %4245 = vmatpush2.bf16.xpose.msra.mxu0 0
        %4246 = vmatprep.subr.bf16.mxu0 0
        %4247 = vmatpush2.bf16.xpose.msra.mxu0 0
        %4248 = vmatprep.mubr.bf16.mxu0 0
        %4249 = vmatmul.mubr.bf16.gmra.mxu0 %v4211
        %v4250 = vpop.f32.mrf.mxu0
        %v4251 = vadd.f32 0.0, %v4250
        %v4252 = vpop.f32.mrf.mxu0
        %v4253 = vpop.f32.mrf.mxu0
        %v4254 = vpop.f32.mrf.mxu0
        %4255 = vdwg.mxu0
        %v4257 = vsel %vm1759, %v4148, 0
        %v4260 = vsel %vm1759, %v4162, 0
        %4262 = vmatprep.subr.bf16.mxu0 0
        %4263 = vmatpush1.bf16.xpose.msra.mxu0 0
        %4264 = vmatprep.subr.bf16.mxu0 0
        %4265 = vmatpush1.bf16.xpose.msra.mxu0 0
        %4266 = vmatprep.subr.bf16.mxu0 0
        %4267 = vmatpush1.bf16.xpose.msra.mxu0 0
        %4268 = vmatprep.subr.bf16.mxu0 0
        %4269 = vmatpush1.bf16.xpose.msra.mxu0 0
        %4270 = vmatprep.subr.bf16.mxu0 0
        %4271 = vmatpush1.bf16.xpose.msra.mxu0 0
        %4272 = vmatprep.subr.bf16.mxu0 0
        %4273 = vmatpush1.bf16.xpose.msra.mxu0 0
        %4274 = vmatprep.subr.bf16.mxu0 0
        %4275 = vmatpush1.bf16.xpose.msra.mxu0 0
        %4276 = vmatprep.subr.bf16.mxu0 0
        %4277 = vmatpush1.bf16.xpose.msra.mxu0 %v4260
        %4278 = vmatprep.subr.bf16.mxu0 0
        %4279 = vmatpush2.bf16.xpose.msra.mxu0 0
        %4280 = vmatprep.subr.bf16.mxu0 0
        %4281 = vmatpush2.bf16.xpose.msra.mxu0 0
        %4282 = vmatprep.subr.bf16.mxu0 0
        %4283 = vmatpush2.bf16.xpose.msra.mxu0 0
        %4284 = vmatprep.subr.bf16.mxu0 0
        %4285 = vmatpush2.bf16.xpose.msra.mxu0 0
        %4286 = vmatprep.subr.bf16.mxu0 0
        %4287 = vmatpush2.bf16.xpose.msra.mxu0 0
        %4288 = vmatprep.subr.bf16.mxu0 0
        %4289 = vmatpush2.bf16.xpose.msra.mxu0 0
        %4290 = vmatprep.subr.bf16.mxu0 0
        %4291 = vmatpush2.bf16.xpose.msra.mxu0 0
        %4292 = vmatprep.subr.bf16.mxu0 0
        %4293 = vmatpush2.bf16.xpose.msra.mxu0 0
        %4294 = vmatprep.mubr.bf16.mxu0 0
        %4295 = vmatmul.mubr.bf16.gmra.mxu0 %v4257
        %v4296 = vpop.f32.mrf.mxu0
        %v4297 = vadd.f32 0.0, %v4296
        %v4298 = vpop.f32.mrf.mxu0
        %v4299 = vpop.f32.mrf.mxu0
        %v4300 = vpop.f32.mrf.mxu0
        %4301 = vdwg.mxu0
        %v4303 = vsel %vm1759, %v4149, 0
        %v4306 = vsel %vm1759, %v4163, 0
        %4308 = vmatprep.subr.bf16.mxu0 0
        %4309 = vmatpush1.bf16.xpose.msra.mxu0 0
        %4310 = vmatprep.subr.bf16.mxu0 0
        %4311 = vmatpush1.bf16.xpose.msra.mxu0 0
        %4312 = vmatprep.subr.bf16.mxu0 0
        %4313 = vmatpush1.bf16.xpose.msra.mxu0 0
        %4314 = vmatprep.subr.bf16.mxu0 0
        %4315 = vmatpush1.bf16.xpose.msra.mxu0 0
        %4316 = vmatprep.subr.bf16.mxu0 0
        %4317 = vmatpush1.bf16.xpose.msra.mxu0 0
        %4318 = vmatprep.subr.bf16.mxu0 0
        %4319 = vmatpush1.bf16.xpose.msra.mxu0 0
        %4320 = vmatprep.subr.bf16.mxu0 0
        %4321 = vmatpush1.bf16.xpose.msra.mxu0 0
        %4322 = vmatprep.subr.bf16.mxu0 0
        %4323 = vmatpush1.bf16.xpose.msra.mxu0 %v4306
        %4324 = vmatprep.subr.bf16.mxu0 0
        %4325 = vmatpush2.bf16.xpose.msra.mxu0 0
        %4326 = vmatprep.subr.bf16.mxu0 0
        %4327 = vmatpush2.bf16.xpose.msra.mxu0 0
        %4328 = vmatprep.subr.bf16.mxu0 0
        %4329 = vmatpush2.bf16.xpose.msra.mxu0 0
        %4330 = vmatprep.subr.bf16.mxu0 0
        %4331 = vmatpush2.bf16.xpose.msra.mxu0 0
        %4332 = vmatprep.subr.bf16.mxu0 0
        %4333 = vmatpush2.bf16.xpose.msra.mxu0 0
        %4334 = vmatprep.subr.bf16.mxu0 0
        %4335 = vmatpush2.bf16.xpose.msra.mxu0 0
        %4336 = vmatprep.subr.bf16.mxu0 0
        %4337 = vmatpush2.bf16.xpose.msra.mxu0 0
        %4338 = vmatprep.subr.bf16.mxu0 0
        %4339 = vmatpush2.bf16.xpose.msra.mxu0 0
        %4340 = vmatprep.mubr.bf16.mxu0 0
        %4341 = vmatmul.mubr.bf16.gmra.mxu0 %v4303
        %v4342 = vpop.f32.mrf.mxu0
        %v4343 = vadd.f32 0.0, %v4342
        %v4344 = vpop.f32.mrf.mxu0
        %v4345 = vpop.f32.mrf.mxu0
        %v4346 = vpop.f32.mrf.mxu0
        %4347 = vdwg.mxu0
        %v4348 = vsel %vm1759, %v4205, -inf
        %4349 = vmax.xlane.f32.xlu0 %v4348
        %v4350 = vpop.xlane.xlu0 %4349
        %v4351 = vsel %vm1759, %v4251, -inf
        %4352 = vmax.xlane.f32.xlu0 %v4351
        %v4353 = vpop.xlane.xlu0 %4352
        %v4354 = vsel %vm1759, %v4297, -inf
        %4355 = vmax.xlane.f32.xlu0 %v4354
        %v4356 = vpop.xlane.xlu0 %4355
        %v4357 = vsel %vm1759, %v4343, -inf
        %4358 = vmax.xlane.f32.xlu0 %v4357
        %v4359 = vpop.xlane.xlu0 %4358
        %v4360 = vsub.f32 %v4205, %v4350
        %v4361 = vsub.f32 %v4251, %v4353
        %v4362 = vsub.f32 %v4297, %v4356
        %v4363 = vsub.f32 %v4343, %v4359
        %v4364 = vmul.f32 %v4360, 1.442695
        %v4365 = vpow.pop %v4364
        %v4366 = vmul.f32 %v4361, 1.442695
        %v4367 = vpow.pop %v4366
        %v4368 = vmul.f32 %v4362, 1.442695
        %v4369 = vpow.pop %v4368
        %v4370 = vmul.f32 %v4363, 1.442695
        %v4371 = vpow.pop %v4370
        %v4372 = vsel %vm1759, %v4365, 0.0
        %4373 = vadd.xlane.f32.xlu0 %v4372
        %v4374 = vpop.xlane.xlu0 %4373
        %v4375 = vsel %vm1759, %v4367, 0.0
        %4376 = vadd.xlane.f32.xlu0 %v4375
        %v4377 = vpop.xlane.xlu0 %4376
        %v4378 = vsel %vm1759, %v4369, 0.0
        %4379 = vadd.xlane.f32.xlu0 %v4378
        %v4380 = vpop.xlane.xlu0 %4379
        %v4381 = vsel %vm1759, %v4371, 0.0
        %4382 = vadd.xlane.f32.xlu0 %v4381
        %v4383 = vpop.xlane.xlu0 %4382
        %v4384 = vrcp.pop %v4374
        %v4385 = vmul.f32 %v4365, %v4384
        %v4386 = vrcp.pop %v4377
        %v4387 = vmul.f32 %v4367, %v4386
        %v4388 = vrcp.pop %v4380
        %v4389 = vmul.f32 %v4369, %v4388
        %v4390 = vrcp.pop %v4383
        %v4391 = vmul.f32 %v4371, %v4390
        %v4392 = vpack.c.bf16 %v4385, %v4385
        %v4393 = vpack.c.bf16 %v4387, %v4387
        %v4394 = vpack.c.bf16 %v4389, %v4389
        %v4395 = vpack.c.bf16 %v4391, %v4391
        %4397 = vrot.lane.b32.xlu0 %v4160, 96
        %v4398 = vpop.permute.xlu0 %4397
        %v4400 = vsel %vm1759, %v4392, 0
        %v4403 = vsel %vm2006, %v4398, 0
        %4405 = vmatprep.subr.bf16.mxu0 0
        %4406 = vmatpush1.bf16.msra.mxu0 0
        %4407 = vmatprep.subr.bf16.mxu0 0
        %4408 = vmatpush1.bf16.msra.mxu0 0
        %4409 = vmatprep.subr.bf16.mxu0 0
        %4410 = vmatpush1.bf16.msra.mxu0 0
        %4411 = vmatprep.subr.bf16.mxu0 0
        %4412 = vmatpush1.bf16.msra.mxu0 0
        %4413 = vmatprep.subr.bf16.mxu0 0
        %4414 = vmatpush1.bf16.msra.mxu0 0
        %4415 = vmatprep.subr.bf16.mxu0 0
        %4416 = vmatpush1.bf16.msra.mxu0 0
        %4417 = vmatprep.subr.bf16.mxu0 0
        %4418 = vmatpush1.bf16.msra.mxu0 0
        %4419 = vmatprep.subr.bf16.mxu0 0
        %4420 = vmatpush1.bf16.msra.mxu0 %v4403
        %4421 = vmatprep.subr.bf16.mxu0 0
        %4422 = vmatpush2.bf16.msra.mxu0 0
        %4423 = vmatprep.subr.bf16.mxu0 0
        %4424 = vmatpush2.bf16.msra.mxu0 0
        %4425 = vmatprep.subr.bf16.mxu0 0
        %4426 = vmatpush2.bf16.msra.mxu0 0
        %4427 = vmatprep.subr.bf16.mxu0 0
        %4428 = vmatpush2.bf16.msra.mxu0 0
        %4429 = vmatprep.subr.bf16.mxu0 0
        %4430 = vmatpush2.bf16.msra.mxu0 0
        %4431 = vmatprep.subr.bf16.mxu0 0
        %4432 = vmatpush2.bf16.msra.mxu0 0
        %4433 = vmatprep.subr.bf16.mxu0 0
        %4434 = vmatpush2.bf16.msra.mxu0 0
        %4435 = vmatprep.subr.bf16.mxu0 0
        %4436 = vmatpush2.bf16.msra.mxu0 0
        %4437 = vmatprep.mubr.bf16.mxu0 0
        %4438 = vmatmul.mubr.bf16.gmra.mxu0 %v4400
        %v4439 = vpop.f32.mrf.mxu0
        %v4440 = vadd.f32 0.0, %v4439
        %v4441 = vpop.f32.mrf.mxu0
        %v4442 = vpop.f32.mrf.mxu0
        %v4443 = vpop.f32.mrf.mxu0
        %4444 = vdwg.mxu0
        %4446 = vrot.lane.b32.xlu0 %v4161, 96
        %v4447 = vpop.permute.xlu0 %4446
        %v4449 = vsel %vm1759, %v4393, 0
        %v4452 = vsel %vm2006, %v4447, 0
        %4454 = vmatprep.subr.bf16.mxu0 0
        %4455 = vmatpush1.bf16.msra.mxu0 0
        %4456 = vmatprep.subr.bf16.mxu0 0
        %4457 = vmatpush1.bf16.msra.mxu0 0
        %4458 = vmatprep.subr.bf16.mxu0 0
        %4459 = vmatpush1.bf16.msra.mxu0 0
        %4460 = vmatprep.subr.bf16.mxu0 0
        %4461 = vmatpush1.bf16.msra.mxu0 0
        %4462 = vmatprep.subr.bf16.mxu0 0
        %4463 = vmatpush1.bf16.msra.mxu0 0
        %4464 = vmatprep.subr.bf16.mxu0 0
        %4465 = vmatpush1.bf16.msra.mxu0 0
        %4466 = vmatprep.subr.bf16.mxu0 0
        %4467 = vmatpush1.bf16.msra.mxu0 0
        %4468 = vmatprep.subr.bf16.mxu0 0
        %4469 = vmatpush1.bf16.msra.mxu0 %v4452
        %4470 = vmatprep.subr.bf16.mxu0 0
        %4471 = vmatpush2.bf16.msra.mxu0 0
        %4472 = vmatprep.subr.bf16.mxu0 0
        %4473 = vmatpush2.bf16.msra.mxu0 0
        %4474 = vmatprep.subr.bf16.mxu0 0
        %4475 = vmatpush2.bf16.msra.mxu0 0
        %4476 = vmatprep.subr.bf16.mxu0 0
        %4477 = vmatpush2.bf16.msra.mxu0 0
        %4478 = vmatprep.subr.bf16.mxu0 0
        %4479 = vmatpush2.bf16.msra.mxu0 0
        %4480 = vmatprep.subr.bf16.mxu0 0
        %4481 = vmatpush2.bf16.msra.mxu0 0
        %4482 = vmatprep.subr.bf16.mxu0 0
        %4483 = vmatpush2.bf16.msra.mxu0 0
        %4484 = vmatprep.subr.bf16.mxu0 0
        %4485 = vmatpush2.bf16.msra.mxu0 0
        %4486 = vmatprep.mubr.bf16.mxu0 0
        %4487 = vmatmul.mubr.bf16.gmra.mxu0 %v4449
        %v4488 = vpop.f32.mrf.mxu0
        %v4489 = vadd.f32 0.0, %v4488
        %v4490 = vpop.f32.mrf.mxu0
        %v4491 = vpop.f32.mrf.mxu0
        %v4492 = vpop.f32.mrf.mxu0
        %4493 = vdwg.mxu0
        %4495 = vrot.lane.b32.xlu0 %v4162, 96
        %v4496 = vpop.permute.xlu0 %4495
        %v4498 = vsel %vm1759, %v4394, 0
        %v4501 = vsel %vm2006, %v4496, 0
        %4503 = vmatprep.subr.bf16.mxu0 0
        %4504 = vmatpush1.bf16.msra.mxu0 0
        %4505 = vmatprep.subr.bf16.mxu0 0
        %4506 = vmatpush1.bf16.msra.mxu0 0
        %4507 = vmatprep.subr.bf16.mxu0 0
        %4508 = vmatpush1.bf16.msra.mxu0 0
        %4509 = vmatprep.subr.bf16.mxu0 0
        %4510 = vmatpush1.bf16.msra.mxu0 0
        %4511 = vmatprep.subr.bf16.mxu0 0
        %4512 = vmatpush1.bf16.msra.mxu0 0
        %4513 = vmatprep.subr.bf16.mxu0 0
        %4514 = vmatpush1.bf16.msra.mxu0 0
        %4515 = vmatprep.subr.bf16.mxu0 0
        %4516 = vmatpush1.bf16.msra.mxu0 0
        %4517 = vmatprep.subr.bf16.mxu0 0
        %4518 = vmatpush1.bf16.msra.mxu0 %v4501
        %4519 = vmatprep.subr.bf16.mxu0 0
        %4520 = vmatpush2.bf16.msra.mxu0 0
        %4521 = vmatprep.subr.bf16.mxu0 0
        %4522 = vmatpush2.bf16.msra.mxu0 0
        %4523 = vmatprep.subr.bf16.mxu0 0
        %4524 = vmatpush2.bf16.msra.mxu0 0
        %4525 = vmatprep.subr.bf16.mxu0 0
        %4526 = vmatpush2.bf16.msra.mxu0 0
        %4527 = vmatprep.subr.bf16.mxu0 0
        %4528 = vmatpush2.bf16.msra.mxu0 0
        %4529 = vmatprep.subr.bf16.mxu0 0
        %4530 = vmatpush2.bf16.msra.mxu0 0
        %4531 = vmatprep.subr.bf16.mxu0 0
        %4532 = vmatpush2.bf16.msra.mxu0 0
        %4533 = vmatprep.subr.bf16.mxu0 0
        %4534 = vmatpush2.bf16.msra.mxu0 0
        %4535 = vmatprep.mubr.bf16.mxu0 0
        %4536 = vmatmul.mubr.bf16.gmra.mxu0 %v4498
        %v4537 = vpop.f32.mrf.mxu0
        %v4538 = vadd.f32 0.0, %v4537
        %v4539 = vpop.f32.mrf.mxu0
        %v4540 = vpop.f32.mrf.mxu0
        %v4541 = vpop.f32.mrf.mxu0
        %4542 = vdwg.mxu0
        %4544 = vrot.lane.b32.xlu0 %v4163, 96
        %v4545 = vpop.permute.xlu0 %4544
        %v4547 = vsel %vm1759, %v4395, 0
        %v4550 = vsel %vm2006, %v4545, 0
        %4552 = vmatprep.subr.bf16.mxu0 0
        %4553 = vmatpush1.bf16.msra.mxu0 0
        %4554 = vmatprep.subr.bf16.mxu0 0
        %4555 = vmatpush1.bf16.msra.mxu0 0
        %4556 = vmatprep.subr.bf16.mxu0 0
        %4557 = vmatpush1.bf16.msra.mxu0 0
        %4558 = vmatprep.subr.bf16.mxu0 0
        %4559 = vmatpush1.bf16.msra.mxu0 0
        %4560 = vmatprep.subr.bf16.mxu0 0
        %4561 = vmatpush1.bf16.msra.mxu0 0
        %4562 = vmatprep.subr.bf16.mxu0 0
        %4563 = vmatpush1.bf16.msra.mxu0 0
        %4564 = vmatprep.subr.bf16.mxu0 0
        %4565 = vmatpush1.bf16.msra.mxu0 0
        %4566 = vmatprep.subr.bf16.mxu0 0
        %4567 = vmatpush1.bf16.msra.mxu0 %v4550
        %4568 = vmatprep.subr.bf16.mxu0 0
        %4569 = vmatpush2.bf16.msra.mxu0 0
        %4570 = vmatprep.subr.bf16.mxu0 0
        %4571 = vmatpush2.bf16.msra.mxu0 0
        %4572 = vmatprep.subr.bf16.mxu0 0
        %4573 = vmatpush2.bf16.msra.mxu0 0
        %4574 = vmatprep.subr.bf16.mxu0 0
        %4575 = vmatpush2.bf16.msra.mxu0 0
        %4576 = vmatprep.subr.bf16.mxu0 0
        %4577 = vmatpush2.bf16.msra.mxu0 0
        %4578 = vmatprep.subr.bf16.mxu0 0
        %4579 = vmatpush2.bf16.msra.mxu0 0
        %4580 = vmatprep.subr.bf16.mxu0 0
        %4581 = vmatpush2.bf16.msra.mxu0 0
        %4582 = vmatprep.subr.bf16.mxu0 0
        %4583 = vmatpush2.bf16.msra.mxu0 0
        %4584 = vmatprep.mubr.bf16.mxu0 0
        %4585 = vmatmul.mubr.bf16.gmra.mxu0 %v4547
        %v4586 = vpop.f32.mrf.mxu0
        %v4587 = vadd.f32 0.0, %v4586
        %v4588 = vpop.f32.mrf.mxu0
        %v4589 = vpop.f32.mrf.mxu0
        %v4590 = vpop.f32.mrf.mxu0
        %4591 = vdwg.mxu0
        %4593 = vrot.lane.b32.xlu0 %v4489, 8
        %v4594 = vpop.permute.xlu0 %4593
        %4597 = vrot.lane.b32.xlu0 %v4538, 16
        %v4598 = vpop.permute.xlu0 %4597
        %4601 = vrot.lane.b32.xlu0 %v4587, 24
        %v4602 = vpop.permute.xlu0 %4601
        %v4604 = vsel %vm1759, %v4440, %v4594
        %v4605 = vsel %vm2207, %v4604, %v4598
        %v4606 = vsel %vm2209, %v4605, %v4602
        %v4607 = vpack.c.bf16 %v4606, %v4606
        %v4609 = vlaneseq
        %v4610 = vshrl.u32 %v4609, 7
        %v4611 = vsub.s32 0, %v4610
        %v4612 = vrot.slane %v4135, %v4611
        %v4618 = vunpack.c.l.b16 %v4131
        %v4619 = vunpack.c.l.b16 %v4132
        %v4620 = vunpack.c.l.b16 %v4133
        %v4621 = vunpack.c.l.b16 %v4134
        %v4622 = vpack.c.b16 %v4619, %v4618
        %v4623 = vpack.c.b16 %v4621, %v4620
        %v4627 = vsel %vm1626, %v4607, 0
        %4629 = vmatprep.subr.bf16.mxu0 0
        %4630 = vmatpush1.bf16.msra.mxu0 0
        %4631 = vmatprep.subr.bf16.mxu0 0
        %4632 = vmatpush1.bf16.msra.mxu0 0
        %4633 = vmatprep.subr.bf16.mxu0 0
        %4634 = vmatpush1.bf16.msra.mxu0 0
        %4635 = vmatprep.subr.bf16.mxu0 0
        %4636 = vmatpush1.bf16.msra.mxu0 0
        %4637 = vmatprep.subr.bf16.mxu0 0
        %4638 = vmatpush1.bf16.msra.mxu0 0
        %4639 = vmatprep.subr.bf16.mxu0 0
        %4640 = vmatpush1.bf16.msra.mxu0 0
        %4641 = vmatprep.subr.bf16.mxu0 0
        %4642 = vmatpush1.bf16.msra.mxu0 %v4623
        %4643 = vmatprep.subr.bf16.mxu0 0
        %4644 = vmatpush1.bf16.msra.mxu0 %v4622
        %4645 = vmatprep.subr.bf16.mxu0 0
        %4646 = vmatpush2.bf16.msra.mxu0 0
        %4647 = vmatprep.subr.bf16.mxu0 0
        %4648 = vmatpush2.bf16.msra.mxu0 0
        %4649 = vmatprep.subr.bf16.mxu0 0
        %4650 = vmatpush2.bf16.msra.mxu0 0
        %4651 = vmatprep.subr.bf16.mxu0 0
        %4652 = vmatpush2.bf16.msra.mxu0 0
        %4653 = vmatprep.subr.bf16.mxu0 0
        %4654 = vmatpush2.bf16.msra.mxu0 0
        %4655 = vmatprep.subr.bf16.mxu0 0
        %4656 = vmatpush2.bf16.msra.mxu0 0
        %4657 = vmatprep.subr.bf16.mxu0 0
        %4658 = vmatpush2.bf16.msra.mxu0 0
        %4659 = vmatprep.subr.bf16.mxu0 0
        %4660 = vmatpush2.bf16.msra.mxu0 0
        %4661 = vmatprep.mubr.bf16.mxu0 0
        %4662 = vmatmul.mubr.bf16.gmra.mxu0 %v4627
        %v4663 = vpop.f32.mrf.mxu0
        %v4664 = vadd.f32 %v4612, %v4663
        %v4665 = vpop.f32.mrf.mxu0
        %v4666 = vpop.f32.mrf.mxu0
        %v4667 = vpop.f32.mrf.mxu0
        %4668 = vdwg.mxu0
        %v4669 = vadd.f32 %v3966, %v4664
        %v4670 = vld [vmem:[%s63] sm:$0x1]
        %v4671 = vld [vmem:[%s65] sm:$0x1]
        %v4672 = vsel %vm1626, %v4669, 0.0
        %4673 = vadd.xlane.f32.xlu0 %v4672
        %v4674 = vpop.xlane.xlu0 %4673
        %v4675 = vmul.f32 %v4674, %v1630
        %v4676 = vsub.f32 %v4669, %v4675
        %v4677 = vmul.f32 %v4676, %v4676
        %v4678 = vsel %vm1626, %v4677, 0.0
        %4679 = vadd.xlane.f32.xlu0 %v4678
        %v4680 = vpop.xlane.xlu0 %4679
        %v4681 = vmul.f32 %v4680, %v1630
        %v4682 = vadd.f32 %v4681, 1e-06
        %v4683 = vrsqrt.pop %v4682
        %v4684 = vmul.f32 %v4676, %v4683
        %v4686 = vlaneseq
        %v4687 = vshrl.u32 %v4686, 7
        %v4688 = vsub.s32 0, %v4687
        %v4689 = vrot.slane %v4670, %v4688
        %v4691 = vmul.f32 %v4684, %v4689
        %v4693 = vlaneseq
        %v4694 = vshrl.u32 %v4693, 7
        %v4695 = vsub.s32 0, %v4694
        %v4696 = vrot.slane %v4671, %v4695
        %v4698 = vadd.f32 %v4691, %v4696
        %v4699 = vld [vmem:[#allocation34] sm:$0xf]
        %v4700 = vld [vmem:[#allocation34 + $0x4] sm:$0xf]
        %v4701 = vld [vmem:[#allocation34 + $0x8] sm:$0xf]
        %v4702 = vld [vmem:[#allocation34 + $0xc] sm:$0xf]
        %v4703 = vld [vmem:[%s69] sm:$0x1]
        %v4704 = vld [vmem:[%s71] sm:$0xf]
        %v4705 = vld [vmem:[%s71 + $0x4] sm:$0xf]
        %v4706 = vld [vmem:[%s71 + $0x8] sm:$0xf]
        %v4707 = vld [vmem:[%s71 + $0xc] sm:$0xf]
        %v4708 = vld [vmem:[%s71 + $0x10] sm:$0xf]
        %v4709 = vld [vmem:[%s71 + $0x14] sm:$0xf]
        %v4710 = vld [vmem:[%s71 + $0x18] sm:$0xf]
        %v4711 = vld [vmem:[%s71 + $0x1c] sm:$0xf]
        %v4712 = vld [vmem:[%s73] sm:$0x1]
        %v4713 = vpack.c.bf16 %v4698, %v4698
        %v4715 = vlaneseq
        %v4716 = vshrl.u32 %v4715, 7
        %v4717 = vsub.s32 0, %v4716
        %v4718 = vrot.slane %v4703, %v4717
        %v4724 = vunpack.c.l.b16 %v4699
        %v4725 = vunpack.c.l.b16 %v4700
        %v4726 = vunpack.c.l.b16 %v4701
        %v4727 = vunpack.c.l.b16 %v4702
        %v4728 = vpack.c.b16 %v4725, %v4724
        %v4729 = vpack.c.b16 %v4727, %v4726
        %v4733 = vsel %vm1626, %v4713, 0
        %4735 = vmatprep.subr.bf16.mxu0 0
        %4736 = vmatpush1.bf16.msra.mxu0 0
        %4737 = vmatprep.subr.bf16.mxu0 0
        %4738 = vmatpush1.bf16.msra.mxu0 0
        %4739 = vmatprep.subr.bf16.mxu0 0
        %4740 = vmatpush1.bf16.msra.mxu0 0
        %4741 = vmatprep.subr.bf16.mxu0 0
        %4742 = vmatpush1.bf16.msra.mxu0 0
        %4743 = vmatprep.subr.bf16.mxu0 0
        %4744 = vmatpush1.bf16.msra.mxu0 0
        %4745 = vmatprep.subr.bf16.mxu0 0
        %4746 = vmatpush1.bf16.msra.mxu0 0
        %4747 = vmatprep.subr.bf16.mxu0 0
        %4748 = vmatpush1.bf16.msra.mxu0 %v4729
        %4749 = vmatprep.subr.bf16.mxu0 0
        %4750 = vmatpush1.bf16.msra.mxu0 %v4728
        %4751 = vmatprep.subr.bf16.mxu0 0
        %4752 = vmatpush2.bf16.msra.mxu0 0
        %4753 = vmatprep.subr.bf16.mxu0 0
        %4754 = vmatpush2.bf16.msra.mxu0 0
        %4755 = vmatprep.subr.bf16.mxu0 0
        %4756 = vmatpush2.bf16.msra.mxu0 0
        %4757 = vmatprep.subr.bf16.mxu0 0
        %4758 = vmatpush2.bf16.msra.mxu0 0
        %4759 = vmatprep.subr.bf16.mxu0 0
        %4760 = vmatpush2.bf16.msra.mxu0 0
        %4761 = vmatprep.subr.bf16.mxu0 0
        %4762 = vmatpush2.bf16.msra.mxu0 0
        %4763 = vmatprep.subr.bf16.mxu0 0
        %4764 = vmatpush2.bf16.msra.mxu0 0
        %4765 = vmatprep.subr.bf16.mxu0 0
        %4766 = vmatpush2.bf16.msra.mxu0 0
        %4767 = vmatprep.mubr.bf16.mxu0 0
        %4768 = vmatmul.mubr.bf16.gmra.mxu0 %v4733
        %v4769 = vpop.f32.mrf.mxu0
        %v4770 = vadd.f32 %v4718, %v4769
        %v4771 = vpop.f32.mrf.mxu0
        %v4772 = vpop.f32.mrf.mxu0
        %v4773 = vpop.f32.mrf.mxu0
        %4774 = vdwg.mxu0
        %v4775 = vmax.f32 %v4770, 0.0
        %v4776 = vpack.c.bf16 %v4775, %v4775
        %v4778 = vlaneseq
        %v4779 = vshrl.u32 %v4778, 7
        %v4780 = vsub.s32 0, %v4779
        %v4781 = vrot.slane %v4712, %v4780
        %v4791 = vunpack.c.l.b16 %v4704
        %v4792 = vunpack.c.l.b16 %v4705
        %v4793 = vunpack.c.l.b16 %v4706
        %v4794 = vunpack.c.l.b16 %v4707
        %v4795 = vunpack.c.l.b16 %v4708
        %v4796 = vunpack.c.l.b16 %v4709
        %v4797 = vunpack.c.l.b16 %v4710
        %v4798 = vunpack.c.l.b16 %v4711
        %v4799 = vpack.c.b16 %v4792, %v4791
        %v4800 = vpack.c.b16 %v4794, %v4793
        %v4801 = vpack.c.b16 %v4796, %v4795
        %v4802 = vpack.c.b16 %v4798, %v4797
        %v4808 = vsel %vm2411, %v4776, 0
        %4810 = vmatprep.subr.bf16.mxu0 0
        %4811 = vmatpush1.bf16.msra.mxu0 0
        %4812 = vmatprep.subr.bf16.mxu0 0
        %4813 = vmatpush1.bf16.msra.mxu0 0
        %4814 = vmatprep.subr.bf16.mxu0 0
        %4815 = vmatpush1.bf16.msra.mxu0 0
        %4816 = vmatprep.subr.bf16.mxu0 0
        %4817 = vmatpush1.bf16.msra.mxu0 0
        %4818 = vmatprep.subr.bf16.mxu0 0
        %4819 = vmatpush1.bf16.msra.mxu0 %v4802
        %4820 = vmatprep.subr.bf16.mxu0 0
        %4821 = vmatpush1.bf16.msra.mxu0 %v4801
        %4822 = vmatprep.subr.bf16.mxu0 0
        %4823 = vmatpush1.bf16.msra.mxu0 %v4800
        %4824 = vmatprep.subr.bf16.mxu0 0
        %4825 = vmatpush1.bf16.msra.mxu0 %v4799
        %4826 = vmatprep.subr.bf16.mxu0 0
        %4827 = vmatpush2.bf16.msra.mxu0 0
        %4828 = vmatprep.subr.bf16.mxu0 0
        %4829 = vmatpush2.bf16.msra.mxu0 0
        %4830 = vmatprep.subr.bf16.mxu0 0
        %4831 = vmatpush2.bf16.msra.mxu0 0
        %4832 = vmatprep.subr.bf16.mxu0 0
        %4833 = vmatpush2.bf16.msra.mxu0 0
        %4834 = vmatprep.subr.bf16.mxu0 0
        %4835 = vmatpush2.bf16.msra.mxu0 0
        %4836 = vmatprep.subr.bf16.mxu0 0
        %4837 = vmatpush2.bf16.msra.mxu0 0
        %4838 = vmatprep.subr.bf16.mxu0 0
        %4839 = vmatpush2.bf16.msra.mxu0 0
        %4840 = vmatprep.subr.bf16.mxu0 0
        %4841 = vmatpush2.bf16.msra.mxu0 0
        %4842 = vmatprep.mubr.bf16.mxu0 0
        %4843 = vmatmul.mubr.bf16.gmra.mxu0 %v4808
        %v4844 = vpop.f32.mrf.mxu0
        %v4845 = vadd.f32 %v4781, %v4844
        %v4846 = vpop.f32.mrf.mxu0
        %v4847 = vpop.f32.mrf.mxu0
        %v4848 = vpop.f32.mrf.mxu0
        %4849 = vdwg.mxu0
        %v4850 = vadd.f32 %v4669, %v4845
        %s4851 = scalar_lea.vmem [#allocation23], 1
        %v4852 = vld [vmem:[%s4851] sm:$0x1]
        %s4853 = scalar_lea.vmem [#allocation25], 1
        %v4854 = vld [vmem:[%s4853] sm:$0x1]
        %v4855 = vsel %vm1626, %v4850, 0.0
        %4856 = vadd.xlane.f32.xlu0 %v4855
        %v4857 = vpop.xlane.xlu0 %4856
        %v4858 = vmul.f32 %v4857, %v1630
        %v4859 = vsub.f32 %v4850, %v4858
        %v4860 = vmul.f32 %v4859, %v4859
        %v4861 = vsel %vm1626, %v4860, 0.0
        %4862 = vadd.xlane.f32.xlu0 %v4861
        %v4863 = vpop.xlane.xlu0 %4862
        %v4864 = vmul.f32 %v4863, %v1630
        %v4865 = vadd.f32 %v4864, 1e-06
        %v4866 = vrsqrt.pop %v4865
        %v4867 = vmul.f32 %v4859, %v4866
        %v4869 = vlaneseq
        %v4870 = vshrl.u32 %v4869, 7
        %v4871 = vsub.s32 0, %v4870
        %v4872 = vrot.slane %v4852, %v4871
        %v4874 = vmul.f32 %v4867, %v4872
        %v4876 = vlaneseq
        %v4877 = vshrl.u32 %v4876, 7
        %v4878 = vsub.s32 0, %v4877
        %v4879 = vrot.slane %v4854, %v4878
        %v4881 = vadd.f32 %v4874, %v4879
        %s4882 = scalar_lea.vmem %s39, 16
        %v4883 = vld [vmem:[%s4882] sm:$0xf]
        %v4884 = vld [vmem:[%s4882 + $0x4] sm:$0xf]
        %v4885 = vld [vmem:[%s4882 + $0x8] sm:$0xf]
        %v4886 = vld [vmem:[%s4882 + $0xc] sm:$0xf]
        %v4887 = vpack.c.bf16 %v4881, %v4881
        %s4888 = scalar_lea.vmem [#allocation26], 1
        %v4889 = vld [vmem:[%s4888] sm:$0x1]
        %v4891 = vlaneseq
        %v4892 = vshrl.u32 %v4891, 7
        %v4893 = vsub.s32 0, %v4892
        %v4894 = vrot.slane %v4889, %v4893
        %v4900 = vunpack.c.l.b16 %v4883
        %v4901 = vunpack.c.l.b16 %v4884
        %v4902 = vunpack.c.l.b16 %v4885
        %v4903 = vunpack.c.l.b16 %v4886
        %v4904 = vpack.c.b16 %v4901, %v4900
        %v4905 = vpack.c.b16 %v4903, %v4902
        %v4909 = vsel %vm1626, %v4887, 0
        %4911 = vmatprep.subr.bf16.mxu0 0
        %4912 = vmatpush1.bf16.msra.mxu0 0
        %4913 = vmatprep.subr.bf16.mxu0 0
        %4914 = vmatpush1.bf16.msra.mxu0 0
        %4915 = vmatprep.subr.bf16.mxu0 0
        %4916 = vmatpush1.bf16.msra.mxu0 0
        %4917 = vmatprep.subr.bf16.mxu0 0
        %4918 = vmatpush1.bf16.msra.mxu0 0
        %4919 = vmatprep.subr.bf16.mxu0 0
        %4920 = vmatpush1.bf16.msra.mxu0 0
        %4921 = vmatprep.subr.bf16.mxu0 0
        %4922 = vmatpush1.bf16.msra.mxu0 0
        %4923 = vmatprep.subr.bf16.mxu0 0
        %4924 = vmatpush1.bf16.msra.mxu0 %v4905
        %4925 = vmatprep.subr.bf16.mxu0 0
        %4926 = vmatpush1.bf16.msra.mxu0 %v4904
        %4927 = vmatprep.subr.bf16.mxu0 0
        %4928 = vmatpush2.bf16.msra.mxu0 0
        %4929 = vmatprep.subr.bf16.mxu0 0
        %4930 = vmatpush2.bf16.msra.mxu0 0
        %4931 = vmatprep.subr.bf16.mxu0 0
        %4932 = vmatpush2.bf16.msra.mxu0 0
        %4933 = vmatprep.subr.bf16.mxu0 0
        %4934 = vmatpush2.bf16.msra.mxu0 0
        %4935 = vmatprep.subr.bf16.mxu0 0
        %4936 = vmatpush2.bf16.msra.mxu0 0
        %4937 = vmatprep.subr.bf16.mxu0 0
        %4938 = vmatpush2.bf16.msra.mxu0 0
        %4939 = vmatprep.subr.bf16.mxu0 0
        %4940 = vmatpush2.bf16.msra.mxu0 0
        %4941 = vmatprep.subr.bf16.mxu0 0
        %4942 = vmatpush2.bf16.msra.mxu0 0
        %4943 = vmatprep.mubr.bf16.mxu0 0
        %4944 = vmatmul.mubr.bf16.gmra.mxu0 %v4909
        %v4945 = vpop.f32.mrf.mxu0
        %v4946 = vadd.f32 %v4894, %v4945
        %v4947 = vpop.f32.mrf.mxu0
        %v4948 = vpop.f32.mrf.mxu0
        %v4949 = vpop.f32.mrf.mxu0
        %4950 = vdwg.mxu0
        %v4951 = vmul.f32 %v4946, 0.35355338
        %s4952 = scalar_lea.vmem %s43, 16
        %v4953 = vld [vmem:[%s4952] sm:$0xf]
        %v4954 = vld [vmem:[%s4952 + $0x4] sm:$0xf]
        %v4955 = vld [vmem:[%s4952 + $0x8] sm:$0xf]
        %v4956 = vld [vmem:[%s4952 + $0xc] sm:$0xf]
        %s4957 = scalar_lea.vmem [#allocation28], 1
        %v4958 = vld [vmem:[%s4957] sm:$0x1]
        %4960 = vrot.lane.b32.xlu0 %v4951, 120
        %v4961 = vpop.permute.xlu0 %4960
        %4963 = vrot.lane.b32.xlu0 %v4951, 112
        %v4964 = vpop.permute.xlu0 %4963
        %4966 = vrot.lane.b32.xlu0 %v4951, 104
        %v4967 = vpop.permute.xlu0 %4966
        %v4969 = vpack.c.bf16 %v4951, %v4951
        %v4970 = vpack.c.bf16 %v4961, %v4961
        %v4971 = vpack.c.bf16 %v4964, %v4964
        %v4972 = vpack.c.bf16 %v4967, %v4967
        %4974 = vrot.lane.b32.xlu0 %v4946, 120
        %v4975 = vpop.permute.xlu0 %4974
        %4977 = vrot.lane.b32.xlu0 %v4946, 112
        %v4978 = vpop.permute.xlu0 %4977
        %4980 = vrot.lane.b32.xlu0 %v4946, 104
        %v4981 = vpop.permute.xlu0 %4980
        %v4983 = vpack.c.bf16 %v4946, %v4946
        %v4984 = vpack.c.bf16 %v4975, %v4975
        %v4985 = vpack.c.bf16 %v4978, %v4978
        %v4986 = vpack.c.bf16 %v4981, %v4981
        %4988 = vrot.lane.b32.xlu0 %v4983, 96
        %v4989 = vpop.permute.xlu0 %4988
        %v4991 = vsel %vm1759, %v4969, 0
        %v4994 = vsel %vm1759, %v4989, 0
        %4996 = vmatprep.subr.bf16.mxu0 0
        %4997 = vmatpush1.bf16.xpose.msra.mxu0 0
        %4998 = vmatprep.subr.bf16.mxu0 0
        %4999 = vmatpush1.bf16.xpose.msra.mxu0 0
        %5000 = vmatprep.subr.bf16.mxu0 0
        %5001 = vmatpush1.bf16.xpose.msra.mxu0 0
        %5002 = vmatprep.subr.bf16.mxu0 0
        %5003 = vmatpush1.bf16.xpose.msra.mxu0 0
        %5004 = vmatprep.subr.bf16.mxu0 0
        %5005 = vmatpush1.bf16.xpose.msra.mxu0 0
        %5006 = vmatprep.subr.bf16.mxu0 0
        %5007 = vmatpush1.bf16.xpose.msra.mxu0 0
        %5008 = vmatprep.subr.bf16.mxu0 0
        %5009 = vmatpush1.bf16.xpose.msra.mxu0 0
        %5010 = vmatprep.subr.bf16.mxu0 0
        %5011 = vmatpush1.bf16.xpose.msra.mxu0 %v4994
        %5012 = vmatprep.subr.bf16.mxu0 0
        %5013 = vmatpush2.bf16.xpose.msra.mxu0 0
        %5014 = vmatprep.subr.bf16.mxu0 0
        %5015 = vmatpush2.bf16.xpose.msra.mxu0 0
        %5016 = vmatprep.subr.bf16.mxu0 0
        %5017 = vmatpush2.bf16.xpose.msra.mxu0 0
        %5018 = vmatprep.subr.bf16.mxu0 0
        %5019 = vmatpush2.bf16.xpose.msra.mxu0 0
        %5020 = vmatprep.subr.bf16.mxu0 0
        %5021 = vmatpush2.bf16.xpose.msra.mxu0 0
        %5022 = vmatprep.subr.bf16.mxu0 0
        %5023 = vmatpush2.bf16.xpose.msra.mxu0 0
        %5024 = vmatprep.subr.bf16.mxu0 0
        %5025 = vmatpush2.bf16.xpose.msra.mxu0 0
        %5026 = vmatprep.subr.bf16.mxu0 0
        %5027 = vmatpush2.bf16.xpose.msra.mxu0 0
        %5028 = vmatprep.mubr.bf16.mxu0 0
        %5029 = vmatmul.mubr.bf16.gmra.mxu0 %v4991
        %v5030 = vpop.f32.mrf.mxu0
        %v5031 = vadd.f32 %v1622, %v5030
        %v5032 = vpop.f32.mrf.mxu0
        %v5033 = vpop.f32.mrf.mxu0
        %v5034 = vpop.f32.mrf.mxu0
        %5035 = vdwg.mxu0
        %5037 = vrot.lane.b32.xlu0 %v4984, 96
        %v5038 = vpop.permute.xlu0 %5037
        %v5040 = vsel %vm1759, %v4970, 0
        %v5043 = vsel %vm1759, %v5038, 0
        %5045 = vmatprep.subr.bf16.mxu0 0
        %5046 = vmatpush1.bf16.xpose.msra.mxu0 0
        %5047 = vmatprep.subr.bf16.mxu0 0
        %5048 = vmatpush1.bf16.xpose.msra.mxu0 0
        %5049 = vmatprep.subr.bf16.mxu0 0
        %5050 = vmatpush1.bf16.xpose.msra.mxu0 0
        %5051 = vmatprep.subr.bf16.mxu0 0
        %5052 = vmatpush1.bf16.xpose.msra.mxu0 0
        %5053 = vmatprep.subr.bf16.mxu0 0
        %5054 = vmatpush1.bf16.xpose.msra.mxu0 0
        %5055 = vmatprep.subr.bf16.mxu0 0
        %5056 = vmatpush1.bf16.xpose.msra.mxu0 0
        %5057 = vmatprep.subr.bf16.mxu0 0
        %5058 = vmatpush1.bf16.xpose.msra.mxu0 0
        %5059 = vmatprep.subr.bf16.mxu0 0
        %5060 = vmatpush1.bf16.xpose.msra.mxu0 %v5043
        %5061 = vmatprep.subr.bf16.mxu0 0
        %5062 = vmatpush2.bf16.xpose.msra.mxu0 0
        %5063 = vmatprep.subr.bf16.mxu0 0
        %5064 = vmatpush2.bf16.xpose.msra.mxu0 0
        %5065 = vmatprep.subr.bf16.mxu0 0
        %5066 = vmatpush2.bf16.xpose.msra.mxu0 0
        %5067 = vmatprep.subr.bf16.mxu0 0
        %5068 = vmatpush2.bf16.xpose.msra.mxu0 0
        %5069 = vmatprep.subr.bf16.mxu0 0
        %5070 = vmatpush2.bf16.xpose.msra.mxu0 0
        %5071 = vmatprep.subr.bf16.mxu0 0
        %5072 = vmatpush2.bf16.xpose.msra.mxu0 0
        %5073 = vmatprep.subr.bf16.mxu0 0
        %5074 = vmatpush2.bf16.xpose.msra.mxu0 0
        %5075 = vmatprep.subr.bf16.mxu0 0
        %5076 = vmatpush2.bf16.xpose.msra.mxu0 0
        %5077 = vmatprep.mubr.bf16.mxu0 0
        %5078 = vmatmul.mubr.bf16.gmra.mxu0 %v5040
        %v5079 = vpop.f32.mrf.mxu0
        %v5080 = vadd.f32 %v1622, %v5079
        %v5081 = vpop.f32.mrf.mxu0
        %v5082 = vpop.f32.mrf.mxu0
        %v5083 = vpop.f32.mrf.mxu0
        %5084 = vdwg.mxu0
        %5086 = vrot.lane.b32.xlu0 %v4985, 96
        %v5087 = vpop.permute.xlu0 %5086
        %v5089 = vsel %vm1759, %v4971, 0
        %v5092 = vsel %vm1759, %v5087, 0
        %5094 = vmatprep.subr.bf16.mxu0 0
        %5095 = vmatpush1.bf16.xpose.msra.mxu0 0
        %5096 = vmatprep.subr.bf16.mxu0 0
        %5097 = vmatpush1.bf16.xpose.msra.mxu0 0
        %5098 = vmatprep.subr.bf16.mxu0 0
        %5099 = vmatpush1.bf16.xpose.msra.mxu0 0
        %5100 = vmatprep.subr.bf16.mxu0 0
        %5101 = vmatpush1.bf16.xpose.msra.mxu0 0
        %5102 = vmatprep.subr.bf16.mxu0 0
        %5103 = vmatpush1.bf16.xpose.msra.mxu0 0
        %5104 = vmatprep.subr.bf16.mxu0 0
        %5105 = vmatpush1.bf16.xpose.msra.mxu0 0
        %5106 = vmatprep.subr.bf16.mxu0 0
        %5107 = vmatpush1.bf16.xpose.msra.mxu0 0
        %5108 = vmatprep.subr.bf16.mxu0 0
        %5109 = vmatpush1.bf16.xpose.msra.mxu0 %v5092
        %5110 = vmatprep.subr.bf16.mxu0 0
        %5111 = vmatpush2.bf16.xpose.msra.mxu0 0
        %5112 = vmatprep.subr.bf16.mxu0 0
        %5113 = vmatpush2.bf16.xpose.msra.mxu0 0
        %5114 = vmatprep.subr.bf16.mxu0 0
        %5115 = vmatpush2.bf16.xpose.msra.mxu0 0
        %5116 = vmatprep.subr.bf16.mxu0 0
        %5117 = vmatpush2.bf16.xpose.msra.mxu0 0
        %5118 = vmatprep.subr.bf16.mxu0 0
        %5119 = vmatpush2.bf16.xpose.msra.mxu0 0
        %5120 = vmatprep.subr.bf16.mxu0 0
        %5121 = vmatpush2.bf16.xpose.msra.mxu0 0
        %5122 = vmatprep.subr.bf16.mxu0 0
        %5123 = vmatpush2.bf16.xpose.msra.mxu0 0
        %5124 = vmatprep.subr.bf16.mxu0 0
        %5125 = vmatpush2.bf16.xpose.msra.mxu0 0
        %5126 = vmatprep.mubr.bf16.mxu0 0
        %5127 = vmatmul.mubr.bf16.gmra.mxu0 %v5089
        %v5128 = vpop.f32.mrf.mxu0
        %v5129 = vadd.f32 %v1622, %v5128
        %v5130 = vpop.f32.mrf.mxu0
        %v5131 = vpop.f32.mrf.mxu0
        %v5132 = vpop.f32.mrf.mxu0
        %5133 = vdwg.mxu0
        %5135 = vrot.lane.b32.xlu0 %v4986, 96
        %v5136 = vpop.permute.xlu0 %5135
        %v5138 = vsel %vm1759, %v4972, 0
        %v5141 = vsel %vm1759, %v5136, 0
        %5143 = vmatprep.subr.bf16.mxu0 0
        %5144 = vmatpush1.bf16.xpose.msra.mxu0 0
        %5145 = vmatprep.subr.bf16.mxu0 0
        %5146 = vmatpush1.bf16.xpose.msra.mxu0 0
        %5147 = vmatprep.subr.bf16.mxu0 0
        %5148 = vmatpush1.bf16.xpose.msra.mxu0 0
        %5149 = vmatprep.subr.bf16.mxu0 0
        %5150 = vmatpush1.bf16.xpose.msra.mxu0 0
        %5151 = vmatprep.subr.bf16.mxu0 0
        %5152 = vmatpush1.bf16.xpose.msra.mxu0 0
        %5153 = vmatprep.subr.bf16.mxu0 0
        %5154 = vmatpush1.bf16.xpose.msra.mxu0 0
        %5155 = vmatprep.subr.bf16.mxu0 0
        %5156 = vmatpush1.bf16.xpose.msra.mxu0 0
        %5157 = vmatprep.subr.bf16.mxu0 0
        %5158 = vmatpush1.bf16.xpose.msra.mxu0 %v5141
        %5159 = vmatprep.subr.bf16.mxu0 0
        %5160 = vmatpush2.bf16.xpose.msra.mxu0 0
        %5161 = vmatprep.subr.bf16.mxu0 0
        %5162 = vmatpush2.bf16.xpose.msra.mxu0 0
        %5163 = vmatprep.subr.bf16.mxu0 0
        %5164 = vmatpush2.bf16.xpose.msra.mxu0 0
        %5165 = vmatprep.subr.bf16.mxu0 0
        %5166 = vmatpush2.bf16.xpose.msra.mxu0 0
        %5167 = vmatprep.subr.bf16.mxu0 0
        %5168 = vmatpush2.bf16.xpose.msra.mxu0 0
        %5169 = vmatprep.subr.bf16.mxu0 0
        %5170 = vmatpush2.bf16.xpose.msra.mxu0 0
        %5171 = vmatprep.subr.bf16.mxu0 0
        %5172 = vmatpush2.bf16.xpose.msra.mxu0 0
        %5173 = vmatprep.subr.bf16.mxu0 0
        %5174 = vmatpush2.bf16.xpose.msra.mxu0 0
        %5175 = vmatprep.mubr.bf16.mxu0 0
        %5176 = vmatmul.mubr.bf16.gmra.mxu0 %v5138
        %v5177 = vpop.f32.mrf.mxu0
        %v5178 = vadd.f32 %v1622, %v5177
        %v5179 = vpop.f32.mrf.mxu0
        %v5180 = vpop.f32.mrf.mxu0
        %v5181 = vpop.f32.mrf.mxu0
        %5182 = vdwg.mxu0
        %v5183 = vsel %vm1759, %v5031, -inf
        %5184 = vmax.xlane.f32.xlu0 %v5183
        %v5185 = vpop.xlane.xlu0 %5184
        %v5186 = vsel %vm1759, %v5080, -inf
        %5187 = vmax.xlane.f32.xlu0 %v5186
        %v5188 = vpop.xlane.xlu0 %5187
        %v5189 = vsel %vm1759, %v5129, -inf
        %5190 = vmax.xlane.f32.xlu0 %v5189
        %v5191 = vpop.xlane.xlu0 %5190
        %v5192 = vsel %vm1759, %v5178, -inf
        %5193 = vmax.xlane.f32.xlu0 %v5192
        %v5194 = vpop.xlane.xlu0 %5193
        %v5195 = vsub.f32 %v5031, %v5185
        %v5196 = vsub.f32 %v5080, %v5188
        %v5197 = vsub.f32 %v5129, %v5191
        %v5198 = vsub.f32 %v5178, %v5194
        %v5199 = vmul.f32 %v5195, 1.442695
        %v5200 = vpow.pop %v5199
        %v5201 = vmul.f32 %v5196, 1.442695
        %v5202 = vpow.pop %v5201
        %v5203 = vmul.f32 %v5197, 1.442695
        %v5204 = vpow.pop %v5203
        %v5205 = vmul.f32 %v5198, 1.442695
        %v5206 = vpow.pop %v5205
        %v5207 = vsel %vm1759, %v5200, 0.0
        %5208 = vadd.xlane.f32.xlu0 %v5207
        %v5209 = vpop.xlane.xlu0 %5208
        %v5210 = vsel %vm1759, %v5202, 0.0
        %5211 = vadd.xlane.f32.xlu0 %v5210
        %v5212 = vpop.xlane.xlu0 %5211
        %v5213 = vsel %vm1759, %v5204, 0.0
        %5214 = vadd.xlane.f32.xlu0 %v5213
        %v5215 = vpop.xlane.xlu0 %5214
        %v5216 = vsel %vm1759, %v5206, 0.0
        %5217 = vadd.xlane.f32.xlu0 %v5216
        %v5218 = vpop.xlane.xlu0 %5217
        %v5219 = vrcp.pop %v5209
        %v5220 = vmul.f32 %v5200, %v5219
        %v5221 = vrcp.pop %v5212
        %v5222 = vmul.f32 %v5202, %v5221
        %v5223 = vrcp.pop %v5215
        %v5224 = vmul.f32 %v5204, %v5223
        %v5225 = vrcp.pop %v5218
        %v5226 = vmul.f32 %v5206, %v5225
        %v5227 = vpack.c.bf16 %v5220, %v5220
        %v5228 = vpack.c.bf16 %v5222, %v5222
        %v5229 = vpack.c.bf16 %v5224, %v5224
        %v5230 = vpack.c.bf16 %v5226, %v5226
        %5231 = vrot.lane.b32.xlu0 %v4983, 64
        %v5232 = vpop.permute.xlu0 %5231
        %v5234 = vsel %vm1759, %v5227, 0
        %v5237 = vsel %vm2006, %v5232, 0
        %5239 = vmatprep.subr.bf16.mxu0 0
        %5240 = vmatpush1.bf16.msra.mxu0 0
        %5241 = vmatprep.subr.bf16.mxu0 0
        %5242 = vmatpush1.bf16.msra.mxu0 0
        %5243 = vmatprep.subr.bf16.mxu0 0
        %5244 = vmatpush1.bf16.msra.mxu0 0
        %5245 = vmatprep.subr.bf16.mxu0 0
        %5246 = vmatpush1.bf16.msra.mxu0 0
        %5247 = vmatprep.subr.bf16.mxu0 0
        %5248 = vmatpush1.bf16.msra.mxu0 0
        %5249 = vmatprep.subr.bf16.mxu0 0
        %5250 = vmatpush1.bf16.msra.mxu0 0
        %5251 = vmatprep.subr.bf16.mxu0 0
        %5252 = vmatpush1.bf16.msra.mxu0 0
        %5253 = vmatprep.subr.bf16.mxu0 0
        %5254 = vmatpush1.bf16.msra.mxu0 %v5237
        %5255 = vmatprep.subr.bf16.mxu0 0
        %5256 = vmatpush2.bf16.msra.mxu0 0
        %5257 = vmatprep.subr.bf16.mxu0 0
        %5258 = vmatpush2.bf16.msra.mxu0 0
        %5259 = vmatprep.subr.bf16.mxu0 0
        %5260 = vmatpush2.bf16.msra.mxu0 0
        %5261 = vmatprep.subr.bf16.mxu0 0
        %5262 = vmatpush2.bf16.msra.mxu0 0
        %5263 = vmatprep.subr.bf16.mxu0 0
        %5264 = vmatpush2.bf16.msra.mxu0 0
        %5265 = vmatprep.subr.bf16.mxu0 0
        %5266 = vmatpush2.bf16.msra.mxu0 0
        %5267 = vmatprep.subr.bf16.mxu0 0
        %5268 = vmatpush2.bf16.msra.mxu0 0
        %5269 = vmatprep.subr.bf16.mxu0 0
        %5270 = vmatpush2.bf16.msra.mxu0 0
        %5271 = vmatprep.mubr.bf16.mxu0 0
        %5272 = vmatmul.mubr.bf16.gmra.mxu0 %v5234
        %v5273 = vpop.f32.mrf.mxu0
        %v5274 = vadd.f32 0.0, %v5273
        %v5275 = vpop.f32.mrf.mxu0
        %v5276 = vpop.f32.mrf.mxu0
        %v5277 = vpop.f32.mrf.mxu0
        %5278 = vdwg.mxu0
        %5279 = vrot.lane.b32.xlu0 %v4984, 64
        %v5280 = vpop.permute.xlu0 %5279
        %v5282 = vsel %vm1759, %v5228, 0
        %v5285 = vsel %vm2006, %v5280, 0
        %5287 = vmatprep.subr.bf16.mxu0 0
        %5288 = vmatpush1.bf16.msra.mxu0 0
        %5289 = vmatprep.subr.bf16.mxu0 0
        %5290 = vmatpush1.bf16.msra.mxu0 0
        %5291 = vmatprep.subr.bf16.mxu0 0
        %5292 = vmatpush1.bf16.msra.mxu0 0
        %5293 = vmatprep.subr.bf16.mxu0 0
        %5294 = vmatpush1.bf16.msra.mxu0 0
        %5295 = vmatprep.subr.bf16.mxu0 0
        %5296 = vmatpush1.bf16.msra.mxu0 0
        %5297 = vmatprep.subr.bf16.mxu0 0
        %5298 = vmatpush1.bf16.msra.mxu0 0
        %5299 = vmatprep.subr.bf16.mxu0 0
        %5300 = vmatpush1.bf16.msra.mxu0 0
        %5301 = vmatprep.subr.bf16.mxu0 0
        %5302 = vmatpush1.bf16.msra.mxu0 %v5285
        %5303 = vmatprep.subr.bf16.mxu0 0
        %5304 = vmatpush2.bf16.msra.mxu0 0
        %5305 = vmatprep.subr.bf16.mxu0 0
        %5306 = vmatpush2.bf16.msra.mxu0 0
        %5307 = vmatprep.subr.bf16.mxu0 0
        %5308 = vmatpush2.bf16.msra.mxu0 0
        %5309 = vmatprep.subr.bf16.mxu0 0
        %5310 = vmatpush2.bf16.msra.mxu0 0
        %5311 = vmatprep.subr.bf16.mxu0 0
        %5312 = vmatpush2.bf16.msra.mxu0 0
        %5313 = vmatprep.subr.bf16.mxu0 0
        %5314 = vmatpush2.bf16.msra.mxu0 0
        %5315 = vmatprep.subr.bf16.mxu0 0
        %5316 = vmatpush2.bf16.msra.mxu0 0
        %5317 = vmatprep.subr.bf16.mxu0 0
        %5318 = vmatpush2.bf16.msra.mxu0 0
        %5319 = vmatprep.mubr.bf16.mxu0 0
        %5320 = vmatmul.mubr.bf16.gmra.mxu0 %v5282
        %v5321 = vpop.f32.mrf.mxu0
        %v5322 = vadd.f32 0.0, %v5321
        %v5323 = vpop.f32.mrf.mxu0
        %v5324 = vpop.f32.mrf.mxu0
        %v5325 = vpop.f32.mrf.mxu0
        %5326 = vdwg.mxu0
        %5327 = vrot.lane.b32.xlu0 %v4985, 64
        %v5328 = vpop.permute.xlu0 %5327
        %v5330 = vsel %vm1759, %v5229, 0
        %v5333 = vsel %vm2006, %v5328, 0
        %5335 = vmatprep.subr.bf16.mxu0 0
        %5336 = vmatpush1.bf16.msra.mxu0 0
        %5337 = vmatprep.subr.bf16.mxu0 0
        %5338 = vmatpush1.bf16.msra.mxu0 0
        %5339 = vmatprep.subr.bf16.mxu0 0
        %5340 = vmatpush1.bf16.msra.mxu0 0
        %5341 = vmatprep.subr.bf16.mxu0 0
        %5342 = vmatpush1.bf16.msra.mxu0 0
        %5343 = vmatprep.subr.bf16.mxu0 0
        %5344 = vmatpush1.bf16.msra.mxu0 0
        %5345 = vmatprep.subr.bf16.mxu0 0
        %5346 = vmatpush1.bf16.msra.mxu0 0
        %5347 = vmatprep.subr.bf16.mxu0 0
        %5348 = vmatpush1.bf16.msra.mxu0 0
        %5349 = vmatprep.subr.bf16.mxu0 0
        %5350 = vmatpush1.bf16.msra.mxu0 %v5333
        %5351 = vmatprep.subr.bf16.mxu0 0
        %5352 = vmatpush2.bf16.msra.mxu0 0
        %5353 = vmatprep.subr.bf16.mxu0 0
        %5354 = vmatpush2.bf16.msra.mxu0 0
        %5355 = vmatprep.subr.bf16.mxu0 0
        %5356 = vmatpush2.bf16.msra.mxu0 0
        %5357 = vmatprep.subr.bf16.mxu0 0
        %5358 = vmatpush2.bf16.msra.mxu0 0
        %5359 = vmatprep.subr.bf16.mxu0 0
        %5360 = vmatpush2.bf16.msra.mxu0 0
        %5361 = vmatprep.subr.bf16.mxu0 0
        %5362 = vmatpush2.bf16.msra.mxu0 0
        %5363 = vmatprep.subr.bf16.mxu0 0
        %5364 = vmatpush2.bf16.msra.mxu0 0
        %5365 = vmatprep.subr.bf16.mxu0 0
        %5366 = vmatpush2.bf16.msra.mxu0 0
        %5367 = vmatprep.mubr.bf16.mxu0 0
        %5368 = vmatmul.mubr.bf16.gmra.mxu0 %v5330
        %v5369 = vpop.f32.mrf.mxu0
        %v5370 = vadd.f32 0.0, %v5369
        %v5371 = vpop.f32.mrf.mxu0
        %v5372 = vpop.f32.mrf.mxu0
        %v5373 = vpop.f32.mrf.mxu0
        %5374 = vdwg.mxu0
        %5375 = vrot.lane.b32.xlu0 %v4986, 64
        %v5376 = vpop.permute.xlu0 %5375
        %v5378 = vsel %vm1759, %v5230, 0
        %v5381 = vsel %vm2006, %v5376, 0
        %5383 = vmatprep.subr.bf16.mxu0 0
        %5384 = vmatpush1.bf16.msra.mxu0 0
        %5385 = vmatprep.subr.bf16.mxu0 0
        %5386 = vmatpush1.bf16.msra.mxu0 0
        %5387 = vmatprep.subr.bf16.mxu0 0
        %5388 = vmatpush1.bf16.msra.mxu0 0
        %5389 = vmatprep.subr.bf16.mxu0 0
        %5390 = vmatpush1.bf16.msra.mxu0 0
        %5391 = vmatprep.subr.bf16.mxu0 0
        %5392 = vmatpush1.bf16.msra.mxu0 0
        %5393 = vmatprep.subr.bf16.mxu0 0
        %5394 = vmatpush1.bf16.msra.mxu0 0
        %5395 = vmatprep.subr.bf16.mxu0 0
        %5396 = vmatpush1.bf16.msra.mxu0 0
        %5397 = vmatprep.subr.bf16.mxu0 0
        %5398 = vmatpush1.bf16.msra.mxu0 %v5381
        %5399 = vmatprep.subr.bf16.mxu0 0
        %5400 = vmatpush2.bf16.msra.mxu0 0
        %5401 = vmatprep.subr.bf16.mxu0 0
        %5402 = vmatpush2.bf16.msra.mxu0 0
        %5403 = vmatprep.subr.bf16.mxu0 0
        %5404 = vmatpush2.bf16.msra.mxu0 0
        %5405 = vmatprep.subr.bf16.mxu0 0
        %5406 = vmatpush2.bf16.msra.mxu0 0
        %5407 = vmatprep.subr.bf16.mxu0 0
        %5408 = vmatpush2.bf16.msra.mxu0 0
        %5409 = vmatprep.subr.bf16.mxu0 0
        %5410 = vmatpush2.bf16.msra.mxu0 0
        %5411 = vmatprep.subr.bf16.mxu0 0
        %5412 = vmatpush2.bf16.msra.mxu0 0
        %5413 = vmatprep.subr.bf16.mxu0 0
        %5414 = vmatpush2.bf16.msra.mxu0 0
        %5415 = vmatprep.mubr.bf16.mxu0 0
        %5416 = vmatmul.mubr.bf16.gmra.mxu0 %v5378
        %v5417 = vpop.f32.mrf.mxu0
        %v5418 = vadd.f32 0.0, %v5417
        %v5419 = vpop.f32.mrf.mxu0
        %v5420 = vpop.f32.mrf.mxu0
        %v5421 = vpop.f32.mrf.mxu0
        %5422 = vdwg.mxu0
        %5424 = vrot.lane.b32.xlu0 %v5322, 8
        %v5425 = vpop.permute.xlu0 %5424
        %5428 = vrot.lane.b32.xlu0 %v5370, 16
        %v5429 = vpop.permute.xlu0 %5428
        %5432 = vrot.lane.b32.xlu0 %v5418, 24
        %v5433 = vpop.permute.xlu0 %5432
        %v5435 = vsel %vm1759, %v5274, %v5425
        %v5436 = vsel %vm2207, %v5435, %v5429
        %v5437 = vsel %vm2209, %v5436, %v5433
        %v5438 = vpack.c.bf16 %v5437, %v5437
        %v5440 = vlaneseq
        %v5441 = vshrl.u32 %v5440, 7
        %v5442 = vsub.s32 0, %v5441
        %v5443 = vrot.slane %v4958, %v5442
        %v5449 = vunpack.c.l.b16 %v4953
        %v5450 = vunpack.c.l.b16 %v4954
        %v5451 = vunpack.c.l.b16 %v4955
        %v5452 = vunpack.c.l.b16 %v4956
        %v5453 = vpack.c.b16 %v5450, %v5449
        %v5454 = vpack.c.b16 %v5452, %v5451
        %v5458 = vsel %vm1626, %v5438, 0
        %5460 = vmatprep.subr.bf16.mxu0 0
        %5461 = vmatpush1.bf16.msra.mxu0 0
        %5462 = vmatprep.subr.bf16.mxu0 0
        %5463 = vmatpush1.bf16.msra.mxu0 0
        %5464 = vmatprep.subr.bf16.mxu0 0
        %5465 = vmatpush1.bf16.msra.mxu0 0
        %5466 = vmatprep.subr.bf16.mxu0 0
        %5467 = vmatpush1.bf16.msra.mxu0 0
        %5468 = vmatprep.subr.bf16.mxu0 0
        %5469 = vmatpush1.bf16.msra.mxu0 0
        %5470 = vmatprep.subr.bf16.mxu0 0
        %5471 = vmatpush1.bf16.msra.mxu0 0
        %5472 = vmatprep.subr.bf16.mxu0 0
        %5473 = vmatpush1.bf16.msra.mxu0 %v5454
        %5474 = vmatprep.subr.bf16.mxu0 0
        %5475 = vmatpush1.bf16.msra.mxu0 %v5453
        %5476 = vmatprep.subr.bf16.mxu0 0
        %5477 = vmatpush2.bf16.msra.mxu0 0
        %5478 = vmatprep.subr.bf16.mxu0 0
        %5479 = vmatpush2.bf16.msra.mxu0 0
        %5480 = vmatprep.subr.bf16.mxu0 0
        %5481 = vmatpush2.bf16.msra.mxu0 0
        %5482 = vmatprep.subr.bf16.mxu0 0
        %5483 = vmatpush2.bf16.msra.mxu0 0
        %5484 = vmatprep.subr.bf16.mxu0 0
        %5485 = vmatpush2.bf16.msra.mxu0 0
        %5486 = vmatprep.subr.bf16.mxu0 0
        %5487 = vmatpush2.bf16.msra.mxu0 0
        %5488 = vmatprep.subr.bf16.mxu0 0
        %5489 = vmatpush2.bf16.msra.mxu0 0
        %5490 = vmatprep.subr.bf16.mxu0 0
        %5491 = vmatpush2.bf16.msra.mxu0 0
        %5492 = vmatprep.mubr.bf16.mxu0 0
        %5493 = vmatmul.mubr.bf16.gmra.mxu0 %v5458
        %v5494 = vpop.f32.mrf.mxu0
        %v5495 = vadd.f32 %v5443, %v5494
        %v5496 = vpop.f32.mrf.mxu0
        %v5497 = vpop.f32.mrf.mxu0
        %v5498 = vpop.f32.mrf.mxu0
        %5499 = vdwg.mxu0
        %v5500 = vadd.f32 %v4850, %v5495
        %s5501 = scalar_lea.vmem [#allocation29], 1
        %v5502 = vld [vmem:[%s5501] sm:$0x1]
        %s5503 = scalar_lea.vmem [#allocation31], 1
        %v5504 = vld [vmem:[%s5503] sm:$0x1]
        %v5505 = vsel %vm1626, %v5500, 0.0
        %5506 = vadd.xlane.f32.xlu0 %v5505
        %v5507 = vpop.xlane.xlu0 %5506
        %v5508 = vmul.f32 %v5507, %v1630
        %v5509 = vsub.f32 %v5500, %v5508
        %v5510 = vmul.f32 %v5509, %v5509
        %v5511 = vsel %vm1626, %v5510, 0.0
        %5512 = vadd.xlane.f32.xlu0 %v5511
        %v5513 = vpop.xlane.xlu0 %5512
        %v5514 = vmul.f32 %v5513, %v1630
        %v5515 = vadd.f32 %v5514, 1e-06
        %v5516 = vrsqrt.pop %v5515
        %v5517 = vmul.f32 %v5509, %v5516
        %v5519 = vlaneseq
        %v5520 = vshrl.u32 %v5519, 7
        %v5521 = vsub.s32 0, %v5520
        %v5522 = vrot.slane %v5502, %v5521
        %v5524 = vmul.f32 %v5517, %v5522
        %v5526 = vlaneseq
        %v5527 = vshrl.u32 %v5526, 7
        %v5528 = vsub.s32 0, %v5527
        %v5529 = vrot.slane %v5504, %v5528
        %v5531 = vadd.f32 %v5524, %v5529
        %s5532 = scalar_lea.vmem %s51, 16
        %v5533 = vld [vmem:[%s5532] sm:$0xf]
        %v5534 = vld [vmem:[%s5532 + $0x4] sm:$0xf]
        %v5535 = vld [vmem:[%s5532 + $0x8] sm:$0xf]
        %v5536 = vld [vmem:[%s5532 + $0xc] sm:$0xf]
        %v5537 = vpack.c.bf16 %v5531, %v5531
        %s5538 = scalar_lea.vmem [#allocation32], 1
        %v5539 = vld [vmem:[%s5538] sm:$0x1]
        %v5541 = vlaneseq
        %v5542 = vshrl.u32 %v5541, 7
        %v5543 = vsub.s32 0, %v5542
        %v5544 = vrot.slane %v5539, %v5543
        %v5550 = vunpack.c.l.b16 %v5533
        %v5551 = vunpack.c.l.b16 %v5534
        %v5552 = vunpack.c.l.b16 %v5535
        %v5553 = vunpack.c.l.b16 %v5536
        %v5554 = vpack.c.b16 %v5551, %v5550
        %v5555 = vpack.c.b16 %v5553, %v5552
        %v5559 = vsel %vm1626, %v5537, 0
        %5561 = vmatprep.subr.bf16.mxu0 0
        %5562 = vmatpush1.bf16.msra.mxu0 0
        %5563 = vmatprep.subr.bf16.mxu0 0
        %5564 = vmatpush1.bf16.msra.mxu0 0
        %5565 = vmatprep.subr.bf16.mxu0 0
        %5566 = vmatpush1.bf16.msra.mxu0 0
        %5567 = vmatprep.subr.bf16.mxu0 0
        %5568 = vmatpush1.bf16.msra.mxu0 0
        %5569 = vmatprep.subr.bf16.mxu0 0
        %5570 = vmatpush1.bf16.msra.mxu0 0
        %5571 = vmatprep.subr.bf16.mxu0 0
        %5572 = vmatpush1.bf16.msra.mxu0 0
        %5573 = vmatprep.subr.bf16.mxu0 0
        %5574 = vmatpush1.bf16.msra.mxu0 %v5555
        %5575 = vmatprep.subr.bf16.mxu0 0
        %5576 = vmatpush1.bf16.msra.mxu0 %v5554
        %5577 = vmatprep.subr.bf16.mxu0 0
        %5578 = vmatpush2.bf16.msra.mxu0 0
        %5579 = vmatprep.subr.bf16.mxu0 0
        %5580 = vmatpush2.bf16.msra.mxu0 0
        %5581 = vmatprep.subr.bf16.mxu0 0
        %5582 = vmatpush2.bf16.msra.mxu0 0
        %5583 = vmatprep.subr.bf16.mxu0 0
        %5584 = vmatpush2.bf16.msra.mxu0 0
        %5585 = vmatprep.subr.bf16.mxu0 0
        %5586 = vmatpush2.bf16.msra.mxu0 0
        %5587 = vmatprep.subr.bf16.mxu0 0
        %5588 = vmatpush2.bf16.msra.mxu0 0
        %5589 = vmatprep.subr.bf16.mxu0 0
        %5590 = vmatpush2.bf16.msra.mxu0 0
        %5591 = vmatprep.subr.bf16.mxu0 0
        %5592 = vmatpush2.bf16.msra.mxu0 0
        %5593 = vmatprep.mubr.bf16.mxu0 0
        %5594 = vmatmul.mubr.bf16.gmra.mxu0 %v5559
        %v5595 = vpop.f32.mrf.mxu0
        %v5596 = vadd.f32 %v5544, %v5595
        %v5597 = vpop.f32.mrf.mxu0
        %v5598 = vpop.f32.mrf.mxu0
        %v5599 = vpop.f32.mrf.mxu0
        %5600 = vdwg.mxu0
        %v5601 = vmul.f32 %v5596, 0.35355338
        %s5602 = scalar_lea.vmem %s55, 16
        %v5603 = vld [vmem:[%s5602] sm:$0xf]
        %v5604 = vld [vmem:[%s5602 + $0x4] sm:$0xf]
        %v5605 = vld [vmem:[%s5602 + $0x8] sm:$0xf]
        %v5606 = vld [vmem:[%s5602 + $0xc] sm:$0xf]
        %s5607 = scalar_lea.vmem %s57, 1
        %v5608 = vld [vmem:[%s5607] sm:$0x1]
        %v5610 = vlaneseq
        %v5611 = vshrl.u32 %v5610, 7
        %v5612 = vsub.s32 0, %v5611
        %v5613 = vrot.slane %v5608, %v5612
        %v5619 = vunpack.c.l.b16 %v5603
        %v5620 = vunpack.c.l.b16 %v5604
        %v5621 = vunpack.c.l.b16 %v5605
        %v5622 = vunpack.c.l.b16 %v5606
        %v5623 = vpack.c.b16 %v5620, %v5619
        %v5624 = vpack.c.b16 %v5622, %v5621
        %5627 = vmatprep.subr.bf16.mxu0 0
        %5628 = vmatpush1.bf16.msra.mxu0 0
        %5629 = vmatprep.subr.bf16.mxu0 0
        %5630 = vmatpush1.bf16.msra.mxu0 0
        %5631 = vmatprep.subr.bf16.mxu0 0
        %5632 = vmatpush1.bf16.msra.mxu0 0
        %5633 = vmatprep.subr.bf16.mxu0 0
        %5634 = vmatpush1.bf16.msra.mxu0 0
        %5635 = vmatprep.subr.bf16.mxu0 0
        %5636 = vmatpush1.bf16.msra.mxu0 0
        %5637 = vmatprep.subr.bf16.mxu0 0
        %5638 = vmatpush1.bf16.msra.mxu0 0
        %5639 = vmatprep.subr.bf16.mxu0 0
        %5640 = vmatpush1.bf16.msra.mxu0 %v5624
        %5641 = vmatprep.subr.bf16.mxu0 0
        %5642 = vmatpush1.bf16.msra.mxu0 %v5623
        %5643 = vmatprep.subr.bf16.mxu0 0
        %5644 = vmatpush2.bf16.msra.mxu0 0
        %5645 = vmatprep.subr.bf16.mxu0 0
        %5646 = vmatpush2.bf16.msra.mxu0 0
        %5647 = vmatprep.subr.bf16.mxu0 0
        %5648 = vmatpush2.bf16.msra.mxu0 0
        %5649 = vmatprep.subr.bf16.mxu0 0
        %5650 = vmatpush2.bf16.msra.mxu0 0
        %5651 = vmatprep.subr.bf16.mxu0 0
        %5652 = vmatpush2.bf16.msra.mxu0 0
        %5653 = vmatprep.subr.bf16.mxu0 0
        %5654 = vmatpush2.bf16.msra.mxu0 0
        %5655 = vmatprep.subr.bf16.mxu0 0
        %5656 = vmatpush2.bf16.msra.mxu0 0
        %5657 = vmatprep.subr.bf16.mxu0 0
        %5658 = vmatpush2.bf16.msra.mxu0 0
        %5659 = vmatprep.mubr.bf16.mxu0 0
        %5660 = vmatmul.mubr.bf16.gmra.mxu0 %v4089
        %v5661 = vpop.f32.mrf.mxu0
        %v5662 = vadd.f32 %v5613, %v5661
        %v5663 = vpop.f32.mrf.mxu0
        %v5664 = vpop.f32.mrf.mxu0
        %v5665 = vpop.f32.mrf.mxu0
        %5666 = vdwg.mxu0
        %s5667 = scalar_lea.vmem %s59, 16
        %v5668 = vld [vmem:[%s5667] sm:$0xf]
        %v5669 = vld [vmem:[%s5667 + $0x4] sm:$0xf]
        %v5670 = vld [vmem:[%s5667 + $0x8] sm:$0xf]
        %v5671 = vld [vmem:[%s5667 + $0xc] sm:$0xf]
        %s5672 = scalar_lea.vmem %s61, 1
        %v5673 = vld [vmem:[%s5672] sm:$0x1]
        %5675 = vrot.lane.b32.xlu0 %v5601, 120
        %v5676 = vpop.permute.xlu0 %5675
        %5678 = vrot.lane.b32.xlu0 %v5601, 112
        %v5679 = vpop.permute.xlu0 %5678
        %5681 = vrot.lane.b32.xlu0 %v5601, 104
        %v5682 = vpop.permute.xlu0 %5681
        %v5684 = vpack.c.bf16 %v5601, %v5601
        %v5685 = vpack.c.bf16 %v5676, %v5676
        %v5686 = vpack.c.bf16 %v5679, %v5679
        %v5687 = vpack.c.bf16 %v5682, %v5682
        %5689 = vrot.lane.b32.xlu0 %v5662, 120
        %v5690 = vpop.permute.xlu0 %5689
        %5692 = vrot.lane.b32.xlu0 %v5662, 112
        %v5693 = vpop.permute.xlu0 %5692
        %5695 = vrot.lane.b32.xlu0 %v5662, 104
        %v5696 = vpop.permute.xlu0 %5695
        %v5698 = vpack.c.bf16 %v5662, %v5662
        %v5699 = vpack.c.bf16 %v5690, %v5690
        %v5700 = vpack.c.bf16 %v5693, %v5693
        %v5701 = vpack.c.bf16 %v5696, %v5696
        %v5703 = vsel %vm1759, %v5684, 0
        %v5706 = vsel %vm1759, %v5698, 0
        %5708 = vmatprep.subr.bf16.mxu0 0
        %5709 = vmatpush1.bf16.xpose.msra.mxu0 0
        %5710 = vmatprep.subr.bf16.mxu0 0
        %5711 = vmatpush1.bf16.xpose.msra.mxu0 0
        %5712 = vmatprep.subr.bf16.mxu0 0
        %5713 = vmatpush1.bf16.xpose.msra.mxu0 0
        %5714 = vmatprep.subr.bf16.mxu0 0
        %5715 = vmatpush1.bf16.xpose.msra.mxu0 0
        %5716 = vmatprep.subr.bf16.mxu0 0
        %5717 = vmatpush1.bf16.xpose.msra.mxu0 0
        %5718 = vmatprep.subr.bf16.mxu0 0
        %5719 = vmatpush1.bf16.xpose.msra.mxu0 0
        %5720 = vmatprep.subr.bf16.mxu0 0
        %5721 = vmatpush1.bf16.xpose.msra.mxu0 0
        %5722 = vmatprep.subr.bf16.mxu0 0
        %5723 = vmatpush1.bf16.xpose.msra.mxu0 %v5706
        %5724 = vmatprep.subr.bf16.mxu0 0
        %5725 = vmatpush2.bf16.xpose.msra.mxu0 0
        %5726 = vmatprep.subr.bf16.mxu0 0
        %5727 = vmatpush2.bf16.xpose.msra.mxu0 0
        %5728 = vmatprep.subr.bf16.mxu0 0
        %5729 = vmatpush2.bf16.xpose.msra.mxu0 0
        %5730 = vmatprep.subr.bf16.mxu0 0
        %5731 = vmatpush2.bf16.xpose.msra.mxu0 0
        %5732 = vmatprep.subr.bf16.mxu0 0
        %5733 = vmatpush2.bf16.xpose.msra.mxu0 0
        %5734 = vmatprep.subr.bf16.mxu0 0
        %5735 = vmatpush2.bf16.xpose.msra.mxu0 0
        %5736 = vmatprep.subr.bf16.mxu0 0
        %5737 = vmatpush2.bf16.xpose.msra.mxu0 0
        %5738 = vmatprep.subr.bf16.mxu0 0
        %5739 = vmatpush2.bf16.xpose.msra.mxu0 0
        %5740 = vmatprep.mubr.bf16.mxu0 0
        %5741 = vmatmul.mubr.bf16.gmra.mxu0 %v5703
        %v5742 = vpop.f32.mrf.mxu0
        %v5743 = vadd.f32 0.0, %v5742
        %v5744 = vpop.f32.mrf.mxu0
        %v5745 = vpop.f32.mrf.mxu0
        %v5746 = vpop.f32.mrf.mxu0
        %5747 = vdwg.mxu0
        %v5749 = vsel %vm1759, %v5685, 0
        %v5752 = vsel %vm1759, %v5699, 0
        %5754 = vmatprep.subr.bf16.mxu0 0
        %5755 = vmatpush1.bf16.xpose.msra.mxu0 0
        %5756 = vmatprep.subr.bf16.mxu0 0
        %5757 = vmatpush1.bf16.xpose.msra.mxu0 0
        %5758 = vmatprep.subr.bf16.mxu0 0
        %5759 = vmatpush1.bf16.xpose.msra.mxu0 0
        %5760 = vmatprep.subr.bf16.mxu0 0
        %5761 = vmatpush1.bf16.xpose.msra.mxu0 0
        %5762 = vmatprep.subr.bf16.mxu0 0
        %5763 = vmatpush1.bf16.xpose.msra.mxu0 0
        %5764 = vmatprep.subr.bf16.mxu0 0
        %5765 = vmatpush1.bf16.xpose.msra.mxu0 0
        %5766 = vmatprep.subr.bf16.mxu0 0
        %5767 = vmatpush1.bf16.xpose.msra.mxu0 0
        %5768 = vmatprep.subr.bf16.mxu0 0
        %5769 = vmatpush1.bf16.xpose.msra.mxu0 %v5752
        %5770 = vmatprep.subr.bf16.mxu0 0
        %5771 = vmatpush2.bf16.xpose.msra.mxu0 0
        %5772 = vmatprep.subr.bf16.mxu0 0
        %5773 = vmatpush2.bf16.xpose.msra.mxu0 0
        %5774 = vmatprep.subr.bf16.mxu0 0
        %5775 = vmatpush2.bf16.xpose.msra.mxu0 0
        %5776 = vmatprep.subr.bf16.mxu0 0
        %5777 = vmatpush2.bf16.xpose.msra.mxu0 0
        %5778 = vmatprep.subr.bf16.mxu0 0
        %5779 = vmatpush2.bf16.xpose.msra.mxu0 0
        %5780 = vmatprep.subr.bf16.mxu0 0
        %5781 = vmatpush2.bf16.xpose.msra.mxu0 0
        %5782 = vmatprep.subr.bf16.mxu0 0
        %5783 = vmatpush2.bf16.xpose.msra.mxu0 0
        %5784 = vmatprep.subr.bf16.mxu0 0
        %5785 = vmatpush2.bf16.xpose.msra.mxu0 0
        %5786 = vmatprep.mubr.bf16.mxu0 0
        %5787 = vmatmul.mubr.bf16.gmra.mxu0 %v5749
        %v5788 = vpop.f32.mrf.mxu0
        %v5789 = vadd.f32 0.0, %v5788
        %v5790 = vpop.f32.mrf.mxu0
        %v5791 = vpop.f32.mrf.mxu0
        %v5792 = vpop.f32.mrf.mxu0
        %5793 = vdwg.mxu0
        %v5795 = vsel %vm1759, %v5686, 0
        %v5798 = vsel %vm1759, %v5700, 0
        %5800 = vmatprep.subr.bf16.mxu0 0
        %5801 = vmatpush1.bf16.xpose.msra.mxu0 0
        %5802 = vmatprep.subr.bf16.mxu0 0
        %5803 = vmatpush1.bf16.xpose.msra.mxu0 0
        %5804 = vmatprep.subr.bf16.mxu0 0
        %5805 = vmatpush1.bf16.xpose.msra.mxu0 0
        %5806 = vmatprep.subr.bf16.mxu0 0
        %5807 = vmatpush1.bf16.xpose.msra.mxu0 0
        %5808 = vmatprep.subr.bf16.mxu0 0
        %5809 = vmatpush1.bf16.xpose.msra.mxu0 0
        %5810 = vmatprep.subr.bf16.mxu0 0
        %5811 = vmatpush1.bf16.xpose.msra.mxu0 0
        %5812 = vmatprep.subr.bf16.mxu0 0
        %5813 = vmatpush1.bf16.xpose.msra.mxu0 0
        %5814 = vmatprep.subr.bf16.mxu0 0
        %5815 = vmatpush1.bf16.xpose.msra.mxu0 %v5798
        %5816 = vmatprep.subr.bf16.mxu0 0
        %5817 = vmatpush2.bf16.xpose.msra.mxu0 0
        %5818 = vmatprep.subr.bf16.mxu0 0
        %5819 = vmatpush2.bf16.xpose.msra.mxu0 0
        %5820 = vmatprep.subr.bf16.mxu0 0
        %5821 = vmatpush2.bf16.xpose.msra.mxu0 0
        %5822 = vmatprep.subr.bf16.mxu0 0
        %5823 = vmatpush2.bf16.xpose.msra.mxu0 0
        %5824 = vmatprep.subr.bf16.mxu0 0
        %5825 = vmatpush2.bf16.xpose.msra.mxu0 0
        %5826 = vmatprep.subr.bf16.mxu0 0
        %5827 = vmatpush2.bf16.xpose.msra.mxu0 0
        %5828 = vmatprep.subr.bf16.mxu0 0
        %5829 = vmatpush2.bf16.xpose.msra.mxu0 0
        %5830 = vmatprep.subr.bf16.mxu0 0
        %5831 = vmatpush2.bf16.xpose.msra.mxu0 0
        %5832 = vmatprep.mubr.bf16.mxu0 0
        %5833 = vmatmul.mubr.bf16.gmra.mxu0 %v5795
        %v5834 = vpop.f32.mrf.mxu0
        %v5835 = vadd.f32 0.0, %v5834
        %v5836 = vpop.f32.mrf.mxu0
        %v5837 = vpop.f32.mrf.mxu0
        %v5838 = vpop.f32.mrf.mxu0
        %5839 = vdwg.mxu0
        %v5841 = vsel %vm1759, %v5687, 0
        %v5844 = vsel %vm1759, %v5701, 0
        %5846 = vmatprep.subr.bf16.mxu0 0
        %5847 = vmatpush1.bf16.xpose.msra.mxu0 0
        %5848 = vmatprep.subr.bf16.mxu0 0
        %5849 = vmatpush1.bf16.xpose.msra.mxu0 0
        %5850 = vmatprep.subr.bf16.mxu0 0
        %5851 = vmatpush1.bf16.xpose.msra.mxu0 0
        %5852 = vmatprep.subr.bf16.mxu0 0
        %5853 = vmatpush1.bf16.xpose.msra.mxu0 0
        %5854 = vmatprep.subr.bf16.mxu0 0
        %5855 = vmatpush1.bf16.xpose.msra.mxu0 0
        %5856 = vmatprep.subr.bf16.mxu0 0
        %5857 = vmatpush1.bf16.xpose.msra.mxu0 0
        %5858 = vmatprep.subr.bf16.mxu0 0
        %5859 = vmatpush1.bf16.xpose.msra.mxu0 0
        %5860 = vmatprep.subr.bf16.mxu0 0
        %5861 = vmatpush1.bf16.xpose.msra.mxu0 %v5844
        %5862 = vmatprep.subr.bf16.mxu0 0
        %5863 = vmatpush2.bf16.xpose.msra.mxu0 0
        %5864 = vmatprep.subr.bf16.mxu0 0
        %5865 = vmatpush2.bf16.xpose.msra.mxu0 0
        %5866 = vmatprep.subr.bf16.mxu0 0
        %5867 = vmatpush2.bf16.xpose.msra.mxu0 0
        %5868 = vmatprep.subr.bf16.mxu0 0
        %5869 = vmatpush2.bf16.xpose.msra.mxu0 0
        %5870 = vmatprep.subr.bf16.mxu0 0
        %5871 = vmatpush2.bf16.xpose.msra.mxu0 0
        %5872 = vmatprep.subr.bf16.mxu0 0
        %5873 = vmatpush2.bf16.xpose.msra.mxu0 0
        %5874 = vmatprep.subr.bf16.mxu0 0
        %5875 = vmatpush2.bf16.xpose.msra.mxu0 0
        %5876 = vmatprep.subr.bf16.mxu0 0
        %5877 = vmatpush2.bf16.xpose.msra.mxu0 0
        %5878 = vmatprep.mubr.bf16.mxu0 0
        %5879 = vmatmul.mubr.bf16.gmra.mxu0 %v5841
        %v5880 = vpop.f32.mrf.mxu0
        %v5881 = vadd.f32 0.0, %v5880
        %v5882 = vpop.f32.mrf.mxu0
        %v5883 = vpop.f32.mrf.mxu0
        %v5884 = vpop.f32.mrf.mxu0
        %5885 = vdwg.mxu0
        %v5886 = vsel %vm1759, %v5743, -inf
        %5887 = vmax.xlane.f32.xlu0 %v5886
        %v5888 = vpop.xlane.xlu0 %5887
        %v5889 = vsel %vm1759, %v5789, -inf
        %5890 = vmax.xlane.f32.xlu0 %v5889
        %v5891 = vpop.xlane.xlu0 %5890
        %v5892 = vsel %vm1759, %v5835, -inf
        %5893 = vmax.xlane.f32.xlu0 %v5892
        %v5894 = vpop.xlane.xlu0 %5893
        %v5895 = vsel %vm1759, %v5881, -inf
        %5896 = vmax.xlane.f32.xlu0 %v5895
        %v5897 = vpop.xlane.xlu0 %5896
        %v5898 = vsub.f32 %v5743, %v5888
        %v5899 = vsub.f32 %v5789, %v5891
        %v5900 = vsub.f32 %v5835, %v5894
        %v5901 = vsub.f32 %v5881, %v5897
        %v5902 = vmul.f32 %v5898, 1.442695
        %v5903 = vpow.pop %v5902
        %v5904 = vmul.f32 %v5899, 1.442695
        %v5905 = vpow.pop %v5904
        %v5906 = vmul.f32 %v5900, 1.442695
        %v5907 = vpow.pop %v5906
        %v5908 = vmul.f32 %v5901, 1.442695
        %v5909 = vpow.pop %v5908
        %v5910 = vsel %vm1759, %v5903, 0.0
        %5911 = vadd.xlane.f32.xlu0 %v5910
        %v5912 = vpop.xlane.xlu0 %5911
        %v5913 = vsel %vm1759, %v5905, 0.0
        %5914 = vadd.xlane.f32.xlu0 %v5913
        %v5915 = vpop.xlane.xlu0 %5914
        %v5916 = vsel %vm1759, %v5907, 0.0
        %5917 = vadd.xlane.f32.xlu0 %v5916
        %v5918 = vpop.xlane.xlu0 %5917
        %v5919 = vsel %vm1759, %v5909, 0.0
        %5920 = vadd.xlane.f32.xlu0 %v5919
        %v5921 = vpop.xlane.xlu0 %5920
        %v5922 = vrcp.pop %v5912
        %v5923 = vmul.f32 %v5903, %v5922
        %v5924 = vrcp.pop %v5915
        %v5925 = vmul.f32 %v5905, %v5924
        %v5926 = vrcp.pop %v5918
        %v5927 = vmul.f32 %v5907, %v5926
        %v5928 = vrcp.pop %v5921
        %v5929 = vmul.f32 %v5909, %v5928
        %v5930 = vpack.c.bf16 %v5923, %v5923
        %v5931 = vpack.c.bf16 %v5925, %v5925
        %v5932 = vpack.c.bf16 %v5927, %v5927
        %v5933 = vpack.c.bf16 %v5929, %v5929
        %5935 = vrot.lane.b32.xlu0 %v5698, 96
        %v5936 = vpop.permute.xlu0 %5935
        %v5938 = vsel %vm1759, %v5930, 0
        %v5941 = vsel %vm2006, %v5936, 0
        %5943 = vmatprep.subr.bf16.mxu0 0
        %5944 = vmatpush1.bf16.msra.mxu0 0
        %5945 = vmatprep.subr.bf16.mxu0 0
        %5946 = vmatpush1.bf16.msra.mxu0 0
        %5947 = vmatprep.subr.bf16.mxu0 0
        %5948 = vmatpush1.bf16.msra.mxu0 0
        %5949 = vmatprep.subr.bf16.mxu0 0
        %5950 = vmatpush1.bf16.msra.mxu0 0
        %5951 = vmatprep.subr.bf16.mxu0 0
        %5952 = vmatpush1.bf16.msra.mxu0 0
        %5953 = vmatprep.subr.bf16.mxu0 0
        %5954 = vmatpush1.bf16.msra.mxu0 0
        %5955 = vmatprep.subr.bf16.mxu0 0
        %5956 = vmatpush1.bf16.msra.mxu0 0
        %5957 = vmatprep.subr.bf16.mxu0 0
        %5958 = vmatpush1.bf16.msra.mxu0 %v5941
        %5959 = vmatprep.subr.bf16.mxu0 0
        %5960 = vmatpush2.bf16.msra.mxu0 0
        %5961 = vmatprep.subr.bf16.mxu0 0
        %5962 = vmatpush2.bf16.msra.mxu0 0
        %5963 = vmatprep.subr.bf16.mxu0 0
        %5964 = vmatpush2.bf16.msra.mxu0 0
        %5965 = vmatprep.subr.bf16.mxu0 0
        %5966 = vmatpush2.bf16.msra.mxu0 0
        %5967 = vmatprep.subr.bf16.mxu0 0
        %5968 = vmatpush2.bf16.msra.mxu0 0
        %5969 = vmatprep.subr.bf16.mxu0 0
        %5970 = vmatpush2.bf16.msra.mxu0 0
        %5971 = vmatprep.subr.bf16.mxu0 0
        %5972 = vmatpush2.bf16.msra.mxu0 0
        %5973 = vmatprep.subr.bf16.mxu0 0
        %5974 = vmatpush2.bf16.msra.mxu0 0
        %5975 = vmatprep.mubr.bf16.mxu0 0
        %5976 = vmatmul.mubr.bf16.gmra.mxu0 %v5938
        %v5977 = vpop.f32.mrf.mxu0
        %v5978 = vadd.f32 0.0, %v5977
        %v5979 = vpop.f32.mrf.mxu0
        %v5980 = vpop.f32.mrf.mxu0
        %v5981 = vpop.f32.mrf.mxu0
        %5982 = vdwg.mxu0
        %5984 = vrot.lane.b32.xlu0 %v5699, 96
        %v5985 = vpop.permute.xlu0 %5984
        %v5987 = vsel %vm1759, %v5931, 0
        %v5990 = vsel %vm2006, %v5985, 0
        %5992 = vmatprep.subr.bf16.mxu0 0
        %5993 = vmatpush1.bf16.msra.mxu0 0
        %5994 = vmatprep.subr.bf16.mxu0 0
        %5995 = vmatpush1.bf16.msra.mxu0 0
        %5996 = vmatprep.subr.bf16.mxu0 0
        %5997 = vmatpush1.bf16.msra.mxu0 0
        %5998 = vmatprep.subr.bf16.mxu0 0
        %5999 = vmatpush1.bf16.msra.mxu0 0
        %6000 = vmatprep.subr.bf16.mxu0 0
        %6001 = vmatpush1.bf16.msra.mxu0 0
        %6002 = vmatprep.subr.bf16.mxu0 0
        %6003 = vmatpush1.bf16.msra.mxu0 0
        %6004 = vmatprep.subr.bf16.mxu0 0
        %6005 = vmatpush1.bf16.msra.mxu0 0
        %6006 = vmatprep.subr.bf16.mxu0 0
        %6007 = vmatpush1.bf16.msra.mxu0 %v5990
        %6008 = vmatprep.subr.bf16.mxu0 0
        %6009 = vmatpush2.bf16.msra.mxu0 0
        %6010 = vmatprep.subr.bf16.mxu0 0
        %6011 = vmatpush2.bf16.msra.mxu0 0
        %6012 = vmatprep.subr.bf16.mxu0 0
        %6013 = vmatpush2.bf16.msra.mxu0 0
        %6014 = vmatprep.subr.bf16.mxu0 0
        %6015 = vmatpush2.bf16.msra.mxu0 0
        %6016 = vmatprep.subr.bf16.mxu0 0
        %6017 = vmatpush2.bf16.msra.mxu0 0
        %6018 = vmatprep.subr.bf16.mxu0 0
        %6019 = vmatpush2.bf16.msra.mxu0 0
        %6020 = vmatprep.subr.bf16.mxu0 0
        %6021 = vmatpush2.bf16.msra.mxu0 0
        %6022 = vmatprep.subr.bf16.mxu0 0
        %6023 = vmatpush2.bf16.msra.mxu0 0
        %6024 = vmatprep.mubr.bf16.mxu0 0
        %6025 = vmatmul.mubr.bf16.gmra.mxu0 %v5987
        %v6026 = vpop.f32.mrf.mxu0
        %v6027 = vadd.f32 0.0, %v6026
        %v6028 = vpop.f32.mrf.mxu0
        %v6029 = vpop.f32.mrf.mxu0
        %v6030 = vpop.f32.mrf.mxu0
        %6031 = vdwg.mxu0
        %6033 = vrot.lane.b32.xlu0 %v5700, 96
        %v6034 = vpop.permute.xlu0 %6033
        %v6036 = vsel %vm1759, %v5932, 0
        %v6039 = vsel %vm2006, %v6034, 0
        %6041 = vmatprep.subr.bf16.mxu0 0
        %6042 = vmatpush1.bf16.msra.mxu0 0
        %6043 = vmatprep.subr.bf16.mxu0 0
        %6044 = vmatpush1.bf16.msra.mxu0 0
        %6045 = vmatprep.subr.bf16.mxu0 0
        %6046 = vmatpush1.bf16.msra.mxu0 0
        %6047 = vmatprep.subr.bf16.mxu0 0
        %6048 = vmatpush1.bf16.msra.mxu0 0
        %6049 = vmatprep.subr.bf16.mxu0 0
        %6050 = vmatpush1.bf16.msra.mxu0 0
        %6051 = vmatprep.subr.bf16.mxu0 0
        %6052 = vmatpush1.bf16.msra.mxu0 0
        %6053 = vmatprep.subr.bf16.mxu0 0
        %6054 = vmatpush1.bf16.msra.mxu0 0
        %6055 = vmatprep.subr.bf16.mxu0 0
        %6056 = vmatpush1.bf16.msra.mxu0 %v6039
        %6057 = vmatprep.subr.bf16.mxu0 0
        %6058 = vmatpush2.bf16.msra.mxu0 0
        %6059 = vmatprep.subr.bf16.mxu0 0
        %6060 = vmatpush2.bf16.msra.mxu0 0
        %6061 = vmatprep.subr.bf16.mxu0 0
        %6062 = vmatpush2.bf16.msra.mxu0 0
        %6063 = vmatprep.subr.bf16.mxu0 0
        %6064 = vmatpush2.bf16.msra.mxu0 0
        %6065 = vmatprep.subr.bf16.mxu0 0
        %6066 = vmatpush2.bf16.msra.mxu0 0
        %6067 = vmatprep.subr.bf16.mxu0 0
        %6068 = vmatpush2.bf16.msra.mxu0 0
        %6069 = vmatprep.subr.bf16.mxu0 0
        %6070 = vmatpush2.bf16.msra.mxu0 0
        %6071 = vmatprep.subr.bf16.mxu0 0
        %6072 = vmatpush2.bf16.msra.mxu0 0
        %6073 = vmatprep.mubr.bf16.mxu0 0
        %6074 = vmatmul.mubr.bf16.gmra.mxu0 %v6036
        %v6075 = vpop.f32.mrf.mxu0
        %v6076 = vadd.f32 0.0, %v6075
        %v6077 = vpop.f32.mrf.mxu0
        %v6078 = vpop.f32.mrf.mxu0
        %v6079 = vpop.f32.mrf.mxu0
        %6080 = vdwg.mxu0
        %6082 = vrot.lane.b32.xlu0 %v5701, 96
        %v6083 = vpop.permute.xlu0 %6082
        %v6085 = vsel %vm1759, %v5933, 0
        %v6088 = vsel %vm2006, %v6083, 0
        %6090 = vmatprep.subr.bf16.mxu0 0
        %6091 = vmatpush1.bf16.msra.mxu0 0
        %6092 = vmatprep.subr.bf16.mxu0 0
        %6093 = vmatpush1.bf16.msra.mxu0 0
        %6094 = vmatprep.subr.bf16.mxu0 0
        %6095 = vmatpush1.bf16.msra.mxu0 0
        %6096 = vmatprep.subr.bf16.mxu0 0
        %6097 = vmatpush1.bf16.msra.mxu0 0
        %6098 = vmatprep.subr.bf16.mxu0 0
        %6099 = vmatpush1.bf16.msra.mxu0 0
        %6100 = vmatprep.subr.bf16.mxu0 0
        %6101 = vmatpush1.bf16.msra.mxu0 0
        %6102 = vmatprep.subr.bf16.mxu0 0
        %6103 = vmatpush1.bf16.msra.mxu0 0
        %6104 = vmatprep.subr.bf16.mxu0 0
        %6105 = vmatpush1.bf16.msra.mxu0 %v6088
        %6106 = vmatprep.subr.bf16.mxu0 0
        %6107 = vmatpush2.bf16.msra.mxu0 0
        %6108 = vmatprep.subr.bf16.mxu0 0
        %6109 = vmatpush2.bf16.msra.mxu0 0
        %6110 = vmatprep.subr.bf16.mxu0 0
        %6111 = vmatpush2.bf16.msra.mxu0 0
        %6112 = vmatprep.subr.bf16.mxu0 0
        %6113 = vmatpush2.bf16.msra.mxu0 0
        %6114 = vmatprep.subr.bf16.mxu0 0
        %6115 = vmatpush2.bf16.msra.mxu0 0
        %6116 = vmatprep.subr.bf16.mxu0 0
        %6117 = vmatpush2.bf16.msra.mxu0 0
        %6118 = vmatprep.subr.bf16.mxu0 0
        %6119 = vmatpush2.bf16.msra.mxu0 0
        %6120 = vmatprep.subr.bf16.mxu0 0
        %6121 = vmatpush2.bf16.msra.mxu0 0
        %6122 = vmatprep.mubr.bf16.mxu0 0
        %6123 = vmatmul.mubr.bf16.gmra.mxu0 %v6085
        %v6124 = vpop.f32.mrf.mxu0
        %v6125 = vadd.f32 0.0, %v6124
        %v6126 = vpop.f32.mrf.mxu0
        %v6127 = vpop.f32.mrf.mxu0
        %v6128 = vpop.f32.mrf.mxu0
        %6129 = vdwg.mxu0
        %6131 = vrot.lane.b32.xlu0 %v6027, 8
        %v6132 = vpop.permute.xlu0 %6131
        %6135 = vrot.lane.b32.xlu0 %v6076, 16
        %v6136 = vpop.permute.xlu0 %6135
        %6139 = vrot.lane.b32.xlu0 %v6125, 24
        %v6140 = vpop.permute.xlu0 %6139
        %v6142 = vsel %vm1759, %v5978, %v6132
        %v6143 = vsel %vm2207, %v6142, %v6136
        %v6144 = vsel %vm2209, %v6143, %v6140
        %v6145 = vpack.c.bf16 %v6144, %v6144
        %v6147 = vlaneseq
        %v6148 = vshrl.u32 %v6147, 7
        %v6149 = vsub.s32 0, %v6148
        %v6150 = vrot.slane %v5673, %v6149
        %v6156 = vunpack.c.l.b16 %v5668
        %v6157 = vunpack.c.l.b16 %v5669
        %v6158 = vunpack.c.l.b16 %v5670
        %v6159 = vunpack.c.l.b16 %v5671
        %v6160 = vpack.c.b16 %v6157, %v6156
        %v6161 = vpack.c.b16 %v6159, %v6158
        %v6165 = vsel %vm1626, %v6145, 0
        %6167 = vmatprep.subr.bf16.mxu0 0
        %6168 = vmatpush1.bf16.msra.mxu0 0
        %6169 = vmatprep.subr.bf16.mxu0 0
        %6170 = vmatpush1.bf16.msra.mxu0 0
        %6171 = vmatprep.subr.bf16.mxu0 0
        %6172 = vmatpush1.bf16.msra.mxu0 0
        %6173 = vmatprep.subr.bf16.mxu0 0
        %6174 = vmatpush1.bf16.msra.mxu0 0
        %6175 = vmatprep.subr.bf16.mxu0 0
        %6176 = vmatpush1.bf16.msra.mxu0 0
        %6177 = vmatprep.subr.bf16.mxu0 0
        %6178 = vmatpush1.bf16.msra.mxu0 0
        %6179 = vmatprep.subr.bf16.mxu0 0
        %6180 = vmatpush1.bf16.msra.mxu0 %v6161
        %6181 = vmatprep.subr.bf16.mxu0 0
        %6182 = vmatpush1.bf16.msra.mxu0 %v6160
        %6183 = vmatprep.subr.bf16.mxu0 0
        %6184 = vmatpush2.bf16.msra.mxu0 0
        %6185 = vmatprep.subr.bf16.mxu0 0
        %6186 = vmatpush2.bf16.msra.mxu0 0
        %6187 = vmatprep.subr.bf16.mxu0 0
        %6188 = vmatpush2.bf16.msra.mxu0 0
        %6189 = vmatprep.subr.bf16.mxu0 0
        %6190 = vmatpush2.bf16.msra.mxu0 0
        %6191 = vmatprep.subr.bf16.mxu0 0
        %6192 = vmatpush2.bf16.msra.mxu0 0
        %6193 = vmatprep.subr.bf16.mxu0 0
        %6194 = vmatpush2.bf16.msra.mxu0 0
        %6195 = vmatprep.subr.bf16.mxu0 0
        %6196 = vmatpush2.bf16.msra.mxu0 0
        %6197 = vmatprep.subr.bf16.mxu0 0
        %6198 = vmatpush2.bf16.msra.mxu0 0
        %6199 = vmatprep.mubr.bf16.mxu0 0
        %6200 = vmatmul.mubr.bf16.gmra.mxu0 %v6165
        %v6201 = vpop.f32.mrf.mxu0
        %v6202 = vadd.f32 %v6150, %v6201
        %v6203 = vpop.f32.mrf.mxu0
        %v6204 = vpop.f32.mrf.mxu0
        %v6205 = vpop.f32.mrf.mxu0
        %6206 = vdwg.mxu0
        %v6207 = vadd.f32 %v5500, %v6202
        %s6208 = scalar_lea.vmem %s63, 1
        %v6209 = vld [vmem:[%s6208] sm:$0x1]
        %s6210 = scalar_lea.vmem %s65, 1
        %v6211 = vld [vmem:[%s6210] sm:$0x1]
        %v6212 = vsel %vm1626, %v6207, 0.0
        %6213 = vadd.xlane.f32.xlu0 %v6212
        %v6214 = vpop.xlane.xlu0 %6213
        %v6215 = vmul.f32 %v6214, %v1630
        %v6216 = vsub.f32 %v6207, %v6215
        %v6217 = vmul.f32 %v6216, %v6216
        %v6218 = vsel %vm1626, %v6217, 0.0
        %6219 = vadd.xlane.f32.xlu0 %v6218
        %v6220 = vpop.xlane.xlu0 %6219
        %v6221 = vmul.f32 %v6220, %v1630
        %v6222 = vadd.f32 %v6221, 1e-06
        %v6223 = vrsqrt.pop %v6222
        %v6224 = vmul.f32 %v6216, %v6223
        %v6226 = vlaneseq
        %v6227 = vshrl.u32 %v6226, 7
        %v6228 = vsub.s32 0, %v6227
        %v6229 = vrot.slane %v6209, %v6228
        %v6231 = vmul.f32 %v6224, %v6229
        %v6233 = vlaneseq
        %v6234 = vshrl.u32 %v6233, 7
        %v6235 = vsub.s32 0, %v6234
        %v6236 = vrot.slane %v6211, %v6235
        %v6238 = vadd.f32 %v6231, %v6236
        %s6239 = scalar_lea.vmem [#allocation34], 16
        %v6240 = vld [vmem:[%s6239] sm:$0xf]
        %v6241 = vld [vmem:[%s6239 + $0x4] sm:$0xf]
        %v6242 = vld [vmem:[%s6239 + $0x8] sm:$0xf]
        %v6243 = vld [vmem:[%s6239 + $0xc] sm:$0xf]
        %s6244 = scalar_lea.vmem %s69, 1
        %v6245 = vld [vmem:[%s6244] sm:$0x1]
        %s6246 = scalar_lea.vmem %s71, 32
        %v6247 = vld [vmem:[%s6246] sm:$0xf]
        %v6248 = vld [vmem:[%s6246 + $0x4] sm:$0xf]
        %v6249 = vld [vmem:[%s6246 + $0x8] sm:$0xf]
        %v6250 = vld [vmem:[%s6246 + $0xc] sm:$0xf]
        %v6251 = vld [vmem:[%s6246 + $0x10] sm:$0xf]
        %v6252 = vld [vmem:[%s6246 + $0x14] sm:$0xf]
        %v6253 = vld [vmem:[%s6246 + $0x18] sm:$0xf]
        %v6254 = vld [vmem:[%s6246 + $0x1c] sm:$0xf]
        %s6255 = scalar_lea.vmem %s73, 1
        %v6256 = vld [vmem:[%s6255] sm:$0x1]
        %v6257 = vpack.c.bf16 %v6238, %v6238
        %v6259 = vlaneseq
        %v6260 = vshrl.u32 %v6259, 7
        %v6261 = vsub.s32 0, %v6260
        %v6262 = vrot.slane %v6245, %v6261
        %v6268 = vunpack.c.l.b16 %v6240
        %v6269 = vunpack.c.l.b16 %v6241
        %v6270 = vunpack.c.l.b16 %v6242
        %v6271 = vunpack.c.l.b16 %v6243
        %v6272 = vpack.c.b16 %v6269, %v6268
        %v6273 = vpack.c.b16 %v6271, %v6270
        %v6277 = vsel %vm1626, %v6257, 0
        %6279 = vmatprep.subr.bf16.mxu0 0
        %6280 = vmatpush1.bf16.msra.mxu0 0
        %6281 = vmatprep.subr.bf16.mxu0 0
        %6282 = vmatpush1.bf16.msra.mxu0 0
        %6283 = vmatprep.subr.bf16.mxu0 0
        %6284 = vmatpush1.bf16.msra.mxu0 0
        %6285 = vmatprep.subr.bf16.mxu0 0
        %6286 = vmatpush1.bf16.msra.mxu0 0
        %6287 = vmatprep.subr.bf16.mxu0 0
        %6288 = vmatpush1.bf16.msra.mxu0 0
        %6289 = vmatprep.subr.bf16.mxu0 0
        %6290 = vmatpush1.bf16.msra.mxu0 0
        %6291 = vmatprep.subr.bf16.mxu0 0
        %6292 = vmatpush1.bf16.msra.mxu0 %v6273
        %6293 = vmatprep.subr.bf16.mxu0 0
        %6294 = vmatpush1.bf16.msra.mxu0 %v6272
        %6295 = vmatprep.subr.bf16.mxu0 0
        %6296 = vmatpush2.bf16.msra.mxu0 0
        %6297 = vmatprep.subr.bf16.mxu0 0
        %6298 = vmatpush2.bf16.msra.mxu0 0
        %6299 = vmatprep.subr.bf16.mxu0 0
        %6300 = vmatpush2.bf16.msra.mxu0 0
        %6301 = vmatprep.subr.bf16.mxu0 0
        %6302 = vmatpush2.bf16.msra.mxu0 0
        %6303 = vmatprep.subr.bf16.mxu0 0
        %6304 = vmatpush2.bf16.msra.mxu0 0
        %6305 = vmatprep.subr.bf16.mxu0 0
        %6306 = vmatpush2.bf16.msra.mxu0 0
        %6307 = vmatprep.subr.bf16.mxu0 0
        %6308 = vmatpush2.bf16.msra.mxu0 0
        %6309 = vmatprep.subr.bf16.mxu0 0
        %6310 = vmatpush2.bf16.msra.mxu0 0
        %6311 = vmatprep.mubr.bf16.mxu0 0
        %6312 = vmatmul.mubr.bf16.gmra.mxu0 %v6277
        %v6313 = vpop.f32.mrf.mxu0
        %v6314 = vadd.f32 %v6262, %v6313
        %v6315 = vpop.f32.mrf.mxu0
        %v6316 = vpop.f32.mrf.mxu0
        %v6317 = vpop.f32.mrf.mxu0
        %6318 = vdwg.mxu0
        %v6319 = vmax.f32 %v6314, 0.0
        %v6320 = vpack.c.bf16 %v6319, %v6319
        %v6322 = vlaneseq
        %v6323 = vshrl.u32 %v6322, 7
        %v6324 = vsub.s32 0, %v6323
        %v6325 = vrot.slane %v6256, %v6324
        %v6335 = vunpack.c.l.b16 %v6247
        %v6336 = vunpack.c.l.b16 %v6248
        %v6337 = vunpack.c.l.b16 %v6249
        %v6338 = vunpack.c.l.b16 %v6250
        %v6339 = vunpack.c.l.b16 %v6251
        %v6340 = vunpack.c.l.b16 %v6252
        %v6341 = vunpack.c.l.b16 %v6253
        %v6342 = vunpack.c.l.b16 %v6254
        %v6343 = vpack.c.b16 %v6336, %v6335
        %v6344 = vpack.c.b16 %v6338, %v6337
        %v6345 = vpack.c.b16 %v6340, %v6339
        %v6346 = vpack.c.b16 %v6342, %v6341
        %v6352 = vsel %vm2411, %v6320, 0
        %6354 = vmatprep.subr.bf16.mxu0 0
        %6355 = vmatpush1.bf16.msra.mxu0 0
        %6356 = vmatprep.subr.bf16.mxu0 0
        %6357 = vmatpush1.bf16.msra.mxu0 0
        %6358 = vmatprep.subr.bf16.mxu0 0
        %6359 = vmatpush1.bf16.msra.mxu0 0
        %6360 = vmatprep.subr.bf16.mxu0 0
        %6361 = vmatpush1.bf16.msra.mxu0 0
        %6362 = vmatprep.subr.bf16.mxu0 0
        %6363 = vmatpush1.bf16.msra.mxu0 %v6346
        %6364 = vmatprep.subr.bf16.mxu0 0
        %6365 = vmatpush1.bf16.msra.mxu0 %v6345
        %6366 = vmatprep.subr.bf16.mxu0 0
        %6367 = vmatpush1.bf16.msra.mxu0 %v6344
        %6368 = vmatprep.subr.bf16.mxu0 0
        %6369 = vmatpush1.bf16.msra.mxu0 %v6343
        %6370 = vmatprep.subr.bf16.mxu0 0
        %6371 = vmatpush2.bf16.msra.mxu0 0
        %6372 = vmatprep.subr.bf16.mxu0 0
        %6373 = vmatpush2.bf16.msra.mxu0 0
        %6374 = vmatprep.subr.bf16.mxu0 0
        %6375 = vmatpush2.bf16.msra.mxu0 0
        %6376 = vmatprep.subr.bf16.mxu0 0
        %6377 = vmatpush2.bf16.msra.mxu0 0
        %6378 = vmatprep.subr.bf16.mxu0 0
        %6379 = vmatpush2.bf16.msra.mxu0 0
        %6380 = vmatprep.subr.bf16.mxu0 0
        %6381 = vmatpush2.bf16.msra.mxu0 0
        %6382 = vmatprep.subr.bf16.mxu0 0
        %6383 = vmatpush2.bf16.msra.mxu0 0
        %6384 = vmatprep.subr.bf16.mxu0 0
        %6385 = vmatpush2.bf16.msra.mxu0 0
        %6386 = vmatprep.mubr.bf16.mxu0 0
        %6387 = vmatmul.mubr.bf16.gmra.mxu0 %v6352
        %v6388 = vpop.f32.mrf.mxu0
        %v6389 = vadd.f32 %v6325, %v6388
        %v6390 = vpop.f32.mrf.mxu0
        %v6391 = vpop.f32.mrf.mxu0
        %v6392 = vpop.f32.mrf.mxu0
        %6393 = vdwg.mxu0
        %v6394 = vadd.f32 %v6207, %v6389
        %v6395 = vld [vmem:[%s75] sm:$0x1]
        %v6396 = vld [vmem:[%s77] sm:$0x1]
        %v6397 = vsel %vm1626, %v6394, 0.0
        %6398 = vadd.xlane.f32.xlu0 %v6397
        %v6399 = vpop.xlane.xlu0 %6398
        %v6400 = vmul.f32 %v6399, %v1630
        %v6401 = vsub.f32 %v6394, %v6400
        %v6402 = vmul.f32 %v6401, %v6401
        %v6403 = vsel %vm1626, %v6402, 0.0
        %6404 = vadd.xlane.f32.xlu0 %v6403
        %v6405 = vpop.xlane.xlu0 %6404
        %v6406 = vmul.f32 %v6405, %v1630
        %v6407 = vadd.f32 %v6406, 1e-06
        %v6408 = vrsqrt.pop %v6407
        %v6409 = vmul.f32 %v6401, %v6408
        %v6411 = vlaneseq
        %v6412 = vshrl.u32 %v6411, 7
        %v6413 = vsub.s32 0, %v6412
        %v6414 = vrot.slane %v6395, %v6413
        %v6416 = vmul.f32 %v6409, %v6414
        %v6418 = vlaneseq
        %v6419 = vshrl.u32 %v6418, 7
        %v6420 = vsub.s32 0, %v6419
        %v6421 = vrot.slane %v6396, %v6420
        %v6423 = vadd.f32 %v6416, %v6421
        %6424 = vst.msk [vmem:[%s1613] sm:$0xff] %vm1626, %v6423
        %v6425 = vld [vmem:[%s79] sm:$0xf]
        %v6426 = vld [vmem:[%s79 + $0x4] sm:$0xf]
        %v6427 = vld [vmem:[%s79 + $0x8] sm:$0xf]
        %v6428 = vld [vmem:[%s79 + $0xc] sm:$0xf]
        %v6429 = vpack.c.bf16 %v6423, %v6423
        %v6430 = vld [vmem:[%s81] sm:$0x1]
        %v6432 = vlaneseq
        %v6433 = vshrl.u32 %v6432, 7
        %v6434 = vsub.s32 0, %v6433
        %v6435 = vrot.slane %v6430, %v6434
        %v6441 = vunpack.c.l.b16 %v6425
        %v6442 = vunpack.c.l.b16 %v6426
        %v6443 = vunpack.c.l.b16 %v6427
        %v6444 = vunpack.c.l.b16 %v6428
        %v6445 = vpack.c.b16 %v6442, %v6441
        %v6446 = vpack.c.b16 %v6444, %v6443
        %v6450 = vsel %vm1626, %v6429, 0
        %6452 = vmatprep.subr.bf16.mxu0 0
        %6453 = vmatpush1.bf16.msra.mxu0 0
        %6454 = vmatprep.subr.bf16.mxu0 0
        %6455 = vmatpush1.bf16.msra.mxu0 0
        %6456 = vmatprep.subr.bf16.mxu0 0
        %6457 = vmatpush1.bf16.msra.mxu0 0
        %6458 = vmatprep.subr.bf16.mxu0 0
        %6459 = vmatpush1.bf16.msra.mxu0 0
        %6460 = vmatprep.subr.bf16.mxu0 0
        %6461 = vmatpush1.bf16.msra.mxu0 0
        %6462 = vmatprep.subr.bf16.mxu0 0
        %6463 = vmatpush1.bf16.msra.mxu0 0
        %6464 = vmatprep.subr.bf16.mxu0 0
        %6465 = vmatpush1.bf16.msra.mxu0 %v6446
        %6466 = vmatprep.subr.bf16.mxu0 0
        %6467 = vmatpush1.bf16.msra.mxu0 %v6445
        %6468 = vmatprep.subr.bf16.mxu0 0
        %6469 = vmatpush2.bf16.msra.mxu0 0
        %6470 = vmatprep.subr.bf16.mxu0 0
        %6471 = vmatpush2.bf16.msra.mxu0 0
        %6472 = vmatprep.subr.bf16.mxu0 0
        %6473 = vmatpush2.bf16.msra.mxu0 0
        %6474 = vmatprep.subr.bf16.mxu0 0
        %6475 = vmatpush2.bf16.msra.mxu0 0
        %6476 = vmatprep.subr.bf16.mxu0 0
        %6477 = vmatpush2.bf16.msra.mxu0 0
        %6478 = vmatprep.subr.bf16.mxu0 0
        %6479 = vmatpush2.bf16.msra.mxu0 0
        %6480 = vmatprep.subr.bf16.mxu0 0
        %6481 = vmatpush2.bf16.msra.mxu0 0
        %6482 = vmatprep.subr.bf16.mxu0 0
        %6483 = vmatpush2.bf16.msra.mxu0 0
        %6484 = vmatprep.mubr.bf16.mxu0 0
        %6485 = vmatmul.mubr.bf16.gmra.mxu0 %v6450
        %v6486 = vpop.f32.mrf.mxu0
        %v6487 = vadd.f32 %v6435, %v6486
        %v6488 = vpop.f32.mrf.mxu0
        %v6489 = vpop.f32.mrf.mxu0
        %v6490 = vpop.f32.mrf.mxu0
        %6491 = vdwg.mxu0
        %v6492 = vsel %vm2207, %v6487, -inf
        %6493 = vmax.xlane.f32.xlu0 %v6492
        %v6494 = vpop.xlane.xlu0 %6493
        %v6495 = vsub.f32 %v6487, %v6494
        %v6496 = vmul.f32 %v6495, 1.442695
        %v6497 = vpow.pop %v6496
        %v6498 = vsel %vm2207, %v6497, 0.0
        %6499 = vadd.xlane.f32.xlu0 %v6498
        %v6500 = vpop.xlane.xlu0 %6499
        %v6501 = vlog2.pop %v6500
        %v6502 = vmul.f32 %v6501, 0.6931472
        %v6503 = vsub.f32 %v6495, %v6502
        %6504 = vst.msk [vmem:[%s1620] sm:$0xff] %vm2207, %v6503
        %s6505 = sand.u32 %s1002, 1
        %s6506 = scalar_lea.sflag [#allocation4], %s6505
        %s6507 = sand.u32 %s1002, 1
        %s6508 = smul.addr %s6507, 8
        %s6509 = scalar_lea.vmem [#allocation35], %s6508
        %s6510 = sand.u32 %s1028, 1
        %s6511 = scalar_lea.sflag [#allocation37], %s6510
        %s6512 = sand.u32 %s1028, 1
        %s6513 = smul.addr %s6512, 8
        %s6514 = scalar_lea.vmem [#allocation36], %s6513
        // Predicated region
        $region269: #{tpu_custom_call.1} parent=183 // pred_check
          %p6515 = pneg %p1012
        $region270: #{tpu_custom_call.1} parent=183 // pred_check_branch
          %6517 = sbr.rel (%p6515) target = $region272
        $region271: #{tpu_custom_call.1} parent=183 // pred_region
          %s6519 = ssub.s32 128, 128
          %6520 = vsyncadd %s6506, %s6519
          %s6521 = smul.addr %s118, 128
          %s6522 = scalar_lea.hbm %s83, %s6521
          %s6524 = sshll.u32 %s6509, 4
          %s6525 = int_to_ptr.vmem [resolvable:$true] %s6524
          %6527 = dma.vmem_to_hbm [thread:$0]  %s6525, 128, %s6522, %s6506
        $region272: #{tpu_custom_call.1} parent=183 // pred_fallthru
          _
        // Predicated region
        $region273: #{tpu_custom_call.1} parent=183 // pred_check
          %p6528 = pneg %p1038
        $region274: #{tpu_custom_call.1} parent=183 // pred_check_branch
          %6530 = sbr.rel (%p6528) target = $region276
        $region275: #{tpu_custom_call.1} parent=183 // pred_region
          %s6532 = ssub.s32 128, 128
          %6533 = vsyncadd %s6511, %s6532
          %s6534 = smul.addr %s118, 128
          %s6535 = scalar_lea.hbm %s85, %s6534
          %s6537 = sshll.u32 %s6514, 4
          %s6538 = int_to_ptr.vmem [resolvable:$true] %s6537
          %6540 = dma.vmem_to_hbm [thread:$0]  %s6538, 128, %s6535, %s6511
        $region276: #{tpu_custom_call.1} parent=183 // pred_fallthru
          _
      $region184: #{tpu_custom_call.1} parent=5 // pred_fallthru
        _
      %p6541 = scmp.le.s32.totalorder 2, %s113
      // Predicated region
      $region277: #{tpu_custom_call.1} parent=5 // pred_check
        %p6542 = pneg %p6541
      $region278: #{tpu_custom_call.1} parent=5 // pred_check_branch
        %6544 = sbr.rel (%p6542) target = $region280
      $region279: #{tpu_custom_call.1} parent=5 // pred_region
        %s6545 = ssub.s32 %s113, 2
        // Predicated region
        $region281: #{tpu_custom_call.1} parent=279 // pred_check
          %p6546 = pneg %p1018
        $region282: #{tpu_custom_call.1} parent=279 // pred_check_branch
          %6548 = sbr.rel (%p6546) target = $region284
        $region283: #{tpu_custom_call.1} parent=279 // pred_region
          %s6549 = sand.u32 %s1003, 1
          %s6550 = scalar_lea.sflag [#allocation4], %s6549
          %s6551 = sand.u32 %s1003, 1
          %s6552 = smul.addr %s6551, 8
          %s6553 = scalar_lea.vmem [#allocation35], %s6552
          %6554 = dma.done %s6550, 128
        $region284: #{tpu_custom_call.1} parent=279 // pred_fallthru
          _
        // Predicated region
        $region285: #{tpu_custom_call.1} parent=279 // pred_check
          %p6555 = pneg %p1044
        $region286: #{tpu_custom_call.1} parent=279 // pred_check_branch
          %6557 = sbr.rel (%p6555) target = $region288
        $region287: #{tpu_custom_call.1} parent=279 // pred_region
          %s6558 = sand.u32 %s1029, 1
          %s6559 = scalar_lea.sflag [#allocation37], %s6558
          %s6560 = sand.u32 %s1029, 1
          %s6561 = smul.addr %s6560, 8
          %s6562 = scalar_lea.vmem [#allocation36], %s6561
          %6563 = dma.done %s6559, 128
        $region288: #{tpu_custom_call.1} parent=279 // pred_fallthru
          _
      $region280: #{tpu_custom_call.1} parent=5 // pred_fallthru
        _
    $region6: #{tpu_custom_call.1} parent=1 // loop_footer
      %s117 = sadd.s32 1, %s113
    $region7: #{tpu_custom_call.1} parent=1 // loop_footer_branch
      %112 = sbr.rel target = $region3
    $region8: #{tpu_custom_call.1} parent=1 // loop_exit
      _
    %6564 = vsyncpa [#allocation3], 1
    %s6565 = scalar_lea.sflag [#allocation3], 1
    %6566 = vsyncpa %s6565, 1
    %6567 = vsyncpa [#allocation6], 1
    %s6568 = scalar_lea.sflag [#allocation6], 1
    %6569 = vsyncpa %s6568, 1
    %6570 = vsyncpa [#allocation9], 1
    %6571 = vsyncpa [#allocation12], 1
    %6572 = vsyncpa [#allocation15], 1
    %6573 = vsyncpa [#allocation18], 1
    %6574 = vsyncpa [#allocation21], 1
    %6575 = vsyncpa [#allocation24], 1
    %6576 = vsyncpa [#allocation27], 1
    %6577 = vsyncpa [#allocation30], 1
    %6578 = vsyncpa [#allocation33], 1
    %6579 = vsyncpa [#allocation4], 1
    %s6580 = scalar_lea.sflag [#allocation4], 1
    %6581 = vsyncpa %s6580, 1
    %6582 = vsyncpa [#allocation37], 1
    %s6583 = scalar_lea.sflag [#allocation37], 1
    %6584 = vsyncpa %s6583, 1

</llo_original>
